<compile_context>
chip_gen: v7x
topology: tpu7x:2x2x1
jax: 0.10.0
libtpu: 0.0.40
codegen_flags: <defaults>
</compile_context>

<pallas_src>
import functools

import jax
import jax.numpy as jnp
from jax.experimental import pallas as pl
from jax.experimental.pallas import tpu as pltpu


_PAD_COL = 8  # interior column offset in the padded VMEM scratch; a multiple
              # of 8 (sublane) keeps the interior store unmasked.


# ----------------------------- Pallas kernel --------------------------------


def _conv_block_fused_kernel(x_ref, w1_ref, shift1_ref, w2_ref, shift2_ref,
                             out_ref, pad1_ref, pad2_ref,
                             *, H, W, Cin, C, Ho, Wo):
    """conv3x3+BN+ReLU -> conv3x3+BN+ReLU -> 2x2 avg pool for one batch image."""
    L = _PAD_COL - 1          # leftmost padded column read by the kx == 0 tap
    R = _PAD_COL + W          # rightmost padded column read by the kx == 2 tap
    Wp = W + 2 * _PAD_COL     # padded scratch width

    # --- zero ONLY the 1-pixel halo (interior is fully overwritten below). ---
    # Re-zeroed every grid step: cheap, and megacore-safe (no program_id guard).
    pad1_ref[0:1, :, :] = jnp.zeros((1, Wp, Cin), jnp.float32)
    pad1_ref[H + 1:H + 2, :, :] = jnp.zeros((1, Wp, Cin), jnp.float32)
    pad1_ref[1:H + 1, L:L + 1, :] = jnp.zeros((H, 1, Cin), jnp.float32)
    pad1_ref[1:H + 1, R:R + 1, :] = jnp.zeros((H, 1, Cin), jnp.float32)
    pad2_ref[0:1, :, :] = jnp.zeros((1, Wp, C), jnp.float32)
    pad2_ref[H + 1:H + 2, :, :] = jnp.zeros((1, Wp, C), jnp.float32)
    pad2_ref[1:H + 1, L:L + 1, :] = jnp.zeros((H, 1, C), jnp.float32)
    pad2_ref[1:H + 1, R:R + 1, :] = jnp.zeros((H, 1, C), jnp.float32)

    # ---- conv1 + BN shift + ReLU (BN scale pre-folded into bf16 w1) --------
    pad1_ref[1:H + 1, _PAD_COL:_PAD_COL + W, :] = x_ref[0]
    acc1 = jnp.zeros((H * W, C), jnp.float32)
    for ky in range(3):
        for kx in range(3):
            patch = pad1_ref[ky:ky + H, L + kx:L + kx + W, :].reshape(H * W, Cin)
            acc1 = acc1 + jnp.dot(patch.astype(jnp.bfloat16), w1_ref[ky, kx],
                                  preferred_element_type=jnp.float32)
    h1 = jnp.maximum(acc1 + shift1_ref[...], 0.0)                 # (H*W, C) f32

    # ---- conv2 + BN shift + ReLU: 18 accumulated K=C MXU dots ---------------
    # No im2col scratch: each 3x3 tap is read straight from the padded h1,
    # split into even / odd output columns via stride-2 VMEM reads so that the
    # 2x2 pooling below is a pure layout-preserving register add.
    pad2_ref[1:H + 1, _PAD_COL:_PAD_COL + W, :] = h1.reshape(H, W, C)
    acc_e = jnp.zeros((H * Wo, C), jnp.float32)   # output pixels with even w
    acc_o = jnp.zeros((H * Wo, C), jnp.float32)   # output pixels with odd  w
    for ky in range(3):
        for kx in range(3):
            w_tap = w2_ref[ky, kx]                                # (C, C) bf16
            base = L + kx
            pe = pad2_ref[ky:ky + H, pl.ds(base, Wo, stride=2), :]
            po = pad2_ref[ky:ky + H, pl.ds(base + 1, Wo, stride=2), :]
            acc_e = acc_e + jnp.dot(pe.reshape(H * Wo, C).astype(jnp.bfloat16),
                                    w_tap, preferred_element_type=jnp.float32)
            acc_o = acc_o + jnp.dot(po.reshape(H * Wo, C).astype(jnp.bfloat16),
                                    w_tap, preferred_element_type=jnp.float32)
    shift2 = shift2_ref[...]
    h2_e = jnp.maximum(acc_e + shift2, 0.0)       # ReLU BEFORE pooling
    h2_o = jnp.maximum(acc_o + shift2, 0.0)

    # ---- 2x2 average pool, entirely in registers ----------------------------
    col_sum = h2_e + h2_o                         # (H*Wo, C): adjacent-w pairs
    g = col_sum.reshape(Ho, 2 * Wo, C)            # layout-preserving row split
    pooled = (g[:, :Wo, :] + g[:, Wo:, :]) * 0.25  # adjacent-h pairs -> (Ho,Wo,C)
    out_ref[0] = pooled.astype(out_ref.dtype)


# ------------------------------- Wrapper ------------------------------------


def conv_block_forward(x_nchw, params, pool_size=(2, 2), pool_type="avg"):
    """ConvBlock.forward: conv-bn-relu, conv-bn-relu, 2x2 avg pool (NCHW io)."""
    if pool_type != "avg":
        # TODO(synk): 'max' and 'avg+max' pool variants not implemented.
        raise NotImplementedError("only pool_type='avg' (the default) is implemented")
    if pool_size != (2, 2):
        # TODO(synk): general pool sizes / PyTorch floor-mode pooling for odd
        # spatial dims not implemented.
        raise NotImplementedError("only pool_size=(2, 2) is implemented")

    x = jnp.transpose(x_nchw, (0, 2, 3, 1))  # NCHW -> NHWC
    B, H, W, Cin = x.shape
    C = params["w1"].shape[-1]
    assert H % 2 == 0 and W % 2 == 0, "even spatial dims required"
    Ho, Wo = H // 2, W // 2

    # Fold the BN scale into the conv weights host-side (in f32), then cast the
    # matmul operands to bf16 (MXU-native); BN shift (+ ReLU) stays in-kernel
    # in f32.
    w1 = (params["w1"] * params["scale1"].reshape(1, 1, 1, C)).astype(jnp.bfloat16)
    w2 = (params["w2"] * params["scale2"].reshape(1, 1, 1, C)).astype(jnp.bfloat16)

    kernel = functools.partial(_conv_block_fused_kernel,
                               H=H, W=W, Cin=Cin, C=C, Ho=Ho, Wo=Wo)
    # TODO(synk): for production-scale spectrograms (large H*W) replace the
    # whole-image pad2 scratch with row-tiled grid blocks (1-row halo) and set
    # vmem_limit_bytes explicitly; at this demo size it fits comfortably.
    out = pl.pallas_call(
        kernel,
        out_shape=jax.ShapeDtypeStruct((B, Ho, Wo, C), jnp.float32),
        grid=(B,),
        in_specs=[
            pl.BlockSpec((1, H, W, Cin), lambda b: (b, 0, 0, 0)),
            pl.BlockSpec((3, 3, Cin, C), lambda b: (0, 0, 0, 0)),
            pl.BlockSpec((1, C), lambda b: (0, 0)),
            pl.BlockSpec((3, 3, C, C), lambda b: (0, 0, 0, 0)),
            pl.BlockSpec((1, C), lambda b: (0, 0)),
        ],
        out_specs=pl.BlockSpec((1, Ho, Wo, C), lambda b: (b, 0, 0, 0)),
        scratch_shapes=[
            pltpu.VMEM((H + 2, W + 2 * _PAD_COL, Cin), jnp.float32),  # padded x
            pltpu.VMEM((H + 2, W + 2 * _PAD_COL, C), jnp.float32),    # padded h1
        ],
        compiler_params=pltpu.CompilerParams(
            dimension_semantics=("parallel",)),  # batch steps across TCs (v7x)
    )(x, w1, params["shift1"], w2, params["shift2"])
    return jnp.transpose(out, (0, 3, 1, 2))  # NHWC -> NCHW


# --------------------------- Parameter init ---------------------------------


def _xavier_uniform_conv(key, out_c, in_c, kh=3, kw=3):
    # torch Conv2d weight (Cout, Cin, kh, kw); xavier_uniform bound.
    bound = (6.0 / (in_c * kh * kw + out_c * kh * kw)) ** 0.5
    w_oihw = jax.random.uniform(key, (out_c, in_c, kh, kw), jnp.float32,
                                -bound, bound)
    return jnp.transpose(w_oihw, (2, 3, 1, 0))  # -> HWIO


def init_conv_block_params(key, in_channels, out_channels, bn_eps=1e-5):
    k1, k2 = jax.random.split(key)
    # BN (eval mode, fresh init): gamma=1, beta=0, mean=0, var=1.
    scale = jnp.full((1, out_channels), 1.0 / jnp.sqrt(1.0 + bn_eps), jnp.float32)
    shift = jnp.zeros((1, out_channels), jnp.float32)
    return {
        "w1": _xavier_uniform_conv(k1, out_channels, in_channels),
        "w2": _xavier_uniform_conv(k2, out_channels, out_channels),
        "scale1": scale, "shift1": shift,
        "scale2": scale, "shift2": shift,
    }


# ------------------------------ Reference -----------------------------------


def _ref_forward(x_nchw, params, pool_size=(2, 2)):
    x = jnp.transpose(x_nchw, (0, 2, 3, 1))

    def cbr(x, w, s, b):
        y = jax.lax.conv_general_dilated(
            x, w, (1, 1), "SAME",
            dimension_numbers=("NHWC", "HWIO", "NHWC"))
        return jnp.maximum(y * s + b, 0.0)

    y = cbr(x, params["w1"], params["scale1"], params["shift1"])
    y = cbr(y, params["w2"], params["scale2"], params["shift2"])
    B, H, W, C = y.shape
    ph, pw = pool_size
    y = y.reshape(B, H // ph, ph, W // pw, pw, C).mean(axis=(2, 4))
    return jnp.transpose(y, (0, 3, 1, 2))


# --------------------------------- Main --------------------------------------


if __name__ == "__main__":
    key = jax.random.PRNGKey(0)
    kx, kp = jax.random.split(key)

    # Cout=128 mirrors real PANNs ConvBlock channel counts and keeps the
    # channel (lane) dim of all matmuls / stores fully dense.
    B, Cin, Cout, H, W = 2, 4, 128, 16, 16
    x = jax.random.normal(kx, (B, Cin, H, W), jnp.float32)  # NCHW, like PyTorch
    params = init_conv_block_params(kp, Cin, Cout)

    out = conv_block_forward(x, params, pool_size=(2, 2), pool_type="avg")
    out = jax.block_until_ready(out)

    ref = jax.block_until_ready(_ref_forward(x, params))
    assert out.shape == (B, Cout, H // 2, W // 2), out.shape
    # Tolerance loosened vs. the pure-f32 version: matmul operands are bf16
    # (f32 accumulation), the f32 reference is not bit-equivalent.
    if not jnp.allclose(out, ref, rtol=2e-2, atol=2e-2):
        raise AssertionError(
            f"mismatch vs reference, max abs err = {float(jnp.max(jnp.abs(out - ref)))}")

    print("KERNEL_OK")
</pallas_src>

<mosaic_0001>
module attributes {stable_mosaic.version = 11 : i64} {
  func.func @_conv_block_fused_kernel(%arg0: i32, %arg1: memref<1x16x16x4xf32, #tpu.memory_space<vmem>>, %arg2: memref<3x3x4x128xbf16, #tpu.memory_space<vmem>>, %arg3: memref<1x128xf32, #tpu.memory_space<vmem>>, %arg4: memref<3x3x128x128xbf16, #tpu.memory_space<vmem>>, %arg5: memref<1x128xf32, #tpu.memory_space<vmem>>, %arg6: memref<1x8x8x128xf32, #tpu.memory_space<vmem>>, %arg7: memref<18x32x4xf32, #tpu.memory_space<vmem>>, %arg8: memref<18x32x128xf32, #tpu.memory_space<vmem>>) attributes {dimension_semantics = [#tpu.dimension_semantics<parallel>], iteration_bounds = array<i64: 2>, scalar_prefetch = 0 : i64, scratch_operands = 2 : i64, tpu.core_type = #tpu.core_type<tc>, window_params = [{transform_indices = @transform_0, window_bounds = array<i64: 1, 16, 16, 4>}, {pipeline_mode = #tpu.pipeline_mode<synchronous>, transform_indices = @transform_1, window_bounds = array<i64: 3, 3, 4, 128>}, {pipeline_mode = #tpu.pipeline_mode<synchronous>, transform_indices = @transform_2, window_bounds = array<i64: 1, 128>}, {pipeline_mode = #tpu.pipeline_mode<synchronous>, transform_indices = @transform_3, window_bounds = array<i64: 3, 3, 128, 128>}, {pipeline_mode = #tpu.pipeline_mode<synchronous>, transform_indices = @transform_4, window_bounds = array<i64: 1, 128>}, {transform_indices = @transform_5, window_bounds = array<i64: 1, 8, 8, 128>}]} {
    %cst = arith.constant 0.000000e+00 : f32
    %0 = vector.broadcast %cst : f32 to vector<1x32x4xf32>
    %c0 = arith.constant 0 : index
    %c0_0 = arith.constant 0 : index
    %c0_1 = arith.constant 0 : index
    %1 = vector.load %arg7[%c0, %c0_0, %c0_1] : memref<18x32x4xf32, #tpu.memory_space<vmem>>, vector<1x32x4xf32>
    tpu.vector_store %arg7[%c0, %c0_0, %c0_1], %0 {strides = array<i32>} : memref<18x32x4xf32, #tpu.memory_space<vmem>>, vector<1x32x4xf32>,
    %cst_2 = arith.constant 0.000000e+00 : f32
    %2 = vector.broadcast %cst_2 : f32 to vector<1x32x4xf32>
    %c17 = arith.constant 17 : index
    %c0_3 = arith.constant 0 : index
    %c0_4 = arith.constant 0 : index
    %3 = vector.load %arg7[%c17, %c0_3, %c0_4] : memref<18x32x4xf32, #tpu.memory_space<vmem>>, vector<1x32x4xf32>
    tpu.vector_store %arg7[%c17, %c0_3, %c0_4], %2 {strides = array<i32>} : memref<18x32x4xf32, #tpu.memory_space<vmem>>, vector<1x32x4xf32>,
    %cst_5 = arith.constant 0.000000e+00 : f32
    %4 = vector.broadcast %cst_5 : f32 to vector<16x1x4xf32>
    %c1 = arith.constant 1 : index
    %c7 = arith.constant 7 : index
    %c0_6 = arith.constant 0 : index
    %5 = vector.load %arg7[%c1, %c7, %c0_6] : memref<18x32x4xf32, #tpu.memory_space<vmem>>, vector<16x1x4xf32>
    tpu.vector_store %arg7[%c1, %c7, %c0_6], %4 {strides = array<i32>} : memref<18x32x4xf32, #tpu.memory_space<vmem>>, vector<16x1x4xf32>,
    %cst_7 = arith.constant 0.000000e+00 : f32
    %6 = vector.broadcast %cst_7 : f32 to vector<16x1x4xf32>
    %c1_8 = arith.constant 1 : index
    %c24 = arith.constant 24 : index
    %c0_9 = arith.constant 0 : index
    %7 = vector.load %arg7[%c1_8, %c24, %c0_9] : memref<18x32x4xf32, #tpu.memory_space<vmem>>, vector<16x1x4xf32>
    tpu.vector_store %arg7[%c1_8, %c24, %c0_9], %6 {strides = array<i32>} : memref<18x32x4xf32, #tpu.memory_space<vmem>>, vector<16x1x4xf32>,
    %cst_10 = arith.constant 0.000000e+00 : f32
    %8 = vector.broadcast %cst_10 : f32 to vector<1x32x128xf32>
    %c0_11 = arith.constant 0 : index
    %c0_12 = arith.constant 0 : index
    %c0_13 = arith.constant 0 : index
    %9 = vector.load %arg8[%c0_11, %c0_12, %c0_13] : memref<18x32x128xf32, #tpu.memory_space<vmem>>, vector<1x32x128xf32>
    tpu.vector_store %arg8[%c0_11, %c0_12, %c0_13], %8 {strides = array<i32>} : memref<18x32x128xf32, #tpu.memory_space<vmem>>, vector<1x32x128xf32>,
    %cst_14 = arith.constant 0.000000e+00 : f32
    %10 = vector.broadcast %cst_14 : f32 to vector<1x32x128xf32>
    %c17_15 = arith.constant 17 : index
    %c0_16 = arith.constant 0 : index
    %c0_17 = arith.constant 0 : index
    %11 = vector.load %arg8[%c17_15, %c0_16, %c0_17] : memref<18x32x128xf32, #tpu.memory_space<vmem>>, vector<1x32x128xf32>
    tpu.vector_store %arg8[%c17_15, %c0_16, %c0_17], %10 {strides = array<i32>} : memref<18x32x128xf32, #tpu.memory_space<vmem>>, vector<1x32x128xf32>,
    %cst_18 = arith.constant 0.000000e+00 : f32
    %12 = vector.broadcast %cst_18 : f32 to vector<16x1x128xf32>
    %c1_19 = arith.constant 1 : index
    %c7_20 = arith.constant 7 : index
    %c0_21 = arith.constant 0 : index
    %13 = vector.load %arg8[%c1_19, %c7_20, %c0_21] : memref<18x32x128xf32, #tpu.memory_space<vmem>>, vector<16x1x128xf32>
    tpu.vector_store %arg8[%c1_19, %c7_20, %c0_21], %12 {strides = array<i32>} : memref<18x32x128xf32, #tpu.memory_space<vmem>>, vector<16x1x128xf32>,
    %cst_22 = arith.constant 0.000000e+00 : f32
    %14 = vector.broadcast %cst_22 : f32 to vector<16x1x128xf32>
    %c1_23 = arith.constant 1 : index
    %c24_24 = arith.constant 24 : index
    %c0_25 = arith.constant 0 : index
    %15 = vector.load %arg8[%c1_23, %c24_24, %c0_25] : memref<18x32x128xf32, #tpu.memory_space<vmem>>, vector<16x1x128xf32>
    tpu.vector_store %arg8[%c1_23, %c24_24, %c0_25], %14 {strides = array<i32>} : memref<18x32x128xf32, #tpu.memory_space<vmem>>, vector<16x1x128xf32>,
    %c0_26 = arith.constant 0 : index
    %c0_27 = arith.constant 0 : index
    %c0_28 = arith.constant 0 : index
    %c0_29 = arith.constant 0 : index
    %16 = vector.load %arg1[%c0_26, %c0_27, %c0_28, %c0_29] : memref<1x16x16x4xf32, #tpu.memory_space<vmem>>, vector<1x16x16x4xf32>
    %17 = vector.shape_cast %16 : vector<1x16x16x4xf32> to vector<16x16x4xf32>
    %c1_30 = arith.constant 1 : index
    %c8 = arith.constant 8 : index
    %c0_31 = arith.constant 0 : index
    %18 = vector.load %arg7[%c1_30, %c8, %c0_31] : memref<18x32x4xf32, #tpu.memory_space<vmem>>, vector<16x16x4xf32>
    tpu.vector_store %arg7[%c1_30, %c8, %c0_31], %17 {strides = array<i32>} : memref<18x32x4xf32, #tpu.memory_space<vmem>>, vector<16x16x4xf32>,
    %cst_32 = arith.constant 0.000000e+00 : f32
    %19 = vector.broadcast %cst_32 : f32 to vector<256x128xf32>
    %c0_33 = arith.constant 0 : index
    %c7_34 = arith.constant 7 : index
    %c0_35 = arith.constant 0 : index
    %20 = vector.load %arg7[%c0_33, %c7_34, %c0_35] : memref<18x32x4xf32, #tpu.memory_space<vmem>>, vector<16x16x4xf32>
    %21 = vector.shape_cast %20 : vector<16x16x4xf32> to vector<256x4xf32>
    %22 = arith.truncf %21 : vector<256x4xf32> to vector<256x4xbf16>
    %c0_36 = arith.constant 0 : index
    %c0_37 = arith.constant 0 : index
    %c0_38 = arith.constant 0 : index
    %c0_39 = arith.constant 0 : index
    %23 = vector.load %arg2[%c0_36, %c0_37, %c0_38, %c0_39] : memref<3x3x4x128xbf16, #tpu.memory_space<vmem>>, vector<1x1x4x128xbf16>
    %24 = vector.shape_cast %23 : vector<1x1x4x128xbf16> to vector<4x128xbf16>
    %cst_40 = arith.constant dense<0.000000e+00> : vector<256x128xf32>
    %25 = tpu.matmul %22, %24, %cst_40 {dimension_numbers = #tpu.dot_dimension_numbers<[1], [0], [0], [1], [0, 0, 1, 1], [], []>} : vector<256x4xbf16>, vector<4x128xbf16>, vector<256x128xf32> -> vector<256x128xf32>
    %26 = arith.addf %19, %25 : vector<256x128xf32>
    %c0_41 = arith.constant 0 : index
    %c8_42 = arith.constant 8 : index
    %c0_43 = arith.constant 0 : index
    %27 = vector.load %arg7[%c0_41, %c8_42, %c0_43] : memref<18x32x4xf32, #tpu.memory_space<vmem>>, vector<16x16x4xf32>
    %28 = vector.shape_cast %27 : vector<16x16x4xf32> to vector<256x4xf32>
    %29 = arith.truncf %28 : vector<256x4xf32> to vector<256x4xbf16>
    %c0_44 = arith.constant 0 : index
    %c1_45 = arith.constant 1 : index
    %c0_46 = arith.constant 0 : index
    %c0_47 = arith.constant 0 : index
    %30 = vector.load %arg2[%c0_44, %c1_45, %c0_46, %c0_47] : memref<3x3x4x128xbf16, #tpu.memory_space<vmem>>, vector<1x1x4x128xbf16>
    %31 = vector.shape_cast %30 : vector<1x1x4x128xbf16> to vector<4x128xbf16>
    %cst_48 = arith.constant dense<0.000000e+00> : vector<256x128xf32>
    %32 = tpu.matmul %29, %31, %cst_48 {dimension_numbers = #tpu.dot_dimension_numbers<[1], [0], [0], [1], [0, 0, 1, 1], [], []>} : vector<256x4xbf16>, vector<4x128xbf16>, vector<256x128xf32> -> vector<256x128xf32>
    %33 = arith.addf %26, %32 : vector<256x128xf32>
    %c0_49 = arith.constant 0 : index
    %c9 = arith.constant 9 : index
    %c0_50 = arith.constant 0 : index
    %34 = vector.load %arg7[%c0_49, %c9, %c0_50] : memref<18x32x4xf32, #tpu.memory_space<vmem>>, vector<16x16x4xf32>
    %35 = vector.shape_cast %34 : vector<16x16x4xf32> to vector<256x4xf32>
    %36 = arith.truncf %35 : vector<256x4xf32> to vector<256x4xbf16>
    %c0_51 = arith.constant 0 : index
    %c2 = arith.constant 2 : index
    %c0_52 = arith.constant 0 : index
    %c0_53 = arith.constant 0 : index
    %37 = vector.load %arg2[%c0_51, %c2, %c0_52, %c0_53] : memref<3x3x4x128xbf16, #tpu.memory_space<vmem>>, vector<1x1x4x128xbf16>
    %38 = vector.shape_cast %37 : vector<1x1x4x128xbf16> to vector<4x128xbf16>
    %cst_54 = arith.constant dense<0.000000e+00> : vector<256x128xf32>
    %39 = tpu.matmul %36, %38, %cst_54 {dimension_numbers = #tpu.dot_dimension_numbers<[1], [0], [0], [1], [0, 0, 1, 1], [], []>} : vector<256x4xbf16>, vector<4x128xbf16>, vector<256x128xf32> -> vector<256x128xf32>
    %40 = arith.addf %33, %39 : vector<256x128xf32>
    %c1_55 = arith.constant 1 : index
    %c7_56 = arith.constant 7 : index
    %c0_57 = arith.constant 0 : index
    %41 = vector.load %arg7[%c1_55, %c7_56, %c0_57] : memref<18x32x4xf32, #tpu.memory_space<vmem>>, vector<16x16x4xf32>
    %42 = vector.shape_cast %41 : vector<16x16x4xf32> to vector<256x4xf32>
    %43 = arith.truncf %42 : vector<256x4xf32> to vector<256x4xbf16>
    %c1_58 = arith.constant 1 : index
    %c0_59 = arith.constant 0 : index
    %c0_60 = arith.constant 0 : index
    %c0_61 = arith.constant 0 : index
    %44 = vector.load %arg2[%c1_58, %c0_59, %c0_60, %c0_61] : memref<3x3x4x128xbf16, #tpu.memory_space<vmem>>, vector<1x1x4x128xbf16>
    %45 = vector.shape_cast %44 : vector<1x1x4x128xbf16> to vector<4x128xbf16>
    %cst_62 = arith.constant dense<0.000000e+00> : vector<256x128xf32>
    %46 = tpu.matmul %43, %45, %cst_62 {dimension_numbers = #tpu.dot_dimension_numbers<[1], [0], [0], [1], [0, 0, 1, 1], [], []>} : vector<256x4xbf16>, vector<4x128xbf16>, vector<256x128xf32> -> vector<256x128xf32>
    %47 = arith.addf %40, %46 : vector<256x128xf32>
    %c1_63 = arith.constant 1 : index
    %c8_64 = arith.constant 8 : index
    %c0_65 = arith.constant 0 : index
    %48 = vector.load %arg7[%c1_63, %c8_64, %c0_65] : memref<18x32x4xf32, #tpu.memory_space<vmem>>, vector<16x16x4xf32>
    %49 = vector.shape_cast %48 : vector<16x16x4xf32> to vector<256x4xf32>
    %50 = arith.truncf %49 : vector<256x4xf32> to vector<256x4xbf16>
    %c1_66 = arith.constant 1 : index
    %c1_67 = arith.constant 1 : index
    %c0_68 = arith.constant 0 : index
    %c0_69 = arith.constant 0 : index
    %51 = vector.load %arg2[%c1_66, %c1_67, %c0_68, %c0_69] : memref<3x3x4x128xbf16, #tpu.memory_space<vmem>>, vector<1x1x4x128xbf16>
    %52 = vector.shape_cast %51 : vector<1x1x4x128xbf16> to vector<4x128xbf16>
    %cst_70 = arith.constant dense<0.000000e+00> : vector<256x128xf32>
    %53 = tpu.matmul %50, %52, %cst_70 {dimension_numbers = #tpu.dot_dimension_numbers<[1], [0], [0], [1], [0, 0, 1, 1], [], []>} : vector<256x4xbf16>, vector<4x128xbf16>, vector<256x128xf32> -> vector<256x128xf32>
    %54 = arith.addf %47, %53 : vector<256x128xf32>
    %c1_71 = arith.constant 1 : index
    %c9_72 = arith.constant 9 : index
    %c0_73 = arith.constant 0 : index
    %55 = vector.load %arg7[%c1_71, %c9_72, %c0_73] : memref<18x32x4xf32, #tpu.memory_space<vmem>>, vector<16x16x4xf32>
    %56 = vector.shape_cast %55 : vector<16x16x4xf32> to vector<256x4xf32>
    %57 = arith.truncf %56 : vector<256x4xf32> to vector<256x4xbf16>
    %c1_74 = arith.constant 1 : index
    %c2_75 = arith.constant 2 : index
    %c0_76 = arith.constant 0 : index
    %c0_77 = arith.constant 0 : index
    %58 = vector.load %arg2[%c1_74, %c2_75, %c0_76, %c0_77] : memref<3x3x4x128xbf16, #tpu.memory_space<vmem>>, vector<1x1x4x128xbf16>
    %59 = vector.shape_cast %58 : vector<1x1x4x128xbf16> to vector<4x128xbf16>
    %cst_78 = arith.constant dense<0.000000e+00> : vector<256x128xf32>
    %60 = tpu.matmul %57, %59, %cst_78 {dimension_numbers = #tpu.dot_dimension_numbers<[1], [0], [0], [1], [0, 0, 1, 1], [], []>} : vector<256x4xbf16>, vector<4x128xbf16>, vector<256x128xf32> -> vector<256x128xf32>
    %61 = arith.addf %54, %60 : vector<256x128xf32>
    %c2_79 = arith.constant 2 : index
    %c7_80 = arith.constant 7 : index
    %c0_81 = arith.constant 0 : index
    %62 = vector.load %arg7[%c2_79, %c7_80, %c0_81] : memref<18x32x4xf32, #tpu.memory_space<vmem>>, vector<16x16x4xf32>
    %63 = vector.shape_cast %62 : vector<16x16x4xf32> to vector<256x4xf32>
    %64 = arith.truncf %63 : vector<256x4xf32> to vector<256x4xbf16>
    %c2_82 = arith.constant 2 : index
    %c0_83 = arith.constant 0 : index
    %c0_84 = arith.constant 0 : index
    %c0_85 = arith.constant 0 : index
    %65 = vector.load %arg2[%c2_82, %c0_83, %c0_84, %c0_85] : memref<3x3x4x128xbf16, #tpu.memory_space<vmem>>, vector<1x1x4x128xbf16>
    %66 = vector.shape_cast %65 : vector<1x1x4x128xbf16> to vector<4x128xbf16>
    %cst_86 = arith.constant dense<0.000000e+00> : vector<256x128xf32>
    %67 = tpu.matmul %64, %66, %cst_86 {dimension_numbers = #tpu.dot_dimension_numbers<[1], [0], [0], [1], [0, 0, 1, 1], [], []>} : vector<256x4xbf16>, vector<4x128xbf16>, vector<256x128xf32> -> vector<256x128xf32>
    %68 = arith.addf %61, %67 : vector<256x128xf32>
    %c2_87 = arith.constant 2 : index
    %c8_88 = arith.constant 8 : index
    %c0_89 = arith.constant 0 : index
    %69 = vector.load %arg7[%c2_87, %c8_88, %c0_89] : memref<18x32x4xf32, #tpu.memory_space<vmem>>, vector<16x16x4xf32>
    %70 = vector.shape_cast %69 : vector<16x16x4xf32> to vector<256x4xf32>
    %71 = arith.truncf %70 : vector<256x4xf32> to vector<256x4xbf16>
    %c2_90 = arith.constant 2 : index
    %c1_91 = arith.constant 1 : index
    %c0_92 = arith.constant 0 : index
    %c0_93 = arith.constant 0 : index
    %72 = vector.load %arg2[%c2_90, %c1_91, %c0_92, %c0_93] : memref<3x3x4x128xbf16, #tpu.memory_space<vmem>>, vector<1x1x4x128xbf16>
    %73 = vector.shape_cast %72 : vector<1x1x4x128xbf16> to vector<4x128xbf16>
    %cst_94 = arith.constant dense<0.000000e+00> : vector<256x128xf32>
    %74 = tpu.matmul %71, %73, %cst_94 {dimension_numbers = #tpu.dot_dimension_numbers<[1], [0], [0], [1], [0, 0, 1, 1], [], []>} : vector<256x4xbf16>, vector<4x128xbf16>, vector<256x128xf32> -> vector<256x128xf32>
    %75 = arith.addf %68, %74 : vector<256x128xf32>
    %c2_95 = arith.constant 2 : index
    %c9_96 = arith.constant 9 : index
    %c0_97 = arith.constant 0 : index
    %76 = vector.load %arg7[%c2_95, %c9_96, %c0_97] : memref<18x32x4xf32, #tpu.memory_space<vmem>>, vector<16x16x4xf32>
    %77 = vector.shape_cast %76 : vector<16x16x4xf32> to vector<256x4xf32>
    %78 = arith.truncf %77 : vector<256x4xf32> to vector<256x4xbf16>
    %c2_98 = arith.constant 2 : index
    %c2_99 = arith.constant 2 : index
    %c0_100 = arith.constant 0 : index
    %c0_101 = arith.constant 0 : index
    %79 = vector.load %arg2[%c2_98, %c2_99, %c0_100, %c0_101] : memref<3x3x4x128xbf16, #tpu.memory_space<vmem>>, vector<1x1x4x128xbf16>
    %80 = vector.shape_cast %79 : vector<1x1x4x128xbf16> to vector<4x128xbf16>
    %cst_102 = arith.constant dense<0.000000e+00> : vector<256x128xf32>
    %81 = tpu.matmul %78, %80, %cst_102 {dimension_numbers = #tpu.dot_dimension_numbers<[1], [0], [0], [1], [0, 0, 1, 1], [], []>} : vector<256x4xbf16>, vector<4x128xbf16>, vector<256x128xf32> -> vector<256x128xf32>
    %82 = arith.addf %75, %81 : vector<256x128xf32>
    %c0_103 = arith.constant 0 : index
    %c0_104 = arith.constant 0 : index
    %83 = vector.load %arg3[%c0_103, %c0_104] : memref<1x128xf32, #tpu.memory_space<vmem>>, vector<1x128xf32>
    %84 = vector.broadcast %83 : vector<1x128xf32> to vector<256x128xf32>
    %85 = arith.addf %82, %84 : vector<256x128xf32>
    %cst_105 = arith.constant 0.000000e+00 : f32
    %86 = vector.broadcast %cst_105 : f32 to vector<256x128xf32>
    %87 = arith.maximumf %85, %86 : vector<256x128xf32>
    %88 = vector.shape_cast %87 : vector<256x128xf32> to vector<16x16x128xf32>
    %c1_106 = arith.constant 1 : index
    %c8_107 = arith.constant 8 : index
    %c0_108 = arith.constant 0 : index
    %89 = vector.load %arg8[%c1_106, %c8_107, %c0_108] : memref<18x32x128xf32, #tpu.memory_space<vmem>>, vector<16x16x128xf32>
    tpu.vector_store %arg8[%c1_106, %c8_107, %c0_108], %88 {strides = array<i32>} : memref<18x32x128xf32, #tpu.memory_space<vmem>>, vector<16x16x128xf32>,
    %cst_109 = arith.constant 0.000000e+00 : f32
    %90 = vector.broadcast %cst_109 : f32 to vector<128x128xf32>
    %cst_110 = arith.constant 0.000000e+00 : f32
    %91 = vector.broadcast %cst_110 : f32 to vector<128x128xf32>
    %c0_111 = arith.constant 0 : index
    %c0_112 = arith.constant 0 : index
    %c0_113 = arith.constant 0 : index
    %c0_114 = arith.constant 0 : index
    %92 = vector.load %arg4[%c0_111, %c0_112, %c0_113, %c0_114] : memref<3x3x128x128xbf16, #tpu.memory_space<vmem>>, vector<1x1x128x128xbf16>
    %93 = vector.shape_cast %92 : vector<1x1x128x128xbf16> to vector<128x128xbf16>
    %c0_115 = arith.constant 0 : index
    %c7_116 = arith.constant 7 : index
    %c0_117 = arith.constant 0 : index
    %94 = tpu.strided_load %arg8[%c0_115, %c7_116, %c0_117] {strides = array<i32: 1, 2, 1>} : memref<18x32x128xf32, #tpu.memory_space<vmem>>, vector<16x8x128xf32>
    %c0_118 = arith.constant 0 : index
    %c8_119 = arith.constant 8 : index
    %c0_120 = arith.constant 0 : index
    %95 = tpu.strided_load %arg8[%c0_118, %c8_119, %c0_120] {strides = array<i32: 1, 2, 1>} : memref<18x32x128xf32, #tpu.memory_space<vmem>>, vector<16x8x128xf32>
    %96 = vector.shape_cast %94 : vector<16x8x128xf32> to vector<128x128xf32>
    %97 = arith.truncf %96 : vector<128x128xf32> to vector<128x128xbf16>
    %cst_121 = arith.constant dense<0.000000e+00> : vector<128x128xf32>
    %98 = tpu.matmul %97, %93, %cst_121 {dimension_numbers = #tpu.dot_dimension_numbers<[1], [0], [0], [1], [0, 0, 1, 1], [], []>} : vector<128x128xbf16>, vector<128x128xbf16>, vector<128x128xf32> -> vector<128x128xf32>
    %99 = arith.addf %90, %98 : vector<128x128xf32>
    %100 = vector.shape_cast %95 : vector<16x8x128xf32> to vector<128x128xf32>
    %101 = arith.truncf %100 : vector<128x128xf32> to vector<128x128xbf16>
    %cst_122 = arith.constant dense<0.000000e+00> : vector<128x128xf32>
    %102 = tpu.matmul %101, %93, %cst_122 {dimension_numbers = #tpu.dot_dimension_numbers<[1], [0], [0], [1], [0, 0, 1, 1], [], []>} : vector<128x128xbf16>, vector<128x128xbf16>, vector<128x128xf32> -> vector<128x128xf32>
    %103 = arith.addf %91, %102 : vector<128x128xf32>
    %c0_123 = arith.constant 0 : index
    %c1_124 = arith.constant 1 : index
    %c0_125 = arith.constant 0 : index
    %c0_126 = arith.constant 0 : index
    %104 = vector.load %arg4[%c0_123, %c1_124, %c0_125, %c0_126] : memref<3x3x128x128xbf16, #tpu.memory_space<vmem>>, vector<1x1x128x128xbf16>
    %105 = vector.shape_cast %104 : vector<1x1x128x128xbf16> to vector<128x128xbf16>
    %c0_127 = arith.constant 0 : index
    %c8_128 = arith.constant 8 : index
    %c0_129 = arith.constant 0 : index
    %106 = tpu.strided_load %arg8[%c0_127, %c8_128, %c0_129] {strides = array<i32: 1, 2, 1>} : memref<18x32x128xf32, #tpu.memory_space<vmem>>, vector<16x8x128xf32>
    %c0_130 = arith.constant 0 : index
    %c9_131 = arith.constant 9 : index
    %c0_132 = arith.constant 0 : index
    %107 = tpu.strided_load %arg8[%c0_130, %c9_131, %c0_132] {strides = array<i32: 1, 2, 1>} : memref<18x32x128xf32, #tpu.memory_space<vmem>>, vector<16x8x128xf32>
    %108 = vector.shape_cast %106 : vector<16x8x128xf32> to vector<128x128xf32>
    %109 = arith.truncf %108 : vector<128x128xf32> to vector<128x128xbf16>
    %cst_133 = arith.constant dense<0.000000e+00> : vector<128x128xf32>
    %110 = tpu.matmul %109, %105, %cst_133 {dimension_numbers = #tpu.dot_dimension_numbers<[1], [0], [0], [1], [0, 0, 1, 1], [], []>} : vector<128x128xbf16>, vector<128x128xbf16>, vector<128x128xf32> -> vector<128x128xf32>
    %111 = arith.addf %99, %110 : vector<128x128xf32>
    %112 = vector.shape_cast %107 : vector<16x8x128xf32> to vector<128x128xf32>
    %113 = arith.truncf %112 : vector<128x128xf32> to vector<128x128xbf16>
    %cst_134 = arith.constant dense<0.000000e+00> : vector<128x128xf32>
    %114 = tpu.matmul %113, %105, %cst_134 {dimension_numbers = #tpu.dot_dimension_numbers<[1], [0], [0], [1], [0, 0, 1, 1], [], []>} : vector<128x128xbf16>, vector<128x128xbf16>, vector<128x128xf32> -> vector<128x128xf32>
    %115 = arith.addf %103, %114 : vector<128x128xf32>
    %c0_135 = arith.constant 0 : index
    %c2_136 = arith.constant 2 : index
    %c0_137 = arith.constant 0 : index
    %c0_138 = arith.constant 0 : index
    %116 = vector.load %arg4[%c0_135, %c2_136, %c0_137, %c0_138] : memref<3x3x128x128xbf16, #tpu.memory_space<vmem>>, vector<1x1x128x128xbf16>
    %117 = vector.shape_cast %116 : vector<1x1x128x128xbf16> to vector<128x128xbf16>
    %c0_139 = arith.constant 0 : index
    %c9_140 = arith.constant 9 : index
    %c0_141 = arith.constant 0 : index
    %118 = tpu.strided_load %arg8[%c0_139, %c9_140, %c0_141] {strides = array<i32: 1, 2, 1>} : memref<18x32x128xf32, #tpu.memory_space<vmem>>, vector<16x8x128xf32>
    %c0_142 = arith.constant 0 : index
    %c10 = arith.constant 10 : index
    %c0_143 = arith.constant 0 : index
    %119 = tpu.strided_load %arg8[%c0_142, %c10, %c0_143] {strides = array<i32: 1, 2, 1>} : memref<18x32x128xf32, #tpu.memory_space<vmem>>, vector<16x8x128xf32>
    %120 = vector.shape_cast %118 : vector<16x8x128xf32> to vector<128x128xf32>
    %121 = arith.truncf %120 : vector<128x128xf32> to vector<128x128xbf16>
    %cst_144 = arith.constant dense<0.000000e+00> : vector<128x128xf32>
    %122 = tpu.matmul %121, %117, %cst_144 {dimension_numbers = #tpu.dot_dimension_numbers<[1], [0], [0], [1], [0, 0, 1, 1], [], []>} : vector<128x128xbf16>, vector<128x128xbf16>, vector<128x128xf32> -> vector<128x128xf32>
    %123 = arith.addf %111, %122 : vector<128x128xf32>
    %124 = vector.shape_cast %119 : vector<16x8x128xf32> to vector<128x128xf32>
    %125 = arith.truncf %124 : vector<128x128xf32> to vector<128x128xbf16>
    %cst_145 = arith.constant dense<0.000000e+00> : vector<128x128xf32>
    %126 = tpu.matmul %125, %117, %cst_145 {dimension_numbers = #tpu.dot_dimension_numbers<[1], [0], [0], [1], [0, 0, 1, 1], [], []>} : vector<128x128xbf16>, vector<128x128xbf16>, vector<128x128xf32> -> vector<128x128xf32>
    %127 = arith.addf %115, %126 : vector<128x128xf32>
    %c1_146 = arith.constant 1 : index
    %c0_147 = arith.constant 0 : index
    %c0_148 = arith.constant 0 : index
    %c0_149 = arith.constant 0 : index
    %128 = vector.load %arg4[%c1_146, %c0_147, %c0_148, %c0_149] : memref<3x3x128x128xbf16, #tpu.memory_space<vmem>>, vector<1x1x128x128xbf16>
    %129 = vector.shape_cast %128 : vector<1x1x128x128xbf16> to vector<128x128xbf16>
    %c1_150 = arith.constant 1 : index
    %c7_151 = arith.constant 7 : index
    %c0_152 = arith.constant 0 : index
    %130 = tpu.strided_load %arg8[%c1_150, %c7_151, %c0_152] {strides = array<i32: 1, 2, 1>} : memref<18x32x128xf32, #tpu.memory_space<vmem>>, vector<16x8x128xf32>
    %c1_153 = arith.constant 1 : index
    %c8_154 = arith.constant 8 : index
    %c0_155 = arith.constant 0 : index
    %131 = tpu.strided_load %arg8[%c1_153, %c8_154, %c0_155] {strides = array<i32: 1, 2, 1>} : memref<18x32x128xf32, #tpu.memory_space<vmem>>, vector<16x8x128xf32>
    %132 = vector.shape_cast %130 : vector<16x8x128xf32> to vector<128x128xf32>
    %133 = arith.truncf %132 : vector<128x128xf32> to vector<128x128xbf16>
    %cst_156 = arith.constant dense<0.000000e+00> : vector<128x128xf32>
    %134 = tpu.matmul %133, %129, %cst_156 {dimension_numbers = #tpu.dot_dimension_numbers<[1], [0], [0], [1], [0, 0, 1, 1], [], []>} : vector<128x128xbf16>, vector<128x128xbf16>, vector<128x128xf32> -> vector<128x128xf32>
    %135 = arith.addf %123, %134 : vector<128x128xf32>
    %136 = vector.shape_cast %131 : vector<16x8x128xf32> to vector<128x128xf32>
    %137 = arith.truncf %136 : vector<128x128xf32> to vector<128x128xbf16>
    %cst_157 = arith.constant dense<0.000000e+00> : vector<128x128xf32>
    %138 = tpu.matmul %137, %129, %cst_157 {dimension_numbers = #tpu.dot_dimension_numbers<[1], [0], [0], [1], [0, 0, 1, 1], [], []>} : vector<128x128xbf16>, vector<128x128xbf16>, vector<128x128xf32> -> vector<128x128xf32>
    %139 = arith.addf %127, %138 : vector<128x128xf32>
    %c1_158 = arith.constant 1 : index
    %c1_159 = arith.constant 1 : index
    %c0_160 = arith.constant 0 : index
    %c0_161 = arith.constant 0 : index
    %140 = vector.load %arg4[%c1_158, %c1_159, %c0_160, %c0_161] : memref<3x3x128x128xbf16, #tpu.memory_space<vmem>>, vector<1x1x128x128xbf16>
    %141 = vector.shape_cast %140 : vector<1x1x128x128xbf16> to vector<128x128xbf16>
    %c1_162 = arith.constant 1 : index
    %c8_163 = arith.constant 8 : index
    %c0_164 = arith.constant 0 : index
    %142 = tpu.strided_load %arg8[%c1_162, %c8_163, %c0_164] {strides = array<i32: 1, 2, 1>} : memref<18x32x128xf32, #tpu.memory_space<vmem>>, vector<16x8x128xf32>
    %c1_165 = arith.constant 1 : index
    %c9_166 = arith.constant 9 : index
    %c0_167 = arith.constant 0 : index
    %143 = tpu.strided_load %arg8[%c1_165, %c9_166, %c0_167] {strides = array<i32: 1, 2, 1>} : memref<18x32x128xf32, #tpu.memory_space<vmem>>, vector<16x8x128xf32>
    %144 = vector.shape_cast %142 : vector<16x8x128xf32> to vector<128x128xf32>
    %145 = arith.truncf %144 : vector<128x128xf32> to vector<128x128xbf16>
    %cst_168 = arith.constant dense<0.000000e+00> : vector<128x128xf32>
    %146 = tpu.matmul %145, %141, %cst_168 {dimension_numbers = #tpu.dot_dimension_numbers<[1], [0], [0], [1], [0, 0, 1, 1], [], []>} : vector<128x128xbf16>, vector<128x128xbf16>, vector<128x128xf32> -> vector<128x128xf32>
    %147 = arith.addf %135, %146 : vector<128x128xf32>
    %148 = vector.shape_cast %143 : vector<16x8x128xf32> to vector<128x128xf32>
    %149 = arith.truncf %148 : vector<128x128xf32> to vector<128x128xbf16>
    %cst_169 = arith.constant dense<0.000000e+00> : vector<128x128xf32>
    %150 = tpu.matmul %149, %141, %cst_169 {dimension_numbers = #tpu.dot_dimension_numbers<[1], [0], [0], [1], [0, 0, 1, 1], [], []>} : vector<128x128xbf16>, vector<128x128xbf16>, vector<128x128xf32> -> vector<128x128xf32>
    %151 = arith.addf %139, %150 : vector<128x128xf32>
    %c1_170 = arith.constant 1 : index
    %c2_171 = arith.constant 2 : index
    %c0_172 = arith.constant 0 : index
    %c0_173 = arith.constant 0 : index
    %152 = vector.load %arg4[%c1_170, %c2_171, %c0_172, %c0_173] : memref<3x3x128x128xbf16, #tpu.memory_space<vmem>>, vector<1x1x128x128xbf16>
    %153 = vector.shape_cast %152 : vector<1x1x128x128xbf16> to vector<128x128xbf16>
    %c1_174 = arith.constant 1 : index
    %c9_175 = arith.constant 9 : index
    %c0_176 = arith.constant 0 : index
    %154 = tpu.strided_load %arg8[%c1_174, %c9_175, %c0_176] {strides = array<i32: 1, 2, 1>} : memref<18x32x128xf32, #tpu.memory_space<vmem>>, vector<16x8x128xf32>
    %c1_177 = arith.constant 1 : index
    %c10_178 = arith.constant 10 : index
    %c0_179 = arith.constant 0 : index
    %155 = tpu.strided_load %arg8[%c1_177, %c10_178, %c0_179] {strides = array<i32: 1, 2, 1>} : memref<18x32x128xf32, #tpu.memory_space<vmem>>, vector<16x8x128xf32>
    %156 = vector.shape_cast %154 : vector<16x8x128xf32> to vector<128x128xf32>
    %157 = arith.truncf %156 : vector<128x128xf32> to vector<128x128xbf16>
    %cst_180 = arith.constant dense<0.000000e+00> : vector<128x128xf32>
    %158 = tpu.matmul %157, %153, %cst_180 {dimension_numbers = #tpu.dot_dimension_numbers<[1], [0], [0], [1], [0, 0, 1, 1], [], []>} : vector<128x128xbf16>, vector<128x128xbf16>, vector<128x128xf32> -> vector<128x128xf32>
    %159 = arith.addf %147, %158 : vector<128x128xf32>
    %160 = vector.shape_cast %155 : vector<16x8x128xf32> to vector<128x128xf32>
    %161 = arith.truncf %160 : vector<128x128xf32> to vector<128x128xbf16>
    %cst_181 = arith.constant dense<0.000000e+00> : vector<128x128xf32>
    %162 = tpu.matmul %161, %153, %cst_181 {dimension_numbers = #tpu.dot_dimension_numbers<[1], [0], [0], [1], [0, 0, 1, 1], [], []>} : vector<128x128xbf16>, vector<128x128xbf16>, vector<128x128xf32> -> vector<128x128xf32>
    %163 = arith.addf %151, %162 : vector<128x128xf32>
    %c2_182 = arith.constant 2 : index
    %c0_183 = arith.constant 0 : index
    %c0_184 = arith.constant 0 : index
    %c0_185 = arith.constant 0 : index
    %164 = vector.load %arg4[%c2_182, %c0_183, %c0_184, %c0_185] : memref<3x3x128x128xbf16, #tpu.memory_space<vmem>>, vector<1x1x128x128xbf16>
    %165 = vector.shape_cast %164 : vector<1x1x128x128xbf16> to vector<128x128xbf16>
    %c2_186 = arith.constant 2 : index
    %c7_187 = arith.constant 7 : index
    %c0_188 = arith.constant 0 : index
    %166 = tpu.strided_load %arg8[%c2_186, %c7_187, %c0_188] {strides = array<i32: 1, 2, 1>} : memref<18x32x128xf32, #tpu.memory_space<vmem>>, vector<16x8x128xf32>
    %c2_189 = arith.constant 2 : index
    %c8_190 = arith.constant 8 : index
    %c0_191 = arith.constant 0 : index
    %167 = tpu.strided_load %arg8[%c2_189, %c8_190, %c0_191] {strides = array<i32: 1, 2, 1>} : memref<18x32x128xf32, #tpu.memory_space<vmem>>, vector<16x8x128xf32>
    %168 = vector.shape_cast %166 : vector<16x8x128xf32> to vector<128x128xf32>
    %169 = arith.truncf %168 : vector<128x128xf32> to vector<128x128xbf16>
    %cst_192 = arith.constant dense<0.000000e+00> : vector<128x128xf32>
    %170 = tpu.matmul %169, %165, %cst_192 {dimension_numbers = #tpu.dot_dimension_numbers<[1], [0], [0], [1], [0, 0, 1, 1], [], []>} : vector<128x128xbf16>, vector<128x128xbf16>, vector<128x128xf32> -> vector<128x128xf32>
    %171 = arith.addf %159, %170 : vector<128x128xf32>
    %172 = vector.shape_cast %167 : vector<16x8x128xf32> to vector<128x128xf32>
    %173 = arith.truncf %172 : vector<128x128xf32> to vector<128x128xbf16>
    %cst_193 = arith.constant dense<0.000000e+00> : vector<128x128xf32>
    %174 = tpu.matmul %173, %165, %cst_193 {dimension_numbers = #tpu.dot_dimension_numbers<[1], [0], [0], [1], [0, 0, 1, 1], [], []>} : vector<128x128xbf16>, vector<128x128xbf16>, vector<128x128xf32> -> vector<128x128xf32>
    %175 = arith.addf %163, %174 : vector<128x128xf32>
    %c2_194 = arith.constant 2 : index
    %c1_195 = arith.constant 1 : index
    %c0_196 = arith.constant 0 : index
    %c0_197 = arith.constant 0 : index
    %176 = vector.load %arg4[%c2_194, %c1_195, %c0_196, %c0_197] : memref<3x3x128x128xbf16, #tpu.memory_space<vmem>>, vector<1x1x128x128xbf16>
    %177 = vector.shape_cast %176 : vector<1x1x128x128xbf16> to vector<128x128xbf16>
    %c2_198 = arith.constant 2 : index
    %c8_199 = arith.constant 8 : index
    %c0_200 = arith.constant 0 : index
    %178 = tpu.strided_load %arg8[%c2_198, %c8_199, %c0_200] {strides = array<i32: 1, 2, 1>} : memref<18x32x128xf32, #tpu.memory_space<vmem>>, vector<16x8x128xf32>
    %c2_201 = arith.constant 2 : index
    %c9_202 = arith.constant 9 : index
    %c0_203 = arith.constant 0 : index
    %179 = tpu.strided_load %arg8[%c2_201, %c9_202, %c0_203] {strides = array<i32: 1, 2, 1>} : memref<18x32x128xf32, #tpu.memory_space<vmem>>, vector<16x8x128xf32>
    %180 = vector.shape_cast %178 : vector<16x8x128xf32> to vector<128x128xf32>
    %181 = arith.truncf %180 : vector<128x128xf32> to vector<128x128xbf16>
    %cst_204 = arith.constant dense<0.000000e+00> : vector<128x128xf32>
    %182 = tpu.matmul %181, %177, %cst_204 {dimension_numbers = #tpu.dot_dimension_numbers<[1], [0], [0], [1], [0, 0, 1, 1], [], []>} : vector<128x128xbf16>, vector<128x128xbf16>, vector<128x128xf32> -> vector<128x128xf32>
    %183 = arith.addf %171, %182 : vector<128x128xf32>
    %184 = vector.shape_cast %179 : vector<16x8x128xf32> to vector<128x128xf32>
    %185 = arith.truncf %184 : vector<128x128xf32> to vector<128x128xbf16>
    %cst_205 = arith.constant dense<0.000000e+00> : vector<128x128xf32>
    %186 = tpu.matmul %185, %177, %cst_205 {dimension_numbers = #tpu.dot_dimension_numbers<[1], [0], [0], [1], [0, 0, 1, 1], [], []>} : vector<128x128xbf16>, vector<128x128xbf16>, vector<128x128xf32> -> vector<128x128xf32>
    %187 = arith.addf %175, %186 : vector<128x128xf32>
    %c2_206 = arith.constant 2 : index
    %c2_207 = arith.constant 2 : index
    %c0_208 = arith.constant 0 : index
    %c0_209 = arith.constant 0 : index
    %188 = vector.load %arg4[%c2_206, %c2_207, %c0_208, %c0_209] : memref<3x3x128x128xbf16, #tpu.memory_space<vmem>>, vector<1x1x128x128xbf16>
    %189 = vector.shape_cast %188 : vector<1x1x128x128xbf16> to vector<128x128xbf16>
    %c2_210 = arith.constant 2 : index
    %c9_211 = arith.constant 9 : index
    %c0_212 = arith.constant 0 : index
    %190 = tpu.strided_load %arg8[%c2_210, %c9_211, %c0_212] {strides = array<i32: 1, 2, 1>} : memref<18x32x128xf32, #tpu.memory_space<vmem>>, vector<16x8x128xf32>
    %c2_213 = arith.constant 2 : index
    %c10_214 = arith.constant 10 : index
    %c0_215 = arith.constant 0 : index
    %191 = tpu.strided_load %arg8[%c2_213, %c10_214, %c0_215] {strides = array<i32: 1, 2, 1>} : memref<18x32x128xf32, #tpu.memory_space<vmem>>, vector<16x8x128xf32>
    %192 = vector.shape_cast %190 : vector<16x8x128xf32> to vector<128x128xf32>
    %193 = arith.truncf %192 : vector<128x128xf32> to vector<128x128xbf16>
    %cst_216 = arith.constant dense<0.000000e+00> : vector<128x128xf32>
    %194 = tpu.matmul %193, %189, %cst_216 {dimension_numbers = #tpu.dot_dimension_numbers<[1], [0], [0], [1], [0, 0, 1, 1], [], []>} : vector<128x128xbf16>, vector<128x128xbf16>, vector<128x128xf32> -> vector<128x128xf32>
    %195 = arith.addf %183, %194 : vector<128x128xf32>
    %196 = vector.shape_cast %191 : vector<16x8x128xf32> to vector<128x128xf32>
    %197 = arith.truncf %196 : vector<128x128xf32> to vector<128x128xbf16>
    %cst_217 = arith.constant dense<0.000000e+00> : vector<128x128xf32>
    %198 = tpu.matmul %197, %189, %cst_217 {dimension_numbers = #tpu.dot_dimension_numbers<[1], [0], [0], [1], [0, 0, 1, 1], [], []>} : vector<128x128xbf16>, vector<128x128xbf16>, vector<128x128xf32> -> vector<128x128xf32>
    %199 = arith.addf %187, %198 : vector<128x128xf32>
    %c0_218 = arith.constant 0 : index
    %c0_219 = arith.constant 0 : index
    %200 = vector.load %arg5[%c0_218, %c0_219] : memref<1x128xf32, #tpu.memory_space<vmem>>, vector<1x128xf32>
    %201 = vector.broadcast %200 : vector<1x128xf32> to vector<128x128xf32>
    %202 = arith.addf %195, %201 : vector<128x128xf32>
    %cst_220 = arith.constant 0.000000e+00 : f32
    %203 = vector.broadcast %cst_220 : f32 to vector<128x128xf32>
    %204 = arith.maximumf %202, %203 : vector<128x128xf32>
    %205 = vector.broadcast %200 : vector<1x128xf32> to vector<128x128xf32>
    %206 = arith.addf %199, %205 : vector<128x128xf32>
    %cst_221 = arith.constant 0.000000e+00 : f32
    %207 = vector.broadcast %cst_221 : f32 to vector<128x128xf32>
    %208 = arith.maximumf %206, %207 : vector<128x128xf32>
    %209 = arith.addf %204, %208 : vector<128x128xf32>
    %210 = vector.shape_cast %209 : vector<128x128xf32> to vector<8x16x128xf32>
    %211 = vector.extract_strided_slice %210 {offsets = [0, 0, 0], sizes = [8, 8, 128], strides = [1, 1, 1]} : vector<8x16x128xf32> to vector<8x8x128xf32>
    %212 = vector.extract_strided_slice %210 {offsets = [0, 8, 0], sizes = [8, 8, 128], strides = [1, 1, 1]} : vector<8x16x128xf32> to vector<8x8x128xf32>
    %213 = arith.addf %211, %212 : vector<8x8x128xf32>
    %cst_222 = arith.constant 2.500000e-01 : f32
    %214 = vector.broadcast %cst_222 : f32 to vector<8x8x128xf32>
    %215 = arith.mulf %213, %214 : vector<8x8x128xf32>
    %c0_223 = arith.constant 0 : index
    %c0_224 = arith.constant 0 : index
    %c0_225 = arith.constant 0 : index
    %c0_226 = arith.constant 0 : index
    %216 = vector.load %arg6[%c0_223, %c0_224, %c0_225, %c0_226] : memref<1x8x8x128xf32, #tpu.memory_space<vmem>>, vector<1x8x8x128xf32>
    %217 = vector.shape_cast %216 : vector<1x8x8x128xf32> to vector<8x8x128xf32>
    %218 = vector.shape_cast %215 : vector<8x8x128xf32> to vector<1x8x8x128xf32>
    tpu.vector_store %arg6[%c0_223, %c0_224, %c0_225, %c0_226], %218 {strides = array<i32>} : memref<1x8x8x128xf32, #tpu.memory_space<vmem>>, vector<1x8x8x128xf32>,
    return
  }
  func.func @transform_0(%arg0: i32) -> (i32, i32, i32, i32) {
    %c0_i32 = arith.constant 0 : i32
    %c0_i32_0 = arith.constant 0 : i32
    %c0_i32_1 = arith.constant 0 : i32
    %c0_i32_2 = arith.constant 0 : i32
    return %arg0, %c0_i32, %c0_i32_0, %c0_i32_1 : i32, i32, i32, i32
  }
  func.func @transform_1(%arg0: i32) -> (i32, i32, i32, i32) {
    %c0_i32 = arith.constant 0 : i32
    %c0_i32_0 = arith.constant 0 : i32
    %c0_i32_1 = arith.constant 0 : i32
    %c0_i32_2 = arith.constant 0 : i32
    %c0_i32_3 = arith.constant 0 : i32
    return %c0_i32, %c0_i32_0, %c0_i32_1, %c0_i32_2 : i32, i32, i32, i32
  }
  func.func @transform_2(%arg0: i32) -> (i32, i32) {
    %c0_i32 = arith.constant 0 : i32
    %c0_i32_0 = arith.constant 0 : i32
    %c0_i32_1 = arith.constant 0 : i32
    return %c0_i32, %c0_i32_0 : i32, i32
  }
  func.func @transform_3(%arg0: i32) -> (i32, i32, i32, i32) {
    %c0_i32 = arith.constant 0 : i32
    %c0_i32_0 = arith.constant 0 : i32
    %c0_i32_1 = arith.constant 0 : i32
    %c0_i32_2 = arith.constant 0 : i32
    %c0_i32_3 = arith.constant 0 : i32
    return %c0_i32, %c0_i32_0, %c0_i32_1, %c0_i32_2 : i32, i32, i32, i32
  }
  func.func @transform_4(%arg0: i32) -> (i32, i32) {
    %c0_i32 = arith.constant 0 : i32
    %c0_i32_0 = arith.constant 0 : i32
    %c0_i32_1 = arith.constant 0 : i32
    return %c0_i32, %c0_i32_0 : i32, i32
  }
  func.func @transform_5(%arg0: i32) -> (i32, i32, i32, i32) {
    %c0_i32 = arith.constant 0 : i32
    %c0_i32_0 = arith.constant 0 : i32
    %c0_i32_1 = arith.constant 0 : i32
    %c0_i32_2 = arith.constant 0 : i32
    return %arg0, %c0_i32, %c0_i32_0, %c0_i32_1 : i32, i32, i32, i32
  }
}

</mosaic_0001>

<llo_original>
// kernel: tpu_custom_call.1
$region0: #{tpu_custom_call.1}
  #allocation0 [shape = 'u32[]', space=smem, size = 0x4, offset = 0x4, fixed_abs, tag = 'smem constant byte address 0x4 - core index']
  #allocation1 [shape = 'u32[144,128]{1,0:T(1,128)}', space=vmem, size = 0x12000, scoped, tag = 'internal scratch']
  #allocation2 [shape = 'f32[18,32,4]{2,1,0:T(8,128)}', space=vmem, size = 0x48000, scoped, tag = 'scratch operand']
  #allocation3 [shape = 'f32[18,32,128]{2,1,0:T(8,128)}', space=vmem, size = 0x48000, scoped, tag = 'scratch operand']
  %s0 = inlined_call_operand.vmem [shape: f32[2,16,16,4], index: 0, kind: input, shape index: {}]
  %s1 = inlined_call_operand.vmem [shape: bf16[3,3,4,128], index: 1, kind: input, shape index: {}]
  %s2 = inlined_call_operand.vmem [shape: f32[1,128], index: 2, kind: input, shape index: {}]
  %s3 = inlined_call_operand.vmem [shape: bf16[3,3,128,128], index: 3, kind: input, shape index: {}]
  %s4 = inlined_call_operand.vmem [shape: f32[1,128], index: 4, kind: input, shape index: {}]
  %s5 = inlined_call_operand.hbm [shape: f32[2,8,8,128], index: 5, kind: output, shape index: {}]
  %s6 = sld [smem:[#allocation0]]
  $region53: #{tpu_custom_call.1} parent=0
    _
  %s8 = ssub.s32 1, %s6
  %s9 = scalar_select 0, %s8, %s6
  $region1: #{tpu_custom_call.1} parent=0
    #allocation4 [shape = 'u8[65536]{0}', space=vmem, size = 0x10000, scoped, tag = 'output window, operand 0']
    #allocation5 [shape = 's32[2]{0}', space=sflag, size = 0x8, scoped, tag = 'scoped memory for tpu_custom_call.1']
    %10 = vsyncpa [#allocation5], 0
    %s11 = scalar_lea.sflag [#allocation5], 1
    %12 = vsyncpa %s11, 0
    loop: start=0, step=1, limit=4
    $region2: #{tpu_custom_call.1} parent=1 // loop_pre_header
      _
    $region3: #{tpu_custom_call.1} parent=1 // loop_header
      %s14 = sphi 0, %s18
      %p15 = scmp.ge.s32.totalorder %s14, 4
      %s24 = sphi 0, %s26
      %s27 = sphi 0, %s24
      %s28 = sphi 0, %s27
      %s44 = sphi 0, %s28
      %s48 = sphi 0, %s48
      %s50 = sphi 0, %s48
      %s51 = sphi 0, %s50
      %s65 = sphi 0, %s51
      %s69 = sphi 0, %s69
      %s71 = sphi 0, %s69
      %s72 = sphi 0, %s71
      %s86 = sphi 0, %s72
      %s90 = sphi 0, %s90
      %s92 = sphi 0, %s90
      %s93 = sphi 0, %s92
      %s107 = sphi 0, %s93
      %s111 = sphi 0, %s111
      %s113 = sphi 0, %s111
      %s114 = sphi 0, %s113
      %s128 = sphi 0, %s114
      %s134 = sphi 0, %s136
      %s137 = sphi 0, %s134
      %s138 = sphi 0, %s137
      %s154 = sphi 0, %s138
    $region4: #{tpu_custom_call.1} parent=1 // loop_header_branch
      %17 = sbr.rel (%p15) target = $region8
    $region5: #{tpu_custom_call.1} parent=1 // loop_body
      %s19 = ssub.s32 %s14, 1
      %s20 = ssub.s32 %s14, 2
      %s21 = sadd.s32 %s14, 1
      %s22 = ssub.s32 %s14, %s21
      %p23 = scmp.eq.s32.totalorder %s22, 0
      %s25 = sadd.s32 %s24, 1
      %s26 = scalar_select %p23, %s24, %s25
      %p29 = pneg %p23
      %p30 = scmp.eq.s32.totalorder %s14, 1
      %p31 = por %p29, %p30
      %p32 = scmp.ne.s32.totalorder %s24, %s27
      %p33 = scmp.eq.s32.totalorder %s14, 0
      %p34 = por %p32, %p33
      %p35 = scmp.ne.s32.totalorder %s24, %s27
      %p36 = scmp.eq.s32.totalorder %s19, 1
      %p37 = por %p35, %p36
      %p38 = scmp.ne.s32.totalorder %s27, %s28
      %p39 = scmp.eq.s32.totalorder %s19, 0
      %p40 = por %p38, %p39
      %p41 = scmp.ne.s32.totalorder %s27, %s28
      %p42 = scmp.eq.s32.totalorder %s20, 1
      %p43 = por %p41, %p42
      %p45 = scmp.ne.s32.totalorder %s28, %s44
      %p46 = scmp.eq.s32.totalorder %s20, 0
      %p47 = por %p45, %p46
      %s49 = sadd.s32 %s48, 1
      %p52 = scmp.eq.s32.totalorder %s14, 1
      %p53 = scmp.ne.s32.totalorder %s48, %s50
      %p54 = scmp.eq.s32.totalorder %s14, 0
      %p55 = por %p53, %p54
      %p56 = scmp.ne.s32.totalorder %s48, %s50
      %p57 = scmp.eq.s32.totalorder %s19, 1
      %p58 = por %p56, %p57
      %p59 = scmp.ne.s32.totalorder %s50, %s51
      %p60 = scmp.eq.s32.totalorder %s19, 0
      %p61 = por %p59, %p60
      %p62 = scmp.ne.s32.totalorder %s50, %s51
      %p63 = scmp.eq.s32.totalorder %s20, 1
      %p64 = por %p62, %p63
      %p66 = scmp.ne.s32.totalorder %s51, %s65
      %p67 = scmp.eq.s32.totalorder %s20, 0
      %p68 = por %p66, %p67
      %s70 = sadd.s32 %s69, 1
      %p73 = scmp.eq.s32.totalorder %s14, 1
      %p74 = scmp.ne.s32.totalorder %s69, %s71
      %p75 = scmp.eq.s32.totalorder %s14, 0
      %p76 = por %p74, %p75
      %p77 = scmp.ne.s32.totalorder %s69, %s71
      %p78 = scmp.eq.s32.totalorder %s19, 1
      %p79 = por %p77, %p78
      %p80 = scmp.ne.s32.totalorder %s71, %s72
      %p81 = scmp.eq.s32.totalorder %s19, 0
      %p82 = por %p80, %p81
      %p83 = scmp.ne.s32.totalorder %s71, %s72
      %p84 = scmp.eq.s32.totalorder %s20, 1
      %p85 = por %p83, %p84
      %p87 = scmp.ne.s32.totalorder %s72, %s86
      %p88 = scmp.eq.s32.totalorder %s20, 0
      %p89 = por %p87, %p88
      %s91 = sadd.s32 %s90, 1
      %p94 = scmp.eq.s32.totalorder %s14, 1
      %p95 = scmp.ne.s32.totalorder %s90, %s92
      %p96 = scmp.eq.s32.totalorder %s14, 0
      %p97 = por %p95, %p96
      %p98 = scmp.ne.s32.totalorder %s90, %s92
      %p99 = scmp.eq.s32.totalorder %s19, 1
      %p100 = por %p98, %p99
      %p101 = scmp.ne.s32.totalorder %s92, %s93
      %p102 = scmp.eq.s32.totalorder %s19, 0
      %p103 = por %p101, %p102
      %p104 = scmp.ne.s32.totalorder %s92, %s93
      %p105 = scmp.eq.s32.totalorder %s20, 1
      %p106 = por %p104, %p105
      %p108 = scmp.ne.s32.totalorder %s93, %s107
      %p109 = scmp.eq.s32.totalorder %s20, 0
      %p110 = por %p108, %p109
      %s112 = sadd.s32 %s111, 1
      %p115 = scmp.eq.s32.totalorder %s14, 1
      %p116 = scmp.ne.s32.totalorder %s111, %s113
      %p117 = scmp.eq.s32.totalorder %s14, 0
      %p118 = por %p116, %p117
      %p119 = scmp.ne.s32.totalorder %s111, %s113
      %p120 = scmp.eq.s32.totalorder %s19, 1
      %p121 = por %p119, %p120
      %p122 = scmp.ne.s32.totalorder %s113, %s114
      %p123 = scmp.eq.s32.totalorder %s19, 0
      %p124 = por %p122, %p123
      %p125 = scmp.ne.s32.totalorder %s113, %s114
      %p126 = scmp.eq.s32.totalorder %s20, 1
      %p127 = por %p125, %p126
      %p129 = scmp.ne.s32.totalorder %s114, %s128
      %p130 = scmp.eq.s32.totalorder %s20, 0
      %p131 = por %p129, %p130
      %s132 = ssub.s32 %s14, %s21
      %p133 = scmp.eq.s32.totalorder %s132, 0
      %s135 = sadd.s32 %s134, 1
      %s136 = scalar_select %p133, %s134, %s135
      %p139 = pneg %p133
      %p140 = scmp.eq.s32.totalorder %s14, 1
      %p141 = por %p139, %p140
      %p142 = scmp.ne.s32.totalorder %s134, %s137
      %p143 = scmp.eq.s32.totalorder %s14, 0
      %p144 = por %p142, %p143
      %p145 = scmp.ne.s32.totalorder %s134, %s137
      %p146 = scmp.eq.s32.totalorder %s19, 1
      %p147 = por %p145, %p146
      %p148 = scmp.ne.s32.totalorder %s137, %s138
      %p149 = scmp.eq.s32.totalorder %s19, 0
      %p150 = por %p148, %p149
      %p151 = scmp.ne.s32.totalorder %s137, %s138
      %p152 = scmp.eq.s32.totalorder %s20, 1
      %p153 = por %p151, %p152
      %p155 = scmp.ne.s32.totalorder %s138, %s154
      %p156 = scmp.eq.s32.totalorder %s20, 0
      %p157 = por %p155, %p156
      %p158 = scmp.le.s32.totalorder 1, %s14
      %p159 = scmp.lt.s32.totalorder %s14, 3
      %p160 = pnand %p158, %p159
      %p161 = pneg %p160
      // Predicated region
      $region9: #{tpu_custom_call.1} parent=5 // pred_check
        _
      $region10: #{tpu_custom_call.1} parent=5 // pred_check_branch
        %163 = sbr.rel (%p160) target = $region12
      $region11: #{tpu_custom_call.1} parent=5 // pred_region
        %s164 = ssub.s32 %s14, 1
        // Predicated region
        $region13: #{tpu_custom_call.1} parent=11 // pred_check
          %p165 = pneg %p61
        $region14: #{tpu_custom_call.1} parent=11 // pred_check_branch
          %167 = sbr.rel (%p165) target = $region16
        $region15: #{tpu_custom_call.1} parent=11 // pred_region
          _
        $region16: #{tpu_custom_call.1} parent=11 // pred_fallthru
          _
        // Predicated region
        $region17: #{tpu_custom_call.1} parent=11 // pred_check
          %p168 = pneg %p82
        $region18: #{tpu_custom_call.1} parent=11 // pred_check_branch
          %170 = sbr.rel (%p168) target = $region20
        $region19: #{tpu_custom_call.1} parent=11 // pred_region
          _
        $region20: #{tpu_custom_call.1} parent=11 // pred_fallthru
          _
        // Predicated region
        $region21: #{tpu_custom_call.1} parent=11 // pred_check
          %p171 = pneg %p103
        $region22: #{tpu_custom_call.1} parent=11 // pred_check_branch
          %173 = sbr.rel (%p171) target = $region24
        $region23: #{tpu_custom_call.1} parent=11 // pred_region
          _
        $region24: #{tpu_custom_call.1} parent=11 // pred_fallthru
          _
        // Predicated region
        $region25: #{tpu_custom_call.1} parent=11 // pred_check
          %p174 = pneg %p124
        $region26: #{tpu_custom_call.1} parent=11 // pred_check_branch
          %176 = sbr.rel (%p174) target = $region28
        $region27: #{tpu_custom_call.1} parent=11 // pred_region
          _
        $region28: #{tpu_custom_call.1} parent=11 // pred_fallthru
          _
      $region12: #{tpu_custom_call.1} parent=5 // pred_fallthru
        _
      %p177 = scmp.lt.s32.totalorder %s14, 2
      // Predicated region
      $region29: #{tpu_custom_call.1} parent=5 // pred_check
        %p178 = pneg %p177
      $region30: #{tpu_custom_call.1} parent=5 // pred_check_branch
        %180 = sbr.rel (%p178) target = $region32
      $region31: #{tpu_custom_call.1} parent=5 // pred_region
        // Predicated region
        $region33: #{tpu_custom_call.1} parent=31 // pred_check
          %p181 = pneg %p34
        $region34: #{tpu_custom_call.1} parent=31 // pred_check_branch
          %183 = sbr.rel (%p181) target = $region36
        $region35: #{tpu_custom_call.1} parent=31 // pred_region
          %p184 = scmp.lt.s32.totalorder %s14, 1
          %s185 = scalar_select %p184, %s14, 1
          %s186 = smul.addr %s185, 32
          %s187 = smul.addr %s186, 8
          %s188 = scalar_lea.vmem %s0, %s187
        $region36: #{tpu_custom_call.1} parent=31 // pred_fallthru
          _
      $region32: #{tpu_custom_call.1} parent=5 // pred_fallthru
        _
      %p189 = scmp.le.s32.totalorder 1, %s14
      %p190 = scmp.lt.s32.totalorder %s14, 3
      %p191 = pnand %p189, %p190
      %p192 = pneg %p191
      // Predicated region
      $region37: #{tpu_custom_call.1} parent=5 // pred_check
        _
      $region38: #{tpu_custom_call.1} parent=5 // pred_check_branch
        %194 = sbr.rel (%p191) target = $region40
      $region39: #{tpu_custom_call.1} parent=5 // pred_region
        %s195 = ssub.s32 %s14, 1
        %p196 = scmp.lt.s32.totalorder %s19, 1
        %s197 = scalar_select %p196, %s19, 1
        %s198 = smul.addr %s197, 32
        %s199 = smul.addr %s198, 8
        %s200 = scalar_lea.vmem %s0, %s199
        %p201 = pneg %p40
        %p202 = pneg %p37
        %p203 = pneg %p61
        %p204 = pneg %p58
        %p205 = pneg %p82
        %p206 = pneg %p79
        %p207 = pneg %p103
        %p208 = pneg %p100
        %p209 = pneg %p124
        %p210 = pneg %p121
        %p211 = pneg %p150
        %p212 = pneg %p147
        %s213 = sand.u32 %s137, 1
        %s214 = scalar_lea.sflag [#allocation5], %s213
        %s215 = sand.u32 %s137, 1
        %s216 = smul.addr %s215, 64
        %s217 = scalar_lea.vmem [#allocation4], %s216
        %p218 = scmp.lt.s32.totalorder %s19, 1
        %s219 = scalar_select %p218, %s19, 1
        %s220 = smul.addr %s219, 32
        %s221 = smul.addr %s220, 8
        %s222 = scalar_lea.vmem %s0, %s221
        %vm224 = vcmask 31744
        %225 = vst.msk [vmem:[#allocation2] sm:$0xff] %vm224, 0.0
        %226 = vst.msk [vmem:[#allocation2 + $0x8] sm:$0xff] %vm224, 0.0
        %227 = vst.msk [vmem:[#allocation2 + $0x10] sm:$0xff] %vm224, 0.0
        %228 = vst.msk [vmem:[#allocation2 + $0x18] sm:$0xff] %vm224, 0.0
        %s229 = scalar_lea.vmem [#allocation2], 544
        %230 = vst.msk [vmem:[%s229] sm:$0xff] %vm224, 0.0
        %231 = vst.msk [vmem:[%s229 + $0x8] sm:$0xff] %vm224, 0.0
        %232 = vst.msk [vmem:[%s229 + $0x10] sm:$0xff] %vm224, 0.0
        %233 = vst.msk [vmem:[%s229 + $0x18] sm:$0xff] %vm224, 0.0
        %s234 = scalar_lea.vmem [#allocation2], 32
        %vm235 = vcmask 24576
        %236 = vst.msk [vmem:[%s234 + $0x7] sm:$0x1] %vm235, 0.0
        %237 = vst.msk [vmem:[%s234 + $0x27] sm:$0x1] %vm235, 0.0
        %238 = vst.msk [vmem:[%s234 + $0x47] sm:$0x1] %vm235, 0.0
        %239 = vst.msk [vmem:[%s234 + $0x67] sm:$0x1] %vm235, 0.0
        %240 = vst.msk [vmem:[%s234 + $0x87] sm:$0x1] %vm235, 0.0
        %241 = vst.msk [vmem:[%s234 + $0xa7] sm:$0x1] %vm235, 0.0
        %242 = vst.msk [vmem:[%s234 + $0xc7] sm:$0x1] %vm235, 0.0
        %243 = vst.msk [vmem:[%s234 + $0xe7] sm:$0x1] %vm235, 0.0
        %244 = vst.msk [vmem:[%s234 + $0x107] sm:$0x1] %vm235, 0.0
        %245 = vst.msk [vmem:[%s234 + $0x127] sm:$0x1] %vm235, 0.0
        %246 = vst.msk [vmem:[%s234 + $0x147] sm:$0x1] %vm235, 0.0
        %247 = vst.msk [vmem:[%s234 + $0x167] sm:$0x1] %vm235, 0.0
        %248 = vst.msk [vmem:[%s234 + $0x187] sm:$0x1] %vm235, 0.0
        %249 = vst.msk [vmem:[%s234 + $0x1a7] sm:$0x1] %vm235, 0.0
        %250 = vst.msk [vmem:[%s234 + $0x1c7] sm:$0x1] %vm235, 0.0
        %251 = vst.msk [vmem:[%s234 + $0x1e7] sm:$0x1] %vm235, 0.0
        %252 = vst.msk [vmem:[%s234 + $0x18] sm:$0x1] %vm235, 0.0
        %253 = vst.msk [vmem:[%s234 + $0x38] sm:$0x1] %vm235, 0.0
        %254 = vst.msk [vmem:[%s234 + $0x58] sm:$0x1] %vm235, 0.0
        %255 = vst.msk [vmem:[%s234 + $0x78] sm:$0x1] %vm235, 0.0
        %256 = vst.msk [vmem:[%s234 + $0x98] sm:$0x1] %vm235, 0.0
        %257 = vst.msk [vmem:[%s234 + $0xb8] sm:$0x1] %vm235, 0.0
        %258 = vst.msk [vmem:[%s234 + $0xd8] sm:$0x1] %vm235, 0.0
        %259 = vst.msk [vmem:[%s234 + $0xf8] sm:$0x1] %vm235, 0.0
        %260 = vst.msk [vmem:[%s234 + $0x118] sm:$0x1] %vm235, 0.0
        %261 = vst.msk [vmem:[%s234 + $0x138] sm:$0x1] %vm235, 0.0
        %262 = vst.msk [vmem:[%s234 + $0x158] sm:$0x1] %vm235, 0.0
        %263 = vst.msk [vmem:[%s234 + $0x178] sm:$0x1] %vm235, 0.0
        %264 = vst.msk [vmem:[%s234 + $0x198] sm:$0x1] %vm235, 0.0
        %265 = vst.msk [vmem:[%s234 + $0x1b8] sm:$0x1] %vm235, 0.0
        %266 = vst.msk [vmem:[%s234 + $0x1d8] sm:$0x1] %vm235, 0.0
        %267 = vst.msk [vmem:[%s234 + $0x1f8] sm:$0x1] %vm235, 0.0
        %268 = vst [vmem:[#allocation3] sm:$0xff] 0.0
        %269 = vst [vmem:[#allocation3 + $0x8] sm:$0xff] 0.0
        %270 = vst [vmem:[#allocation3 + $0x10] sm:$0xff] 0.0
        %271 = vst [vmem:[#allocation3 + $0x18] sm:$0xff] 0.0
        %s272 = scalar_lea.vmem [#allocation3], 544
        %273 = vst [vmem:[%s272] sm:$0xff] 0.0
        %274 = vst [vmem:[%s272 + $0x8] sm:$0xff] 0.0
        %275 = vst [vmem:[%s272 + $0x10] sm:$0xff] 0.0
        %276 = vst [vmem:[%s272 + $0x18] sm:$0xff] 0.0
        %s277 = scalar_lea.vmem [#allocation3], 32
        %278 = vst [vmem:[%s277 + $0x7] sm:$0x1] 0.0
        %279 = vst [vmem:[%s277 + $0x27] sm:$0x1] 0.0
        %280 = vst [vmem:[%s277 + $0x47] sm:$0x1] 0.0
        %281 = vst [vmem:[%s277 + $0x67] sm:$0x1] 0.0
        %282 = vst [vmem:[%s277 + $0x87] sm:$0x1] 0.0
        %283 = vst [vmem:[%s277 + $0xa7] sm:$0x1] 0.0
        %284 = vst [vmem:[%s277 + $0xc7] sm:$0x1] 0.0
        %285 = vst [vmem:[%s277 + $0xe7] sm:$0x1] 0.0
        %286 = vst [vmem:[%s277 + $0x107] sm:$0x1] 0.0
        %287 = vst [vmem:[%s277 + $0x127] sm:$0x1] 0.0
        %288 = vst [vmem:[%s277 + $0x147] sm:$0x1] 0.0
        %289 = vst [vmem:[%s277 + $0x167] sm:$0x1] 0.0
        %290 = vst [vmem:[%s277 + $0x187] sm:$0x1] 0.0
        %291 = vst [vmem:[%s277 + $0x1a7] sm:$0x1] 0.0
        %292 = vst [vmem:[%s277 + $0x1c7] sm:$0x1] 0.0
        %293 = vst [vmem:[%s277 + $0x1e7] sm:$0x1] 0.0
        %294 = vst [vmem:[%s277 + $0x18] sm:$0x1] 0.0
        %295 = vst [vmem:[%s277 + $0x38] sm:$0x1] 0.0
        %296 = vst [vmem:[%s277 + $0x58] sm:$0x1] 0.0
        %297 = vst [vmem:[%s277 + $0x78] sm:$0x1] 0.0
        %298 = vst [vmem:[%s277 + $0x98] sm:$0x1] 0.0
        %299 = vst [vmem:[%s277 + $0xb8] sm:$0x1] 0.0
        %300 = vst [vmem:[%s277 + $0xd8] sm:$0x1] 0.0
        %301 = vst [vmem:[%s277 + $0xf8] sm:$0x1] 0.0
        %302 = vst [vmem:[%s277 + $0x118] sm:$0x1] 0.0
        %303 = vst [vmem:[%s277 + $0x138] sm:$0x1] 0.0
        %304 = vst [vmem:[%s277 + $0x158] sm:$0x1] 0.0
        %305 = vst [vmem:[%s277 + $0x178] sm:$0x1] 0.0
        %306 = vst [vmem:[%s277 + $0x198] sm:$0x1] 0.0
        %307 = vst [vmem:[%s277 + $0x1b8] sm:$0x1] 0.0
        %308 = vst [vmem:[%s277 + $0x1d8] sm:$0x1] 0.0
        %309 = vst [vmem:[%s277 + $0x1f8] sm:$0x1] 0.0
        %v310 = vld [vmem:[%s222] sm:$0xff]
        %v311 = vld [vmem:[%s222 + $0x8] sm:$0xff]
        %v312 = vld [vmem:[%s222 + $0x10] sm:$0xff]
        %v313 = vld [vmem:[%s222 + $0x18] sm:$0xff]
        %v314 = vld [vmem:[%s222 + $0x20] sm:$0xff]
        %v315 = vld [vmem:[%s222 + $0x28] sm:$0xff]
        %v316 = vld [vmem:[%s222 + $0x30] sm:$0xff]
        %v317 = vld [vmem:[%s222 + $0x38] sm:$0xff]
        %v318 = vld [vmem:[%s222 + $0x40] sm:$0xff]
        %v319 = vld [vmem:[%s222 + $0x48] sm:$0xff]
        %v320 = vld [vmem:[%s222 + $0x50] sm:$0xff]
        %v321 = vld [vmem:[%s222 + $0x58] sm:$0xff]
        %v322 = vld [vmem:[%s222 + $0x60] sm:$0xff]
        %v323 = vld [vmem:[%s222 + $0x68] sm:$0xff]
        %v324 = vld [vmem:[%s222 + $0x70] sm:$0xff]
        %v325 = vld [vmem:[%s222 + $0x78] sm:$0xff]
        %v326 = vld [vmem:[%s222 + $0x80] sm:$0xff]
        %v327 = vld [vmem:[%s222 + $0x88] sm:$0xff]
        %v328 = vld [vmem:[%s222 + $0x90] sm:$0xff]
        %v329 = vld [vmem:[%s222 + $0x98] sm:$0xff]
        %v330 = vld [vmem:[%s222 + $0xa0] sm:$0xff]
        %v331 = vld [vmem:[%s222 + $0xa8] sm:$0xff]
        %v332 = vld [vmem:[%s222 + $0xb0] sm:$0xff]
        %v333 = vld [vmem:[%s222 + $0xb8] sm:$0xff]
        %v334 = vld [vmem:[%s222 + $0xc0] sm:$0xff]
        %v335 = vld [vmem:[%s222 + $0xc8] sm:$0xff]
        %v336 = vld [vmem:[%s222 + $0xd0] sm:$0xff]
        %v337 = vld [vmem:[%s222 + $0xd8] sm:$0xff]
        %v338 = vld [vmem:[%s222 + $0xe0] sm:$0xff]
        %v339 = vld [vmem:[%s222 + $0xe8] sm:$0xff]
        %v340 = vld [vmem:[%s222 + $0xf0] sm:$0xff]
        %v341 = vld [vmem:[%s222 + $0xf8] sm:$0xff]
        %342 = vst.msk [vmem:[%s234 + $0x8] sm:$0xff] %vm224, %v310
        %343 = vst.msk [vmem:[%s234 + $0x10] sm:$0xff] %vm224, %v311
        %344 = vst.msk [vmem:[%s234 + $0x28] sm:$0xff] %vm224, %v312
        %345 = vst.msk [vmem:[%s234 + $0x30] sm:$0xff] %vm224, %v313
        %346 = vst.msk [vmem:[%s234 + $0x48] sm:$0xff] %vm224, %v314
        %347 = vst.msk [vmem:[%s234 + $0x50] sm:$0xff] %vm224, %v315
        %348 = vst.msk [vmem:[%s234 + $0x68] sm:$0xff] %vm224, %v316
        %349 = vst.msk [vmem:[%s234 + $0x70] sm:$0xff] %vm224, %v317
        %350 = vst.msk [vmem:[%s234 + $0x88] sm:$0xff] %vm224, %v318
        %351 = vst.msk [vmem:[%s234 + $0x90] sm:$0xff] %vm224, %v319
        %352 = vst.msk [vmem:[%s234 + $0xa8] sm:$0xff] %vm224, %v320
        %353 = vst.msk [vmem:[%s234 + $0xb0] sm:$0xff] %vm224, %v321
        %354 = vst.msk [vmem:[%s234 + $0xc8] sm:$0xff] %vm224, %v322
        %355 = vst.msk [vmem:[%s234 + $0xd0] sm:$0xff] %vm224, %v323
        %356 = vst.msk [vmem:[%s234 + $0xe8] sm:$0xff] %vm224, %v324
        %357 = vst.msk [vmem:[%s234 + $0xf0] sm:$0xff] %vm224, %v325
        %358 = vst.msk [vmem:[%s234 + $0x108] sm:$0xff] %vm224, %v326
        %359 = vst.msk [vmem:[%s234 + $0x110] sm:$0xff] %vm224, %v327
        %360 = vst.msk [vmem:[%s234 + $0x128] sm:$0xff] %vm224, %v328
        %361 = vst.msk [vmem:[%s234 + $0x130] sm:$0xff] %vm224, %v329
        %362 = vst.msk [vmem:[%s234 + $0x148] sm:$0xff] %vm224, %v330
        %363 = vst.msk [vmem:[%s234 + $0x150] sm:$0xff] %vm224, %v331
        %364 = vst.msk [vmem:[%s234 + $0x168] sm:$0xff] %vm224, %v332
        %365 = vst.msk [vmem:[%s234 + $0x170] sm:$0xff] %vm224, %v333
        %366 = vst.msk [vmem:[%s234 + $0x188] sm:$0xff] %vm224, %v334
        %367 = vst.msk [vmem:[%s234 + $0x190] sm:$0xff] %vm224, %v335
        %368 = vst.msk [vmem:[%s234 + $0x1a8] sm:$0xff] %vm224, %v336
        %369 = vst.msk [vmem:[%s234 + $0x1b0] sm:$0xff] %vm224, %v337
        %370 = vst.msk [vmem:[%s234 + $0x1c8] sm:$0xff] %vm224, %v338
        %371 = vst.msk [vmem:[%s234 + $0x1d0] sm:$0xff] %vm224, %v339
        %372 = vst.msk [vmem:[%s234 + $0x1e8] sm:$0xff] %vm224, %v340
        %373 = vst.msk [vmem:[%s234 + $0x1f0] sm:$0xff] %vm224, %v341
        %v374 = vld [vmem:[#allocation2 + $0x7] sm:$0xff]
        %v375 = vld [vmem:[#allocation2 + $0xf] sm:$0xff]
        %v376 = vld [vmem:[#allocation2 + $0x27] sm:$0xff]
        %v377 = vld [vmem:[#allocation2 + $0x2f] sm:$0xff]
        %v378 = vld [vmem:[#allocation2 + $0x47] sm:$0xff]
        %v379 = vld [vmem:[#allocation2 + $0x4f] sm:$0xff]
        %v380 = vld [vmem:[#allocation2 + $0x67] sm:$0xff]
        %v381 = vld [vmem:[#allocation2 + $0x6f] sm:$0xff]
        %v382 = vld [vmem:[#allocation2 + $0x87] sm:$0xff]
        %v383 = vld [vmem:[#allocation2 + $0x8f] sm:$0xff]
        %v384 = vld [vmem:[#allocation2 + $0xa7] sm:$0xff]
        %v385 = vld [vmem:[#allocation2 + $0xaf] sm:$0xff]
        %v386 = vld [vmem:[#allocation2 + $0xc7] sm:$0xff]
        %v387 = vld [vmem:[#allocation2 + $0xcf] sm:$0xff]
        %v388 = vld [vmem:[#allocation2 + $0xe7] sm:$0xff]
        %v389 = vld [vmem:[#allocation2 + $0xef] sm:$0xff]
        %v390 = vld [vmem:[#allocation2 + $0x107] sm:$0xff]
        %v391 = vld [vmem:[#allocation2 + $0x10f] sm:$0xff]
        %v392 = vld [vmem:[#allocation2 + $0x127] sm:$0xff]
        %v393 = vld [vmem:[#allocation2 + $0x12f] sm:$0xff]
        %v394 = vld [vmem:[#allocation2 + $0x147] sm:$0xff]
        %v395 = vld [vmem:[#allocation2 + $0x14f] sm:$0xff]
        %v396 = vld [vmem:[#allocation2 + $0x167] sm:$0xff]
        %v397 = vld [vmem:[#allocation2 + $0x16f] sm:$0xff]
        %v398 = vld [vmem:[#allocation2 + $0x187] sm:$0xff]
        %v399 = vld [vmem:[#allocation2 + $0x18f] sm:$0xff]
        %v400 = vld [vmem:[#allocation2 + $0x1a7] sm:$0xff]
        %v401 = vld [vmem:[#allocation2 + $0x1af] sm:$0xff]
        %v402 = vld [vmem:[#allocation2 + $0x1c7] sm:$0xff]
        %v403 = vld [vmem:[#allocation2 + $0x1cf] sm:$0xff]
        %v404 = vld [vmem:[#allocation2 + $0x1e7] sm:$0xff]
        %v405 = vld [vmem:[#allocation2 + $0x1ef] sm:$0xff]
        %v406 = vpack.c.bf16 %v375, %v374
        %v407 = vpack.c.bf16 %v377, %v376
        %v408 = vpack.c.bf16 %v379, %v378
        %v409 = vpack.c.bf16 %v381, %v380
        %v410 = vpack.c.bf16 %v383, %v382
        %v411 = vpack.c.bf16 %v385, %v384
        %v412 = vpack.c.bf16 %v387, %v386
        %v413 = vpack.c.bf16 %v389, %v388
        %v414 = vpack.c.bf16 %v391, %v390
        %v415 = vpack.c.bf16 %v393, %v392
        %v416 = vpack.c.bf16 %v395, %v394
        %v417 = vpack.c.bf16 %v397, %v396
        %v418 = vpack.c.bf16 %v399, %v398
        %v419 = vpack.c.bf16 %v401, %v400
        %v420 = vpack.c.bf16 %v403, %v402
        %v421 = vpack.c.bf16 %v405, %v404
        %v422 = vld [vmem:[%s1] sm:$0x3]
        %v423 = vld [vmem:[#allocation2 + $0x8] sm:$0xff]
        %v424 = vld [vmem:[#allocation2 + $0x10] sm:$0xff]
        %v425 = vld [vmem:[#allocation2 + $0x28] sm:$0xff]
        %v426 = vld [vmem:[#allocation2 + $0x30] sm:$0xff]
        %v427 = vld [vmem:[#allocation2 + $0x48] sm:$0xff]
        %v428 = vld [vmem:[#allocation2 + $0x50] sm:$0xff]
        %v429 = vld [vmem:[#allocation2 + $0x68] sm:$0xff]
        %v430 = vld [vmem:[#allocation2 + $0x70] sm:$0xff]
        %v431 = vld [vmem:[#allocation2 + $0x88] sm:$0xff]
        %v432 = vld [vmem:[#allocation2 + $0x90] sm:$0xff]
        %v433 = vld [vmem:[#allocation2 + $0xa8] sm:$0xff]
        %v434 = vld [vmem:[#allocation2 + $0xb0] sm:$0xff]
        %v435 = vld [vmem:[#allocation2 + $0xc8] sm:$0xff]
        %v436 = vld [vmem:[#allocation2 + $0xd0] sm:$0xff]
        %v437 = vld [vmem:[#allocation2 + $0xe8] sm:$0xff]
        %v438 = vld [vmem:[#allocation2 + $0xf0] sm:$0xff]
        %v439 = vld [vmem:[#allocation2 + $0x108] sm:$0xff]
        %v440 = vld [vmem:[#allocation2 + $0x110] sm:$0xff]
        %v441 = vld [vmem:[#allocation2 + $0x128] sm:$0xff]
        %v442 = vld [vmem:[#allocation2 + $0x130] sm:$0xff]
        %v443 = vld [vmem:[#allocation2 + $0x148] sm:$0xff]
        %v444 = vld [vmem:[#allocation2 + $0x150] sm:$0xff]
        %v445 = vld [vmem:[#allocation2 + $0x168] sm:$0xff]
        %v446 = vld [vmem:[#allocation2 + $0x170] sm:$0xff]
        %v447 = vld [vmem:[#allocation2 + $0x188] sm:$0xff]
        %v448 = vld [vmem:[#allocation2 + $0x190] sm:$0xff]
        %v449 = vld [vmem:[#allocation2 + $0x1a8] sm:$0xff]
        %v450 = vld [vmem:[#allocation2 + $0x1b0] sm:$0xff]
        %v451 = vld [vmem:[#allocation2 + $0x1c8] sm:$0xff]
        %v452 = vld [vmem:[#allocation2 + $0x1d0] sm:$0xff]
        %v453 = vld [vmem:[#allocation2 + $0x1e8] sm:$0xff]
        %v454 = vld [vmem:[#allocation2 + $0x1f0] sm:$0xff]
        %v455 = vpack.c.bf16 %v424, %v423
        %v456 = vpack.c.bf16 %v426, %v425
        %v457 = vpack.c.bf16 %v428, %v427
        %v458 = vpack.c.bf16 %v430, %v429
        %v459 = vpack.c.bf16 %v432, %v431
        %v460 = vpack.c.bf16 %v434, %v433
        %v461 = vpack.c.bf16 %v436, %v435
        %v462 = vpack.c.bf16 %v438, %v437
        %v463 = vpack.c.bf16 %v440, %v439
        %v464 = vpack.c.bf16 %v442, %v441
        %v465 = vpack.c.bf16 %v444, %v443
        %v466 = vpack.c.bf16 %v446, %v445
        %v467 = vpack.c.bf16 %v448, %v447
        %v468 = vpack.c.bf16 %v450, %v449
        %v469 = vpack.c.bf16 %v452, %v451
        %v470 = vpack.c.bf16 %v454, %v453
        %s471 = scalar_lea.vmem %s1, 2
        %v472 = vld [vmem:[%s471] sm:$0x3]
        %v474 = vsel %vm224, %v455, 0
        %v477 = vsel %vm224, %v456, 0
        %v480 = vsel %vm224, %v457, 0
        %v483 = vsel %vm224, %v458, 0
        %v486 = vsel %vm224, %v459, 0
        %v489 = vsel %vm224, %v460, 0
        %v492 = vsel %vm224, %v461, 0
        %v495 = vsel %vm224, %v462, 0
        %v498 = vsel %vm224, %v463, 0
        %v501 = vsel %vm224, %v464, 0
        %v504 = vsel %vm224, %v465, 0
        %v507 = vsel %vm224, %v466, 0
        %v510 = vsel %vm224, %v467, 0
        %v513 = vsel %vm224, %v468, 0
        %v516 = vsel %vm224, %v469, 0
        %v519 = vsel %vm224, %v470, 0
        %vm521 = vcmask 1041408
        %v523 = vsel %vm521, %v472, 0
        %525 = vmatprep.subr.bf16.mxu0 0
        %526 = vmatpush1.bf16.msra.mxu0 %v523
        %527 = vmatprep.subr.bf16.mxu0 0
        %528 = vmatpush1.bf16.msra.mxu0 0
        %529 = vmatprep.subr.bf16.mxu0 0
        %530 = vmatpush1.bf16.msra.mxu0 0
        %531 = vmatprep.subr.bf16.mxu0 0
        %532 = vmatpush1.bf16.msra.mxu0 0
        %533 = vmatprep.subr.bf16.mxu0 0
        %534 = vmatpush1.bf16.msra.mxu0 0
        %535 = vmatprep.subr.bf16.mxu0 0
        %536 = vmatpush1.bf16.msra.mxu0 0
        %537 = vmatprep.subr.bf16.mxu0 0
        %538 = vmatpush1.bf16.msra.mxu0 0
        %539 = vmatprep.subr.bf16.mxu0 0
        %540 = vmatpush1.bf16.msra.mxu0 0
        %541 = vmatprep.subr.bf16.mxu0 0
        %542 = vmatpush1.bf16.msra.mxu0 0
        %543 = vmatprep.subr.bf16.mxu0 0
        %544 = vmatpush1.bf16.msra.mxu0 0
        %545 = vmatprep.subr.bf16.mxu0 0
        %546 = vmatpush1.bf16.msra.mxu0 0
        %547 = vmatprep.subr.bf16.mxu0 0
        %548 = vmatpush1.bf16.msra.mxu0 0
        %549 = vmatprep.subr.bf16.mxu0 0
        %550 = vmatpush1.bf16.msra.mxu0 0
        %551 = vmatprep.subr.bf16.mxu0 0
        %552 = vmatpush1.bf16.msra.mxu0 0
        %553 = vmatprep.subr.bf16.mxu0 0
        %554 = vmatpush1.bf16.msra.mxu0 0
        %555 = vmatprep.subr.bf16.mxu0 0
        %556 = vmatpush1.bf16.msra.mxu0 0
        %557 = vmatprep.mubr.bf16.mxu0 0
        %558 = vmatmul.mubr.bf16.gmra.mrb[0].mxu0 %v474
        %v559 = vpop.f32.mrb[0].mxu0
        %v560 = vadd.f32 0.0, %v559
        %v561 = vpop.f32.mrb[0].mxu0
        %v562 = vpop.f32.mrb[0].mxu0
        %v563 = vadd.f32 0.0, %v562
        %v564 = vpop.f32.mrb[0].mxu0
        %565 = vmatprep.mubr.bf16.mxu0 0
        %566 = vmatmul.mubr.bf16.gmra.mrb[0].mxu0 %v477
        %v567 = vpop.f32.mrb[0].mxu0
        %v568 = vadd.f32 0.0, %v567
        %v569 = vpop.f32.mrb[0].mxu0
        %v570 = vpop.f32.mrb[0].mxu0
        %v571 = vadd.f32 0.0, %v570
        %v572 = vpop.f32.mrb[0].mxu0
        %573 = vmatprep.mubr.bf16.mxu0 0
        %574 = vmatmul.mubr.bf16.gmra.mrb[0].mxu0 %v480
        %v575 = vpop.f32.mrb[0].mxu0
        %v576 = vadd.f32 0.0, %v575
        %v577 = vpop.f32.mrb[0].mxu0
        %v578 = vpop.f32.mrb[0].mxu0
        %v579 = vadd.f32 0.0, %v578
        %v580 = vpop.f32.mrb[0].mxu0
        %581 = vmatprep.mubr.bf16.mxu0 0
        %582 = vmatmul.mubr.bf16.gmra.mrb[0].mxu0 %v483
        %v583 = vpop.f32.mrb[0].mxu0
        %v584 = vadd.f32 0.0, %v583
        %v585 = vpop.f32.mrb[0].mxu0
        %v586 = vpop.f32.mrb[0].mxu0
        %v587 = vadd.f32 0.0, %v586
        %v588 = vpop.f32.mrb[0].mxu0
        %589 = vmatprep.mubr.bf16.mxu0 0
        %590 = vmatmul.mubr.bf16.gmra.mrb[0].mxu0 %v486
        %v591 = vpop.f32.mrb[0].mxu0
        %v592 = vadd.f32 0.0, %v591
        %v593 = vpop.f32.mrb[0].mxu0
        %v594 = vpop.f32.mrb[0].mxu0
        %v595 = vadd.f32 0.0, %v594
        %v596 = vpop.f32.mrb[0].mxu0
        %597 = vmatprep.mubr.bf16.mxu0 0
        %598 = vmatmul.mubr.bf16.gmra.mrb[0].mxu0 %v489
        %v599 = vpop.f32.mrb[0].mxu0
        %v600 = vadd.f32 0.0, %v599
        %v601 = vpop.f32.mrb[0].mxu0
        %v602 = vpop.f32.mrb[0].mxu0
        %v603 = vadd.f32 0.0, %v602
        %v604 = vpop.f32.mrb[0].mxu0
        %605 = vmatprep.mubr.bf16.mxu0 0
        %606 = vmatmul.mubr.bf16.gmra.mrb[0].mxu0 %v492
        %v607 = vpop.f32.mrb[0].mxu0
        %v608 = vadd.f32 0.0, %v607
        %v609 = vpop.f32.mrb[0].mxu0
        %v610 = vpop.f32.mrb[0].mxu0
        %v611 = vadd.f32 0.0, %v610
        %v612 = vpop.f32.mrb[0].mxu0
        %613 = vmatprep.mubr.bf16.mxu0 0
        %614 = vmatmul.mubr.bf16.gmra.mrb[0].mxu0 %v495
        %v615 = vpop.f32.mrb[0].mxu0
        %v616 = vadd.f32 0.0, %v615
        %v617 = vpop.f32.mrb[0].mxu0
        %v618 = vpop.f32.mrb[0].mxu0
        %v619 = vadd.f32 0.0, %v618
        %v620 = vpop.f32.mrb[0].mxu0
        %621 = vmatprep.mubr.bf16.mxu0 0
        %622 = vmatmul.mubr.bf16.gmra.mrb[0].mxu0 %v498
        %v623 = vpop.f32.mrb[0].mxu0
        %v624 = vadd.f32 0.0, %v623
        %v625 = vpop.f32.mrb[0].mxu0
        %v626 = vpop.f32.mrb[0].mxu0
        %v627 = vadd.f32 0.0, %v626
        %v628 = vpop.f32.mrb[0].mxu0
        %629 = vmatprep.mubr.bf16.mxu0 0
        %630 = vmatmul.mubr.bf16.gmra.mrb[0].mxu0 %v501
        %v631 = vpop.f32.mrb[0].mxu0
        %v632 = vadd.f32 0.0, %v631
        %v633 = vpop.f32.mrb[0].mxu0
        %v634 = vpop.f32.mrb[0].mxu0
        %v635 = vadd.f32 0.0, %v634
        %v636 = vpop.f32.mrb[0].mxu0
        %637 = vmatprep.mubr.bf16.mxu0 0
        %638 = vmatmul.mubr.bf16.gmra.mrb[0].mxu0 %v504
        %v639 = vpop.f32.mrb[0].mxu0
        %v640 = vadd.f32 0.0, %v639
        %v641 = vpop.f32.mrb[0].mxu0
        %v642 = vpop.f32.mrb[0].mxu0
        %v643 = vadd.f32 0.0, %v642
        %v644 = vpop.f32.mrb[0].mxu0
        %645 = vmatprep.mubr.bf16.mxu0 0
        %646 = vmatmul.mubr.bf16.gmra.mrb[0].mxu0 %v507
        %v647 = vpop.f32.mrb[0].mxu0
        %v648 = vadd.f32 0.0, %v647
        %v649 = vpop.f32.mrb[0].mxu0
        %v650 = vpop.f32.mrb[0].mxu0
        %v651 = vadd.f32 0.0, %v650
        %v652 = vpop.f32.mrb[0].mxu0
        %653 = vmatprep.mubr.bf16.mxu0 0
        %654 = vmatmul.mubr.bf16.gmra.mrb[0].mxu0 %v510
        %v655 = vpop.f32.mrb[0].mxu0
        %v656 = vadd.f32 0.0, %v655
        %v657 = vpop.f32.mrb[0].mxu0
        %v658 = vpop.f32.mrb[0].mxu0
        %v659 = vadd.f32 0.0, %v658
        %v660 = vpop.f32.mrb[0].mxu0
        %661 = vmatprep.mubr.bf16.mxu0 0
        %662 = vmatmul.mubr.bf16.gmra.mrb[0].mxu0 %v513
        %v663 = vpop.f32.mrb[0].mxu0
        %v664 = vadd.f32 0.0, %v663
        %v665 = vpop.f32.mrb[0].mxu0
        %v666 = vpop.f32.mrb[0].mxu0
        %v667 = vadd.f32 0.0, %v666
        %v668 = vpop.f32.mrb[0].mxu0
        %669 = vmatprep.mubr.bf16.mxu0 0
        %670 = vmatmul.mubr.bf16.gmra.mrb[0].mxu0 %v516
        %v671 = vpop.f32.mrb[0].mxu0
        %v672 = vadd.f32 0.0, %v671
        %v673 = vpop.f32.mrb[0].mxu0
        %v674 = vpop.f32.mrb[0].mxu0
        %v675 = vadd.f32 0.0, %v674
        %v676 = vpop.f32.mrb[0].mxu0
        %677 = vmatprep.mubr.bf16.mxu0 0
        %678 = vmatmul.mubr.bf16.gmra.mrb[0].mxu0 %v519
        %v679 = vpop.f32.mrb[0].mxu0
        %v680 = vadd.f32 0.0, %v679
        %v681 = vpop.f32.mrb[0].mxu0
        %v682 = vpop.f32.mrb[0].mxu0
        %v683 = vadd.f32 0.0, %v682
        %v684 = vpop.f32.mrb[0].mxu0
        %685 = vdwg.mxu0
        %v687 = vsel %vm224, %v406, 0
        %v690 = vsel %vm224, %v407, 0
        %v693 = vsel %vm224, %v408, 0
        %v696 = vsel %vm224, %v409, 0
        %v699 = vsel %vm224, %v410, 0
        %v702 = vsel %vm224, %v411, 0
        %v705 = vsel %vm224, %v412, 0
        %v708 = vsel %vm224, %v413, 0
        %v711 = vsel %vm224, %v414, 0
        %v714 = vsel %vm224, %v415, 0
        %v717 = vsel %vm224, %v416, 0
        %v720 = vsel %vm224, %v417, 0
        %v723 = vsel %vm224, %v418, 0
        %v726 = vsel %vm224, %v419, 0
        %v729 = vsel %vm224, %v420, 0
        %v732 = vsel %vm224, %v421, 0
        %v735 = vsel %vm521, %v422, 0
        %737 = vmatprep.subr.bf16.mxu0 0
        %738 = vmatpush1.bf16.msra.mxu0 %v735
        %739 = vmatprep.subr.bf16.mxu0 0
        %740 = vmatpush1.bf16.msra.mxu0 0
        %741 = vmatprep.subr.bf16.mxu0 0
        %742 = vmatpush1.bf16.msra.mxu0 0
        %743 = vmatprep.subr.bf16.mxu0 0
        %744 = vmatpush1.bf16.msra.mxu0 0
        %745 = vmatprep.subr.bf16.mxu0 0
        %746 = vmatpush1.bf16.msra.mxu0 0
        %747 = vmatprep.subr.bf16.mxu0 0
        %748 = vmatpush1.bf16.msra.mxu0 0
        %749 = vmatprep.subr.bf16.mxu0 0
        %750 = vmatpush1.bf16.msra.mxu0 0
        %751 = vmatprep.subr.bf16.mxu0 0
        %752 = vmatpush1.bf16.msra.mxu0 0
        %753 = vmatprep.subr.bf16.mxu0 0
        %754 = vmatpush1.bf16.msra.mxu0 0
        %755 = vmatprep.subr.bf16.mxu0 0
        %756 = vmatpush1.bf16.msra.mxu0 0
        %757 = vmatprep.subr.bf16.mxu0 0
        %758 = vmatpush1.bf16.msra.mxu0 0
        %759 = vmatprep.subr.bf16.mxu0 0
        %760 = vmatpush1.bf16.msra.mxu0 0
        %761 = vmatprep.subr.bf16.mxu0 0
        %762 = vmatpush1.bf16.msra.mxu0 0
        %763 = vmatprep.subr.bf16.mxu0 0
        %764 = vmatpush1.bf16.msra.mxu0 0
        %765 = vmatprep.subr.bf16.mxu0 0
        %766 = vmatpush1.bf16.msra.mxu0 0
        %767 = vmatprep.subr.bf16.mxu0 0
        %768 = vmatpush1.bf16.msra.mxu0 0
        %769 = vmatprep.mubr.bf16.mxu0 0
        %770 = vmatmul.mubr.bf16.gmra.mrb[0].mxu0 %v687
        %v771 = vpop.f32.mrb[0].mxu0
        %v772 = vadd.f32 %v560, %v771
        %v773 = vpop.f32.mrb[0].mxu0
        %v774 = vpop.f32.mrb[0].mxu0
        %v775 = vadd.f32 %v563, %v774
        %v776 = vpop.f32.mrb[0].mxu0
        %777 = vmatprep.mubr.bf16.mxu0 0
        %778 = vmatmul.mubr.bf16.gmra.mrb[0].mxu0 %v690
        %v779 = vpop.f32.mrb[0].mxu0
        %v780 = vadd.f32 %v568, %v779
        %v781 = vpop.f32.mrb[0].mxu0
        %v782 = vpop.f32.mrb[0].mxu0
        %v783 = vadd.f32 %v571, %v782
        %v784 = vpop.f32.mrb[0].mxu0
        %785 = vmatprep.mubr.bf16.mxu0 0
        %786 = vmatmul.mubr.bf16.gmra.mrb[0].mxu0 %v693
        %v787 = vpop.f32.mrb[0].mxu0
        %v788 = vadd.f32 %v576, %v787
        %v789 = vpop.f32.mrb[0].mxu0
        %v790 = vpop.f32.mrb[0].mxu0
        %v791 = vadd.f32 %v579, %v790
        %v792 = vpop.f32.mrb[0].mxu0
        %793 = vmatprep.mubr.bf16.mxu0 0
        %794 = vmatmul.mubr.bf16.gmra.mrb[0].mxu0 %v696
        %v795 = vpop.f32.mrb[0].mxu0
        %v796 = vadd.f32 %v584, %v795
        %v797 = vpop.f32.mrb[0].mxu0
        %v798 = vpop.f32.mrb[0].mxu0
        %v799 = vadd.f32 %v587, %v798
        %v800 = vpop.f32.mrb[0].mxu0
        %801 = vmatprep.mubr.bf16.mxu0 0
        %802 = vmatmul.mubr.bf16.gmra.mrb[0].mxu0 %v699
        %v803 = vpop.f32.mrb[0].mxu0
        %v804 = vadd.f32 %v592, %v803
        %v805 = vpop.f32.mrb[0].mxu0
        %v806 = vpop.f32.mrb[0].mxu0
        %v807 = vadd.f32 %v595, %v806
        %v808 = vpop.f32.mrb[0].mxu0
        %809 = vmatprep.mubr.bf16.mxu0 0
        %810 = vmatmul.mubr.bf16.gmra.mrb[0].mxu0 %v702
        %v811 = vpop.f32.mrb[0].mxu0
        %v812 = vadd.f32 %v600, %v811
        %v813 = vpop.f32.mrb[0].mxu0
        %v814 = vpop.f32.mrb[0].mxu0
        %v815 = vadd.f32 %v603, %v814
        %v816 = vpop.f32.mrb[0].mxu0
        %817 = vmatprep.mubr.bf16.mxu0 0
        %818 = vmatmul.mubr.bf16.gmra.mrb[0].mxu0 %v705
        %v819 = vpop.f32.mrb[0].mxu0
        %v820 = vadd.f32 %v608, %v819
        %v821 = vpop.f32.mrb[0].mxu0
        %v822 = vpop.f32.mrb[0].mxu0
        %v823 = vadd.f32 %v611, %v822
        %v824 = vpop.f32.mrb[0].mxu0
        %825 = vmatprep.mubr.bf16.mxu0 0
        %826 = vmatmul.mubr.bf16.gmra.mrb[0].mxu0 %v708
        %v827 = vpop.f32.mrb[0].mxu0
        %v828 = vadd.f32 %v616, %v827
        %v829 = vpop.f32.mrb[0].mxu0
        %v830 = vpop.f32.mrb[0].mxu0
        %v831 = vadd.f32 %v619, %v830
        %v832 = vpop.f32.mrb[0].mxu0
        %833 = vmatprep.mubr.bf16.mxu0 0
        %834 = vmatmul.mubr.bf16.gmra.mrb[0].mxu0 %v711
        %v835 = vpop.f32.mrb[0].mxu0
        %v836 = vadd.f32 %v624, %v835
        %v837 = vpop.f32.mrb[0].mxu0
        %v838 = vpop.f32.mrb[0].mxu0
        %v839 = vadd.f32 %v627, %v838
        %v840 = vpop.f32.mrb[0].mxu0
        %841 = vmatprep.mubr.bf16.mxu0 0
        %842 = vmatmul.mubr.bf16.gmra.mrb[0].mxu0 %v714
        %v843 = vpop.f32.mrb[0].mxu0
        %v844 = vadd.f32 %v632, %v843
        %v845 = vpop.f32.mrb[0].mxu0
        %v846 = vpop.f32.mrb[0].mxu0
        %v847 = vadd.f32 %v635, %v846
        %v848 = vpop.f32.mrb[0].mxu0
        %849 = vmatprep.mubr.bf16.mxu0 0
        %850 = vmatmul.mubr.bf16.gmra.mrb[0].mxu0 %v717
        %v851 = vpop.f32.mrb[0].mxu0
        %v852 = vadd.f32 %v640, %v851
        %v853 = vpop.f32.mrb[0].mxu0
        %v854 = vpop.f32.mrb[0].mxu0
        %v855 = vadd.f32 %v643, %v854
        %v856 = vpop.f32.mrb[0].mxu0
        %857 = vmatprep.mubr.bf16.mxu0 0
        %858 = vmatmul.mubr.bf16.gmra.mrb[0].mxu0 %v720
        %v859 = vpop.f32.mrb[0].mxu0
        %v860 = vadd.f32 %v648, %v859
        %v861 = vpop.f32.mrb[0].mxu0
        %v862 = vpop.f32.mrb[0].mxu0
        %v863 = vadd.f32 %v651, %v862
        %v864 = vpop.f32.mrb[0].mxu0
        %865 = vmatprep.mubr.bf16.mxu0 0
        %866 = vmatmul.mubr.bf16.gmra.mrb[0].mxu0 %v723
        %v867 = vpop.f32.mrb[0].mxu0
        %v868 = vadd.f32 %v656, %v867
        %v869 = vpop.f32.mrb[0].mxu0
        %v870 = vpop.f32.mrb[0].mxu0
        %v871 = vadd.f32 %v659, %v870
        %v872 = vpop.f32.mrb[0].mxu0
        %873 = vmatprep.mubr.bf16.mxu0 0
        %874 = vmatmul.mubr.bf16.gmra.mrb[0].mxu0 %v726
        %v875 = vpop.f32.mrb[0].mxu0
        %v876 = vadd.f32 %v664, %v875
        %v877 = vpop.f32.mrb[0].mxu0
        %v878 = vpop.f32.mrb[0].mxu0
        %v879 = vadd.f32 %v667, %v878
        %v880 = vpop.f32.mrb[0].mxu0
        %881 = vmatprep.mubr.bf16.mxu0 0
        %882 = vmatmul.mubr.bf16.gmra.mrb[0].mxu0 %v729
        %v883 = vpop.f32.mrb[0].mxu0
        %v884 = vadd.f32 %v672, %v883
        %v885 = vpop.f32.mrb[0].mxu0
        %v886 = vpop.f32.mrb[0].mxu0
        %v887 = vadd.f32 %v675, %v886
        %v888 = vpop.f32.mrb[0].mxu0
        %889 = vmatprep.mubr.bf16.mxu0 0
        %890 = vmatmul.mubr.bf16.gmra.mrb[0].mxu0 %v732
        %v891 = vpop.f32.mrb[0].mxu0
        %v892 = vadd.f32 %v680, %v891
        %v893 = vpop.f32.mrb[0].mxu0
        %v894 = vpop.f32.mrb[0].mxu0
        %v895 = vadd.f32 %v683, %v894
        %v896 = vpop.f32.mrb[0].mxu0
        %897 = vdwg.mxu0
        %v898 = vld [vmem:[#allocation2 + $0x9] sm:$0xff]
        %v899 = vld [vmem:[#allocation2 + $0x11] sm:$0xff]
        %v900 = vld [vmem:[#allocation2 + $0x29] sm:$0xff]
        %v901 = vld [vmem:[#allocation2 + $0x31] sm:$0xff]
        %v902 = vld [vmem:[#allocation2 + $0x49] sm:$0xff]
        %v903 = vld [vmem:[#allocation2 + $0x51] sm:$0xff]
        %v904 = vld [vmem:[#allocation2 + $0x69] sm:$0xff]
        %v905 = vld [vmem:[#allocation2 + $0x71] sm:$0xff]
        %v906 = vld [vmem:[#allocation2 + $0x89] sm:$0xff]
        %v907 = vld [vmem:[#allocation2 + $0x91] sm:$0xff]
        %v908 = vld [vmem:[#allocation2 + $0xa9] sm:$0xff]
        %v909 = vld [vmem:[#allocation2 + $0xb1] sm:$0xff]
        %v910 = vld [vmem:[#allocation2 + $0xc9] sm:$0xff]
        %v911 = vld [vmem:[#allocation2 + $0xd1] sm:$0xff]
        %v912 = vld [vmem:[#allocation2 + $0xe9] sm:$0xff]
        %v913 = vld [vmem:[#allocation2 + $0xf1] sm:$0xff]
        %v914 = vld [vmem:[#allocation2 + $0x109] sm:$0xff]
        %v915 = vld [vmem:[#allocation2 + $0x111] sm:$0xff]
        %v916 = vld [vmem:[#allocation2 + $0x129] sm:$0xff]
        %v917 = vld [vmem:[#allocation2 + $0x131] sm:$0xff]
        %v918 = vld [vmem:[#allocation2 + $0x149] sm:$0xff]
        %v919 = vld [vmem:[#allocation2 + $0x151] sm:$0xff]
        %v920 = vld [vmem:[#allocation2 + $0x169] sm:$0xff]
        %v921 = vld [vmem:[#allocation2 + $0x171] sm:$0xff]
        %v922 = vld [vmem:[#allocation2 + $0x189] sm:$0xff]
        %v923 = vld [vmem:[#allocation2 + $0x191] sm:$0xff]
        %v924 = vld [vmem:[#allocation2 + $0x1a9] sm:$0xff]
        %v925 = vld [vmem:[#allocation2 + $0x1b1] sm:$0xff]
        %v926 = vld [vmem:[#allocation2 + $0x1c9] sm:$0xff]
        %v927 = vld [vmem:[#allocation2 + $0x1d1] sm:$0xff]
        %v928 = vld [vmem:[#allocation2 + $0x1e9] sm:$0xff]
        %v929 = vld [vmem:[#allocation2 + $0x1f1] sm:$0xff]
        %v930 = vpack.c.bf16 %v899, %v898
        %v931 = vpack.c.bf16 %v901, %v900
        %v932 = vpack.c.bf16 %v903, %v902
        %v933 = vpack.c.bf16 %v905, %v904
        %v934 = vpack.c.bf16 %v907, %v906
        %v935 = vpack.c.bf16 %v909, %v908
        %v936 = vpack.c.bf16 %v911, %v910
        %v937 = vpack.c.bf16 %v913, %v912
        %v938 = vpack.c.bf16 %v915, %v914
        %v939 = vpack.c.bf16 %v917, %v916
        %v940 = vpack.c.bf16 %v919, %v918
        %v941 = vpack.c.bf16 %v921, %v920
        %v942 = vpack.c.bf16 %v923, %v922
        %v943 = vpack.c.bf16 %v925, %v924
        %v944 = vpack.c.bf16 %v927, %v926
        %v945 = vpack.c.bf16 %v929, %v928
        %s946 = scalar_lea.vmem %s1, 4
        %v947 = vld [vmem:[%s946] sm:$0x3]
        %v949 = vsel %vm224, %v930, 0
        %v952 = vsel %vm224, %v931, 0
        %v955 = vsel %vm224, %v932, 0
        %v958 = vsel %vm224, %v933, 0
        %v961 = vsel %vm224, %v934, 0
        %v964 = vsel %vm224, %v935, 0
        %v967 = vsel %vm224, %v936, 0
        %v970 = vsel %vm224, %v937, 0
        %v973 = vsel %vm224, %v938, 0
        %v976 = vsel %vm224, %v939, 0
        %v979 = vsel %vm224, %v940, 0
        %v982 = vsel %vm224, %v941, 0
        %v985 = vsel %vm224, %v942, 0
        %v988 = vsel %vm224, %v943, 0
        %v991 = vsel %vm224, %v944, 0
        %v994 = vsel %vm224, %v945, 0
        %v997 = vsel %vm521, %v947, 0
        %999 = vmatprep.subr.bf16.mxu0 0
        %1000 = vmatpush1.bf16.msra.mxu0 %v997
        %1001 = vmatprep.subr.bf16.mxu0 0
        %1002 = vmatpush1.bf16.msra.mxu0 0
        %1003 = vmatprep.subr.bf16.mxu0 0
        %1004 = vmatpush1.bf16.msra.mxu0 0
        %1005 = vmatprep.subr.bf16.mxu0 0
        %1006 = vmatpush1.bf16.msra.mxu0 0
        %1007 = vmatprep.subr.bf16.mxu0 0
        %1008 = vmatpush1.bf16.msra.mxu0 0
        %1009 = vmatprep.subr.bf16.mxu0 0
        %1010 = vmatpush1.bf16.msra.mxu0 0
        %1011 = vmatprep.subr.bf16.mxu0 0
        %1012 = vmatpush1.bf16.msra.mxu0 0
        %1013 = vmatprep.subr.bf16.mxu0 0
        %1014 = vmatpush1.bf16.msra.mxu0 0
        %1015 = vmatprep.subr.bf16.mxu0 0
        %1016 = vmatpush1.bf16.msra.mxu0 0
        %1017 = vmatprep.subr.bf16.mxu0 0
        %1018 = vmatpush1.bf16.msra.mxu0 0
        %1019 = vmatprep.subr.bf16.mxu0 0
        %1020 = vmatpush1.bf16.msra.mxu0 0
        %1021 = vmatprep.subr.bf16.mxu0 0
        %1022 = vmatpush1.bf16.msra.mxu0 0
        %1023 = vmatprep.subr.bf16.mxu0 0
        %1024 = vmatpush1.bf16.msra.mxu0 0
        %1025 = vmatprep.subr.bf16.mxu0 0
        %1026 = vmatpush1.bf16.msra.mxu0 0
        %1027 = vmatprep.subr.bf16.mxu0 0
        %1028 = vmatpush1.bf16.msra.mxu0 0
        %1029 = vmatprep.subr.bf16.mxu0 0
        %1030 = vmatpush1.bf16.msra.mxu0 0
        %1031 = vmatprep.mubr.bf16.mxu0 0
        %1032 = vmatmul.mubr.bf16.gmra.mrb[0].mxu0 %v949
        %v1033 = vpop.f32.mrb[0].mxu0
        %v1034 = vadd.f32 0.0, %v1033
        %v1035 = vpop.f32.mrb[0].mxu0
        %v1036 = vpop.f32.mrb[0].mxu0
        %v1037 = vadd.f32 0.0, %v1036
        %v1038 = vpop.f32.mrb[0].mxu0
        %1039 = vmatprep.mubr.bf16.mxu0 0
        %1040 = vmatmul.mubr.bf16.gmra.mrb[0].mxu0 %v952
        %v1041 = vpop.f32.mrb[0].mxu0
        %v1042 = vadd.f32 0.0, %v1041
        %v1043 = vpop.f32.mrb[0].mxu0
        %v1044 = vpop.f32.mrb[0].mxu0
        %v1045 = vadd.f32 0.0, %v1044
        %v1046 = vpop.f32.mrb[0].mxu0
        %1047 = vmatprep.mubr.bf16.mxu0 0
        %1048 = vmatmul.mubr.bf16.gmra.mrb[0].mxu0 %v955
        %v1049 = vpop.f32.mrb[0].mxu0
        %v1050 = vadd.f32 0.0, %v1049
        %v1051 = vpop.f32.mrb[0].mxu0
        %v1052 = vpop.f32.mrb[0].mxu0
        %v1053 = vadd.f32 0.0, %v1052
        %v1054 = vpop.f32.mrb[0].mxu0
        %1055 = vmatprep.mubr.bf16.mxu0 0
        %1056 = vmatmul.mubr.bf16.gmra.mrb[0].mxu0 %v958
        %v1057 = vpop.f32.mrb[0].mxu0
        %v1058 = vadd.f32 0.0, %v1057
        %v1059 = vpop.f32.mrb[0].mxu0
        %v1060 = vpop.f32.mrb[0].mxu0
        %v1061 = vadd.f32 0.0, %v1060
        %v1062 = vpop.f32.mrb[0].mxu0
        %1063 = vmatprep.mubr.bf16.mxu0 0
        %1064 = vmatmul.mubr.bf16.gmra.mrb[0].mxu0 %v961
        %v1065 = vpop.f32.mrb[0].mxu0
        %v1066 = vadd.f32 0.0, %v1065
        %v1067 = vpop.f32.mrb[0].mxu0
        %v1068 = vpop.f32.mrb[0].mxu0
        %v1069 = vadd.f32 0.0, %v1068
        %v1070 = vpop.f32.mrb[0].mxu0
        %1071 = vmatprep.mubr.bf16.mxu0 0
        %1072 = vmatmul.mubr.bf16.gmra.mrb[0].mxu0 %v964
        %v1073 = vpop.f32.mrb[0].mxu0
        %v1074 = vadd.f32 0.0, %v1073
        %v1075 = vpop.f32.mrb[0].mxu0
        %v1076 = vpop.f32.mrb[0].mxu0
        %v1077 = vadd.f32 0.0, %v1076
        %v1078 = vpop.f32.mrb[0].mxu0
        %1079 = vmatprep.mubr.bf16.mxu0 0
        %1080 = vmatmul.mubr.bf16.gmra.mrb[0].mxu0 %v967
        %v1081 = vpop.f32.mrb[0].mxu0
        %v1082 = vadd.f32 0.0, %v1081
        %v1083 = vpop.f32.mrb[0].mxu0
        %v1084 = vpop.f32.mrb[0].mxu0
        %v1085 = vadd.f32 0.0, %v1084
        %v1086 = vpop.f32.mrb[0].mxu0
        %1087 = vmatprep.mubr.bf16.mxu0 0
        %1088 = vmatmul.mubr.bf16.gmra.mrb[0].mxu0 %v970
        %v1089 = vpop.f32.mrb[0].mxu0
        %v1090 = vadd.f32 0.0, %v1089
        %v1091 = vpop.f32.mrb[0].mxu0
        %v1092 = vpop.f32.mrb[0].mxu0
        %v1093 = vadd.f32 0.0, %v1092
        %v1094 = vpop.f32.mrb[0].mxu0
        %1095 = vmatprep.mubr.bf16.mxu0 0
        %1096 = vmatmul.mubr.bf16.gmra.mrb[0].mxu0 %v973
        %v1097 = vpop.f32.mrb[0].mxu0
        %v1098 = vadd.f32 0.0, %v1097
        %v1099 = vpop.f32.mrb[0].mxu0
        %v1100 = vpop.f32.mrb[0].mxu0
        %v1101 = vadd.f32 0.0, %v1100
        %v1102 = vpop.f32.mrb[0].mxu0
        %1103 = vmatprep.mubr.bf16.mxu0 0
        %1104 = vmatmul.mubr.bf16.gmra.mrb[0].mxu0 %v976
        %v1105 = vpop.f32.mrb[0].mxu0
        %v1106 = vadd.f32 0.0, %v1105
        %v1107 = vpop.f32.mrb[0].mxu0
        %v1108 = vpop.f32.mrb[0].mxu0
        %v1109 = vadd.f32 0.0, %v1108
        %v1110 = vpop.f32.mrb[0].mxu0
        %1111 = vmatprep.mubr.bf16.mxu0 0
        %1112 = vmatmul.mubr.bf16.gmra.mrb[0].mxu0 %v979
        %v1113 = vpop.f32.mrb[0].mxu0
        %v1114 = vadd.f32 0.0, %v1113
        %v1115 = vpop.f32.mrb[0].mxu0
        %v1116 = vpop.f32.mrb[0].mxu0
        %v1117 = vadd.f32 0.0, %v1116
        %v1118 = vpop.f32.mrb[0].mxu0
        %1119 = vmatprep.mubr.bf16.mxu0 0
        %1120 = vmatmul.mubr.bf16.gmra.mrb[0].mxu0 %v982
        %v1121 = vpop.f32.mrb[0].mxu0
        %v1122 = vadd.f32 0.0, %v1121
        %v1123 = vpop.f32.mrb[0].mxu0
        %v1124 = vpop.f32.mrb[0].mxu0
        %v1125 = vadd.f32 0.0, %v1124
        %v1126 = vpop.f32.mrb[0].mxu0
        %1127 = vmatprep.mubr.bf16.mxu0 0
        %1128 = vmatmul.mubr.bf16.gmra.mrb[0].mxu0 %v985
        %v1129 = vpop.f32.mrb[0].mxu0
        %v1130 = vadd.f32 0.0, %v1129
        %v1131 = vpop.f32.mrb[0].mxu0
        %v1132 = vpop.f32.mrb[0].mxu0
        %v1133 = vadd.f32 0.0, %v1132
        %v1134 = vpop.f32.mrb[0].mxu0
        %1135 = vmatprep.mubr.bf16.mxu0 0
        %1136 = vmatmul.mubr.bf16.gmra.mrb[0].mxu0 %v988
        %v1137 = vpop.f32.mrb[0].mxu0
        %v1138 = vadd.f32 0.0, %v1137
        %v1139 = vpop.f32.mrb[0].mxu0
        %v1140 = vpop.f32.mrb[0].mxu0
        %v1141 = vadd.f32 0.0, %v1140
        %v1142 = vpop.f32.mrb[0].mxu0
        %1143 = vmatprep.mubr.bf16.mxu0 0
        %1144 = vmatmul.mubr.bf16.gmra.mrb[0].mxu0 %v991
        %v1145 = vpop.f32.mrb[0].mxu0
        %v1146 = vadd.f32 0.0, %v1145
        %v1147 = vpop.f32.mrb[0].mxu0
        %v1148 = vpop.f32.mrb[0].mxu0
        %v1149 = vadd.f32 0.0, %v1148
        %v1150 = vpop.f32.mrb[0].mxu0
        %1151 = vmatprep.mubr.bf16.mxu0 0
        %1152 = vmatmul.mubr.bf16.gmra.mrb[0].mxu0 %v994
        %v1153 = vpop.f32.mrb[0].mxu0
        %v1154 = vadd.f32 0.0, %v1153
        %v1155 = vpop.f32.mrb[0].mxu0
        %v1156 = vpop.f32.mrb[0].mxu0
        %v1157 = vadd.f32 0.0, %v1156
        %v1158 = vpop.f32.mrb[0].mxu0
        %1159 = vdwg.mxu0
        %v1160 = vadd.f32 %v772, %v1034
        %v1161 = vadd.f32 %v775, %v1037
        %v1162 = vadd.f32 %v780, %v1042
        %v1163 = vadd.f32 %v783, %v1045
        %v1164 = vadd.f32 %v788, %v1050
        %v1165 = vadd.f32 %v791, %v1053
        %v1166 = vadd.f32 %v796, %v1058
        %v1167 = vadd.f32 %v799, %v1061
        %v1168 = vadd.f32 %v804, %v1066
        %v1169 = vadd.f32 %v807, %v1069
        %v1170 = vadd.f32 %v812, %v1074
        %v1171 = vadd.f32 %v815, %v1077
        %v1172 = vadd.f32 %v820, %v1082
        %v1173 = vadd.f32 %v823, %v1085
        %v1174 = vadd.f32 %v828, %v1090
        %v1175 = vadd.f32 %v831, %v1093
        %v1176 = vadd.f32 %v836, %v1098
        %v1177 = vadd.f32 %v839, %v1101
        %v1178 = vadd.f32 %v844, %v1106
        %v1179 = vadd.f32 %v847, %v1109
        %v1180 = vadd.f32 %v852, %v1114
        %v1181 = vadd.f32 %v855, %v1117
        %v1182 = vadd.f32 %v860, %v1122
        %v1183 = vadd.f32 %v863, %v1125
        %v1184 = vadd.f32 %v868, %v1130
        %v1185 = vadd.f32 %v871, %v1133
        %v1186 = vadd.f32 %v876, %v1138
        %v1187 = vadd.f32 %v879, %v1141
        %v1188 = vadd.f32 %v884, %v1146
        %v1189 = vadd.f32 %v887, %v1149
        %v1190 = vadd.f32 %v892, %v1154
        %v1191 = vadd.f32 %v895, %v1157
        %v1192 = vld [vmem:[%s234 + $0x7] sm:$0xff]
        %v1193 = vld [vmem:[%s234 + $0xf] sm:$0xff]
        %v1194 = vld [vmem:[%s234 + $0x27] sm:$0xff]
        %v1195 = vld [vmem:[%s234 + $0x2f] sm:$0xff]
        %v1196 = vld [vmem:[%s234 + $0x47] sm:$0xff]
        %v1197 = vld [vmem:[%s234 + $0x4f] sm:$0xff]
        %v1198 = vld [vmem:[%s234 + $0x67] sm:$0xff]
        %v1199 = vld [vmem:[%s234 + $0x6f] sm:$0xff]
        %v1200 = vld [vmem:[%s234 + $0x87] sm:$0xff]
        %v1201 = vld [vmem:[%s234 + $0x8f] sm:$0xff]
        %v1202 = vld [vmem:[%s234 + $0xa7] sm:$0xff]
        %v1203 = vld [vmem:[%s234 + $0xaf] sm:$0xff]
        %v1204 = vld [vmem:[%s234 + $0xc7] sm:$0xff]
        %v1205 = vld [vmem:[%s234 + $0xcf] sm:$0xff]
        %v1206 = vld [vmem:[%s234 + $0xe7] sm:$0xff]
        %v1207 = vld [vmem:[%s234 + $0xef] sm:$0xff]
        %v1208 = vld [vmem:[%s234 + $0x107] sm:$0xff]
        %v1209 = vld [vmem:[%s234 + $0x10f] sm:$0xff]
        %v1210 = vld [vmem:[%s234 + $0x127] sm:$0xff]
        %v1211 = vld [vmem:[%s234 + $0x12f] sm:$0xff]
        %v1212 = vld [vmem:[%s234 + $0x147] sm:$0xff]
        %v1213 = vld [vmem:[%s234 + $0x14f] sm:$0xff]
        %v1214 = vld [vmem:[%s234 + $0x167] sm:$0xff]
        %v1215 = vld [vmem:[%s234 + $0x16f] sm:$0xff]
        %v1216 = vld [vmem:[%s234 + $0x187] sm:$0xff]
        %v1217 = vld [vmem:[%s234 + $0x18f] sm:$0xff]
        %v1218 = vld [vmem:[%s234 + $0x1a7] sm:$0xff]
        %v1219 = vld [vmem:[%s234 + $0x1af] sm:$0xff]
        %v1220 = vld [vmem:[%s234 + $0x1c7] sm:$0xff]
        %v1221 = vld [vmem:[%s234 + $0x1cf] sm:$0xff]
        %v1222 = vld [vmem:[%s234 + $0x1e7] sm:$0xff]
        %v1223 = vld [vmem:[%s234 + $0x1ef] sm:$0xff]
        %v1224 = vpack.c.bf16 %v1193, %v1192
        %v1225 = vpack.c.bf16 %v1195, %v1194
        %v1226 = vpack.c.bf16 %v1197, %v1196
        %v1227 = vpack.c.bf16 %v1199, %v1198
        %v1228 = vpack.c.bf16 %v1201, %v1200
        %v1229 = vpack.c.bf16 %v1203, %v1202
        %v1230 = vpack.c.bf16 %v1205, %v1204
        %v1231 = vpack.c.bf16 %v1207, %v1206
        %v1232 = vpack.c.bf16 %v1209, %v1208
        %v1233 = vpack.c.bf16 %v1211, %v1210
        %v1234 = vpack.c.bf16 %v1213, %v1212
        %v1235 = vpack.c.bf16 %v1215, %v1214
        %v1236 = vpack.c.bf16 %v1217, %v1216
        %v1237 = vpack.c.bf16 %v1219, %v1218
        %v1238 = vpack.c.bf16 %v1221, %v1220
        %v1239 = vpack.c.bf16 %v1223, %v1222
        %s1240 = scalar_lea.vmem %s1, 6
        %v1241 = vld [vmem:[%s1240] sm:$0x3]
        %v1243 = vsel %vm224, %v1224, 0
        %v1246 = vsel %vm224, %v1225, 0
        %v1249 = vsel %vm224, %v1226, 0
        %v1252 = vsel %vm224, %v1227, 0
        %v1255 = vsel %vm224, %v1228, 0
        %v1258 = vsel %vm224, %v1229, 0
        %v1261 = vsel %vm224, %v1230, 0
        %v1264 = vsel %vm224, %v1231, 0
        %v1267 = vsel %vm224, %v1232, 0
        %v1270 = vsel %vm224, %v1233, 0
        %v1273 = vsel %vm224, %v1234, 0
        %v1276 = vsel %vm224, %v1235, 0
        %v1279 = vsel %vm224, %v1236, 0
        %v1282 = vsel %vm224, %v1237, 0
        %v1285 = vsel %vm224, %v1238, 0
        %v1288 = vsel %vm224, %v1239, 0
        %v1291 = vsel %vm521, %v1241, 0
        %1293 = vmatprep.subr.bf16.mxu0 0
        %1294 = vmatpush1.bf16.msra.mxu0 %v1291
        %1295 = vmatprep.subr.bf16.mxu0 0
        %1296 = vmatpush1.bf16.msra.mxu0 0
        %1297 = vmatprep.subr.bf16.mxu0 0
        %1298 = vmatpush1.bf16.msra.mxu0 0
        %1299 = vmatprep.subr.bf16.mxu0 0
        %1300 = vmatpush1.bf16.msra.mxu0 0
        %1301 = vmatprep.subr.bf16.mxu0 0
        %1302 = vmatpush1.bf16.msra.mxu0 0
        %1303 = vmatprep.subr.bf16.mxu0 0
        %1304 = vmatpush1.bf16.msra.mxu0 0
        %1305 = vmatprep.subr.bf16.mxu0 0
        %1306 = vmatpush1.bf16.msra.mxu0 0
        %1307 = vmatprep.subr.bf16.mxu0 0
        %1308 = vmatpush1.bf16.msra.mxu0 0
        %1309 = vmatprep.subr.bf16.mxu0 0
        %1310 = vmatpush1.bf16.msra.mxu0 0
        %1311 = vmatprep.subr.bf16.mxu0 0
        %1312 = vmatpush1.bf16.msra.mxu0 0
        %1313 = vmatprep.subr.bf16.mxu0 0
        %1314 = vmatpush1.bf16.msra.mxu0 0
        %1315 = vmatprep.subr.bf16.mxu0 0
        %1316 = vmatpush1.bf16.msra.mxu0 0
        %1317 = vmatprep.subr.bf16.mxu0 0
        %1318 = vmatpush1.bf16.msra.mxu0 0
        %1319 = vmatprep.subr.bf16.mxu0 0
        %1320 = vmatpush1.bf16.msra.mxu0 0
        %1321 = vmatprep.subr.bf16.mxu0 0
        %1322 = vmatpush1.bf16.msra.mxu0 0
        %1323 = vmatprep.subr.bf16.mxu0 0
        %1324 = vmatpush1.bf16.msra.mxu0 0
        %1325 = vmatprep.mubr.bf16.mxu0 0
        %1326 = vmatmul.mubr.bf16.gmra.mrb[0].mxu0 %v1243
        %v1327 = vpop.f32.mrb[0].mxu0
        %v1328 = vadd.f32 0.0, %v1327
        %v1329 = vpop.f32.mrb[0].mxu0
        %v1330 = vpop.f32.mrb[0].mxu0
        %v1331 = vadd.f32 0.0, %v1330
        %v1332 = vpop.f32.mrb[0].mxu0
        %1333 = vmatprep.mubr.bf16.mxu0 0
        %1334 = vmatmul.mubr.bf16.gmra.mrb[0].mxu0 %v1246
        %v1335 = vpop.f32.mrb[0].mxu0
        %v1336 = vadd.f32 0.0, %v1335
        %v1337 = vpop.f32.mrb[0].mxu0
        %v1338 = vpop.f32.mrb[0].mxu0
        %v1339 = vadd.f32 0.0, %v1338
        %v1340 = vpop.f32.mrb[0].mxu0
        %1341 = vmatprep.mubr.bf16.mxu0 0
        %1342 = vmatmul.mubr.bf16.gmra.mrb[0].mxu0 %v1249
        %v1343 = vpop.f32.mrb[0].mxu0
        %v1344 = vadd.f32 0.0, %v1343
        %v1345 = vpop.f32.mrb[0].mxu0
        %v1346 = vpop.f32.mrb[0].mxu0
        %v1347 = vadd.f32 0.0, %v1346
        %v1348 = vpop.f32.mrb[0].mxu0
        %1349 = vmatprep.mubr.bf16.mxu0 0
        %1350 = vmatmul.mubr.bf16.gmra.mrb[0].mxu0 %v1252
        %v1351 = vpop.f32.mrb[0].mxu0
        %v1352 = vadd.f32 0.0, %v1351
        %v1353 = vpop.f32.mrb[0].mxu0
        %v1354 = vpop.f32.mrb[0].mxu0
        %v1355 = vadd.f32 0.0, %v1354
        %v1356 = vpop.f32.mrb[0].mxu0
        %1357 = vmatprep.mubr.bf16.mxu0 0
        %1358 = vmatmul.mubr.bf16.gmra.mrb[0].mxu0 %v1255
        %v1359 = vpop.f32.mrb[0].mxu0
        %v1360 = vadd.f32 0.0, %v1359
        %v1361 = vpop.f32.mrb[0].mxu0
        %v1362 = vpop.f32.mrb[0].mxu0
        %v1363 = vadd.f32 0.0, %v1362
        %v1364 = vpop.f32.mrb[0].mxu0
        %1365 = vmatprep.mubr.bf16.mxu0 0
        %1366 = vmatmul.mubr.bf16.gmra.mrb[0].mxu0 %v1258
        %v1367 = vpop.f32.mrb[0].mxu0
        %v1368 = vadd.f32 0.0, %v1367
        %v1369 = vpop.f32.mrb[0].mxu0
        %v1370 = vpop.f32.mrb[0].mxu0
        %v1371 = vadd.f32 0.0, %v1370
        %v1372 = vpop.f32.mrb[0].mxu0
        %1373 = vmatprep.mubr.bf16.mxu0 0
        %1374 = vmatmul.mubr.bf16.gmra.mrb[0].mxu0 %v1261
        %v1375 = vpop.f32.mrb[0].mxu0
        %v1376 = vadd.f32 0.0, %v1375
        %v1377 = vpop.f32.mrb[0].mxu0
        %v1378 = vpop.f32.mrb[0].mxu0
        %v1379 = vadd.f32 0.0, %v1378
        %v1380 = vpop.f32.mrb[0].mxu0
        %1381 = vmatprep.mubr.bf16.mxu0 0
        %1382 = vmatmul.mubr.bf16.gmra.mrb[0].mxu0 %v1264
        %v1383 = vpop.f32.mrb[0].mxu0
        %v1384 = vadd.f32 0.0, %v1383
        %v1385 = vpop.f32.mrb[0].mxu0
        %v1386 = vpop.f32.mrb[0].mxu0
        %v1387 = vadd.f32 0.0, %v1386
        %v1388 = vpop.f32.mrb[0].mxu0
        %1389 = vmatprep.mubr.bf16.mxu0 0
        %1390 = vmatmul.mubr.bf16.gmra.mrb[0].mxu0 %v1267
        %v1391 = vpop.f32.mrb[0].mxu0
        %v1392 = vadd.f32 0.0, %v1391
        %v1393 = vpop.f32.mrb[0].mxu0
        %v1394 = vpop.f32.mrb[0].mxu0
        %v1395 = vadd.f32 0.0, %v1394
        %v1396 = vpop.f32.mrb[0].mxu0
        %1397 = vmatprep.mubr.bf16.mxu0 0
        %1398 = vmatmul.mubr.bf16.gmra.mrb[0].mxu0 %v1270
        %v1399 = vpop.f32.mrb[0].mxu0
        %v1400 = vadd.f32 0.0, %v1399
        %v1401 = vpop.f32.mrb[0].mxu0
        %v1402 = vpop.f32.mrb[0].mxu0
        %v1403 = vadd.f32 0.0, %v1402
        %v1404 = vpop.f32.mrb[0].mxu0
        %1405 = vmatprep.mubr.bf16.mxu0 0
        %1406 = vmatmul.mubr.bf16.gmra.mrb[0].mxu0 %v1273
        %v1407 = vpop.f32.mrb[0].mxu0
        %v1408 = vadd.f32 0.0, %v1407
        %v1409 = vpop.f32.mrb[0].mxu0
        %v1410 = vpop.f32.mrb[0].mxu0
        %v1411 = vadd.f32 0.0, %v1410
        %v1412 = vpop.f32.mrb[0].mxu0
        %1413 = vmatprep.mubr.bf16.mxu0 0
        %1414 = vmatmul.mubr.bf16.gmra.mrb[0].mxu0 %v1276
        %v1415 = vpop.f32.mrb[0].mxu0
        %v1416 = vadd.f32 0.0, %v1415
        %v1417 = vpop.f32.mrb[0].mxu0
        %v1418 = vpop.f32.mrb[0].mxu0
        %v1419 = vadd.f32 0.0, %v1418
        %v1420 = vpop.f32.mrb[0].mxu0
        %1421 = vmatprep.mubr.bf16.mxu0 0
        %1422 = vmatmul.mubr.bf16.gmra.mrb[0].mxu0 %v1279
        %v1423 = vpop.f32.mrb[0].mxu0
        %v1424 = vadd.f32 0.0, %v1423
        %v1425 = vpop.f32.mrb[0].mxu0
        %v1426 = vpop.f32.mrb[0].mxu0
        %v1427 = vadd.f32 0.0, %v1426
        %v1428 = vpop.f32.mrb[0].mxu0
        %1429 = vmatprep.mubr.bf16.mxu0 0
        %1430 = vmatmul.mubr.bf16.gmra.mrb[0].mxu0 %v1282
        %v1431 = vpop.f32.mrb[0].mxu0
        %v1432 = vadd.f32 0.0, %v1431
        %v1433 = vpop.f32.mrb[0].mxu0
        %v1434 = vpop.f32.mrb[0].mxu0
        %v1435 = vadd.f32 0.0, %v1434
        %v1436 = vpop.f32.mrb[0].mxu0
        %1437 = vmatprep.mubr.bf16.mxu0 0
        %1438 = vmatmul.mubr.bf16.gmra.mrb[0].mxu0 %v1285
        %v1439 = vpop.f32.mrb[0].mxu0
        %v1440 = vadd.f32 0.0, %v1439
        %v1441 = vpop.f32.mrb[0].mxu0
        %v1442 = vpop.f32.mrb[0].mxu0
        %v1443 = vadd.f32 0.0, %v1442
        %v1444 = vpop.f32.mrb[0].mxu0
        %1445 = vmatprep.mubr.bf16.mxu0 0
        %1446 = vmatmul.mubr.bf16.gmra.mrb[0].mxu0 %v1288
        %v1447 = vpop.f32.mrb[0].mxu0
        %v1448 = vadd.f32 0.0, %v1447
        %v1449 = vpop.f32.mrb[0].mxu0
        %v1450 = vpop.f32.mrb[0].mxu0
        %v1451 = vadd.f32 0.0, %v1450
        %v1452 = vpop.f32.mrb[0].mxu0
        %1453 = vdwg.mxu0
        %v1454 = vadd.f32 %v1160, %v1328
        %v1455 = vadd.f32 %v1161, %v1331
        %v1456 = vadd.f32 %v1162, %v1336
        %v1457 = vadd.f32 %v1163, %v1339
        %v1458 = vadd.f32 %v1164, %v1344
        %v1459 = vadd.f32 %v1165, %v1347
        %v1460 = vadd.f32 %v1166, %v1352
        %v1461 = vadd.f32 %v1167, %v1355
        %v1462 = vadd.f32 %v1168, %v1360
        %v1463 = vadd.f32 %v1169, %v1363
        %v1464 = vadd.f32 %v1170, %v1368
        %v1465 = vadd.f32 %v1171, %v1371
        %v1466 = vadd.f32 %v1172, %v1376
        %v1467 = vadd.f32 %v1173, %v1379
        %v1468 = vadd.f32 %v1174, %v1384
        %v1469 = vadd.f32 %v1175, %v1387
        %v1470 = vadd.f32 %v1176, %v1392
        %v1471 = vadd.f32 %v1177, %v1395
        %v1472 = vadd.f32 %v1178, %v1400
        %v1473 = vadd.f32 %v1179, %v1403
        %v1474 = vadd.f32 %v1180, %v1408
        %v1475 = vadd.f32 %v1181, %v1411
        %v1476 = vadd.f32 %v1182, %v1416
        %v1477 = vadd.f32 %v1183, %v1419
        %v1478 = vadd.f32 %v1184, %v1424
        %v1479 = vadd.f32 %v1185, %v1427
        %v1480 = vadd.f32 %v1186, %v1432
        %v1481 = vadd.f32 %v1187, %v1435
        %v1482 = vadd.f32 %v1188, %v1440
        %v1483 = vadd.f32 %v1189, %v1443
        %v1484 = vadd.f32 %v1190, %v1448
        %v1485 = vadd.f32 %v1191, %v1451
        %v1486 = vld [vmem:[%s234 + $0x8] sm:$0xff]
        %v1487 = vld [vmem:[%s234 + $0x10] sm:$0xff]
        %v1488 = vld [vmem:[%s234 + $0x28] sm:$0xff]
        %v1489 = vld [vmem:[%s234 + $0x30] sm:$0xff]
        %v1490 = vld [vmem:[%s234 + $0x48] sm:$0xff]
        %v1491 = vld [vmem:[%s234 + $0x50] sm:$0xff]
        %v1492 = vld [vmem:[%s234 + $0x68] sm:$0xff]
        %v1493 = vld [vmem:[%s234 + $0x70] sm:$0xff]
        %v1494 = vld [vmem:[%s234 + $0x88] sm:$0xff]
        %v1495 = vld [vmem:[%s234 + $0x90] sm:$0xff]
        %v1496 = vld [vmem:[%s234 + $0xa8] sm:$0xff]
        %v1497 = vld [vmem:[%s234 + $0xb0] sm:$0xff]
        %v1498 = vld [vmem:[%s234 + $0xc8] sm:$0xff]
        %v1499 = vld [vmem:[%s234 + $0xd0] sm:$0xff]
        %v1500 = vld [vmem:[%s234 + $0xe8] sm:$0xff]
        %v1501 = vld [vmem:[%s234 + $0xf0] sm:$0xff]
        %v1502 = vld [vmem:[%s234 + $0x108] sm:$0xff]
        %v1503 = vld [vmem:[%s234 + $0x110] sm:$0xff]
        %v1504 = vld [vmem:[%s234 + $0x128] sm:$0xff]
        %v1505 = vld [vmem:[%s234 + $0x130] sm:$0xff]
        %v1506 = vld [vmem:[%s234 + $0x148] sm:$0xff]
        %v1507 = vld [vmem:[%s234 + $0x150] sm:$0xff]
        %v1508 = vld [vmem:[%s234 + $0x168] sm:$0xff]
        %v1509 = vld [vmem:[%s234 + $0x170] sm:$0xff]
        %v1510 = vld [vmem:[%s234 + $0x188] sm:$0xff]
        %v1511 = vld [vmem:[%s234 + $0x190] sm:$0xff]
        %v1512 = vld [vmem:[%s234 + $0x1a8] sm:$0xff]
        %v1513 = vld [vmem:[%s234 + $0x1b0] sm:$0xff]
        %v1514 = vld [vmem:[%s234 + $0x1c8] sm:$0xff]
        %v1515 = vld [vmem:[%s234 + $0x1d0] sm:$0xff]
        %v1516 = vld [vmem:[%s234 + $0x1e8] sm:$0xff]
        %v1517 = vld [vmem:[%s234 + $0x1f0] sm:$0xff]
        %v1518 = vpack.c.bf16 %v1487, %v1486
        %v1519 = vpack.c.bf16 %v1489, %v1488
        %v1520 = vpack.c.bf16 %v1491, %v1490
        %v1521 = vpack.c.bf16 %v1493, %v1492
        %v1522 = vpack.c.bf16 %v1495, %v1494
        %v1523 = vpack.c.bf16 %v1497, %v1496
        %v1524 = vpack.c.bf16 %v1499, %v1498
        %v1525 = vpack.c.bf16 %v1501, %v1500
        %v1526 = vpack.c.bf16 %v1503, %v1502
        %v1527 = vpack.c.bf16 %v1505, %v1504
        %v1528 = vpack.c.bf16 %v1507, %v1506
        %v1529 = vpack.c.bf16 %v1509, %v1508
        %v1530 = vpack.c.bf16 %v1511, %v1510
        %v1531 = vpack.c.bf16 %v1513, %v1512
        %v1532 = vpack.c.bf16 %v1515, %v1514
        %v1533 = vpack.c.bf16 %v1517, %v1516
        %s1534 = scalar_lea.vmem %s1, 8
        %v1535 = vld [vmem:[%s1534] sm:$0x3]
        %v1537 = vsel %vm224, %v1518, 0
        %v1540 = vsel %vm224, %v1519, 0
        %v1543 = vsel %vm224, %v1520, 0
        %v1546 = vsel %vm224, %v1521, 0
        %v1549 = vsel %vm224, %v1522, 0
        %v1552 = vsel %vm224, %v1523, 0
        %v1555 = vsel %vm224, %v1524, 0
        %v1558 = vsel %vm224, %v1525, 0
        %v1561 = vsel %vm224, %v1526, 0
        %v1564 = vsel %vm224, %v1527, 0
        %v1567 = vsel %vm224, %v1528, 0
        %v1570 = vsel %vm224, %v1529, 0
        %v1573 = vsel %vm224, %v1530, 0
        %v1576 = vsel %vm224, %v1531, 0
        %v1579 = vsel %vm224, %v1532, 0
        %v1582 = vsel %vm224, %v1533, 0
        %v1585 = vsel %vm521, %v1535, 0
        %1587 = vmatprep.subr.bf16.mxu0 0
        %1588 = vmatpush1.bf16.msra.mxu0 %v1585
        %1589 = vmatprep.subr.bf16.mxu0 0
        %1590 = vmatpush1.bf16.msra.mxu0 0
        %1591 = vmatprep.subr.bf16.mxu0 0
        %1592 = vmatpush1.bf16.msra.mxu0 0
        %1593 = vmatprep.subr.bf16.mxu0 0
        %1594 = vmatpush1.bf16.msra.mxu0 0
        %1595 = vmatprep.subr.bf16.mxu0 0
        %1596 = vmatpush1.bf16.msra.mxu0 0
        %1597 = vmatprep.subr.bf16.mxu0 0
        %1598 = vmatpush1.bf16.msra.mxu0 0
        %1599 = vmatprep.subr.bf16.mxu0 0
        %1600 = vmatpush1.bf16.msra.mxu0 0
        %1601 = vmatprep.subr.bf16.mxu0 0
        %1602 = vmatpush1.bf16.msra.mxu0 0
        %1603 = vmatprep.subr.bf16.mxu0 0
        %1604 = vmatpush1.bf16.msra.mxu0 0
        %1605 = vmatprep.subr.bf16.mxu0 0
        %1606 = vmatpush1.bf16.msra.mxu0 0
        %1607 = vmatprep.subr.bf16.mxu0 0
        %1608 = vmatpush1.bf16.msra.mxu0 0
        %1609 = vmatprep.subr.bf16.mxu0 0
        %1610 = vmatpush1.bf16.msra.mxu0 0
        %1611 = vmatprep.subr.bf16.mxu0 0
        %1612 = vmatpush1.bf16.msra.mxu0 0
        %1613 = vmatprep.subr.bf16.mxu0 0
        %1614 = vmatpush1.bf16.msra.mxu0 0
        %1615 = vmatprep.subr.bf16.mxu0 0
        %1616 = vmatpush1.bf16.msra.mxu0 0
        %1617 = vmatprep.subr.bf16.mxu0 0
        %1618 = vmatpush1.bf16.msra.mxu0 0
        %1619 = vmatprep.mubr.bf16.mxu0 0
        %1620 = vmatmul.mubr.bf16.gmra.mrb[0].mxu0 %v1537
        %v1621 = vpop.f32.mrb[0].mxu0
        %v1622 = vadd.f32 0.0, %v1621
        %v1623 = vpop.f32.mrb[0].mxu0
        %v1624 = vpop.f32.mrb[0].mxu0
        %v1625 = vadd.f32 0.0, %v1624
        %v1626 = vpop.f32.mrb[0].mxu0
        %1627 = vmatprep.mubr.bf16.mxu0 0
        %1628 = vmatmul.mubr.bf16.gmra.mrb[0].mxu0 %v1540
        %v1629 = vpop.f32.mrb[0].mxu0
        %v1630 = vadd.f32 0.0, %v1629
        %v1631 = vpop.f32.mrb[0].mxu0
        %v1632 = vpop.f32.mrb[0].mxu0
        %v1633 = vadd.f32 0.0, %v1632
        %v1634 = vpop.f32.mrb[0].mxu0
        %1635 = vmatprep.mubr.bf16.mxu0 0
        %1636 = vmatmul.mubr.bf16.gmra.mrb[0].mxu0 %v1543
        %v1637 = vpop.f32.mrb[0].mxu0
        %v1638 = vadd.f32 0.0, %v1637
        %v1639 = vpop.f32.mrb[0].mxu0
        %v1640 = vpop.f32.mrb[0].mxu0
        %v1641 = vadd.f32 0.0, %v1640
        %v1642 = vpop.f32.mrb[0].mxu0
        %1643 = vmatprep.mubr.bf16.mxu0 0
        %1644 = vmatmul.mubr.bf16.gmra.mrb[0].mxu0 %v1546
        %v1645 = vpop.f32.mrb[0].mxu0
        %v1646 = vadd.f32 0.0, %v1645
        %v1647 = vpop.f32.mrb[0].mxu0
        %v1648 = vpop.f32.mrb[0].mxu0
        %v1649 = vadd.f32 0.0, %v1648
        %v1650 = vpop.f32.mrb[0].mxu0
        %1651 = vmatprep.mubr.bf16.mxu0 0
        %1652 = vmatmul.mubr.bf16.gmra.mrb[0].mxu0 %v1549
        %v1653 = vpop.f32.mrb[0].mxu0
        %v1654 = vadd.f32 0.0, %v1653
        %v1655 = vpop.f32.mrb[0].mxu0
        %v1656 = vpop.f32.mrb[0].mxu0
        %v1657 = vadd.f32 0.0, %v1656
        %v1658 = vpop.f32.mrb[0].mxu0
        %1659 = vmatprep.mubr.bf16.mxu0 0
        %1660 = vmatmul.mubr.bf16.gmra.mrb[0].mxu0 %v1552
        %v1661 = vpop.f32.mrb[0].mxu0
        %v1662 = vadd.f32 0.0, %v1661
        %v1663 = vpop.f32.mrb[0].mxu0
        %v1664 = vpop.f32.mrb[0].mxu0
        %v1665 = vadd.f32 0.0, %v1664
        %v1666 = vpop.f32.mrb[0].mxu0
        %1667 = vmatprep.mubr.bf16.mxu0 0
        %1668 = vmatmul.mubr.bf16.gmra.mrb[0].mxu0 %v1555
        %v1669 = vpop.f32.mrb[0].mxu0
        %v1670 = vadd.f32 0.0, %v1669
        %v1671 = vpop.f32.mrb[0].mxu0
        %v1672 = vpop.f32.mrb[0].mxu0
        %v1673 = vadd.f32 0.0, %v1672
        %v1674 = vpop.f32.mrb[0].mxu0
        %1675 = vmatprep.mubr.bf16.mxu0 0
        %1676 = vmatmul.mubr.bf16.gmra.mrb[0].mxu0 %v1558
        %v1677 = vpop.f32.mrb[0].mxu0
        %v1678 = vadd.f32 0.0, %v1677
        %v1679 = vpop.f32.mrb[0].mxu0
        %v1680 = vpop.f32.mrb[0].mxu0
        %v1681 = vadd.f32 0.0, %v1680
        %v1682 = vpop.f32.mrb[0].mxu0
        %1683 = vmatprep.mubr.bf16.mxu0 0
        %1684 = vmatmul.mubr.bf16.gmra.mrb[0].mxu0 %v1561
        %v1685 = vpop.f32.mrb[0].mxu0
        %v1686 = vadd.f32 0.0, %v1685
        %v1687 = vpop.f32.mrb[0].mxu0
        %v1688 = vpop.f32.mrb[0].mxu0
        %v1689 = vadd.f32 0.0, %v1688
        %v1690 = vpop.f32.mrb[0].mxu0
        %1691 = vmatprep.mubr.bf16.mxu0 0
        %1692 = vmatmul.mubr.bf16.gmra.mrb[0].mxu0 %v1564
        %v1693 = vpop.f32.mrb[0].mxu0
        %v1694 = vadd.f32 0.0, %v1693
        %v1695 = vpop.f32.mrb[0].mxu0
        %v1696 = vpop.f32.mrb[0].mxu0
        %v1697 = vadd.f32 0.0, %v1696
        %v1698 = vpop.f32.mrb[0].mxu0
        %1699 = vmatprep.mubr.bf16.mxu0 0
        %1700 = vmatmul.mubr.bf16.gmra.mrb[0].mxu0 %v1567
        %v1701 = vpop.f32.mrb[0].mxu0
        %v1702 = vadd.f32 0.0, %v1701
        %v1703 = vpop.f32.mrb[0].mxu0
        %v1704 = vpop.f32.mrb[0].mxu0
        %v1705 = vadd.f32 0.0, %v1704
        %v1706 = vpop.f32.mrb[0].mxu0
        %1707 = vmatprep.mubr.bf16.mxu0 0
        %1708 = vmatmul.mubr.bf16.gmra.mrb[0].mxu0 %v1570
        %v1709 = vpop.f32.mrb[0].mxu0
        %v1710 = vadd.f32 0.0, %v1709
        %v1711 = vpop.f32.mrb[0].mxu0
        %v1712 = vpop.f32.mrb[0].mxu0
        %v1713 = vadd.f32 0.0, %v1712
        %v1714 = vpop.f32.mrb[0].mxu0
        %1715 = vmatprep.mubr.bf16.mxu0 0
        %1716 = vmatmul.mubr.bf16.gmra.mrb[0].mxu0 %v1573
        %v1717 = vpop.f32.mrb[0].mxu0
        %v1718 = vadd.f32 0.0, %v1717
        %v1719 = vpop.f32.mrb[0].mxu0
        %v1720 = vpop.f32.mrb[0].mxu0
        %v1721 = vadd.f32 0.0, %v1720
        %v1722 = vpop.f32.mrb[0].mxu0
        %1723 = vmatprep.mubr.bf16.mxu0 0
        %1724 = vmatmul.mubr.bf16.gmra.mrb[0].mxu0 %v1576
        %v1725 = vpop.f32.mrb[0].mxu0
        %v1726 = vadd.f32 0.0, %v1725
        %v1727 = vpop.f32.mrb[0].mxu0
        %v1728 = vpop.f32.mrb[0].mxu0
        %v1729 = vadd.f32 0.0, %v1728
        %v1730 = vpop.f32.mrb[0].mxu0
        %1731 = vmatprep.mubr.bf16.mxu0 0
        %1732 = vmatmul.mubr.bf16.gmra.mrb[0].mxu0 %v1579
        %v1733 = vpop.f32.mrb[0].mxu0
        %v1734 = vadd.f32 0.0, %v1733
        %v1735 = vpop.f32.mrb[0].mxu0
        %v1736 = vpop.f32.mrb[0].mxu0
        %v1737 = vadd.f32 0.0, %v1736
        %v1738 = vpop.f32.mrb[0].mxu0
        %1739 = vmatprep.mubr.bf16.mxu0 0
        %1740 = vmatmul.mubr.bf16.gmra.mrb[0].mxu0 %v1582
        %v1741 = vpop.f32.mrb[0].mxu0
        %v1742 = vadd.f32 0.0, %v1741
        %v1743 = vpop.f32.mrb[0].mxu0
        %v1744 = vpop.f32.mrb[0].mxu0
        %v1745 = vadd.f32 0.0, %v1744
        %v1746 = vpop.f32.mrb[0].mxu0
        %1747 = vdwg.mxu0
        %v1748 = vadd.f32 %v1454, %v1622
        %v1749 = vadd.f32 %v1455, %v1625
        %v1750 = vadd.f32 %v1456, %v1630
        %v1751 = vadd.f32 %v1457, %v1633
        %v1752 = vadd.f32 %v1458, %v1638
        %v1753 = vadd.f32 %v1459, %v1641
        %v1754 = vadd.f32 %v1460, %v1646
        %v1755 = vadd.f32 %v1461, %v1649
        %v1756 = vadd.f32 %v1462, %v1654
        %v1757 = vadd.f32 %v1463, %v1657
        %v1758 = vadd.f32 %v1464, %v1662
        %v1759 = vadd.f32 %v1465, %v1665
        %v1760 = vadd.f32 %v1466, %v1670
        %v1761 = vadd.f32 %v1467, %v1673
        %v1762 = vadd.f32 %v1468, %v1678
        %v1763 = vadd.f32 %v1469, %v1681
        %v1764 = vadd.f32 %v1470, %v1686
        %v1765 = vadd.f32 %v1471, %v1689
        %v1766 = vadd.f32 %v1472, %v1694
        %v1767 = vadd.f32 %v1473, %v1697
        %v1768 = vadd.f32 %v1474, %v1702
        %v1769 = vadd.f32 %v1475, %v1705
        %v1770 = vadd.f32 %v1476, %v1710
        %v1771 = vadd.f32 %v1477, %v1713
        %v1772 = vadd.f32 %v1478, %v1718
        %v1773 = vadd.f32 %v1479, %v1721
        %v1774 = vadd.f32 %v1480, %v1726
        %v1775 = vadd.f32 %v1481, %v1729
        %v1776 = vadd.f32 %v1482, %v1734
        %v1777 = vadd.f32 %v1483, %v1737
        %v1778 = vadd.f32 %v1484, %v1742
        %v1779 = vadd.f32 %v1485, %v1745
        %v1780 = vld [vmem:[%s234 + $0x9] sm:$0xff]
        %v1781 = vld [vmem:[%s234 + $0x11] sm:$0xff]
        %v1782 = vld [vmem:[%s234 + $0x29] sm:$0xff]
        %v1783 = vld [vmem:[%s234 + $0x31] sm:$0xff]
        %v1784 = vld [vmem:[%s234 + $0x49] sm:$0xff]
        %v1785 = vld [vmem:[%s234 + $0x51] sm:$0xff]
        %v1786 = vld [vmem:[%s234 + $0x69] sm:$0xff]
        %v1787 = vld [vmem:[%s234 + $0x71] sm:$0xff]
        %v1788 = vld [vmem:[%s234 + $0x89] sm:$0xff]
        %v1789 = vld [vmem:[%s234 + $0x91] sm:$0xff]
        %v1790 = vld [vmem:[%s234 + $0xa9] sm:$0xff]
        %v1791 = vld [vmem:[%s234 + $0xb1] sm:$0xff]
        %v1792 = vld [vmem:[%s234 + $0xc9] sm:$0xff]
        %v1793 = vld [vmem:[%s234 + $0xd1] sm:$0xff]
        %v1794 = vld [vmem:[%s234 + $0xe9] sm:$0xff]
        %v1795 = vld [vmem:[%s234 + $0xf1] sm:$0xff]
        %v1796 = vld [vmem:[%s234 + $0x109] sm:$0xff]
        %v1797 = vld [vmem:[%s234 + $0x111] sm:$0xff]
        %v1798 = vld [vmem:[%s234 + $0x129] sm:$0xff]
        %v1799 = vld [vmem:[%s234 + $0x131] sm:$0xff]
        %v1800 = vld [vmem:[%s234 + $0x149] sm:$0xff]
        %v1801 = vld [vmem:[%s234 + $0x151] sm:$0xff]
        %v1802 = vld [vmem:[%s234 + $0x169] sm:$0xff]
        %v1803 = vld [vmem:[%s234 + $0x171] sm:$0xff]
        %v1804 = vld [vmem:[%s234 + $0x189] sm:$0xff]
        %v1805 = vld [vmem:[%s234 + $0x191] sm:$0xff]
        %v1806 = vld [vmem:[%s234 + $0x1a9] sm:$0xff]
        %v1807 = vld [vmem:[%s234 + $0x1b1] sm:$0xff]
        %v1808 = vld [vmem:[%s234 + $0x1c9] sm:$0xff]
        %v1809 = vld [vmem:[%s234 + $0x1d1] sm:$0xff]
        %v1810 = vld [vmem:[%s234 + $0x1e9] sm:$0xff]
        %v1811 = vld [vmem:[%s234 + $0x1f1] sm:$0xff]
        %v1812 = vpack.c.bf16 %v1781, %v1780
        %v1813 = vpack.c.bf16 %v1783, %v1782
        %v1814 = vpack.c.bf16 %v1785, %v1784
        %v1815 = vpack.c.bf16 %v1787, %v1786
        %v1816 = vpack.c.bf16 %v1789, %v1788
        %v1817 = vpack.c.bf16 %v1791, %v1790
        %v1818 = vpack.c.bf16 %v1793, %v1792
        %v1819 = vpack.c.bf16 %v1795, %v1794
        %v1820 = vpack.c.bf16 %v1797, %v1796
        %v1821 = vpack.c.bf16 %v1799, %v1798
        %v1822 = vpack.c.bf16 %v1801, %v1800
        %v1823 = vpack.c.bf16 %v1803, %v1802
        %v1824 = vpack.c.bf16 %v1805, %v1804
        %v1825 = vpack.c.bf16 %v1807, %v1806
        %v1826 = vpack.c.bf16 %v1809, %v1808
        %v1827 = vpack.c.bf16 %v1811, %v1810
        %s1828 = scalar_lea.vmem %s1, 10
        %v1829 = vld [vmem:[%s1828] sm:$0x3]
        %v1831 = vsel %vm224, %v1812, 0
        %v1834 = vsel %vm224, %v1813, 0
        %v1837 = vsel %vm224, %v1814, 0
        %v1840 = vsel %vm224, %v1815, 0
        %v1843 = vsel %vm224, %v1816, 0
        %v1846 = vsel %vm224, %v1817, 0
        %v1849 = vsel %vm224, %v1818, 0
        %v1852 = vsel %vm224, %v1819, 0
        %v1855 = vsel %vm224, %v1820, 0
        %v1858 = vsel %vm224, %v1821, 0
        %v1861 = vsel %vm224, %v1822, 0
        %v1864 = vsel %vm224, %v1823, 0
        %v1867 = vsel %vm224, %v1824, 0
        %v1870 = vsel %vm224, %v1825, 0
        %v1873 = vsel %vm224, %v1826, 0
        %v1876 = vsel %vm224, %v1827, 0
        %v1879 = vsel %vm521, %v1829, 0
        %1881 = vmatprep.subr.bf16.mxu0 0
        %1882 = vmatpush1.bf16.msra.mxu0 %v1879
        %1883 = vmatprep.subr.bf16.mxu0 0
        %1884 = vmatpush1.bf16.msra.mxu0 0
        %1885 = vmatprep.subr.bf16.mxu0 0
        %1886 = vmatpush1.bf16.msra.mxu0 0
        %1887 = vmatprep.subr.bf16.mxu0 0
        %1888 = vmatpush1.bf16.msra.mxu0 0
        %1889 = vmatprep.subr.bf16.mxu0 0
        %1890 = vmatpush1.bf16.msra.mxu0 0
        %1891 = vmatprep.subr.bf16.mxu0 0
        %1892 = vmatpush1.bf16.msra.mxu0 0
        %1893 = vmatprep.subr.bf16.mxu0 0
        %1894 = vmatpush1.bf16.msra.mxu0 0
        %1895 = vmatprep.subr.bf16.mxu0 0
        %1896 = vmatpush1.bf16.msra.mxu0 0
        %1897 = vmatprep.subr.bf16.mxu0 0
        %1898 = vmatpush1.bf16.msra.mxu0 0
        %1899 = vmatprep.subr.bf16.mxu0 0
        %1900 = vmatpush1.bf16.msra.mxu0 0
        %1901 = vmatprep.subr.bf16.mxu0 0
        %1902 = vmatpush1.bf16.msra.mxu0 0
        %1903 = vmatprep.subr.bf16.mxu0 0
        %1904 = vmatpush1.bf16.msra.mxu0 0
        %1905 = vmatprep.subr.bf16.mxu0 0
        %1906 = vmatpush1.bf16.msra.mxu0 0
        %1907 = vmatprep.subr.bf16.mxu0 0
        %1908 = vmatpush1.bf16.msra.mxu0 0
        %1909 = vmatprep.subr.bf16.mxu0 0
        %1910 = vmatpush1.bf16.msra.mxu0 0
        %1911 = vmatprep.subr.bf16.mxu0 0
        %1912 = vmatpush1.bf16.msra.mxu0 0
        %1913 = vmatprep.mubr.bf16.mxu0 0
        %1914 = vmatmul.mubr.bf16.gmra.mrb[0].mxu0 %v1831
        %v1915 = vpop.f32.mrb[0].mxu0
        %v1916 = vadd.f32 0.0, %v1915
        %v1917 = vpop.f32.mrb[0].mxu0
        %v1918 = vpop.f32.mrb[0].mxu0
        %v1919 = vadd.f32 0.0, %v1918
        %v1920 = vpop.f32.mrb[0].mxu0
        %1921 = vmatprep.mubr.bf16.mxu0 0
        %1922 = vmatmul.mubr.bf16.gmra.mrb[0].mxu0 %v1834
        %v1923 = vpop.f32.mrb[0].mxu0
        %v1924 = vadd.f32 0.0, %v1923
        %v1925 = vpop.f32.mrb[0].mxu0
        %v1926 = vpop.f32.mrb[0].mxu0
        %v1927 = vadd.f32 0.0, %v1926
        %v1928 = vpop.f32.mrb[0].mxu0
        %1929 = vmatprep.mubr.bf16.mxu0 0
        %1930 = vmatmul.mubr.bf16.gmra.mrb[0].mxu0 %v1837
        %v1931 = vpop.f32.mrb[0].mxu0
        %v1932 = vadd.f32 0.0, %v1931
        %v1933 = vpop.f32.mrb[0].mxu0
        %v1934 = vpop.f32.mrb[0].mxu0
        %v1935 = vadd.f32 0.0, %v1934
        %v1936 = vpop.f32.mrb[0].mxu0
        %1937 = vmatprep.mubr.bf16.mxu0 0
        %1938 = vmatmul.mubr.bf16.gmra.mrb[0].mxu0 %v1840
        %v1939 = vpop.f32.mrb[0].mxu0
        %v1940 = vadd.f32 0.0, %v1939
        %v1941 = vpop.f32.mrb[0].mxu0
        %v1942 = vpop.f32.mrb[0].mxu0
        %v1943 = vadd.f32 0.0, %v1942
        %v1944 = vpop.f32.mrb[0].mxu0
        %1945 = vmatprep.mubr.bf16.mxu0 0
        %1946 = vmatmul.mubr.bf16.gmra.mrb[0].mxu0 %v1843
        %v1947 = vpop.f32.mrb[0].mxu0
        %v1948 = vadd.f32 0.0, %v1947
        %v1949 = vpop.f32.mrb[0].mxu0
        %v1950 = vpop.f32.mrb[0].mxu0
        %v1951 = vadd.f32 0.0, %v1950
        %v1952 = vpop.f32.mrb[0].mxu0
        %1953 = vmatprep.mubr.bf16.mxu0 0
        %1954 = vmatmul.mubr.bf16.gmra.mrb[0].mxu0 %v1846
        %v1955 = vpop.f32.mrb[0].mxu0
        %v1956 = vadd.f32 0.0, %v1955
        %v1957 = vpop.f32.mrb[0].mxu0
        %v1958 = vpop.f32.mrb[0].mxu0
        %v1959 = vadd.f32 0.0, %v1958
        %v1960 = vpop.f32.mrb[0].mxu0
        %1961 = vmatprep.mubr.bf16.mxu0 0
        %1962 = vmatmul.mubr.bf16.gmra.mrb[0].mxu0 %v1849
        %v1963 = vpop.f32.mrb[0].mxu0
        %v1964 = vadd.f32 0.0, %v1963
        %v1965 = vpop.f32.mrb[0].mxu0
        %v1966 = vpop.f32.mrb[0].mxu0
        %v1967 = vadd.f32 0.0, %v1966
        %v1968 = vpop.f32.mrb[0].mxu0
        %1969 = vmatprep.mubr.bf16.mxu0 0
        %1970 = vmatmul.mubr.bf16.gmra.mrb[0].mxu0 %v1852
        %v1971 = vpop.f32.mrb[0].mxu0
        %v1972 = vadd.f32 0.0, %v1971
        %v1973 = vpop.f32.mrb[0].mxu0
        %v1974 = vpop.f32.mrb[0].mxu0
        %v1975 = vadd.f32 0.0, %v1974
        %v1976 = vpop.f32.mrb[0].mxu0
        %1977 = vmatprep.mubr.bf16.mxu0 0
        %1978 = vmatmul.mubr.bf16.gmra.mrb[0].mxu0 %v1855
        %v1979 = vpop.f32.mrb[0].mxu0
        %v1980 = vadd.f32 0.0, %v1979
        %v1981 = vpop.f32.mrb[0].mxu0
        %v1982 = vpop.f32.mrb[0].mxu0
        %v1983 = vadd.f32 0.0, %v1982
        %v1984 = vpop.f32.mrb[0].mxu0
        %1985 = vmatprep.mubr.bf16.mxu0 0
        %1986 = vmatmul.mubr.bf16.gmra.mrb[0].mxu0 %v1858
        %v1987 = vpop.f32.mrb[0].mxu0
        %v1988 = vadd.f32 0.0, %v1987
        %v1989 = vpop.f32.mrb[0].mxu0
        %v1990 = vpop.f32.mrb[0].mxu0
        %v1991 = vadd.f32 0.0, %v1990
        %v1992 = vpop.f32.mrb[0].mxu0
        %1993 = vmatprep.mubr.bf16.mxu0 0
        %1994 = vmatmul.mubr.bf16.gmra.mrb[0].mxu0 %v1861
        %v1995 = vpop.f32.mrb[0].mxu0
        %v1996 = vadd.f32 0.0, %v1995
        %v1997 = vpop.f32.mrb[0].mxu0
        %v1998 = vpop.f32.mrb[0].mxu0
        %v1999 = vadd.f32 0.0, %v1998
        %v2000 = vpop.f32.mrb[0].mxu0
        %2001 = vmatprep.mubr.bf16.mxu0 0
        %2002 = vmatmul.mubr.bf16.gmra.mrb[0].mxu0 %v1864
        %v2003 = vpop.f32.mrb[0].mxu0
        %v2004 = vadd.f32 0.0, %v2003
        %v2005 = vpop.f32.mrb[0].mxu0
        %v2006 = vpop.f32.mrb[0].mxu0
        %v2007 = vadd.f32 0.0, %v2006
        %v2008 = vpop.f32.mrb[0].mxu0
        %2009 = vmatprep.mubr.bf16.mxu0 0
        %2010 = vmatmul.mubr.bf16.gmra.mrb[0].mxu0 %v1867
        %v2011 = vpop.f32.mrb[0].mxu0
        %v2012 = vadd.f32 0.0, %v2011
        %v2013 = vpop.f32.mrb[0].mxu0
        %v2014 = vpop.f32.mrb[0].mxu0
        %v2015 = vadd.f32 0.0, %v2014
        %v2016 = vpop.f32.mrb[0].mxu0
        %2017 = vmatprep.mubr.bf16.mxu0 0
        %2018 = vmatmul.mubr.bf16.gmra.mrb[0].mxu0 %v1870
        %v2019 = vpop.f32.mrb[0].mxu0
        %v2020 = vadd.f32 0.0, %v2019
        %v2021 = vpop.f32.mrb[0].mxu0
        %v2022 = vpop.f32.mrb[0].mxu0
        %v2023 = vadd.f32 0.0, %v2022
        %v2024 = vpop.f32.mrb[0].mxu0
        %2025 = vmatprep.mubr.bf16.mxu0 0
        %2026 = vmatmul.mubr.bf16.gmra.mrb[0].mxu0 %v1873
        %v2027 = vpop.f32.mrb[0].mxu0
        %v2028 = vadd.f32 0.0, %v2027
        %v2029 = vpop.f32.mrb[0].mxu0
        %v2030 = vpop.f32.mrb[0].mxu0
        %v2031 = vadd.f32 0.0, %v2030
        %v2032 = vpop.f32.mrb[0].mxu0
        %2033 = vmatprep.mubr.bf16.mxu0 0
        %2034 = vmatmul.mubr.bf16.gmra.mrb[0].mxu0 %v1876
        %v2035 = vpop.f32.mrb[0].mxu0
        %v2036 = vadd.f32 0.0, %v2035
        %v2037 = vpop.f32.mrb[0].mxu0
        %v2038 = vpop.f32.mrb[0].mxu0
        %v2039 = vadd.f32 0.0, %v2038
        %v2040 = vpop.f32.mrb[0].mxu0
        %2041 = vdwg.mxu0
        %v2042 = vadd.f32 %v1748, %v1916
        %v2043 = vadd.f32 %v1749, %v1919
        %v2044 = vadd.f32 %v1750, %v1924
        %v2045 = vadd.f32 %v1751, %v1927
        %v2046 = vadd.f32 %v1752, %v1932
        %v2047 = vadd.f32 %v1753, %v1935
        %v2048 = vadd.f32 %v1754, %v1940
        %v2049 = vadd.f32 %v1755, %v1943
        %v2050 = vadd.f32 %v1756, %v1948
        %v2051 = vadd.f32 %v1757, %v1951
        %v2052 = vadd.f32 %v1758, %v1956
        %v2053 = vadd.f32 %v1759, %v1959
        %v2054 = vadd.f32 %v1760, %v1964
        %v2055 = vadd.f32 %v1761, %v1967
        %v2056 = vadd.f32 %v1762, %v1972
        %v2057 = vadd.f32 %v1763, %v1975
        %v2058 = vadd.f32 %v1764, %v1980
        %v2059 = vadd.f32 %v1765, %v1983
        %v2060 = vadd.f32 %v1766, %v1988
        %v2061 = vadd.f32 %v1767, %v1991
        %v2062 = vadd.f32 %v1768, %v1996
        %v2063 = vadd.f32 %v1769, %v1999
        %v2064 = vadd.f32 %v1770, %v2004
        %v2065 = vadd.f32 %v1771, %v2007
        %v2066 = vadd.f32 %v1772, %v2012
        %v2067 = vadd.f32 %v1773, %v2015
        %v2068 = vadd.f32 %v1774, %v2020
        %v2069 = vadd.f32 %v1775, %v2023
        %v2070 = vadd.f32 %v1776, %v2028
        %v2071 = vadd.f32 %v1777, %v2031
        %v2072 = vadd.f32 %v1778, %v2036
        %v2073 = vadd.f32 %v1779, %v2039
        %s2074 = scalar_lea.vmem [#allocation2], 64
        %v2075 = vld [vmem:[%s2074 + $0x7] sm:$0xff]
        %v2076 = vld [vmem:[%s2074 + $0xf] sm:$0xff]
        %v2077 = vld [vmem:[%s2074 + $0x27] sm:$0xff]
        %v2078 = vld [vmem:[%s2074 + $0x2f] sm:$0xff]
        %v2079 = vld [vmem:[%s2074 + $0x47] sm:$0xff]
        %v2080 = vld [vmem:[%s2074 + $0x4f] sm:$0xff]
        %v2081 = vld [vmem:[%s2074 + $0x67] sm:$0xff]
        %v2082 = vld [vmem:[%s2074 + $0x6f] sm:$0xff]
        %v2083 = vld [vmem:[%s2074 + $0x87] sm:$0xff]
        %v2084 = vld [vmem:[%s2074 + $0x8f] sm:$0xff]
        %v2085 = vld [vmem:[%s2074 + $0xa7] sm:$0xff]
        %v2086 = vld [vmem:[%s2074 + $0xaf] sm:$0xff]
        %v2087 = vld [vmem:[%s2074 + $0xc7] sm:$0xff]
        %v2088 = vld [vmem:[%s2074 + $0xcf] sm:$0xff]
        %v2089 = vld [vmem:[%s2074 + $0xe7] sm:$0xff]
        %v2090 = vld [vmem:[%s2074 + $0xef] sm:$0xff]
        %v2091 = vld [vmem:[%s2074 + $0x107] sm:$0xff]
        %v2092 = vld [vmem:[%s2074 + $0x10f] sm:$0xff]
        %v2093 = vld [vmem:[%s2074 + $0x127] sm:$0xff]
        %v2094 = vld [vmem:[%s2074 + $0x12f] sm:$0xff]
        %v2095 = vld [vmem:[%s2074 + $0x147] sm:$0xff]
        %v2096 = vld [vmem:[%s2074 + $0x14f] sm:$0xff]
        %v2097 = vld [vmem:[%s2074 + $0x167] sm:$0xff]
        %v2098 = vld [vmem:[%s2074 + $0x16f] sm:$0xff]
        %v2099 = vld [vmem:[%s2074 + $0x187] sm:$0xff]
        %v2100 = vld [vmem:[%s2074 + $0x18f] sm:$0xff]
        %v2101 = vld [vmem:[%s2074 + $0x1a7] sm:$0xff]
        %v2102 = vld [vmem:[%s2074 + $0x1af] sm:$0xff]
        %v2103 = vld [vmem:[%s2074 + $0x1c7] sm:$0xff]
        %v2104 = vld [vmem:[%s2074 + $0x1cf] sm:$0xff]
        %v2105 = vld [vmem:[%s2074 + $0x1e7] sm:$0xff]
        %v2106 = vld [vmem:[%s2074 + $0x1ef] sm:$0xff]
        %v2107 = vpack.c.bf16 %v2076, %v2075
        %v2108 = vpack.c.bf16 %v2078, %v2077
        %v2109 = vpack.c.bf16 %v2080, %v2079
        %v2110 = vpack.c.bf16 %v2082, %v2081
        %v2111 = vpack.c.bf16 %v2084, %v2083
        %v2112 = vpack.c.bf16 %v2086, %v2085
        %v2113 = vpack.c.bf16 %v2088, %v2087
        %v2114 = vpack.c.bf16 %v2090, %v2089
        %v2115 = vpack.c.bf16 %v2092, %v2091
        %v2116 = vpack.c.bf16 %v2094, %v2093
        %v2117 = vpack.c.bf16 %v2096, %v2095
        %v2118 = vpack.c.bf16 %v2098, %v2097
        %v2119 = vpack.c.bf16 %v2100, %v2099
        %v2120 = vpack.c.bf16 %v2102, %v2101
        %v2121 = vpack.c.bf16 %v2104, %v2103
        %v2122 = vpack.c.bf16 %v2106, %v2105
        %s2123 = scalar_lea.vmem %s1, 12
        %v2124 = vld [vmem:[%s2123] sm:$0x3]
        %v2126 = vsel %vm224, %v2107, 0
        %v2129 = vsel %vm224, %v2108, 0
        %v2132 = vsel %vm224, %v2109, 0
        %v2135 = vsel %vm224, %v2110, 0
        %v2138 = vsel %vm224, %v2111, 0
        %v2141 = vsel %vm224, %v2112, 0
        %v2144 = vsel %vm224, %v2113, 0
        %v2147 = vsel %vm224, %v2114, 0
        %v2150 = vsel %vm224, %v2115, 0
        %v2153 = vsel %vm224, %v2116, 0
        %v2156 = vsel %vm224, %v2117, 0
        %v2159 = vsel %vm224, %v2118, 0
        %v2162 = vsel %vm224, %v2119, 0
        %v2165 = vsel %vm224, %v2120, 0
        %v2168 = vsel %vm224, %v2121, 0
        %v2171 = vsel %vm224, %v2122, 0
        %v2174 = vsel %vm521, %v2124, 0
        %2176 = vmatprep.subr.bf16.mxu0 0
        %2177 = vmatpush1.bf16.msra.mxu0 %v2174
        %2178 = vmatprep.subr.bf16.mxu0 0
        %2179 = vmatpush1.bf16.msra.mxu0 0
        %2180 = vmatprep.subr.bf16.mxu0 0
        %2181 = vmatpush1.bf16.msra.mxu0 0
        %2182 = vmatprep.subr.bf16.mxu0 0
        %2183 = vmatpush1.bf16.msra.mxu0 0
        %2184 = vmatprep.subr.bf16.mxu0 0
        %2185 = vmatpush1.bf16.msra.mxu0 0
        %2186 = vmatprep.subr.bf16.mxu0 0
        %2187 = vmatpush1.bf16.msra.mxu0 0
        %2188 = vmatprep.subr.bf16.mxu0 0
        %2189 = vmatpush1.bf16.msra.mxu0 0
        %2190 = vmatprep.subr.bf16.mxu0 0
        %2191 = vmatpush1.bf16.msra.mxu0 0
        %2192 = vmatprep.subr.bf16.mxu0 0
        %2193 = vmatpush1.bf16.msra.mxu0 0
        %2194 = vmatprep.subr.bf16.mxu0 0
        %2195 = vmatpush1.bf16.msra.mxu0 0
        %2196 = vmatprep.subr.bf16.mxu0 0
        %2197 = vmatpush1.bf16.msra.mxu0 0
        %2198 = vmatprep.subr.bf16.mxu0 0
        %2199 = vmatpush1.bf16.msra.mxu0 0
        %2200 = vmatprep.subr.bf16.mxu0 0
        %2201 = vmatpush1.bf16.msra.mxu0 0
        %2202 = vmatprep.subr.bf16.mxu0 0
        %2203 = vmatpush1.bf16.msra.mxu0 0
        %2204 = vmatprep.subr.bf16.mxu0 0
        %2205 = vmatpush1.bf16.msra.mxu0 0
        %2206 = vmatprep.subr.bf16.mxu0 0
        %2207 = vmatpush1.bf16.msra.mxu0 0
        %2208 = vmatprep.mubr.bf16.mxu0 0
        %2209 = vmatmul.mubr.bf16.gmra.mrb[0].mxu0 %v2126
        %v2210 = vpop.f32.mrb[0].mxu0
        %v2211 = vadd.f32 0.0, %v2210
        %v2212 = vpop.f32.mrb[0].mxu0
        %v2213 = vpop.f32.mrb[0].mxu0
        %v2214 = vadd.f32 0.0, %v2213
        %v2215 = vpop.f32.mrb[0].mxu0
        %2216 = vmatprep.mubr.bf16.mxu0 0
        %2217 = vmatmul.mubr.bf16.gmra.mrb[0].mxu0 %v2129
        %v2218 = vpop.f32.mrb[0].mxu0
        %v2219 = vadd.f32 0.0, %v2218
        %v2220 = vpop.f32.mrb[0].mxu0
        %v2221 = vpop.f32.mrb[0].mxu0
        %v2222 = vadd.f32 0.0, %v2221
        %v2223 = vpop.f32.mrb[0].mxu0
        %2224 = vmatprep.mubr.bf16.mxu0 0
        %2225 = vmatmul.mubr.bf16.gmra.mrb[0].mxu0 %v2132
        %v2226 = vpop.f32.mrb[0].mxu0
        %v2227 = vadd.f32 0.0, %v2226
        %v2228 = vpop.f32.mrb[0].mxu0
        %v2229 = vpop.f32.mrb[0].mxu0
        %v2230 = vadd.f32 0.0, %v2229
        %v2231 = vpop.f32.mrb[0].mxu0
        %2232 = vmatprep.mubr.bf16.mxu0 0
        %2233 = vmatmul.mubr.bf16.gmra.mrb[0].mxu0 %v2135
        %v2234 = vpop.f32.mrb[0].mxu0
        %v2235 = vadd.f32 0.0, %v2234
        %v2236 = vpop.f32.mrb[0].mxu0
        %v2237 = vpop.f32.mrb[0].mxu0
        %v2238 = vadd.f32 0.0, %v2237
        %v2239 = vpop.f32.mrb[0].mxu0
        %2240 = vmatprep.mubr.bf16.mxu0 0
        %2241 = vmatmul.mubr.bf16.gmra.mrb[0].mxu0 %v2138
        %v2242 = vpop.f32.mrb[0].mxu0
        %v2243 = vadd.f32 0.0, %v2242
        %v2244 = vpop.f32.mrb[0].mxu0
        %v2245 = vpop.f32.mrb[0].mxu0
        %v2246 = vadd.f32 0.0, %v2245
        %v2247 = vpop.f32.mrb[0].mxu0
        %2248 = vmatprep.mubr.bf16.mxu0 0
        %2249 = vmatmul.mubr.bf16.gmra.mrb[0].mxu0 %v2141
        %v2250 = vpop.f32.mrb[0].mxu0
        %v2251 = vadd.f32 0.0, %v2250
        %v2252 = vpop.f32.mrb[0].mxu0
        %v2253 = vpop.f32.mrb[0].mxu0
        %v2254 = vadd.f32 0.0, %v2253
        %v2255 = vpop.f32.mrb[0].mxu0
        %2256 = vmatprep.mubr.bf16.mxu0 0
        %2257 = vmatmul.mubr.bf16.gmra.mrb[0].mxu0 %v2144
        %v2258 = vpop.f32.mrb[0].mxu0
        %v2259 = vadd.f32 0.0, %v2258
        %v2260 = vpop.f32.mrb[0].mxu0
        %v2261 = vpop.f32.mrb[0].mxu0
        %v2262 = vadd.f32 0.0, %v2261
        %v2263 = vpop.f32.mrb[0].mxu0
        %2264 = vmatprep.mubr.bf16.mxu0 0
        %2265 = vmatmul.mubr.bf16.gmra.mrb[0].mxu0 %v2147
        %v2266 = vpop.f32.mrb[0].mxu0
        %v2267 = vadd.f32 0.0, %v2266
        %v2268 = vpop.f32.mrb[0].mxu0
        %v2269 = vpop.f32.mrb[0].mxu0
        %v2270 = vadd.f32 0.0, %v2269
        %v2271 = vpop.f32.mrb[0].mxu0
        %2272 = vmatprep.mubr.bf16.mxu0 0
        %2273 = vmatmul.mubr.bf16.gmra.mrb[0].mxu0 %v2150
        %v2274 = vpop.f32.mrb[0].mxu0
        %v2275 = vadd.f32 0.0, %v2274
        %v2276 = vpop.f32.mrb[0].mxu0
        %v2277 = vpop.f32.mrb[0].mxu0
        %v2278 = vadd.f32 0.0, %v2277
        %v2279 = vpop.f32.mrb[0].mxu0
        %2280 = vmatprep.mubr.bf16.mxu0 0
        %2281 = vmatmul.mubr.bf16.gmra.mrb[0].mxu0 %v2153
        %v2282 = vpop.f32.mrb[0].mxu0
        %v2283 = vadd.f32 0.0, %v2282
        %v2284 = vpop.f32.mrb[0].mxu0
        %v2285 = vpop.f32.mrb[0].mxu0
        %v2286 = vadd.f32 0.0, %v2285
        %v2287 = vpop.f32.mrb[0].mxu0
        %2288 = vmatprep.mubr.bf16.mxu0 0
        %2289 = vmatmul.mubr.bf16.gmra.mrb[0].mxu0 %v2156
        %v2290 = vpop.f32.mrb[0].mxu0
        %v2291 = vadd.f32 0.0, %v2290
        %v2292 = vpop.f32.mrb[0].mxu0
        %v2293 = vpop.f32.mrb[0].mxu0
        %v2294 = vadd.f32 0.0, %v2293
        %v2295 = vpop.f32.mrb[0].mxu0
        %2296 = vmatprep.mubr.bf16.mxu0 0
        %2297 = vmatmul.mubr.bf16.gmra.mrb[0].mxu0 %v2159
        %v2298 = vpop.f32.mrb[0].mxu0
        %v2299 = vadd.f32 0.0, %v2298
        %v2300 = vpop.f32.mrb[0].mxu0
        %v2301 = vpop.f32.mrb[0].mxu0
        %v2302 = vadd.f32 0.0, %v2301
        %v2303 = vpop.f32.mrb[0].mxu0
        %2304 = vmatprep.mubr.bf16.mxu0 0
        %2305 = vmatmul.mubr.bf16.gmra.mrb[0].mxu0 %v2162
        %v2306 = vpop.f32.mrb[0].mxu0
        %v2307 = vadd.f32 0.0, %v2306
        %v2308 = vpop.f32.mrb[0].mxu0
        %v2309 = vpop.f32.mrb[0].mxu0
        %v2310 = vadd.f32 0.0, %v2309
        %v2311 = vpop.f32.mrb[0].mxu0
        %2312 = vmatprep.mubr.bf16.mxu0 0
        %2313 = vmatmul.mubr.bf16.gmra.mrb[0].mxu0 %v2165
        %v2314 = vpop.f32.mrb[0].mxu0
        %v2315 = vadd.f32 0.0, %v2314
        %v2316 = vpop.f32.mrb[0].mxu0
        %v2317 = vpop.f32.mrb[0].mxu0
        %v2318 = vadd.f32 0.0, %v2317
        %v2319 = vpop.f32.mrb[0].mxu0
        %2320 = vmatprep.mubr.bf16.mxu0 0
        %2321 = vmatmul.mubr.bf16.gmra.mrb[0].mxu0 %v2168
        %v2322 = vpop.f32.mrb[0].mxu0
        %v2323 = vadd.f32 0.0, %v2322
        %v2324 = vpop.f32.mrb[0].mxu0
        %v2325 = vpop.f32.mrb[0].mxu0
        %v2326 = vadd.f32 0.0, %v2325
        %v2327 = vpop.f32.mrb[0].mxu0
        %2328 = vmatprep.mubr.bf16.mxu0 0
        %2329 = vmatmul.mubr.bf16.gmra.mrb[0].mxu0 %v2171
        %v2330 = vpop.f32.mrb[0].mxu0
        %v2331 = vadd.f32 0.0, %v2330
        %v2332 = vpop.f32.mrb[0].mxu0
        %v2333 = vpop.f32.mrb[0].mxu0
        %v2334 = vadd.f32 0.0, %v2333
        %v2335 = vpop.f32.mrb[0].mxu0
        %2336 = vdwg.mxu0
        %v2337 = vadd.f32 %v2042, %v2211
        %v2338 = vadd.f32 %v2043, %v2214
        %v2339 = vadd.f32 %v2044, %v2219
        %v2340 = vadd.f32 %v2045, %v2222
        %v2341 = vadd.f32 %v2046, %v2227
        %v2342 = vadd.f32 %v2047, %v2230
        %v2343 = vadd.f32 %v2048, %v2235
        %v2344 = vadd.f32 %v2049, %v2238
        %v2345 = vadd.f32 %v2050, %v2243
        %v2346 = vadd.f32 %v2051, %v2246
        %v2347 = vadd.f32 %v2052, %v2251
        %v2348 = vadd.f32 %v2053, %v2254
        %v2349 = vadd.f32 %v2054, %v2259
        %v2350 = vadd.f32 %v2055, %v2262
        %v2351 = vadd.f32 %v2056, %v2267
        %v2352 = vadd.f32 %v2057, %v2270
        %v2353 = vadd.f32 %v2058, %v2275
        %v2354 = vadd.f32 %v2059, %v2278
        %v2355 = vadd.f32 %v2060, %v2283
        %v2356 = vadd.f32 %v2061, %v2286
        %v2357 = vadd.f32 %v2062, %v2291
        %v2358 = vadd.f32 %v2063, %v2294
        %v2359 = vadd.f32 %v2064, %v2299
        %v2360 = vadd.f32 %v2065, %v2302
        %v2361 = vadd.f32 %v2066, %v2307
        %v2362 = vadd.f32 %v2067, %v2310
        %v2363 = vadd.f32 %v2068, %v2315
        %v2364 = vadd.f32 %v2069, %v2318
        %v2365 = vadd.f32 %v2070, %v2323
        %v2366 = vadd.f32 %v2071, %v2326
        %v2367 = vadd.f32 %v2072, %v2331
        %v2368 = vadd.f32 %v2073, %v2334
        %v2369 = vld [vmem:[%s2074 + $0x8] sm:$0xff]
        %v2370 = vld [vmem:[%s2074 + $0x10] sm:$0xff]
        %v2371 = vld [vmem:[%s2074 + $0x28] sm:$0xff]
        %v2372 = vld [vmem:[%s2074 + $0x30] sm:$0xff]
        %v2373 = vld [vmem:[%s2074 + $0x48] sm:$0xff]
        %v2374 = vld [vmem:[%s2074 + $0x50] sm:$0xff]
        %v2375 = vld [vmem:[%s2074 + $0x68] sm:$0xff]
        %v2376 = vld [vmem:[%s2074 + $0x70] sm:$0xff]
        %v2377 = vld [vmem:[%s2074 + $0x88] sm:$0xff]
        %v2378 = vld [vmem:[%s2074 + $0x90] sm:$0xff]
        %v2379 = vld [vmem:[%s2074 + $0xa8] sm:$0xff]
        %v2380 = vld [vmem:[%s2074 + $0xb0] sm:$0xff]
        %v2381 = vld [vmem:[%s2074 + $0xc8] sm:$0xff]
        %v2382 = vld [vmem:[%s2074 + $0xd0] sm:$0xff]
        %v2383 = vld [vmem:[%s2074 + $0xe8] sm:$0xff]
        %v2384 = vld [vmem:[%s2074 + $0xf0] sm:$0xff]
        %v2385 = vld [vmem:[%s2074 + $0x108] sm:$0xff]
        %v2386 = vld [vmem:[%s2074 + $0x110] sm:$0xff]
        %v2387 = vld [vmem:[%s2074 + $0x128] sm:$0xff]
        %v2388 = vld [vmem:[%s2074 + $0x130] sm:$0xff]
        %v2389 = vld [vmem:[%s2074 + $0x148] sm:$0xff]
        %v2390 = vld [vmem:[%s2074 + $0x150] sm:$0xff]
        %v2391 = vld [vmem:[%s2074 + $0x168] sm:$0xff]
        %v2392 = vld [vmem:[%s2074 + $0x170] sm:$0xff]
        %v2393 = vld [vmem:[%s2074 + $0x188] sm:$0xff]
        %v2394 = vld [vmem:[%s2074 + $0x190] sm:$0xff]
        %v2395 = vld [vmem:[%s2074 + $0x1a8] sm:$0xff]
        %v2396 = vld [vmem:[%s2074 + $0x1b0] sm:$0xff]
        %v2397 = vld [vmem:[%s2074 + $0x1c8] sm:$0xff]
        %v2398 = vld [vmem:[%s2074 + $0x1d0] sm:$0xff]
        %v2399 = vld [vmem:[%s2074 + $0x1e8] sm:$0xff]
        %v2400 = vld [vmem:[%s2074 + $0x1f0] sm:$0xff]
        %v2401 = vpack.c.bf16 %v2370, %v2369
        %v2402 = vpack.c.bf16 %v2372, %v2371
        %v2403 = vpack.c.bf16 %v2374, %v2373
        %v2404 = vpack.c.bf16 %v2376, %v2375
        %v2405 = vpack.c.bf16 %v2378, %v2377
        %v2406 = vpack.c.bf16 %v2380, %v2379
        %v2407 = vpack.c.bf16 %v2382, %v2381
        %v2408 = vpack.c.bf16 %v2384, %v2383
        %v2409 = vpack.c.bf16 %v2386, %v2385
        %v2410 = vpack.c.bf16 %v2388, %v2387
        %v2411 = vpack.c.bf16 %v2390, %v2389
        %v2412 = vpack.c.bf16 %v2392, %v2391
        %v2413 = vpack.c.bf16 %v2394, %v2393
        %v2414 = vpack.c.bf16 %v2396, %v2395
        %v2415 = vpack.c.bf16 %v2398, %v2397
        %v2416 = vpack.c.bf16 %v2400, %v2399
        %s2417 = scalar_lea.vmem %s1, 14
        %v2418 = vld [vmem:[%s2417] sm:$0x3]
        %v2420 = vsel %vm224, %v2401, 0
        %v2423 = vsel %vm224, %v2402, 0
        %v2426 = vsel %vm224, %v2403, 0
        %v2429 = vsel %vm224, %v2404, 0
        %v2432 = vsel %vm224, %v2405, 0
        %v2435 = vsel %vm224, %v2406, 0
        %v2438 = vsel %vm224, %v2407, 0
        %v2441 = vsel %vm224, %v2408, 0
        %v2444 = vsel %vm224, %v2409, 0
        %v2447 = vsel %vm224, %v2410, 0
        %v2450 = vsel %vm224, %v2411, 0
        %v2453 = vsel %vm224, %v2412, 0
        %v2456 = vsel %vm224, %v2413, 0
        %v2459 = vsel %vm224, %v2414, 0
        %v2462 = vsel %vm224, %v2415, 0
        %v2465 = vsel %vm224, %v2416, 0
        %v2468 = vsel %vm521, %v2418, 0
        %2470 = vmatprep.subr.bf16.mxu0 0
        %2471 = vmatpush1.bf16.msra.mxu0 %v2468
        %2472 = vmatprep.subr.bf16.mxu0 0
        %2473 = vmatpush1.bf16.msra.mxu0 0
        %2474 = vmatprep.subr.bf16.mxu0 0
        %2475 = vmatpush1.bf16.msra.mxu0 0
        %2476 = vmatprep.subr.bf16.mxu0 0
        %2477 = vmatpush1.bf16.msra.mxu0 0
        %2478 = vmatprep.subr.bf16.mxu0 0
        %2479 = vmatpush1.bf16.msra.mxu0 0
        %2480 = vmatprep.subr.bf16.mxu0 0
        %2481 = vmatpush1.bf16.msra.mxu0 0
        %2482 = vmatprep.subr.bf16.mxu0 0
        %2483 = vmatpush1.bf16.msra.mxu0 0
        %2484 = vmatprep.subr.bf16.mxu0 0
        %2485 = vmatpush1.bf16.msra.mxu0 0
        %2486 = vmatprep.subr.bf16.mxu0 0
        %2487 = vmatpush1.bf16.msra.mxu0 0
        %2488 = vmatprep.subr.bf16.mxu0 0
        %2489 = vmatpush1.bf16.msra.mxu0 0
        %2490 = vmatprep.subr.bf16.mxu0 0
        %2491 = vmatpush1.bf16.msra.mxu0 0
        %2492 = vmatprep.subr.bf16.mxu0 0
        %2493 = vmatpush1.bf16.msra.mxu0 0
        %2494 = vmatprep.subr.bf16.mxu0 0
        %2495 = vmatpush1.bf16.msra.mxu0 0
        %2496 = vmatprep.subr.bf16.mxu0 0
        %2497 = vmatpush1.bf16.msra.mxu0 0
        %2498 = vmatprep.subr.bf16.mxu0 0
        %2499 = vmatpush1.bf16.msra.mxu0 0
        %2500 = vmatprep.subr.bf16.mxu0 0
        %2501 = vmatpush1.bf16.msra.mxu0 0
        %2502 = vmatprep.mubr.bf16.mxu0 0
        %2503 = vmatmul.mubr.bf16.gmra.mrb[0].mxu0 %v2420
        %v2504 = vpop.f32.mrb[0].mxu0
        %v2505 = vadd.f32 0.0, %v2504
        %v2506 = vpop.f32.mrb[0].mxu0
        %v2507 = vpop.f32.mrb[0].mxu0
        %v2508 = vadd.f32 0.0, %v2507
        %v2509 = vpop.f32.mrb[0].mxu0
        %2510 = vmatprep.mubr.bf16.mxu0 0
        %2511 = vmatmul.mubr.bf16.gmra.mrb[0].mxu0 %v2423
        %v2512 = vpop.f32.mrb[0].mxu0
        %v2513 = vadd.f32 0.0, %v2512
        %v2514 = vpop.f32.mrb[0].mxu0
        %v2515 = vpop.f32.mrb[0].mxu0
        %v2516 = vadd.f32 0.0, %v2515
        %v2517 = vpop.f32.mrb[0].mxu0
        %2518 = vmatprep.mubr.bf16.mxu0 0
        %2519 = vmatmul.mubr.bf16.gmra.mrb[0].mxu0 %v2426
        %v2520 = vpop.f32.mrb[0].mxu0
        %v2521 = vadd.f32 0.0, %v2520
        %v2522 = vpop.f32.mrb[0].mxu0
        %v2523 = vpop.f32.mrb[0].mxu0
        %v2524 = vadd.f32 0.0, %v2523
        %v2525 = vpop.f32.mrb[0].mxu0
        %2526 = vmatprep.mubr.bf16.mxu0 0
        %2527 = vmatmul.mubr.bf16.gmra.mrb[0].mxu0 %v2429
        %v2528 = vpop.f32.mrb[0].mxu0
        %v2529 = vadd.f32 0.0, %v2528
        %v2530 = vpop.f32.mrb[0].mxu0
        %v2531 = vpop.f32.mrb[0].mxu0
        %v2532 = vadd.f32 0.0, %v2531
        %v2533 = vpop.f32.mrb[0].mxu0
        %2534 = vmatprep.mubr.bf16.mxu0 0
        %2535 = vmatmul.mubr.bf16.gmra.mrb[0].mxu0 %v2432
        %v2536 = vpop.f32.mrb[0].mxu0
        %v2537 = vadd.f32 0.0, %v2536
        %v2538 = vpop.f32.mrb[0].mxu0
        %v2539 = vpop.f32.mrb[0].mxu0
        %v2540 = vadd.f32 0.0, %v2539
        %v2541 = vpop.f32.mrb[0].mxu0
        %2542 = vmatprep.mubr.bf16.mxu0 0
        %2543 = vmatmul.mubr.bf16.gmra.mrb[0].mxu0 %v2435
        %v2544 = vpop.f32.mrb[0].mxu0
        %v2545 = vadd.f32 0.0, %v2544
        %v2546 = vpop.f32.mrb[0].mxu0
        %v2547 = vpop.f32.mrb[0].mxu0
        %v2548 = vadd.f32 0.0, %v2547
        %v2549 = vpop.f32.mrb[0].mxu0
        %2550 = vmatprep.mubr.bf16.mxu0 0
        %2551 = vmatmul.mubr.bf16.gmra.mrb[0].mxu0 %v2438
        %v2552 = vpop.f32.mrb[0].mxu0
        %v2553 = vadd.f32 0.0, %v2552
        %v2554 = vpop.f32.mrb[0].mxu0
        %v2555 = vpop.f32.mrb[0].mxu0
        %v2556 = vadd.f32 0.0, %v2555
        %v2557 = vpop.f32.mrb[0].mxu0
        %2558 = vmatprep.mubr.bf16.mxu0 0
        %2559 = vmatmul.mubr.bf16.gmra.mrb[0].mxu0 %v2441
        %v2560 = vpop.f32.mrb[0].mxu0
        %v2561 = vadd.f32 0.0, %v2560
        %v2562 = vpop.f32.mrb[0].mxu0
        %v2563 = vpop.f32.mrb[0].mxu0
        %v2564 = vadd.f32 0.0, %v2563
        %v2565 = vpop.f32.mrb[0].mxu0
        %2566 = vmatprep.mubr.bf16.mxu0 0
        %2567 = vmatmul.mubr.bf16.gmra.mrb[0].mxu0 %v2444
        %v2568 = vpop.f32.mrb[0].mxu0
        %v2569 = vadd.f32 0.0, %v2568
        %v2570 = vpop.f32.mrb[0].mxu0
        %v2571 = vpop.f32.mrb[0].mxu0
        %v2572 = vadd.f32 0.0, %v2571
        %v2573 = vpop.f32.mrb[0].mxu0
        %2574 = vmatprep.mubr.bf16.mxu0 0
        %2575 = vmatmul.mubr.bf16.gmra.mrb[0].mxu0 %v2447
        %v2576 = vpop.f32.mrb[0].mxu0
        %v2577 = vadd.f32 0.0, %v2576
        %v2578 = vpop.f32.mrb[0].mxu0
        %v2579 = vpop.f32.mrb[0].mxu0
        %v2580 = vadd.f32 0.0, %v2579
        %v2581 = vpop.f32.mrb[0].mxu0
        %2582 = vmatprep.mubr.bf16.mxu0 0
        %2583 = vmatmul.mubr.bf16.gmra.mrb[0].mxu0 %v2450
        %v2584 = vpop.f32.mrb[0].mxu0
        %v2585 = vadd.f32 0.0, %v2584
        %v2586 = vpop.f32.mrb[0].mxu0
        %v2587 = vpop.f32.mrb[0].mxu0
        %v2588 = vadd.f32 0.0, %v2587
        %v2589 = vpop.f32.mrb[0].mxu0
        %2590 = vmatprep.mubr.bf16.mxu0 0
        %2591 = vmatmul.mubr.bf16.gmra.mrb[0].mxu0 %v2453
        %v2592 = vpop.f32.mrb[0].mxu0
        %v2593 = vadd.f32 0.0, %v2592
        %v2594 = vpop.f32.mrb[0].mxu0
        %v2595 = vpop.f32.mrb[0].mxu0
        %v2596 = vadd.f32 0.0, %v2595
        %v2597 = vpop.f32.mrb[0].mxu0
        %2598 = vmatprep.mubr.bf16.mxu0 0
        %2599 = vmatmul.mubr.bf16.gmra.mrb[0].mxu0 %v2456
        %v2600 = vpop.f32.mrb[0].mxu0
        %v2601 = vadd.f32 0.0, %v2600
        %v2602 = vpop.f32.mrb[0].mxu0
        %v2603 = vpop.f32.mrb[0].mxu0
        %v2604 = vadd.f32 0.0, %v2603
        %v2605 = vpop.f32.mrb[0].mxu0
        %2606 = vmatprep.mubr.bf16.mxu0 0
        %2607 = vmatmul.mubr.bf16.gmra.mrb[0].mxu0 %v2459
        %v2608 = vpop.f32.mrb[0].mxu0
        %v2609 = vadd.f32 0.0, %v2608
        %v2610 = vpop.f32.mrb[0].mxu0
        %v2611 = vpop.f32.mrb[0].mxu0
        %v2612 = vadd.f32 0.0, %v2611
        %v2613 = vpop.f32.mrb[0].mxu0
        %2614 = vmatprep.mubr.bf16.mxu0 0
        %2615 = vmatmul.mubr.bf16.gmra.mrb[0].mxu0 %v2462
        %v2616 = vpop.f32.mrb[0].mxu0
        %v2617 = vadd.f32 0.0, %v2616
        %v2618 = vpop.f32.mrb[0].mxu0
        %v2619 = vpop.f32.mrb[0].mxu0
        %v2620 = vadd.f32 0.0, %v2619
        %v2621 = vpop.f32.mrb[0].mxu0
        %2622 = vmatprep.mubr.bf16.mxu0 0
        %2623 = vmatmul.mubr.bf16.gmra.mrb[0].mxu0 %v2465
        %v2624 = vpop.f32.mrb[0].mxu0
        %v2625 = vadd.f32 0.0, %v2624
        %v2626 = vpop.f32.mrb[0].mxu0
        %v2627 = vpop.f32.mrb[0].mxu0
        %v2628 = vadd.f32 0.0, %v2627
        %v2629 = vpop.f32.mrb[0].mxu0
        %2630 = vdwg.mxu0
        %v2631 = vadd.f32 %v2337, %v2505
        %v2632 = vadd.f32 %v2338, %v2508
        %v2633 = vadd.f32 %v2339, %v2513
        %v2634 = vadd.f32 %v2340, %v2516
        %v2635 = vadd.f32 %v2341, %v2521
        %v2636 = vadd.f32 %v2342, %v2524
        %v2637 = vadd.f32 %v2343, %v2529
        %v2638 = vadd.f32 %v2344, %v2532
        %v2639 = vadd.f32 %v2345, %v2537
        %v2640 = vadd.f32 %v2346, %v2540
        %v2641 = vadd.f32 %v2347, %v2545
        %v2642 = vadd.f32 %v2348, %v2548
        %v2643 = vadd.f32 %v2349, %v2553
        %v2644 = vadd.f32 %v2350, %v2556
        %v2645 = vadd.f32 %v2351, %v2561
        %v2646 = vadd.f32 %v2352, %v2564
        %v2647 = vadd.f32 %v2353, %v2569
        %v2648 = vadd.f32 %v2354, %v2572
        %v2649 = vadd.f32 %v2355, %v2577
        %v2650 = vadd.f32 %v2356, %v2580
        %v2651 = vadd.f32 %v2357, %v2585
        %v2652 = vadd.f32 %v2358, %v2588
        %v2653 = vadd.f32 %v2359, %v2593
        %v2654 = vadd.f32 %v2360, %v2596
        %v2655 = vadd.f32 %v2361, %v2601
        %v2656 = vadd.f32 %v2362, %v2604
        %v2657 = vadd.f32 %v2363, %v2609
        %v2658 = vadd.f32 %v2364, %v2612
        %v2659 = vadd.f32 %v2365, %v2617
        %v2660 = vadd.f32 %v2366, %v2620
        %v2661 = vadd.f32 %v2367, %v2625
        %v2662 = vadd.f32 %v2368, %v2628
        %v2663 = vld [vmem:[%s2074 + $0x9] sm:$0xff]
        %v2664 = vld [vmem:[%s2074 + $0x11] sm:$0xff]
        %v2665 = vld [vmem:[%s2074 + $0x29] sm:$0xff]
        %v2666 = vld [vmem:[%s2074 + $0x31] sm:$0xff]
        %v2667 = vld [vmem:[%s2074 + $0x49] sm:$0xff]
        %v2668 = vld [vmem:[%s2074 + $0x51] sm:$0xff]
        %v2669 = vld [vmem:[%s2074 + $0x69] sm:$0xff]
        %v2670 = vld [vmem:[%s2074 + $0x71] sm:$0xff]
        %v2671 = vld [vmem:[%s2074 + $0x89] sm:$0xff]
        %v2672 = vld [vmem:[%s2074 + $0x91] sm:$0xff]
        %v2673 = vld [vmem:[%s2074 + $0xa9] sm:$0xff]
        %v2674 = vld [vmem:[%s2074 + $0xb1] sm:$0xff]
        %v2675 = vld [vmem:[%s2074 + $0xc9] sm:$0xff]
        %v2676 = vld [vmem:[%s2074 + $0xd1] sm:$0xff]
        %v2677 = vld [vmem:[%s2074 + $0xe9] sm:$0xff]
        %v2678 = vld [vmem:[%s2074 + $0xf1] sm:$0xff]
        %v2679 = vld [vmem:[%s2074 + $0x109] sm:$0xff]
        %v2680 = vld [vmem:[%s2074 + $0x111] sm:$0xff]
        %v2681 = vld [vmem:[%s2074 + $0x129] sm:$0xff]
        %v2682 = vld [vmem:[%s2074 + $0x131] sm:$0xff]
        %v2683 = vld [vmem:[%s2074 + $0x149] sm:$0xff]
        %v2684 = vld [vmem:[%s2074 + $0x151] sm:$0xff]
        %v2685 = vld [vmem:[%s2074 + $0x169] sm:$0xff]
        %v2686 = vld [vmem:[%s2074 + $0x171] sm:$0xff]
        %v2687 = vld [vmem:[%s2074 + $0x189] sm:$0xff]
        %v2688 = vld [vmem:[%s2074 + $0x191] sm:$0xff]
        %v2689 = vld [vmem:[%s2074 + $0x1a9] sm:$0xff]
        %v2690 = vld [vmem:[%s2074 + $0x1b1] sm:$0xff]
        %v2691 = vld [vmem:[%s2074 + $0x1c9] sm:$0xff]
        %v2692 = vld [vmem:[%s2074 + $0x1d1] sm:$0xff]
        %v2693 = vld [vmem:[%s2074 + $0x1e9] sm:$0xff]
        %v2694 = vld [vmem:[%s2074 + $0x1f1] sm:$0xff]
        %v2695 = vpack.c.bf16 %v2664, %v2663
        %v2696 = vpack.c.bf16 %v2666, %v2665
        %v2697 = vpack.c.bf16 %v2668, %v2667
        %v2698 = vpack.c.bf16 %v2670, %v2669
        %v2699 = vpack.c.bf16 %v2672, %v2671
        %v2700 = vpack.c.bf16 %v2674, %v2673
        %v2701 = vpack.c.bf16 %v2676, %v2675
        %v2702 = vpack.c.bf16 %v2678, %v2677
        %v2703 = vpack.c.bf16 %v2680, %v2679
        %v2704 = vpack.c.bf16 %v2682, %v2681
        %v2705 = vpack.c.bf16 %v2684, %v2683
        %v2706 = vpack.c.bf16 %v2686, %v2685
        %v2707 = vpack.c.bf16 %v2688, %v2687
        %v2708 = vpack.c.bf16 %v2690, %v2689
        %v2709 = vpack.c.bf16 %v2692, %v2691
        %v2710 = vpack.c.bf16 %v2694, %v2693
        %s2711 = scalar_lea.vmem %s1, 16
        %v2712 = vld [vmem:[%s2711] sm:$0x3]
        %v2714 = vsel %vm224, %v2695, 0
        %v2717 = vsel %vm224, %v2696, 0
        %v2720 = vsel %vm224, %v2697, 0
        %v2723 = vsel %vm224, %v2698, 0
        %v2726 = vsel %vm224, %v2699, 0
        %v2729 = vsel %vm224, %v2700, 0
        %v2732 = vsel %vm224, %v2701, 0
        %v2735 = vsel %vm224, %v2702, 0
        %v2738 = vsel %vm224, %v2703, 0
        %v2741 = vsel %vm224, %v2704, 0
        %v2744 = vsel %vm224, %v2705, 0
        %v2747 = vsel %vm224, %v2706, 0
        %v2750 = vsel %vm224, %v2707, 0
        %v2753 = vsel %vm224, %v2708, 0
        %v2756 = vsel %vm224, %v2709, 0
        %v2759 = vsel %vm224, %v2710, 0
        %v2762 = vsel %vm521, %v2712, 0
        %2764 = vmatprep.subr.bf16.mxu0 0
        %2765 = vmatpush1.bf16.msra.mxu0 %v2762
        %2766 = vmatprep.subr.bf16.mxu0 0
        %2767 = vmatpush1.bf16.msra.mxu0 0
        %2768 = vmatprep.subr.bf16.mxu0 0
        %2769 = vmatpush1.bf16.msra.mxu0 0
        %2770 = vmatprep.subr.bf16.mxu0 0
        %2771 = vmatpush1.bf16.msra.mxu0 0
        %2772 = vmatprep.subr.bf16.mxu0 0
        %2773 = vmatpush1.bf16.msra.mxu0 0
        %2774 = vmatprep.subr.bf16.mxu0 0
        %2775 = vmatpush1.bf16.msra.mxu0 0
        %2776 = vmatprep.subr.bf16.mxu0 0
        %2777 = vmatpush1.bf16.msra.mxu0 0
        %2778 = vmatprep.subr.bf16.mxu0 0
        %2779 = vmatpush1.bf16.msra.mxu0 0
        %2780 = vmatprep.subr.bf16.mxu0 0
        %2781 = vmatpush1.bf16.msra.mxu0 0
        %2782 = vmatprep.subr.bf16.mxu0 0
        %2783 = vmatpush1.bf16.msra.mxu0 0
        %2784 = vmatprep.subr.bf16.mxu0 0
        %2785 = vmatpush1.bf16.msra.mxu0 0
        %2786 = vmatprep.subr.bf16.mxu0 0
        %2787 = vmatpush1.bf16.msra.mxu0 0
        %2788 = vmatprep.subr.bf16.mxu0 0
        %2789 = vmatpush1.bf16.msra.mxu0 0
        %2790 = vmatprep.subr.bf16.mxu0 0
        %2791 = vmatpush1.bf16.msra.mxu0 0
        %2792 = vmatprep.subr.bf16.mxu0 0
        %2793 = vmatpush1.bf16.msra.mxu0 0
        %2794 = vmatprep.subr.bf16.mxu0 0
        %2795 = vmatpush1.bf16.msra.mxu0 0
        %2796 = vmatprep.mubr.bf16.mxu0 0
        %2797 = vmatmul.mubr.bf16.gmra.mrb[0].mxu0 %v2714
        %v2798 = vpop.f32.mrb[0].mxu0
        %v2799 = vadd.f32 0.0, %v2798
        %v2800 = vpop.f32.mrb[0].mxu0
        %v2801 = vpop.f32.mrb[0].mxu0
        %v2802 = vadd.f32 0.0, %v2801
        %v2803 = vpop.f32.mrb[0].mxu0
        %2804 = vmatprep.mubr.bf16.mxu0 0
        %2805 = vmatmul.mubr.bf16.gmra.mrb[0].mxu0 %v2717
        %v2806 = vpop.f32.mrb[0].mxu0
        %v2807 = vadd.f32 0.0, %v2806
        %v2808 = vpop.f32.mrb[0].mxu0
        %v2809 = vpop.f32.mrb[0].mxu0
        %v2810 = vadd.f32 0.0, %v2809
        %v2811 = vpop.f32.mrb[0].mxu0
        %2812 = vmatprep.mubr.bf16.mxu0 0
        %2813 = vmatmul.mubr.bf16.gmra.mrb[0].mxu0 %v2720
        %v2814 = vpop.f32.mrb[0].mxu0
        %v2815 = vadd.f32 0.0, %v2814
        %v2816 = vpop.f32.mrb[0].mxu0
        %v2817 = vpop.f32.mrb[0].mxu0
        %v2818 = vadd.f32 0.0, %v2817
        %v2819 = vpop.f32.mrb[0].mxu0
        %2820 = vmatprep.mubr.bf16.mxu0 0
        %2821 = vmatmul.mubr.bf16.gmra.mrb[0].mxu0 %v2723
        %v2822 = vpop.f32.mrb[0].mxu0
        %v2823 = vadd.f32 0.0, %v2822
        %v2824 = vpop.f32.mrb[0].mxu0
        %v2825 = vpop.f32.mrb[0].mxu0
        %v2826 = vadd.f32 0.0, %v2825
        %v2827 = vpop.f32.mrb[0].mxu0
        %2828 = vmatprep.mubr.bf16.mxu0 0
        %2829 = vmatmul.mubr.bf16.gmra.mrb[0].mxu0 %v2726
        %v2830 = vpop.f32.mrb[0].mxu0
        %v2831 = vadd.f32 0.0, %v2830
        %v2832 = vpop.f32.mrb[0].mxu0
        %v2833 = vpop.f32.mrb[0].mxu0
        %v2834 = vadd.f32 0.0, %v2833
        %v2835 = vpop.f32.mrb[0].mxu0
        %2836 = vmatprep.mubr.bf16.mxu0 0
        %2837 = vmatmul.mubr.bf16.gmra.mrb[0].mxu0 %v2729
        %v2838 = vpop.f32.mrb[0].mxu0
        %v2839 = vadd.f32 0.0, %v2838
        %v2840 = vpop.f32.mrb[0].mxu0
        %v2841 = vpop.f32.mrb[0].mxu0
        %v2842 = vadd.f32 0.0, %v2841
        %v2843 = vpop.f32.mrb[0].mxu0
        %2844 = vmatprep.mubr.bf16.mxu0 0
        %2845 = vmatmul.mubr.bf16.gmra.mrb[0].mxu0 %v2732
        %v2846 = vpop.f32.mrb[0].mxu0
        %v2847 = vadd.f32 0.0, %v2846
        %v2848 = vpop.f32.mrb[0].mxu0
        %v2849 = vpop.f32.mrb[0].mxu0
        %v2850 = vadd.f32 0.0, %v2849
        %v2851 = vpop.f32.mrb[0].mxu0
        %2852 = vmatprep.mubr.bf16.mxu0 0
        %2853 = vmatmul.mubr.bf16.gmra.mrb[0].mxu0 %v2735
        %v2854 = vpop.f32.mrb[0].mxu0
        %v2855 = vadd.f32 0.0, %v2854
        %v2856 = vpop.f32.mrb[0].mxu0
        %v2857 = vpop.f32.mrb[0].mxu0
        %v2858 = vadd.f32 0.0, %v2857
        %v2859 = vpop.f32.mrb[0].mxu0
        %2860 = vmatprep.mubr.bf16.mxu0 0
        %2861 = vmatmul.mubr.bf16.gmra.mrb[0].mxu0 %v2738
        %v2862 = vpop.f32.mrb[0].mxu0
        %v2863 = vadd.f32 0.0, %v2862
        %v2864 = vpop.f32.mrb[0].mxu0
        %v2865 = vpop.f32.mrb[0].mxu0
        %v2866 = vadd.f32 0.0, %v2865
        %v2867 = vpop.f32.mrb[0].mxu0
        %2868 = vmatprep.mubr.bf16.mxu0 0
        %2869 = vmatmul.mubr.bf16.gmra.mrb[0].mxu0 %v2741
        %v2870 = vpop.f32.mrb[0].mxu0
        %v2871 = vadd.f32 0.0, %v2870
        %v2872 = vpop.f32.mrb[0].mxu0
        %v2873 = vpop.f32.mrb[0].mxu0
        %v2874 = vadd.f32 0.0, %v2873
        %v2875 = vpop.f32.mrb[0].mxu0
        %2876 = vmatprep.mubr.bf16.mxu0 0
        %2877 = vmatmul.mubr.bf16.gmra.mrb[0].mxu0 %v2744
        %v2878 = vpop.f32.mrb[0].mxu0
        %v2879 = vadd.f32 0.0, %v2878
        %v2880 = vpop.f32.mrb[0].mxu0
        %v2881 = vpop.f32.mrb[0].mxu0
        %v2882 = vadd.f32 0.0, %v2881
        %v2883 = vpop.f32.mrb[0].mxu0
        %2884 = vmatprep.mubr.bf16.mxu0 0
        %2885 = vmatmul.mubr.bf16.gmra.mrb[0].mxu0 %v2747
        %v2886 = vpop.f32.mrb[0].mxu0
        %v2887 = vadd.f32 0.0, %v2886
        %v2888 = vpop.f32.mrb[0].mxu0
        %v2889 = vpop.f32.mrb[0].mxu0
        %v2890 = vadd.f32 0.0, %v2889
        %v2891 = vpop.f32.mrb[0].mxu0
        %2892 = vmatprep.mubr.bf16.mxu0 0
        %2893 = vmatmul.mubr.bf16.gmra.mrb[0].mxu0 %v2750
        %v2894 = vpop.f32.mrb[0].mxu0
        %v2895 = vadd.f32 0.0, %v2894
        %v2896 = vpop.f32.mrb[0].mxu0
        %v2897 = vpop.f32.mrb[0].mxu0
        %v2898 = vadd.f32 0.0, %v2897
        %v2899 = vpop.f32.mrb[0].mxu0
        %2900 = vmatprep.mubr.bf16.mxu0 0
        %2901 = vmatmul.mubr.bf16.gmra.mrb[0].mxu0 %v2753
        %v2902 = vpop.f32.mrb[0].mxu0
        %v2903 = vadd.f32 0.0, %v2902
        %v2904 = vpop.f32.mrb[0].mxu0
        %v2905 = vpop.f32.mrb[0].mxu0
        %v2906 = vadd.f32 0.0, %v2905
        %v2907 = vpop.f32.mrb[0].mxu0
        %2908 = vmatprep.mubr.bf16.mxu0 0
        %2909 = vmatmul.mubr.bf16.gmra.mrb[0].mxu0 %v2756
        %v2910 = vpop.f32.mrb[0].mxu0
        %v2911 = vadd.f32 0.0, %v2910
        %v2912 = vpop.f32.mrb[0].mxu0
        %v2913 = vpop.f32.mrb[0].mxu0
        %v2914 = vadd.f32 0.0, %v2913
        %v2915 = vpop.f32.mrb[0].mxu0
        %2916 = vmatprep.mubr.bf16.mxu0 0
        %2917 = vmatmul.mubr.bf16.gmra.mrb[0].mxu0 %v2759
        %v2918 = vpop.f32.mrb[0].mxu0
        %v2919 = vadd.f32 0.0, %v2918
        %v2920 = vpop.f32.mrb[0].mxu0
        %v2921 = vpop.f32.mrb[0].mxu0
        %v2922 = vadd.f32 0.0, %v2921
        %v2923 = vpop.f32.mrb[0].mxu0
        %2924 = vdwg.mxu0
        %v2925 = vadd.f32 %v2631, %v2799
        %v2926 = vadd.f32 %v2632, %v2802
        %v2927 = vadd.f32 %v2633, %v2807
        %v2928 = vadd.f32 %v2634, %v2810
        %v2929 = vadd.f32 %v2635, %v2815
        %v2930 = vadd.f32 %v2636, %v2818
        %v2931 = vadd.f32 %v2637, %v2823
        %v2932 = vadd.f32 %v2638, %v2826
        %v2933 = vadd.f32 %v2639, %v2831
        %v2934 = vadd.f32 %v2640, %v2834
        %v2935 = vadd.f32 %v2641, %v2839
        %v2936 = vadd.f32 %v2642, %v2842
        %v2937 = vadd.f32 %v2643, %v2847
        %v2938 = vadd.f32 %v2644, %v2850
        %v2939 = vadd.f32 %v2645, %v2855
        %v2940 = vadd.f32 %v2646, %v2858
        %v2941 = vadd.f32 %v2647, %v2863
        %v2942 = vadd.f32 %v2648, %v2866
        %v2943 = vadd.f32 %v2649, %v2871
        %v2944 = vadd.f32 %v2650, %v2874
        %v2945 = vadd.f32 %v2651, %v2879
        %v2946 = vadd.f32 %v2652, %v2882
        %v2947 = vadd.f32 %v2653, %v2887
        %v2948 = vadd.f32 %v2654, %v2890
        %v2949 = vadd.f32 %v2655, %v2895
        %v2950 = vadd.f32 %v2656, %v2898
        %v2951 = vadd.f32 %v2657, %v2903
        %v2952 = vadd.f32 %v2658, %v2906
        %v2953 = vadd.f32 %v2659, %v2911
        %v2954 = vadd.f32 %v2660, %v2914
        %v2955 = vadd.f32 %v2661, %v2919
        %v2956 = vadd.f32 %v2662, %v2922
        %v2957 = vld [vmem:[%s2] sm:$0x1]
        %v2959 = vlaneseq
        %v2960 = vshrl.u32 %v2959, 7
        %v2961 = vsub.s32 0, %v2960
        %v2962 = vrot.slane %v2957, %v2961
        %v2964 = vadd.f32 %v2925, %v2962
        %v2965 = vadd.f32 %v2926, %v2962
        %v2966 = vadd.f32 %v2927, %v2962
        %v2967 = vadd.f32 %v2928, %v2962
        %v2968 = vadd.f32 %v2929, %v2962
        %v2969 = vadd.f32 %v2930, %v2962
        %v2970 = vadd.f32 %v2931, %v2962
        %v2971 = vadd.f32 %v2932, %v2962
        %v2972 = vadd.f32 %v2933, %v2962
        %v2973 = vadd.f32 %v2934, %v2962
        %v2974 = vadd.f32 %v2935, %v2962
        %v2975 = vadd.f32 %v2936, %v2962
        %v2976 = vadd.f32 %v2937, %v2962
        %v2977 = vadd.f32 %v2938, %v2962
        %v2978 = vadd.f32 %v2939, %v2962
        %v2979 = vadd.f32 %v2940, %v2962
        %v2980 = vadd.f32 %v2941, %v2962
        %v2981 = vadd.f32 %v2942, %v2962
        %v2982 = vadd.f32 %v2943, %v2962
        %v2983 = vadd.f32 %v2944, %v2962
        %v2984 = vadd.f32 %v2945, %v2962
        %v2985 = vadd.f32 %v2946, %v2962
        %v2986 = vadd.f32 %v2947, %v2962
        %v2987 = vadd.f32 %v2948, %v2962
        %v2988 = vadd.f32 %v2949, %v2962
        %v2989 = vadd.f32 %v2950, %v2962
        %v2990 = vadd.f32 %v2951, %v2962
        %v2991 = vadd.f32 %v2952, %v2962
        %v2992 = vadd.f32 %v2953, %v2962
        %v2993 = vadd.f32 %v2954, %v2962
        %v2994 = vadd.f32 %v2955, %v2962
        %v2995 = vadd.f32 %v2956, %v2962
        %v2996 = vmax.f32 %v2964, 0.0
        %v2997 = vmax.f32 %v2965, 0.0
        %v2998 = vmax.f32 %v2966, 0.0
        %v2999 = vmax.f32 %v2967, 0.0
        %v3000 = vmax.f32 %v2968, 0.0
        %v3001 = vmax.f32 %v2969, 0.0
        %v3002 = vmax.f32 %v2970, 0.0
        %v3003 = vmax.f32 %v2971, 0.0
        %v3004 = vmax.f32 %v2972, 0.0
        %v3005 = vmax.f32 %v2973, 0.0
        %v3006 = vmax.f32 %v2974, 0.0
        %v3007 = vmax.f32 %v2975, 0.0
        %v3008 = vmax.f32 %v2976, 0.0
        %v3009 = vmax.f32 %v2977, 0.0
        %v3010 = vmax.f32 %v2978, 0.0
        %v3011 = vmax.f32 %v2979, 0.0
        %v3012 = vmax.f32 %v2980, 0.0
        %v3013 = vmax.f32 %v2981, 0.0
        %v3014 = vmax.f32 %v2982, 0.0
        %v3015 = vmax.f32 %v2983, 0.0
        %v3016 = vmax.f32 %v2984, 0.0
        %v3017 = vmax.f32 %v2985, 0.0
        %v3018 = vmax.f32 %v2986, 0.0
        %v3019 = vmax.f32 %v2987, 0.0
        %v3020 = vmax.f32 %v2988, 0.0
        %v3021 = vmax.f32 %v2989, 0.0
        %v3022 = vmax.f32 %v2990, 0.0
        %v3023 = vmax.f32 %v2991, 0.0
        %v3024 = vmax.f32 %v2992, 0.0
        %v3025 = vmax.f32 %v2993, 0.0
        %v3026 = vmax.f32 %v2994, 0.0
        %v3027 = vmax.f32 %v2995, 0.0
        %3028 = vst [vmem:[%s277 + $0x8] sm:$0xff] %v2996
        %3029 = vst [vmem:[%s277 + $0x10] sm:$0xff] %v2997
        %3030 = vst [vmem:[%s277 + $0x28] sm:$0xff] %v2998
        %3031 = vst [vmem:[%s277 + $0x30] sm:$0xff] %v2999
        %3032 = vst [vmem:[%s277 + $0x48] sm:$0xff] %v3000
        %3033 = vst [vmem:[%s277 + $0x50] sm:$0xff] %v3001
        %3034 = vst [vmem:[%s277 + $0x68] sm:$0xff] %v3002
        %3035 = vst [vmem:[%s277 + $0x70] sm:$0xff] %v3003
        %3036 = vst [vmem:[%s277 + $0x88] sm:$0xff] %v3004
        %3037 = vst [vmem:[%s277 + $0x90] sm:$0xff] %v3005
        %3038 = vst [vmem:[%s277 + $0xa8] sm:$0xff] %v3006
        %3039 = vst [vmem:[%s277 + $0xb0] sm:$0xff] %v3007
        %3040 = vst [vmem:[%s277 + $0xc8] sm:$0xff] %v3008
        %3041 = vst [vmem:[%s277 + $0xd0] sm:$0xff] %v3009
        %3042 = vst [vmem:[%s277 + $0xe8] sm:$0xff] %v3010
        %3043 = vst [vmem:[%s277 + $0xf0] sm:$0xff] %v3011
        %3044 = vst [vmem:[%s277 + $0x108] sm:$0xff] %v3012
        %3045 = vst [vmem:[%s277 + $0x110] sm:$0xff] %v3013
        %3046 = vst [vmem:[%s277 + $0x128] sm:$0xff] %v3014
        %3047 = vst [vmem:[%s277 + $0x130] sm:$0xff] %v3015
        %3048 = vst [vmem:[%s277 + $0x148] sm:$0xff] %v3016
        %3049 = vst [vmem:[%s277 + $0x150] sm:$0xff] %v3017
        %3050 = vst [vmem:[%s277 + $0x168] sm:$0xff] %v3018
        %3051 = vst [vmem:[%s277 + $0x170] sm:$0xff] %v3019
        %3052 = vst [vmem:[%s277 + $0x188] sm:$0xff] %v3020
        %3053 = vst [vmem:[%s277 + $0x190] sm:$0xff] %v3021
        %3054 = vst [vmem:[%s277 + $0x1a8] sm:$0xff] %v3022
        %3055 = vst [vmem:[%s277 + $0x1b0] sm:$0xff] %v3023
        %3056 = vst [vmem:[%s277 + $0x1c8] sm:$0xff] %v3024
        %3057 = vst [vmem:[%s277 + $0x1d0] sm:$0xff] %v3025
        %3058 = vst [vmem:[%s277 + $0x1e8] sm:$0xff] %v3026
        %3059 = vst [vmem:[%s277 + $0x1f0] sm:$0xff] %v3027
        %v3060 = vld [vmem:[%s3] sm:$0xf]
        %v3061 = vld [vmem:[%s3 + $0x4] sm:$0xf]
        %v3062 = vld [vmem:[%s3 + $0x8] sm:$0xf]
        %v3063 = vld [vmem:[%s3 + $0xc] sm:$0xf]
        %v3064 = vld [vmem:[%s3 + $0x10] sm:$0xf]
        %v3065 = vld [vmem:[%s3 + $0x14] sm:$0xf]
        %v3066 = vld [vmem:[%s3 + $0x18] sm:$0xf]
        %v3067 = vld [vmem:[%s3 + $0x1c] sm:$0xf]
        %v3068 = vld [vmem:[%s3 + $0x20] sm:$0xf]
        %v3069 = vld [vmem:[%s3 + $0x24] sm:$0xf]
        %v3070 = vld [vmem:[%s3 + $0x28] sm:$0xf]
        %v3071 = vld [vmem:[%s3 + $0x2c] sm:$0xf]
        %v3072 = vld [vmem:[%s3 + $0x30] sm:$0xf]
        %v3073 = vld [vmem:[%s3 + $0x34] sm:$0xf]
        %v3074 = vld [vmem:[%s3 + $0x38] sm:$0xf]
        %v3075 = vld [vmem:[%s3 + $0x3c] sm:$0xf]
        %s3076 = scalar_lea.vmem [#allocation3], 7
        %v3077 = vld [vmem:[%s3076] ss:$2 sm:$0xff]
        %s3078 = scalar_lea.vmem [#allocation3], 39
        %v3079 = vld [vmem:[%s3078] ss:$2 sm:$0xff]
        %s3080 = scalar_lea.vmem [#allocation3], 71
        %v3081 = vld [vmem:[%s3080] ss:$2 sm:$0xff]
        %s3082 = scalar_lea.vmem [#allocation3], 103
        %v3083 = vld [vmem:[%s3082] ss:$2 sm:$0xff]
        %s3084 = scalar_lea.vmem [#allocation3], 135
        %v3085 = vld [vmem:[%s3084] ss:$2 sm:$0xff]
        %s3086 = scalar_lea.vmem [#allocation3], 167
        %v3087 = vld [vmem:[%s3086] ss:$2 sm:$0xff]
        %s3088 = scalar_lea.vmem [#allocation3], 199
        %v3089 = vld [vmem:[%s3088] ss:$2 sm:$0xff]
        %s3090 = scalar_lea.vmem [#allocation3], 231
        %v3091 = vld [vmem:[%s3090] ss:$2 sm:$0xff]
        %s3092 = scalar_lea.vmem [#allocation3], 263
        %v3093 = vld [vmem:[%s3092] ss:$2 sm:$0xff]
        %s3094 = scalar_lea.vmem [#allocation3], 295
        %v3095 = vld [vmem:[%s3094] ss:$2 sm:$0xff]
        %s3096 = scalar_lea.vmem [#allocation3], 327
        %v3097 = vld [vmem:[%s3096] ss:$2 sm:$0xff]
        %s3098 = scalar_lea.vmem [#allocation3], 359
        %v3099 = vld [vmem:[%s3098] ss:$2 sm:$0xff]
        %s3100 = scalar_lea.vmem [#allocation3], 391
        %v3101 = vld [vmem:[%s3100] ss:$2 sm:$0xff]
        %s3102 = scalar_lea.vmem [#allocation3], 423
        %v3103 = vld [vmem:[%s3102] ss:$2 sm:$0xff]
        %s3104 = scalar_lea.vmem [#allocation3], 455
        %v3105 = vld [vmem:[%s3104] ss:$2 sm:$0xff]
        %s3106 = scalar_lea.vmem [#allocation3], 487
        %v3107 = vld [vmem:[%s3106] ss:$2 sm:$0xff]
        %s3108 = scalar_lea.vmem [#allocation3], 8
        %v3109 = vld [vmem:[%s3108] ss:$2 sm:$0xff]
        %s3110 = scalar_lea.vmem [#allocation3], 40
        %v3111 = vld [vmem:[%s3110] ss:$2 sm:$0xff]
        %s3112 = scalar_lea.vmem [#allocation3], 72
        %v3113 = vld [vmem:[%s3112] ss:$2 sm:$0xff]
        %s3114 = scalar_lea.vmem [#allocation3], 104
        %v3115 = vld [vmem:[%s3114] ss:$2 sm:$0xff]
        %s3116 = scalar_lea.vmem [#allocation3], 136
        %v3117 = vld [vmem:[%s3116] ss:$2 sm:$0xff]
        %s3118 = scalar_lea.vmem [#allocation3], 168
        %v3119 = vld [vmem:[%s3118] ss:$2 sm:$0xff]
        %s3120 = scalar_lea.vmem [#allocation3], 200
        %v3121 = vld [vmem:[%s3120] ss:$2 sm:$0xff]
        %s3122 = scalar_lea.vmem [#allocation3], 232
        %v3123 = vld [vmem:[%s3122] ss:$2 sm:$0xff]
        %s3124 = scalar_lea.vmem [#allocation3], 264
        %v3125 = vld [vmem:[%s3124] ss:$2 sm:$0xff]
        %s3126 = scalar_lea.vmem [#allocation3], 296
        %v3127 = vld [vmem:[%s3126] ss:$2 sm:$0xff]
        %s3128 = scalar_lea.vmem [#allocation3], 328
        %v3129 = vld [vmem:[%s3128] ss:$2 sm:$0xff]
        %s3130 = scalar_lea.vmem [#allocation3], 360
        %v3131 = vld [vmem:[%s3130] ss:$2 sm:$0xff]
        %s3132 = scalar_lea.vmem [#allocation3], 392
        %v3133 = vld [vmem:[%s3132] ss:$2 sm:$0xff]
        %s3134 = scalar_lea.vmem [#allocation3], 424
        %v3135 = vld [vmem:[%s3134] ss:$2 sm:$0xff]
        %s3136 = scalar_lea.vmem [#allocation3], 456
        %v3137 = vld [vmem:[%s3136] ss:$2 sm:$0xff]
        %s3138 = scalar_lea.vmem [#allocation3], 488
        %v3139 = vld [vmem:[%s3138] ss:$2 sm:$0xff]
        %v3140 = vpack.c.bf16 %v3079, %v3077
        %v3141 = vpack.c.bf16 %v3083, %v3081
        %v3142 = vpack.c.bf16 %v3087, %v3085
        %v3143 = vpack.c.bf16 %v3091, %v3089
        %v3144 = vpack.c.bf16 %v3095, %v3093
        %v3145 = vpack.c.bf16 %v3099, %v3097
        %v3146 = vpack.c.bf16 %v3103, %v3101
        %v3147 = vpack.c.bf16 %v3107, %v3105
        %v3148 = vpack.c.bf16 %v3111, %v3109
        %v3149 = vpack.c.bf16 %v3115, %v3113
        %v3150 = vpack.c.bf16 %v3119, %v3117
        %v3151 = vpack.c.bf16 %v3123, %v3121
        %v3152 = vpack.c.bf16 %v3127, %v3125
        %v3153 = vpack.c.bf16 %v3131, %v3129
        %v3154 = vpack.c.bf16 %v3135, %v3133
        %v3155 = vpack.c.bf16 %v3139, %v3137
        %s3156 = scalar_lea.vmem %s3, 64
        %v3157 = vld [vmem:[%s3156] sm:$0xf]
        %v3158 = vld [vmem:[%s3156 + $0x4] sm:$0xf]
        %v3159 = vld [vmem:[%s3156 + $0x8] sm:$0xf]
        %v3160 = vld [vmem:[%s3156 + $0xc] sm:$0xf]
        %v3161 = vld [vmem:[%s3156 + $0x10] sm:$0xf]
        %v3162 = vld [vmem:[%s3156 + $0x14] sm:$0xf]
        %v3163 = vld [vmem:[%s3156 + $0x18] sm:$0xf]
        %v3164 = vld [vmem:[%s3156 + $0x1c] sm:$0xf]
        %v3165 = vld [vmem:[%s3156 + $0x20] sm:$0xf]
        %v3166 = vld [vmem:[%s3156 + $0x24] sm:$0xf]
        %v3167 = vld [vmem:[%s3156 + $0x28] sm:$0xf]
        %v3168 = vld [vmem:[%s3156 + $0x2c] sm:$0xf]
        %v3169 = vld [vmem:[%s3156 + $0x30] sm:$0xf]
        %v3170 = vld [vmem:[%s3156 + $0x34] sm:$0xf]
        %v3171 = vld [vmem:[%s3156 + $0x38] sm:$0xf]
        %v3172 = vld [vmem:[%s3156 + $0x3c] sm:$0xf]
        %s3173 = scalar_lea.vmem [#allocation3], 9
        %v3174 = vld [vmem:[%s3173] ss:$2 sm:$0xff]
        %s3175 = scalar_lea.vmem [#allocation3], 41
        %v3176 = vld [vmem:[%s3175] ss:$2 sm:$0xff]
        %s3177 = scalar_lea.vmem [#allocation3], 73
        %v3178 = vld [vmem:[%s3177] ss:$2 sm:$0xff]
        %s3179 = scalar_lea.vmem [#allocation3], 105
        %v3180 = vld [vmem:[%s3179] ss:$2 sm:$0xff]
        %s3181 = scalar_lea.vmem [#allocation3], 137
        %v3182 = vld [vmem:[%s3181] ss:$2 sm:$0xff]
        %s3183 = scalar_lea.vmem [#allocation3], 169
        %v3184 = vld [vmem:[%s3183] ss:$2 sm:$0xff]
        %s3185 = scalar_lea.vmem [#allocation3], 201
        %v3186 = vld [vmem:[%s3185] ss:$2 sm:$0xff]
        %s3187 = scalar_lea.vmem [#allocation3], 233
        %v3188 = vld [vmem:[%s3187] ss:$2 sm:$0xff]
        %s3189 = scalar_lea.vmem [#allocation3], 265
        %v3190 = vld [vmem:[%s3189] ss:$2 sm:$0xff]
        %s3191 = scalar_lea.vmem [#allocation3], 297
        %v3192 = vld [vmem:[%s3191] ss:$2 sm:$0xff]
        %s3193 = scalar_lea.vmem [#allocation3], 329
        %v3194 = vld [vmem:[%s3193] ss:$2 sm:$0xff]
        %s3195 = scalar_lea.vmem [#allocation3], 361
        %v3196 = vld [vmem:[%s3195] ss:$2 sm:$0xff]
        %s3197 = scalar_lea.vmem [#allocation3], 393
        %v3198 = vld [vmem:[%s3197] ss:$2 sm:$0xff]
        %s3199 = scalar_lea.vmem [#allocation3], 425
        %v3200 = vld [vmem:[%s3199] ss:$2 sm:$0xff]
        %s3201 = scalar_lea.vmem [#allocation3], 457
        %v3202 = vld [vmem:[%s3201] ss:$2 sm:$0xff]
        %s3203 = scalar_lea.vmem [#allocation3], 489
        %v3204 = vld [vmem:[%s3203] ss:$2 sm:$0xff]
        %v3221 = vunpack.c.l.b16 %v3157
        %v3222 = vunpack.c.l.b16 %v3158
        %v3223 = vunpack.c.l.b16 %v3159
        %v3224 = vunpack.c.l.b16 %v3160
        %v3225 = vunpack.c.l.b16 %v3161
        %v3226 = vunpack.c.l.b16 %v3162
        %v3227 = vunpack.c.l.b16 %v3163
        %v3228 = vunpack.c.l.b16 %v3164
        %v3229 = vunpack.c.l.b16 %v3165
        %v3230 = vunpack.c.l.b16 %v3166
        %v3231 = vunpack.c.l.b16 %v3167
        %v3232 = vunpack.c.l.b16 %v3168
        %v3233 = vunpack.c.l.b16 %v3169
        %v3234 = vunpack.c.l.b16 %v3170
        %v3235 = vunpack.c.l.b16 %v3171
        %v3236 = vunpack.c.l.b16 %v3172
        %v3237 = vpack.c.b16 %v3222, %v3221
        %v3238 = vpack.c.b16 %v3224, %v3223
        %v3239 = vpack.c.b16 %v3226, %v3225
        %v3240 = vpack.c.b16 %v3228, %v3227
        %v3241 = vpack.c.b16 %v3230, %v3229
        %v3242 = vpack.c.b16 %v3232, %v3231
        %v3243 = vpack.c.b16 %v3234, %v3233
        %v3244 = vpack.c.b16 %v3236, %v3235
        %3253 = vmatprep.subr.bf16.mxu0 0
        %3254 = vmatpush1.bf16.msra.mxu0 %v3237
        %3255 = vmatprep.subr.bf16.mxu0 0
        %3256 = vmatpush1.bf16.msra.mxu0 %v3238
        %3257 = vmatprep.subr.bf16.mxu0 0
        %3258 = vmatpush1.bf16.msra.mxu0 %v3239
        %3259 = vmatprep.subr.bf16.mxu0 0
        %3260 = vmatpush1.bf16.msra.mxu0 %v3240
        %3261 = vmatprep.subr.bf16.mxu0 0
        %3262 = vmatpush1.bf16.msra.mxu0 %v3241
        %3263 = vmatprep.subr.bf16.mxu0 0
        %3264 = vmatpush1.bf16.msra.mxu0 %v3242
        %3265 = vmatprep.subr.bf16.mxu0 0
        %3266 = vmatpush1.bf16.msra.mxu0 %v3243
        %3267 = vmatprep.subr.bf16.mxu0 0
        %3268 = vmatpush1.bf16.msra.mxu0 %v3244
        %3269 = vmatprep.subr.bf16.mxu0 0
        %3270 = vmatpush1.bf16.msra.mxu0 0
        %3271 = vmatprep.subr.bf16.mxu0 0
        %3272 = vmatpush1.bf16.msra.mxu0 0
        %3273 = vmatprep.subr.bf16.mxu0 0
        %3274 = vmatpush1.bf16.msra.mxu0 0
        %3275 = vmatprep.subr.bf16.mxu0 0
        %3276 = vmatpush1.bf16.msra.mxu0 0
        %3277 = vmatprep.subr.bf16.mxu0 0
        %3278 = vmatpush1.bf16.msra.mxu0 0
        %3279 = vmatprep.subr.bf16.mxu0 0
        %3280 = vmatpush1.bf16.msra.mxu0 0
        %3281 = vmatprep.subr.bf16.mxu0 0
        %3282 = vmatpush1.bf16.msra.mxu0 0
        %3283 = vmatprep.subr.bf16.mxu0 0
        %3284 = vmatpush1.bf16.msra.mxu0 0
        %3285 = vmatprep.mubr.bf16.mxu0 0
        %3286 = vmatmul.mubr.bf16.gmra.mrb[0].mxu0 %v3148
        %v3287 = vpop.f32.mrb[0].mxu0
        %v3288 = vadd.f32 0.0, %v3287
        %v3289 = vpop.f32.mrb[0].mxu0
        %v3290 = vpop.f32.mrb[0].mxu0
        %v3291 = vadd.f32 0.0, %v3290
        %v3292 = vpop.f32.mrb[0].mxu0
        %3293 = vmatprep.mubr.bf16.mxu0 0
        %3294 = vmatmul.mubr.bf16.gmra.mrb[0].mxu0 %v3149
        %v3295 = vpop.f32.mrb[0].mxu0
        %v3296 = vadd.f32 0.0, %v3295
        %v3297 = vpop.f32.mrb[0].mxu0
        %v3298 = vpop.f32.mrb[0].mxu0
        %v3299 = vadd.f32 0.0, %v3298
        %v3300 = vpop.f32.mrb[0].mxu0
        %3301 = vmatprep.mubr.bf16.mxu0 0
        %3302 = vmatmul.mubr.bf16.gmra.mrb[0].mxu0 %v3150
        %v3303 = vpop.f32.mrb[0].mxu0
        %v3304 = vadd.f32 0.0, %v3303
        %v3305 = vpop.f32.mrb[0].mxu0
        %v3306 = vpop.f32.mrb[0].mxu0
        %v3307 = vadd.f32 0.0, %v3306
        %v3308 = vpop.f32.mrb[0].mxu0
        %3309 = vmatprep.mubr.bf16.mxu0 0
        %3310 = vmatmul.mubr.bf16.gmra.mrb[0].mxu0 %v3151
        %v3311 = vpop.f32.mrb[0].mxu0
        %v3312 = vadd.f32 0.0, %v3311
        %v3313 = vpop.f32.mrb[0].mxu0
        %v3314 = vpop.f32.mrb[0].mxu0
        %v3315 = vadd.f32 0.0, %v3314
        %v3316 = vpop.f32.mrb[0].mxu0
        %3317 = vmatprep.mubr.bf16.mxu0 0
        %3318 = vmatmul.mubr.bf16.gmra.mrb[0].mxu0 %v3152
        %v3319 = vpop.f32.mrb[0].mxu0
        %v3320 = vadd.f32 0.0, %v3319
        %v3321 = vpop.f32.mrb[0].mxu0
        %v3322 = vpop.f32.mrb[0].mxu0
        %v3323 = vadd.f32 0.0, %v3322
        %v3324 = vpop.f32.mrb[0].mxu0
        %3325 = vmatprep.mubr.bf16.mxu0 0
        %3326 = vmatmul.mubr.bf16.gmra.mrb[0].mxu0 %v3153
        %v3327 = vpop.f32.mrb[0].mxu0
        %v3328 = vadd.f32 0.0, %v3327
        %v3329 = vpop.f32.mrb[0].mxu0
        %v3330 = vpop.f32.mrb[0].mxu0
        %v3331 = vadd.f32 0.0, %v3330
        %v3332 = vpop.f32.mrb[0].mxu0
        %3333 = vmatprep.mubr.bf16.mxu0 0
        %3334 = vmatmul.mubr.bf16.gmra.mrb[0].mxu0 %v3154
        %v3335 = vpop.f32.mrb[0].mxu0
        %v3336 = vadd.f32 0.0, %v3335
        %v3337 = vpop.f32.mrb[0].mxu0
        %v3338 = vpop.f32.mrb[0].mxu0
        %v3339 = vadd.f32 0.0, %v3338
        %v3340 = vpop.f32.mrb[0].mxu0
        %3341 = vmatprep.mubr.bf16.mxu0 0
        %3342 = vmatmul.mubr.bf16.gmra.mrb[0].mxu0 %v3155
        %v3343 = vpop.f32.mrb[0].mxu0
        %v3344 = vadd.f32 0.0, %v3343
        %v3345 = vpop.f32.mrb[0].mxu0
        %v3346 = vpop.f32.mrb[0].mxu0
        %v3347 = vadd.f32 0.0, %v3346
        %v3348 = vpop.f32.mrb[0].mxu0
        %3349 = vdwg.mxu0
        %v3366 = vunpack.c.l.b16 %v3060
        %v3367 = vunpack.c.l.b16 %v3061
        %v3368 = vunpack.c.l.b16 %v3062
        %v3369 = vunpack.c.l.b16 %v3063
        %v3370 = vunpack.c.l.b16 %v3064
        %v3371 = vunpack.c.l.b16 %v3065
        %v3372 = vunpack.c.l.b16 %v3066
        %v3373 = vunpack.c.l.b16 %v3067
        %v3374 = vunpack.c.l.b16 %v3068
        %v3375 = vunpack.c.l.b16 %v3069
        %v3376 = vunpack.c.l.b16 %v3070
        %v3377 = vunpack.c.l.b16 %v3071
        %v3378 = vunpack.c.l.b16 %v3072
        %v3379 = vunpack.c.l.b16 %v3073
        %v3380 = vunpack.c.l.b16 %v3074
        %v3381 = vunpack.c.l.b16 %v3075
        %v3382 = vpack.c.b16 %v3367, %v3366
        %v3383 = vpack.c.b16 %v3369, %v3368
        %v3384 = vpack.c.b16 %v3371, %v3370
        %v3385 = vpack.c.b16 %v3373, %v3372
        %v3386 = vpack.c.b16 %v3375, %v3374
        %v3387 = vpack.c.b16 %v3377, %v3376
        %v3388 = vpack.c.b16 %v3379, %v3378
        %v3389 = vpack.c.b16 %v3381, %v3380
        %3398 = vmatprep.subr.bf16.mxu0 0
        %3399 = vmatpush1.bf16.msra.mxu0 %v3382
        %3400 = vmatprep.subr.bf16.mxu0 0
        %3401 = vmatpush1.bf16.msra.mxu0 %v3383
        %3402 = vmatprep.subr.bf16.mxu0 0
        %3403 = vmatpush1.bf16.msra.mxu0 %v3384
        %3404 = vmatprep.subr.bf16.mxu0 0
        %3405 = vmatpush1.bf16.msra.mxu0 %v3385
        %3406 = vmatprep.subr.bf16.mxu0 0
        %3407 = vmatpush1.bf16.msra.mxu0 %v3386
        %3408 = vmatprep.subr.bf16.mxu0 0
        %3409 = vmatpush1.bf16.msra.mxu0 %v3387
        %3410 = vmatprep.subr.bf16.mxu0 0
        %3411 = vmatpush1.bf16.msra.mxu0 %v3388
        %3412 = vmatprep.subr.bf16.mxu0 0
        %3413 = vmatpush1.bf16.msra.mxu0 %v3389
        %3414 = vmatprep.subr.bf16.mxu0 0
        %3415 = vmatpush1.bf16.msra.mxu0 0
        %3416 = vmatprep.subr.bf16.mxu0 0
        %3417 = vmatpush1.bf16.msra.mxu0 0
        %3418 = vmatprep.subr.bf16.mxu0 0
        %3419 = vmatpush1.bf16.msra.mxu0 0
        %3420 = vmatprep.subr.bf16.mxu0 0
        %3421 = vmatpush1.bf16.msra.mxu0 0
        %3422 = vmatprep.subr.bf16.mxu0 0
        %3423 = vmatpush1.bf16.msra.mxu0 0
        %3424 = vmatprep.subr.bf16.mxu0 0
        %3425 = vmatpush1.bf16.msra.mxu0 0
        %3426 = vmatprep.subr.bf16.mxu0 0
        %3427 = vmatpush1.bf16.msra.mxu0 0
        %3428 = vmatprep.subr.bf16.mxu0 0
        %3429 = vmatpush1.bf16.msra.mxu0 0
        %3430 = vmatprep.mubr.bf16.mxu0 0
        %3431 = vmatmul.mubr.bf16.gmra.mrb[0].mxu0 %v3140
        %v3432 = vpop.f32.mrb[0].mxu0
        %v3433 = vadd.f32 %v3288, %v3432
        %v3434 = vpop.f32.mrb[0].mxu0
        %v3435 = vpop.f32.mrb[0].mxu0
        %v3436 = vadd.f32 %v3291, %v3435
        %v3437 = vpop.f32.mrb[0].mxu0
        %3438 = vmatprep.mubr.bf16.mxu0 0
        %3439 = vmatmul.mubr.bf16.gmra.mrb[0].mxu0 %v3141
        %v3440 = vpop.f32.mrb[0].mxu0
        %v3441 = vadd.f32 %v3296, %v3440
        %v3442 = vpop.f32.mrb[0].mxu0
        %v3443 = vpop.f32.mrb[0].mxu0
        %v3444 = vadd.f32 %v3299, %v3443
        %v3445 = vpop.f32.mrb[0].mxu0
        %3446 = vmatprep.mubr.bf16.mxu0 0
        %3447 = vmatmul.mubr.bf16.gmra.mrb[0].mxu0 %v3142
        %v3448 = vpop.f32.mrb[0].mxu0
        %v3449 = vadd.f32 %v3304, %v3448
        %v3450 = vpop.f32.mrb[0].mxu0
        %v3451 = vpop.f32.mrb[0].mxu0
        %v3452 = vadd.f32 %v3307, %v3451
        %v3453 = vpop.f32.mrb[0].mxu0
        %3454 = vmatprep.mubr.bf16.mxu0 0
        %3455 = vmatmul.mubr.bf16.gmra.mrb[0].mxu0 %v3143
        %v3456 = vpop.f32.mrb[0].mxu0
        %v3457 = vadd.f32 %v3312, %v3456
        %v3458 = vpop.f32.mrb[0].mxu0
        %v3459 = vpop.f32.mrb[0].mxu0
        %v3460 = vadd.f32 %v3315, %v3459
        %v3461 = vpop.f32.mrb[0].mxu0
        %3462 = vmatprep.mubr.bf16.mxu0 0
        %3463 = vmatmul.mubr.bf16.gmra.mrb[0].mxu0 %v3144
        %v3464 = vpop.f32.mrb[0].mxu0
        %v3465 = vadd.f32 %v3320, %v3464
        %v3466 = vpop.f32.mrb[0].mxu0
        %v3467 = vpop.f32.mrb[0].mxu0
        %v3468 = vadd.f32 %v3323, %v3467
        %v3469 = vpop.f32.mrb[0].mxu0
        %3470 = vmatprep.mubr.bf16.mxu0 0
        %3471 = vmatmul.mubr.bf16.gmra.mrb[0].mxu0 %v3145
        %v3472 = vpop.f32.mrb[0].mxu0
        %v3473 = vadd.f32 %v3328, %v3472
        %v3474 = vpop.f32.mrb[0].mxu0
        %v3475 = vpop.f32.mrb[0].mxu0
        %v3476 = vadd.f32 %v3331, %v3475
        %v3477 = vpop.f32.mrb[0].mxu0
        %3478 = vmatprep.mubr.bf16.mxu0 0
        %3479 = vmatmul.mubr.bf16.gmra.mrb[0].mxu0 %v3146
        %v3480 = vpop.f32.mrb[0].mxu0
        %v3481 = vadd.f32 %v3336, %v3480
        %v3482 = vpop.f32.mrb[0].mxu0
        %v3483 = vpop.f32.mrb[0].mxu0
        %v3484 = vadd.f32 %v3339, %v3483
        %v3485 = vpop.f32.mrb[0].mxu0
        %3486 = vmatprep.mubr.bf16.mxu0 0
        %3487 = vmatmul.mubr.bf16.gmra.mrb[0].mxu0 %v3147
        %v3488 = vpop.f32.mrb[0].mxu0
        %v3489 = vadd.f32 %v3344, %v3488
        %v3490 = vpop.f32.mrb[0].mxu0
        %v3491 = vpop.f32.mrb[0].mxu0
        %v3492 = vadd.f32 %v3347, %v3491
        %v3493 = vpop.f32.mrb[0].mxu0
        %3494 = vdwg.mxu0
        %v3495 = vpack.c.bf16 %v3176, %v3174
        %v3496 = vpack.c.bf16 %v3180, %v3178
        %v3497 = vpack.c.bf16 %v3184, %v3182
        %v3498 = vpack.c.bf16 %v3188, %v3186
        %v3499 = vpack.c.bf16 %v3192, %v3190
        %v3500 = vpack.c.bf16 %v3196, %v3194
        %v3501 = vpack.c.bf16 %v3200, %v3198
        %v3502 = vpack.c.bf16 %v3204, %v3202
        %3503 = vmatprep.subr.bf16.mxu0 0
        %3504 = vmatpush1.bf16.msra.mxu0 %v3237
        %3505 = vmatprep.subr.bf16.mxu0 0
        %3506 = vmatpush1.bf16.msra.mxu0 %v3238
        %3507 = vmatprep.subr.bf16.mxu0 0
        %3508 = vmatpush1.bf16.msra.mxu0 %v3239
        %3509 = vmatprep.subr.bf16.mxu0 0
        %3510 = vmatpush1.bf16.msra.mxu0 %v3240
        %3511 = vmatprep.subr.bf16.mxu0 0
        %3512 = vmatpush1.bf16.msra.mxu0 %v3241
        %3513 = vmatprep.subr.bf16.mxu0 0
        %3514 = vmatpush1.bf16.msra.mxu0 %v3242
        %3515 = vmatprep.subr.bf16.mxu0 0
        %3516 = vmatpush1.bf16.msra.mxu0 %v3243
        %3517 = vmatprep.subr.bf16.mxu0 0
        %3518 = vmatpush1.bf16.msra.mxu0 %v3244
        %3519 = vmatprep.subr.bf16.mxu0 0
        %3520 = vmatpush1.bf16.msra.mxu0 0
        %3521 = vmatprep.subr.bf16.mxu0 0
        %3522 = vmatpush1.bf16.msra.mxu0 0
        %3523 = vmatprep.subr.bf16.mxu0 0
        %3524 = vmatpush1.bf16.msra.mxu0 0
        %3525 = vmatprep.subr.bf16.mxu0 0
        %3526 = vmatpush1.bf16.msra.mxu0 0
        %3527 = vmatprep.subr.bf16.mxu0 0
        %3528 = vmatpush1.bf16.msra.mxu0 0
        %3529 = vmatprep.subr.bf16.mxu0 0
        %3530 = vmatpush1.bf16.msra.mxu0 0
        %3531 = vmatprep.subr.bf16.mxu0 0
        %3532 = vmatpush1.bf16.msra.mxu0 0
        %3533 = vmatprep.subr.bf16.mxu0 0
        %3534 = vmatpush1.bf16.msra.mxu0 0
        %3535 = vmatprep.mubr.bf16.mxu0 0
        %3536 = vmatmul.mubr.bf16.gmra.mrb[0].mxu0 %v3495
        %v3537 = vpop.f32.mrb[0].mxu0
        %v3538 = vadd.f32 0.0, %v3537
        %v3539 = vpop.f32.mrb[0].mxu0
        %v3540 = vpop.f32.mrb[0].mxu0
        %v3541 = vadd.f32 0.0, %v3540
        %v3542 = vpop.f32.mrb[0].mxu0
        %3543 = vmatprep.mubr.bf16.mxu0 0
        %3544 = vmatmul.mubr.bf16.gmra.mrb[0].mxu0 %v3496
        %v3545 = vpop.f32.mrb[0].mxu0
        %v3546 = vadd.f32 0.0, %v3545
        %v3547 = vpop.f32.mrb[0].mxu0
        %v3548 = vpop.f32.mrb[0].mxu0
        %v3549 = vadd.f32 0.0, %v3548
        %v3550 = vpop.f32.mrb[0].mxu0
        %3551 = vmatprep.mubr.bf16.mxu0 0
        %3552 = vmatmul.mubr.bf16.gmra.mrb[0].mxu0 %v3497
        %v3553 = vpop.f32.mrb[0].mxu0
        %v3554 = vadd.f32 0.0, %v3553
        %v3555 = vpop.f32.mrb[0].mxu0
        %v3556 = vpop.f32.mrb[0].mxu0
        %v3557 = vadd.f32 0.0, %v3556
        %v3558 = vpop.f32.mrb[0].mxu0
        %3559 = vmatprep.mubr.bf16.mxu0 0
        %3560 = vmatmul.mubr.bf16.gmra.mrb[0].mxu0 %v3498
        %v3561 = vpop.f32.mrb[0].mxu0
        %v3562 = vadd.f32 0.0, %v3561
        %v3563 = vpop.f32.mrb[0].mxu0
        %v3564 = vpop.f32.mrb[0].mxu0
        %v3565 = vadd.f32 0.0, %v3564
        %v3566 = vpop.f32.mrb[0].mxu0
        %3567 = vmatprep.mubr.bf16.mxu0 0
        %3568 = vmatmul.mubr.bf16.gmra.mrb[0].mxu0 %v3499
        %v3569 = vpop.f32.mrb[0].mxu0
        %v3570 = vadd.f32 0.0, %v3569
        %v3571 = vpop.f32.mrb[0].mxu0
        %v3572 = vpop.f32.mrb[0].mxu0
        %v3573 = vadd.f32 0.0, %v3572
        %v3574 = vpop.f32.mrb[0].mxu0
        %3575 = vmatprep.mubr.bf16.mxu0 0
        %3576 = vmatmul.mubr.bf16.gmra.mrb[0].mxu0 %v3500
        %v3577 = vpop.f32.mrb[0].mxu0
        %v3578 = vadd.f32 0.0, %v3577
        %v3579 = vpop.f32.mrb[0].mxu0
        %v3580 = vpop.f32.mrb[0].mxu0
        %v3581 = vadd.f32 0.0, %v3580
        %v3582 = vpop.f32.mrb[0].mxu0
        %3583 = vmatprep.mubr.bf16.mxu0 0
        %3584 = vmatmul.mubr.bf16.gmra.mrb[0].mxu0 %v3501
        %v3585 = vpop.f32.mrb[0].mxu0
        %v3586 = vadd.f32 0.0, %v3585
        %v3587 = vpop.f32.mrb[0].mxu0
        %v3588 = vpop.f32.mrb[0].mxu0
        %v3589 = vadd.f32 0.0, %v3588
        %v3590 = vpop.f32.mrb[0].mxu0
        %3591 = vmatprep.mubr.bf16.mxu0 0
        %3592 = vmatmul.mubr.bf16.gmra.mrb[0].mxu0 %v3502
        %v3593 = vpop.f32.mrb[0].mxu0
        %v3594 = vadd.f32 0.0, %v3593
        %v3595 = vpop.f32.mrb[0].mxu0
        %v3596 = vpop.f32.mrb[0].mxu0
        %v3597 = vadd.f32 0.0, %v3596
        %v3598 = vpop.f32.mrb[0].mxu0
        %3599 = vdwg.mxu0
        %3600 = vmatprep.subr.bf16.mxu0 0
        %3601 = vmatpush1.bf16.msra.mxu0 %v3382
        %3602 = vmatprep.subr.bf16.mxu0 0
        %3603 = vmatpush1.bf16.msra.mxu0 %v3383
        %3604 = vmatprep.subr.bf16.mxu0 0
        %3605 = vmatpush1.bf16.msra.mxu0 %v3384
        %3606 = vmatprep.subr.bf16.mxu0 0
        %3607 = vmatpush1.bf16.msra.mxu0 %v3385
        %3608 = vmatprep.subr.bf16.mxu0 0
        %3609 = vmatpush1.bf16.msra.mxu0 %v3386
        %3610 = vmatprep.subr.bf16.mxu0 0
        %3611 = vmatpush1.bf16.msra.mxu0 %v3387
        %3612 = vmatprep.subr.bf16.mxu0 0
        %3613 = vmatpush1.bf16.msra.mxu0 %v3388
        %3614 = vmatprep.subr.bf16.mxu0 0
        %3615 = vmatpush1.bf16.msra.mxu0 %v3389
        %3616 = vmatprep.subr.bf16.mxu0 0
        %3617 = vmatpush1.bf16.msra.mxu0 0
        %3618 = vmatprep.subr.bf16.mxu0 0
        %3619 = vmatpush1.bf16.msra.mxu0 0
        %3620 = vmatprep.subr.bf16.mxu0 0
        %3621 = vmatpush1.bf16.msra.mxu0 0
        %3622 = vmatprep.subr.bf16.mxu0 0
        %3623 = vmatpush1.bf16.msra.mxu0 0
        %3624 = vmatprep.subr.bf16.mxu0 0
        %3625 = vmatpush1.bf16.msra.mxu0 0
        %3626 = vmatprep.subr.bf16.mxu0 0
        %3627 = vmatpush1.bf16.msra.mxu0 0
        %3628 = vmatprep.subr.bf16.mxu0 0
        %3629 = vmatpush1.bf16.msra.mxu0 0
        %3630 = vmatprep.subr.bf16.mxu0 0
        %3631 = vmatpush1.bf16.msra.mxu0 0
        %3632 = vmatprep.mubr.bf16.mxu0 0
        %3633 = vmatmul.mubr.bf16.gmra.mrb[0].mxu0 %v3148
        %v3634 = vpop.f32.mrb[0].mxu0
        %v3635 = vadd.f32 %v3538, %v3634
        %v3636 = vpop.f32.mrb[0].mxu0
        %v3637 = vpop.f32.mrb[0].mxu0
        %v3638 = vadd.f32 %v3541, %v3637
        %v3639 = vpop.f32.mrb[0].mxu0
        %3640 = vmatprep.mubr.bf16.mxu0 0
        %3641 = vmatmul.mubr.bf16.gmra.mrb[0].mxu0 %v3149
        %v3642 = vpop.f32.mrb[0].mxu0
        %v3643 = vadd.f32 %v3546, %v3642
        %v3644 = vpop.f32.mrb[0].mxu0
        %v3645 = vpop.f32.mrb[0].mxu0
        %v3646 = vadd.f32 %v3549, %v3645
        %v3647 = vpop.f32.mrb[0].mxu0
        %3648 = vmatprep.mubr.bf16.mxu0 0
        %3649 = vmatmul.mubr.bf16.gmra.mrb[0].mxu0 %v3150
        %v3650 = vpop.f32.mrb[0].mxu0
        %v3651 = vadd.f32 %v3554, %v3650
        %v3652 = vpop.f32.mrb[0].mxu0
        %v3653 = vpop.f32.mrb[0].mxu0
        %v3654 = vadd.f32 %v3557, %v3653
        %v3655 = vpop.f32.mrb[0].mxu0
        %3656 = vmatprep.mubr.bf16.mxu0 0
        %3657 = vmatmul.mubr.bf16.gmra.mrb[0].mxu0 %v3151
        %v3658 = vpop.f32.mrb[0].mxu0
        %v3659 = vadd.f32 %v3562, %v3658
        %v3660 = vpop.f32.mrb[0].mxu0
        %v3661 = vpop.f32.mrb[0].mxu0
        %v3662 = vadd.f32 %v3565, %v3661
        %v3663 = vpop.f32.mrb[0].mxu0
        %3664 = vmatprep.mubr.bf16.mxu0 0
        %3665 = vmatmul.mubr.bf16.gmra.mrb[0].mxu0 %v3152
        %v3666 = vpop.f32.mrb[0].mxu0
        %v3667 = vadd.f32 %v3570, %v3666
        %v3668 = vpop.f32.mrb[0].mxu0
        %v3669 = vpop.f32.mrb[0].mxu0
        %v3670 = vadd.f32 %v3573, %v3669
        %v3671 = vpop.f32.mrb[0].mxu0
        %3672 = vmatprep.mubr.bf16.mxu0 0
        %3673 = vmatmul.mubr.bf16.gmra.mrb[0].mxu0 %v3153
        %v3674 = vpop.f32.mrb[0].mxu0
        %v3675 = vadd.f32 %v3578, %v3674
        %v3676 = vpop.f32.mrb[0].mxu0
        %v3677 = vpop.f32.mrb[0].mxu0
        %v3678 = vadd.f32 %v3581, %v3677
        %v3679 = vpop.f32.mrb[0].mxu0
        %3680 = vmatprep.mubr.bf16.mxu0 0
        %3681 = vmatmul.mubr.bf16.gmra.mrb[0].mxu0 %v3154
        %v3682 = vpop.f32.mrb[0].mxu0
        %v3683 = vadd.f32 %v3586, %v3682
        %v3684 = vpop.f32.mrb[0].mxu0
        %v3685 = vpop.f32.mrb[0].mxu0
        %v3686 = vadd.f32 %v3589, %v3685
        %v3687 = vpop.f32.mrb[0].mxu0
        %3688 = vmatprep.mubr.bf16.mxu0 0
        %3689 = vmatmul.mubr.bf16.gmra.mrb[0].mxu0 %v3155
        %v3690 = vpop.f32.mrb[0].mxu0
        %v3691 = vadd.f32 %v3594, %v3690
        %v3692 = vpop.f32.mrb[0].mxu0
        %v3693 = vpop.f32.mrb[0].mxu0
        %v3694 = vadd.f32 %v3597, %v3693
        %v3695 = vpop.f32.mrb[0].mxu0
        %3696 = vdwg.mxu0
        %s3697 = scalar_lea.vmem %s3, 128
        %v3698 = vld [vmem:[%s3697] sm:$0xf]
        %v3699 = vld [vmem:[%s3697 + $0x4] sm:$0xf]
        %v3700 = vld [vmem:[%s3697 + $0x8] sm:$0xf]
        %v3701 = vld [vmem:[%s3697 + $0xc] sm:$0xf]
        %v3702 = vld [vmem:[%s3697 + $0x10] sm:$0xf]
        %v3703 = vld [vmem:[%s3697 + $0x14] sm:$0xf]
        %v3704 = vld [vmem:[%s3697 + $0x18] sm:$0xf]
        %v3705 = vld [vmem:[%s3697 + $0x1c] sm:$0xf]
        %v3706 = vld [vmem:[%s3697 + $0x20] sm:$0xf]
        %v3707 = vld [vmem:[%s3697 + $0x24] sm:$0xf]
        %v3708 = vld [vmem:[%s3697 + $0x28] sm:$0xf]
        %v3709 = vld [vmem:[%s3697 + $0x2c] sm:$0xf]
        %v3710 = vld [vmem:[%s3697 + $0x30] sm:$0xf]
        %v3711 = vld [vmem:[%s3697 + $0x34] sm:$0xf]
        %v3712 = vld [vmem:[%s3697 + $0x38] sm:$0xf]
        %v3713 = vld [vmem:[%s3697 + $0x3c] sm:$0xf]
        %s3714 = scalar_lea.vmem [#allocation3], 10
        %v3715 = vld [vmem:[%s3714] ss:$2 sm:$0xff]
        %s3716 = scalar_lea.vmem [#allocation3], 42
        %v3717 = vld [vmem:[%s3716] ss:$2 sm:$0xff]
        %s3718 = scalar_lea.vmem [#allocation3], 74
        %v3719 = vld [vmem:[%s3718] ss:$2 sm:$0xff]
        %s3720 = scalar_lea.vmem [#allocation3], 106
        %v3721 = vld [vmem:[%s3720] ss:$2 sm:$0xff]
        %s3722 = scalar_lea.vmem [#allocation3], 138
        %v3723 = vld [vmem:[%s3722] ss:$2 sm:$0xff]
        %s3724 = scalar_lea.vmem [#allocation3], 170
        %v3725 = vld [vmem:[%s3724] ss:$2 sm:$0xff]
        %s3726 = scalar_lea.vmem [#allocation3], 202
        %v3727 = vld [vmem:[%s3726] ss:$2 sm:$0xff]
        %s3728 = scalar_lea.vmem [#allocation3], 234
        %v3729 = vld [vmem:[%s3728] ss:$2 sm:$0xff]
        %s3730 = scalar_lea.vmem [#allocation3], 266
        %v3731 = vld [vmem:[%s3730] ss:$2 sm:$0xff]
        %s3732 = scalar_lea.vmem [#allocation3], 298
        %v3733 = vld [vmem:[%s3732] ss:$2 sm:$0xff]
        %s3734 = scalar_lea.vmem [#allocation3], 330
        %v3735 = vld [vmem:[%s3734] ss:$2 sm:$0xff]
        %s3736 = scalar_lea.vmem [#allocation3], 362
        %v3737 = vld [vmem:[%s3736] ss:$2 sm:$0xff]
        %s3738 = scalar_lea.vmem [#allocation3], 394
        %v3739 = vld [vmem:[%s3738] ss:$2 sm:$0xff]
        %s3740 = scalar_lea.vmem [#allocation3], 426
        %v3741 = vld [vmem:[%s3740] ss:$2 sm:$0xff]
        %s3742 = scalar_lea.vmem [#allocation3], 458
        %v3743 = vld [vmem:[%s3742] ss:$2 sm:$0xff]
        %s3744 = scalar_lea.vmem [#allocation3], 490
        %v3745 = vld [vmem:[%s3744] ss:$2 sm:$0xff]
        %v3762 = vunpack.c.l.b16 %v3698
        %v3763 = vunpack.c.l.b16 %v3699
        %v3764 = vunpack.c.l.b16 %v3700
        %v3765 = vunpack.c.l.b16 %v3701
        %v3766 = vunpack.c.l.b16 %v3702
        %v3767 = vunpack.c.l.b16 %v3703
        %v3768 = vunpack.c.l.b16 %v3704
        %v3769 = vunpack.c.l.b16 %v3705
        %v3770 = vunpack.c.l.b16 %v3706
        %v3771 = vunpack.c.l.b16 %v3707
        %v3772 = vunpack.c.l.b16 %v3708
        %v3773 = vunpack.c.l.b16 %v3709
        %v3774 = vunpack.c.l.b16 %v3710
        %v3775 = vunpack.c.l.b16 %v3711
        %v3776 = vunpack.c.l.b16 %v3712
        %v3777 = vunpack.c.l.b16 %v3713
        %v3778 = vpack.c.b16 %v3763, %v3762
        %v3779 = vpack.c.b16 %v3765, %v3764
        %v3780 = vpack.c.b16 %v3767, %v3766
        %v3781 = vpack.c.b16 %v3769, %v3768
        %v3782 = vpack.c.b16 %v3771, %v3770
        %v3783 = vpack.c.b16 %v3773, %v3772
        %v3784 = vpack.c.b16 %v3775, %v3774
        %v3785 = vpack.c.b16 %v3777, %v3776
        %3794 = vmatprep.subr.bf16.mxu0 0
        %3795 = vmatpush1.bf16.msra.mxu0 %v3778
        %3796 = vmatprep.subr.bf16.mxu0 0
        %3797 = vmatpush1.bf16.msra.mxu0 %v3779
        %3798 = vmatprep.subr.bf16.mxu0 0
        %3799 = vmatpush1.bf16.msra.mxu0 %v3780
        %3800 = vmatprep.subr.bf16.mxu0 0
        %3801 = vmatpush1.bf16.msra.mxu0 %v3781
        %3802 = vmatprep.subr.bf16.mxu0 0
        %3803 = vmatpush1.bf16.msra.mxu0 %v3782
        %3804 = vmatprep.subr.bf16.mxu0 0
        %3805 = vmatpush1.bf16.msra.mxu0 %v3783
        %3806 = vmatprep.subr.bf16.mxu0 0
        %3807 = vmatpush1.bf16.msra.mxu0 %v3784
        %3808 = vmatprep.subr.bf16.mxu0 0
        %3809 = vmatpush1.bf16.msra.mxu0 %v3785
        %3810 = vmatprep.subr.bf16.mxu0 0
        %3811 = vmatpush1.bf16.msra.mxu0 0
        %3812 = vmatprep.subr.bf16.mxu0 0
        %3813 = vmatpush1.bf16.msra.mxu0 0
        %3814 = vmatprep.subr.bf16.mxu0 0
        %3815 = vmatpush1.bf16.msra.mxu0 0
        %3816 = vmatprep.subr.bf16.mxu0 0
        %3817 = vmatpush1.bf16.msra.mxu0 0
        %3818 = vmatprep.subr.bf16.mxu0 0
        %3819 = vmatpush1.bf16.msra.mxu0 0
        %3820 = vmatprep.subr.bf16.mxu0 0
        %3821 = vmatpush1.bf16.msra.mxu0 0
        %3822 = vmatprep.subr.bf16.mxu0 0
        %3823 = vmatpush1.bf16.msra.mxu0 0
        %3824 = vmatprep.subr.bf16.mxu0 0
        %3825 = vmatpush1.bf16.msra.mxu0 0
        %3826 = vmatprep.mubr.bf16.mxu0 0
        %3827 = vmatmul.mubr.bf16.gmra.mrb[0].mxu0 %v3495
        %v3828 = vpop.f32.mrb[0].mxu0
        %v3829 = vadd.f32 0.0, %v3828
        %v3830 = vpop.f32.mrb[0].mxu0
        %v3831 = vpop.f32.mrb[0].mxu0
        %v3832 = vadd.f32 0.0, %v3831
        %v3833 = vpop.f32.mrb[0].mxu0
        %3834 = vmatprep.mubr.bf16.mxu0 0
        %3835 = vmatmul.mubr.bf16.gmra.mrb[0].mxu0 %v3496
        %v3836 = vpop.f32.mrb[0].mxu0
        %v3837 = vadd.f32 0.0, %v3836
        %v3838 = vpop.f32.mrb[0].mxu0
        %v3839 = vpop.f32.mrb[0].mxu0
        %v3840 = vadd.f32 0.0, %v3839
        %v3841 = vpop.f32.mrb[0].mxu0
        %3842 = vmatprep.mubr.bf16.mxu0 0
        %3843 = vmatmul.mubr.bf16.gmra.mrb[0].mxu0 %v3497
        %v3844 = vpop.f32.mrb[0].mxu0
        %v3845 = vadd.f32 0.0, %v3844
        %v3846 = vpop.f32.mrb[0].mxu0
        %v3847 = vpop.f32.mrb[0].mxu0
        %v3848 = vadd.f32 0.0, %v3847
        %v3849 = vpop.f32.mrb[0].mxu0
        %3850 = vmatprep.mubr.bf16.mxu0 0
        %3851 = vmatmul.mubr.bf16.gmra.mrb[0].mxu0 %v3498
        %v3852 = vpop.f32.mrb[0].mxu0
        %v3853 = vadd.f32 0.0, %v3852
        %v3854 = vpop.f32.mrb[0].mxu0
        %v3855 = vpop.f32.mrb[0].mxu0
        %v3856 = vadd.f32 0.0, %v3855
        %v3857 = vpop.f32.mrb[0].mxu0
        %3858 = vmatprep.mubr.bf16.mxu0 0
        %3859 = vmatmul.mubr.bf16.gmra.mrb[0].mxu0 %v3499
        %v3860 = vpop.f32.mrb[0].mxu0
        %v3861 = vadd.f32 0.0, %v3860
        %v3862 = vpop.f32.mrb[0].mxu0
        %v3863 = vpop.f32.mrb[0].mxu0
        %v3864 = vadd.f32 0.0, %v3863
        %v3865 = vpop.f32.mrb[0].mxu0
        %3866 = vmatprep.mubr.bf16.mxu0 0
        %3867 = vmatmul.mubr.bf16.gmra.mrb[0].mxu0 %v3500
        %v3868 = vpop.f32.mrb[0].mxu0
        %v3869 = vadd.f32 0.0, %v3868
        %v3870 = vpop.f32.mrb[0].mxu0
        %v3871 = vpop.f32.mrb[0].mxu0
        %v3872 = vadd.f32 0.0, %v3871
        %v3873 = vpop.f32.mrb[0].mxu0
        %3874 = vmatprep.mubr.bf16.mxu0 0
        %3875 = vmatmul.mubr.bf16.gmra.mrb[0].mxu0 %v3501
        %v3876 = vpop.f32.mrb[0].mxu0
        %v3877 = vadd.f32 0.0, %v3876
        %v3878 = vpop.f32.mrb[0].mxu0
        %v3879 = vpop.f32.mrb[0].mxu0
        %v3880 = vadd.f32 0.0, %v3879
        %v3881 = vpop.f32.mrb[0].mxu0
        %3882 = vmatprep.mubr.bf16.mxu0 0
        %3883 = vmatmul.mubr.bf16.gmra.mrb[0].mxu0 %v3502
        %v3884 = vpop.f32.mrb[0].mxu0
        %v3885 = vadd.f32 0.0, %v3884
        %v3886 = vpop.f32.mrb[0].mxu0
        %v3887 = vpop.f32.mrb[0].mxu0
        %v3888 = vadd.f32 0.0, %v3887
        %v3889 = vpop.f32.mrb[0].mxu0
        %3890 = vdwg.mxu0
        %v3891 = vadd.f32 %v3433, %v3829
        %v3892 = vadd.f32 %v3436, %v3832
        %v3893 = vadd.f32 %v3441, %v3837
        %v3894 = vadd.f32 %v3444, %v3840
        %v3895 = vadd.f32 %v3449, %v3845
        %v3896 = vadd.f32 %v3452, %v3848
        %v3897 = vadd.f32 %v3457, %v3853
        %v3898 = vadd.f32 %v3460, %v3856
        %v3899 = vadd.f32 %v3465, %v3861
        %v3900 = vadd.f32 %v3468, %v3864
        %v3901 = vadd.f32 %v3473, %v3869
        %v3902 = vadd.f32 %v3476, %v3872
        %v3903 = vadd.f32 %v3481, %v3877
        %v3904 = vadd.f32 %v3484, %v3880
        %v3905 = vadd.f32 %v3489, %v3885
        %v3906 = vadd.f32 %v3492, %v3888
        %v3907 = vpack.c.bf16 %v3717, %v3715
        %v3908 = vpack.c.bf16 %v3721, %v3719
        %v3909 = vpack.c.bf16 %v3725, %v3723
        %v3910 = vpack.c.bf16 %v3729, %v3727
        %v3911 = vpack.c.bf16 %v3733, %v3731
        %v3912 = vpack.c.bf16 %v3737, %v3735
        %v3913 = vpack.c.bf16 %v3741, %v3739
        %v3914 = vpack.c.bf16 %v3745, %v3743
        %3915 = vmatprep.subr.bf16.mxu0 0
        %3916 = vmatpush1.bf16.msra.mxu0 %v3778
        %3917 = vmatprep.subr.bf16.mxu0 0
        %3918 = vmatpush1.bf16.msra.mxu0 %v3779
        %3919 = vmatprep.subr.bf16.mxu0 0
        %3920 = vmatpush1.bf16.msra.mxu0 %v3780
        %3921 = vmatprep.subr.bf16.mxu0 0
        %3922 = vmatpush1.bf16.msra.mxu0 %v3781
        %3923 = vmatprep.subr.bf16.mxu0 0
        %3924 = vmatpush1.bf16.msra.mxu0 %v3782
        %3925 = vmatprep.subr.bf16.mxu0 0
        %3926 = vmatpush1.bf16.msra.mxu0 %v3783
        %3927 = vmatprep.subr.bf16.mxu0 0
        %3928 = vmatpush1.bf16.msra.mxu0 %v3784
        %3929 = vmatprep.subr.bf16.mxu0 0
        %3930 = vmatpush1.bf16.msra.mxu0 %v3785
        %3931 = vmatprep.subr.bf16.mxu0 0
        %3932 = vmatpush1.bf16.msra.mxu0 0
        %3933 = vmatprep.subr.bf16.mxu0 0
        %3934 = vmatpush1.bf16.msra.mxu0 0
        %3935 = vmatprep.subr.bf16.mxu0 0
        %3936 = vmatpush1.bf16.msra.mxu0 0
        %3937 = vmatprep.subr.bf16.mxu0 0
        %3938 = vmatpush1.bf16.msra.mxu0 0
        %3939 = vmatprep.subr.bf16.mxu0 0
        %3940 = vmatpush1.bf16.msra.mxu0 0
        %3941 = vmatprep.subr.bf16.mxu0 0
        %3942 = vmatpush1.bf16.msra.mxu0 0
        %3943 = vmatprep.subr.bf16.mxu0 0
        %3944 = vmatpush1.bf16.msra.mxu0 0
        %3945 = vmatprep.subr.bf16.mxu0 0
        %3946 = vmatpush1.bf16.msra.mxu0 0
        %3947 = vmatprep.mubr.bf16.mxu0 0
        %3948 = vmatmul.mubr.bf16.gmra.mrb[0].mxu0 %v3907
        %v3949 = vpop.f32.mrb[0].mxu0
        %v3950 = vadd.f32 0.0, %v3949
        %v3951 = vpop.f32.mrb[0].mxu0
        %v3952 = vpop.f32.mrb[0].mxu0
        %v3953 = vadd.f32 0.0, %v3952
        %v3954 = vpop.f32.mrb[0].mxu0
        %3955 = vmatprep.mubr.bf16.mxu0 0
        %3956 = vmatmul.mubr.bf16.gmra.mrb[0].mxu0 %v3908
        %v3957 = vpop.f32.mrb[0].mxu0
        %v3958 = vadd.f32 0.0, %v3957
        %v3959 = vpop.f32.mrb[0].mxu0
        %v3960 = vpop.f32.mrb[0].mxu0
        %v3961 = vadd.f32 0.0, %v3960
        %v3962 = vpop.f32.mrb[0].mxu0
        %3963 = vmatprep.mubr.bf16.mxu0 0
        %3964 = vmatmul.mubr.bf16.gmra.mrb[0].mxu0 %v3909
        %v3965 = vpop.f32.mrb[0].mxu0
        %v3966 = vadd.f32 0.0, %v3965
        %v3967 = vpop.f32.mrb[0].mxu0
        %v3968 = vpop.f32.mrb[0].mxu0
        %v3969 = vadd.f32 0.0, %v3968
        %v3970 = vpop.f32.mrb[0].mxu0
        %3971 = vmatprep.mubr.bf16.mxu0 0
        %3972 = vmatmul.mubr.bf16.gmra.mrb[0].mxu0 %v3910
        %v3973 = vpop.f32.mrb[0].mxu0
        %v3974 = vadd.f32 0.0, %v3973
        %v3975 = vpop.f32.mrb[0].mxu0
        %v3976 = vpop.f32.mrb[0].mxu0
        %v3977 = vadd.f32 0.0, %v3976
        %v3978 = vpop.f32.mrb[0].mxu0
        %3979 = vmatprep.mubr.bf16.mxu0 0
        %3980 = vmatmul.mubr.bf16.gmra.mrb[0].mxu0 %v3911
        %v3981 = vpop.f32.mrb[0].mxu0
        %v3982 = vadd.f32 0.0, %v3981
        %v3983 = vpop.f32.mrb[0].mxu0
        %v3984 = vpop.f32.mrb[0].mxu0
        %v3985 = vadd.f32 0.0, %v3984
        %v3986 = vpop.f32.mrb[0].mxu0
        %3987 = vmatprep.mubr.bf16.mxu0 0
        %3988 = vmatmul.mubr.bf16.gmra.mrb[0].mxu0 %v3912
        %v3989 = vpop.f32.mrb[0].mxu0
        %v3990 = vadd.f32 0.0, %v3989
        %v3991 = vpop.f32.mrb[0].mxu0
        %v3992 = vpop.f32.mrb[0].mxu0
        %v3993 = vadd.f32 0.0, %v3992
        %v3994 = vpop.f32.mrb[0].mxu0
        %3995 = vmatprep.mubr.bf16.mxu0 0
        %3996 = vmatmul.mubr.bf16.gmra.mrb[0].mxu0 %v3913
        %v3997 = vpop.f32.mrb[0].mxu0
        %v3998 = vadd.f32 0.0, %v3997
        %v3999 = vpop.f32.mrb[0].mxu0
        %v4000 = vpop.f32.mrb[0].mxu0
        %v4001 = vadd.f32 0.0, %v4000
        %v4002 = vpop.f32.mrb[0].mxu0
        %4003 = vmatprep.mubr.bf16.mxu0 0
        %4004 = vmatmul.mubr.bf16.gmra.mrb[0].mxu0 %v3914
        %v4005 = vpop.f32.mrb[0].mxu0
        %v4006 = vadd.f32 0.0, %v4005
        %v4007 = vpop.f32.mrb[0].mxu0
        %v4008 = vpop.f32.mrb[0].mxu0
        %v4009 = vadd.f32 0.0, %v4008
        %v4010 = vpop.f32.mrb[0].mxu0
        %4011 = vdwg.mxu0
        %v4012 = vadd.f32 %v3635, %v3950
        %v4013 = vadd.f32 %v3638, %v3953
        %v4014 = vadd.f32 %v3643, %v3958
        %v4015 = vadd.f32 %v3646, %v3961
        %v4016 = vadd.f32 %v3651, %v3966
        %v4017 = vadd.f32 %v3654, %v3969
        %v4018 = vadd.f32 %v3659, %v3974
        %v4019 = vadd.f32 %v3662, %v3977
        %v4020 = vadd.f32 %v3667, %v3982
        %v4021 = vadd.f32 %v3670, %v3985
        %v4022 = vadd.f32 %v3675, %v3990
        %v4023 = vadd.f32 %v3678, %v3993
        %v4024 = vadd.f32 %v3683, %v3998
        %v4025 = vadd.f32 %v3686, %v4001
        %v4026 = vadd.f32 %v3691, %v4006
        %v4027 = vadd.f32 %v3694, %v4009
        %s4028 = scalar_lea.vmem %s3, 192
        %v4029 = vld [vmem:[%s4028] sm:$0xf]
        %v4030 = vld [vmem:[%s4028 + $0x4] sm:$0xf]
        %v4031 = vld [vmem:[%s4028 + $0x8] sm:$0xf]
        %v4032 = vld [vmem:[%s4028 + $0xc] sm:$0xf]
        %v4033 = vld [vmem:[%s4028 + $0x10] sm:$0xf]
        %v4034 = vld [vmem:[%s4028 + $0x14] sm:$0xf]
        %v4035 = vld [vmem:[%s4028 + $0x18] sm:$0xf]
        %v4036 = vld [vmem:[%s4028 + $0x1c] sm:$0xf]
        %v4037 = vld [vmem:[%s4028 + $0x20] sm:$0xf]
        %v4038 = vld [vmem:[%s4028 + $0x24] sm:$0xf]
        %v4039 = vld [vmem:[%s4028 + $0x28] sm:$0xf]
        %v4040 = vld [vmem:[%s4028 + $0x2c] sm:$0xf]
        %v4041 = vld [vmem:[%s4028 + $0x30] sm:$0xf]
        %v4042 = vld [vmem:[%s4028 + $0x34] sm:$0xf]
        %v4043 = vld [vmem:[%s4028 + $0x38] sm:$0xf]
        %v4044 = vld [vmem:[%s4028 + $0x3c] sm:$0xf]
        %s4045 = scalar_lea.vmem %s277, 7 [#allocation3]
        %v4046 = vld [vmem:[%s4045] ss:$2 sm:$0xff]
        %s4047 = scalar_lea.vmem %s277, 39 [#allocation3]
        %v4048 = vld [vmem:[%s4047] ss:$2 sm:$0xff]
        %s4049 = scalar_lea.vmem %s277, 71 [#allocation3]
        %v4050 = vld [vmem:[%s4049] ss:$2 sm:$0xff]
        %s4051 = scalar_lea.vmem %s277, 103 [#allocation3]
        %v4052 = vld [vmem:[%s4051] ss:$2 sm:$0xff]
        %s4053 = scalar_lea.vmem %s277, 135 [#allocation3]
        %v4054 = vld [vmem:[%s4053] ss:$2 sm:$0xff]
        %s4055 = scalar_lea.vmem %s277, 167 [#allocation3]
        %v4056 = vld [vmem:[%s4055] ss:$2 sm:$0xff]
        %s4057 = scalar_lea.vmem %s277, 199 [#allocation3]
        %v4058 = vld [vmem:[%s4057] ss:$2 sm:$0xff]
        %s4059 = scalar_lea.vmem %s277, 231 [#allocation3]
        %v4060 = vld [vmem:[%s4059] ss:$2 sm:$0xff]
        %s4061 = scalar_lea.vmem %s277, 263 [#allocation3]
        %v4062 = vld [vmem:[%s4061] ss:$2 sm:$0xff]
        %s4063 = scalar_lea.vmem %s277, 295 [#allocation3]
        %v4064 = vld [vmem:[%s4063] ss:$2 sm:$0xff]
        %s4065 = scalar_lea.vmem %s277, 327 [#allocation3]
        %v4066 = vld [vmem:[%s4065] ss:$2 sm:$0xff]
        %s4067 = scalar_lea.vmem %s277, 359 [#allocation3]
        %v4068 = vld [vmem:[%s4067] ss:$2 sm:$0xff]
        %s4069 = scalar_lea.vmem %s277, 391 [#allocation3]
        %v4070 = vld [vmem:[%s4069] ss:$2 sm:$0xff]
        %s4071 = scalar_lea.vmem %s277, 423 [#allocation3]
        %v4072 = vld [vmem:[%s4071] ss:$2 sm:$0xff]
        %s4073 = scalar_lea.vmem %s277, 455 [#allocation3]
        %v4074 = vld [vmem:[%s4073] ss:$2 sm:$0xff]
        %s4075 = scalar_lea.vmem %s277, 487 [#allocation3]
        %v4076 = vld [vmem:[%s4075] ss:$2 sm:$0xff]
        %s4077 = scalar_lea.vmem %s277, 8 [#allocation3]
        %v4078 = vld [vmem:[%s4077] ss:$2 sm:$0xff]
        %s4079 = scalar_lea.vmem %s277, 40 [#allocation3]
        %v4080 = vld [vmem:[%s4079] ss:$2 sm:$0xff]
        %s4081 = scalar_lea.vmem %s277, 72 [#allocation3]
        %v4082 = vld [vmem:[%s4081] ss:$2 sm:$0xff]
        %s4083 = scalar_lea.vmem %s277, 104 [#allocation3]
        %v4084 = vld [vmem:[%s4083] ss:$2 sm:$0xff]
        %s4085 = scalar_lea.vmem %s277, 136 [#allocation3]
        %v4086 = vld [vmem:[%s4085] ss:$2 sm:$0xff]
        %s4087 = scalar_lea.vmem %s277, 168 [#allocation3]
        %v4088 = vld [vmem:[%s4087] ss:$2 sm:$0xff]
        %s4089 = scalar_lea.vmem %s277, 200 [#allocation3]
        %v4090 = vld [vmem:[%s4089] ss:$2 sm:$0xff]
        %s4091 = scalar_lea.vmem %s277, 232 [#allocation3]
        %v4092 = vld [vmem:[%s4091] ss:$2 sm:$0xff]
        %s4093 = scalar_lea.vmem %s277, 264 [#allocation3]
        %v4094 = vld [vmem:[%s4093] ss:$2 sm:$0xff]
        %s4095 = scalar_lea.vmem %s277, 296 [#allocation3]
        %v4096 = vld [vmem:[%s4095] ss:$2 sm:$0xff]
        %s4097 = scalar_lea.vmem %s277, 328 [#allocation3]
        %v4098 = vld [vmem:[%s4097] ss:$2 sm:$0xff]
        %s4099 = scalar_lea.vmem %s277, 360 [#allocation3]
        %v4100 = vld [vmem:[%s4099] ss:$2 sm:$0xff]
        %s4101 = scalar_lea.vmem %s277, 392 [#allocation3]
        %v4102 = vld [vmem:[%s4101] ss:$2 sm:$0xff]
        %s4103 = scalar_lea.vmem %s277, 424 [#allocation3]
        %v4104 = vld [vmem:[%s4103] ss:$2 sm:$0xff]
        %s4105 = scalar_lea.vmem %s277, 456 [#allocation3]
        %v4106 = vld [vmem:[%s4105] ss:$2 sm:$0xff]
        %s4107 = scalar_lea.vmem %s277, 488 [#allocation3]
        %v4108 = vld [vmem:[%s4107] ss:$2 sm:$0xff]
        %v4109 = vpack.c.bf16 %v4048, %v4046
        %v4110 = vpack.c.bf16 %v4052, %v4050
        %v4111 = vpack.c.bf16 %v4056, %v4054
        %v4112 = vpack.c.bf16 %v4060, %v4058
        %v4113 = vpack.c.bf16 %v4064, %v4062
        %v4114 = vpack.c.bf16 %v4068, %v4066
        %v4115 = vpack.c.bf16 %v4072, %v4070
        %v4116 = vpack.c.bf16 %v4076, %v4074
        %v4133 = vunpack.c.l.b16 %v4029
        %v4134 = vunpack.c.l.b16 %v4030
        %v4135 = vunpack.c.l.b16 %v4031
        %v4136 = vunpack.c.l.b16 %v4032
        %v4137 = vunpack.c.l.b16 %v4033
        %v4138 = vunpack.c.l.b16 %v4034
        %v4139 = vunpack.c.l.b16 %v4035
        %v4140 = vunpack.c.l.b16 %v4036
        %v4141 = vunpack.c.l.b16 %v4037
        %v4142 = vunpack.c.l.b16 %v4038
        %v4143 = vunpack.c.l.b16 %v4039
        %v4144 = vunpack.c.l.b16 %v4040
        %v4145 = vunpack.c.l.b16 %v4041
        %v4146 = vunpack.c.l.b16 %v4042
        %v4147 = vunpack.c.l.b16 %v4043
        %v4148 = vunpack.c.l.b16 %v4044
        %v4149 = vpack.c.b16 %v4134, %v4133
        %v4150 = vpack.c.b16 %v4136, %v4135
        %v4151 = vpack.c.b16 %v4138, %v4137
        %v4152 = vpack.c.b16 %v4140, %v4139
        %v4153 = vpack.c.b16 %v4142, %v4141
        %v4154 = vpack.c.b16 %v4144, %v4143
        %v4155 = vpack.c.b16 %v4146, %v4145
        %v4156 = vpack.c.b16 %v4148, %v4147
        %4165 = vmatprep.subr.bf16.mxu0 0
        %4166 = vmatpush1.bf16.msra.mxu0 %v4149
        %4167 = vmatprep.subr.bf16.mxu0 0
        %4168 = vmatpush1.bf16.msra.mxu0 %v4150
        %4169 = vmatprep.subr.bf16.mxu0 0
        %4170 = vmatpush1.bf16.msra.mxu0 %v4151
        %4171 = vmatprep.subr.bf16.mxu0 0
        %4172 = vmatpush1.bf16.msra.mxu0 %v4152
        %4173 = vmatprep.subr.bf16.mxu0 0
        %4174 = vmatpush1.bf16.msra.mxu0 %v4153
        %4175 = vmatprep.subr.bf16.mxu0 0
        %4176 = vmatpush1.bf16.msra.mxu0 %v4154
        %4177 = vmatprep.subr.bf16.mxu0 0
        %4178 = vmatpush1.bf16.msra.mxu0 %v4155
        %4179 = vmatprep.subr.bf16.mxu0 0
        %4180 = vmatpush1.bf16.msra.mxu0 %v4156
        %4181 = vmatprep.subr.bf16.mxu0 0
        %4182 = vmatpush1.bf16.msra.mxu0 0
        %4183 = vmatprep.subr.bf16.mxu0 0
        %4184 = vmatpush1.bf16.msra.mxu0 0
        %4185 = vmatprep.subr.bf16.mxu0 0
        %4186 = vmatpush1.bf16.msra.mxu0 0
        %4187 = vmatprep.subr.bf16.mxu0 0
        %4188 = vmatpush1.bf16.msra.mxu0 0
        %4189 = vmatprep.subr.bf16.mxu0 0
        %4190 = vmatpush1.bf16.msra.mxu0 0
        %4191 = vmatprep.subr.bf16.mxu0 0
        %4192 = vmatpush1.bf16.msra.mxu0 0
        %4193 = vmatprep.subr.bf16.mxu0 0
        %4194 = vmatpush1.bf16.msra.mxu0 0
        %4195 = vmatprep.subr.bf16.mxu0 0
        %4196 = vmatpush1.bf16.msra.mxu0 0
        %4197 = vmatprep.mubr.bf16.mxu0 0
        %4198 = vmatmul.mubr.bf16.gmra.mrb[0].mxu0 %v4109
        %v4199 = vpop.f32.mrb[0].mxu0
        %v4200 = vadd.f32 0.0, %v4199
        %v4201 = vpop.f32.mrb[0].mxu0
        %v4202 = vpop.f32.mrb[0].mxu0
        %v4203 = vadd.f32 0.0, %v4202
        %v4204 = vpop.f32.mrb[0].mxu0
        %4205 = vmatprep.mubr.bf16.mxu0 0
        %4206 = vmatmul.mubr.bf16.gmra.mrb[0].mxu0 %v4110
        %v4207 = vpop.f32.mrb[0].mxu0
        %v4208 = vadd.f32 0.0, %v4207
        %v4209 = vpop.f32.mrb[0].mxu0
        %v4210 = vpop.f32.mrb[0].mxu0
        %v4211 = vadd.f32 0.0, %v4210
        %v4212 = vpop.f32.mrb[0].mxu0
        %4213 = vmatprep.mubr.bf16.mxu0 0
        %4214 = vmatmul.mubr.bf16.gmra.mrb[0].mxu0 %v4111
        %v4215 = vpop.f32.mrb[0].mxu0
        %v4216 = vadd.f32 0.0, %v4215
        %v4217 = vpop.f32.mrb[0].mxu0
        %v4218 = vpop.f32.mrb[0].mxu0
        %v4219 = vadd.f32 0.0, %v4218
        %v4220 = vpop.f32.mrb[0].mxu0
        %4221 = vmatprep.mubr.bf16.mxu0 0
        %4222 = vmatmul.mubr.bf16.gmra.mrb[0].mxu0 %v4112
        %v4223 = vpop.f32.mrb[0].mxu0
        %v4224 = vadd.f32 0.0, %v4223
        %v4225 = vpop.f32.mrb[0].mxu0
        %v4226 = vpop.f32.mrb[0].mxu0
        %v4227 = vadd.f32 0.0, %v4226
        %v4228 = vpop.f32.mrb[0].mxu0
        %4229 = vmatprep.mubr.bf16.mxu0 0
        %4230 = vmatmul.mubr.bf16.gmra.mrb[0].mxu0 %v4113
        %v4231 = vpop.f32.mrb[0].mxu0
        %v4232 = vadd.f32 0.0, %v4231
        %v4233 = vpop.f32.mrb[0].mxu0
        %v4234 = vpop.f32.mrb[0].mxu0
        %v4235 = vadd.f32 0.0, %v4234
        %v4236 = vpop.f32.mrb[0].mxu0
        %4237 = vmatprep.mubr.bf16.mxu0 0
        %4238 = vmatmul.mubr.bf16.gmra.mrb[0].mxu0 %v4114
        %v4239 = vpop.f32.mrb[0].mxu0
        %v4240 = vadd.f32 0.0, %v4239
        %v4241 = vpop.f32.mrb[0].mxu0
        %v4242 = vpop.f32.mrb[0].mxu0
        %v4243 = vadd.f32 0.0, %v4242
        %v4244 = vpop.f32.mrb[0].mxu0
        %4245 = vmatprep.mubr.bf16.mxu0 0
        %4246 = vmatmul.mubr.bf16.gmra.mrb[0].mxu0 %v4115
        %v4247 = vpop.f32.mrb[0].mxu0
        %v4248 = vadd.f32 0.0, %v4247
        %v4249 = vpop.f32.mrb[0].mxu0
        %v4250 = vpop.f32.mrb[0].mxu0
        %v4251 = vadd.f32 0.0, %v4250
        %v4252 = vpop.f32.mrb[0].mxu0
        %4253 = vmatprep.mubr.bf16.mxu0 0
        %4254 = vmatmul.mubr.bf16.gmra.mrb[0].mxu0 %v4116
        %v4255 = vpop.f32.mrb[0].mxu0
        %v4256 = vadd.f32 0.0, %v4255
        %v4257 = vpop.f32.mrb[0].mxu0
        %v4258 = vpop.f32.mrb[0].mxu0
        %v4259 = vadd.f32 0.0, %v4258
        %v4260 = vpop.f32.mrb[0].mxu0
        %4261 = vdwg.mxu0
        %v4262 = vadd.f32 %v3891, %v4200
        %v4263 = vadd.f32 %v3892, %v4203
        %v4264 = vadd.f32 %v3893, %v4208
        %v4265 = vadd.f32 %v3894, %v4211
        %v4266 = vadd.f32 %v3895, %v4216
        %v4267 = vadd.f32 %v3896, %v4219
        %v4268 = vadd.f32 %v3897, %v4224
        %v4269 = vadd.f32 %v3898, %v4227
        %v4270 = vadd.f32 %v3899, %v4232
        %v4271 = vadd.f32 %v3900, %v4235
        %v4272 = vadd.f32 %v3901, %v4240
        %v4273 = vadd.f32 %v3902, %v4243
        %v4274 = vadd.f32 %v3903, %v4248
        %v4275 = vadd.f32 %v3904, %v4251
        %v4276 = vadd.f32 %v3905, %v4256
        %v4277 = vadd.f32 %v3906, %v4259
        %v4278 = vpack.c.bf16 %v4080, %v4078
        %v4279 = vpack.c.bf16 %v4084, %v4082
        %v4280 = vpack.c.bf16 %v4088, %v4086
        %v4281 = vpack.c.bf16 %v4092, %v4090
        %v4282 = vpack.c.bf16 %v4096, %v4094
        %v4283 = vpack.c.bf16 %v4100, %v4098
        %v4284 = vpack.c.bf16 %v4104, %v4102
        %v4285 = vpack.c.bf16 %v4108, %v4106
        %4286 = vmatprep.subr.bf16.mxu0 0
        %4287 = vmatpush1.bf16.msra.mxu0 %v4149
        %4288 = vmatprep.subr.bf16.mxu0 0
        %4289 = vmatpush1.bf16.msra.mxu0 %v4150
        %4290 = vmatprep.subr.bf16.mxu0 0
        %4291 = vmatpush1.bf16.msra.mxu0 %v4151
        %4292 = vmatprep.subr.bf16.mxu0 0
        %4293 = vmatpush1.bf16.msra.mxu0 %v4152
        %4294 = vmatprep.subr.bf16.mxu0 0
        %4295 = vmatpush1.bf16.msra.mxu0 %v4153
        %4296 = vmatprep.subr.bf16.mxu0 0
        %4297 = vmatpush1.bf16.msra.mxu0 %v4154
        %4298 = vmatprep.subr.bf16.mxu0 0
        %4299 = vmatpush1.bf16.msra.mxu0 %v4155
        %4300 = vmatprep.subr.bf16.mxu0 0
        %4301 = vmatpush1.bf16.msra.mxu0 %v4156
        %4302 = vmatprep.subr.bf16.mxu0 0
        %4303 = vmatpush1.bf16.msra.mxu0 0
        %4304 = vmatprep.subr.bf16.mxu0 0
        %4305 = vmatpush1.bf16.msra.mxu0 0
        %4306 = vmatprep.subr.bf16.mxu0 0
        %4307 = vmatpush1.bf16.msra.mxu0 0
        %4308 = vmatprep.subr.bf16.mxu0 0
        %4309 = vmatpush1.bf16.msra.mxu0 0
        %4310 = vmatprep.subr.bf16.mxu0 0
        %4311 = vmatpush1.bf16.msra.mxu0 0
        %4312 = vmatprep.subr.bf16.mxu0 0
        %4313 = vmatpush1.bf16.msra.mxu0 0
        %4314 = vmatprep.subr.bf16.mxu0 0
        %4315 = vmatpush1.bf16.msra.mxu0 0
        %4316 = vmatprep.subr.bf16.mxu0 0
        %4317 = vmatpush1.bf16.msra.mxu0 0
        %4318 = vmatprep.mubr.bf16.mxu0 0
        %4319 = vmatmul.mubr.bf16.gmra.mrb[0].mxu0 %v4278
        %v4320 = vpop.f32.mrb[0].mxu0
        %v4321 = vadd.f32 0.0, %v4320
        %v4322 = vpop.f32.mrb[0].mxu0
        %v4323 = vpop.f32.mrb[0].mxu0
        %v4324 = vadd.f32 0.0, %v4323
        %v4325 = vpop.f32.mrb[0].mxu0
        %4326 = vmatprep.mubr.bf16.mxu0 0
        %4327 = vmatmul.mubr.bf16.gmra.mrb[0].mxu0 %v4279
        %v4328 = vpop.f32.mrb[0].mxu0
        %v4329 = vadd.f32 0.0, %v4328
        %v4330 = vpop.f32.mrb[0].mxu0
        %v4331 = vpop.f32.mrb[0].mxu0
        %v4332 = vadd.f32 0.0, %v4331
        %v4333 = vpop.f32.mrb[0].mxu0
        %4334 = vmatprep.mubr.bf16.mxu0 0
        %4335 = vmatmul.mubr.bf16.gmra.mrb[0].mxu0 %v4280
        %v4336 = vpop.f32.mrb[0].mxu0
        %v4337 = vadd.f32 0.0, %v4336
        %v4338 = vpop.f32.mrb[0].mxu0
        %v4339 = vpop.f32.mrb[0].mxu0
        %v4340 = vadd.f32 0.0, %v4339
        %v4341 = vpop.f32.mrb[0].mxu0
        %4342 = vmatprep.mubr.bf16.mxu0 0
        %4343 = vmatmul.mubr.bf16.gmra.mrb[0].mxu0 %v4281
        %v4344 = vpop.f32.mrb[0].mxu0
        %v4345 = vadd.f32 0.0, %v4344
        %v4346 = vpop.f32.mrb[0].mxu0
        %v4347 = vpop.f32.mrb[0].mxu0
        %v4348 = vadd.f32 0.0, %v4347
        %v4349 = vpop.f32.mrb[0].mxu0
        %4350 = vmatprep.mubr.bf16.mxu0 0
        %4351 = vmatmul.mubr.bf16.gmra.mrb[0].mxu0 %v4282
        %v4352 = vpop.f32.mrb[0].mxu0
        %v4353 = vadd.f32 0.0, %v4352
        %v4354 = vpop.f32.mrb[0].mxu0
        %v4355 = vpop.f32.mrb[0].mxu0
        %v4356 = vadd.f32 0.0, %v4355
        %v4357 = vpop.f32.mrb[0].mxu0
        %4358 = vmatprep.mubr.bf16.mxu0 0
        %4359 = vmatmul.mubr.bf16.gmra.mrb[0].mxu0 %v4283
        %v4360 = vpop.f32.mrb[0].mxu0
        %v4361 = vadd.f32 0.0, %v4360
        %v4362 = vpop.f32.mrb[0].mxu0
        %v4363 = vpop.f32.mrb[0].mxu0
        %v4364 = vadd.f32 0.0, %v4363
        %v4365 = vpop.f32.mrb[0].mxu0
        %4366 = vmatprep.mubr.bf16.mxu0 0
        %4367 = vmatmul.mubr.bf16.gmra.mrb[0].mxu0 %v4284
        %v4368 = vpop.f32.mrb[0].mxu0
        %v4369 = vadd.f32 0.0, %v4368
        %v4370 = vpop.f32.mrb[0].mxu0
        %v4371 = vpop.f32.mrb[0].mxu0
        %v4372 = vadd.f32 0.0, %v4371
        %v4373 = vpop.f32.mrb[0].mxu0
        %4374 = vmatprep.mubr.bf16.mxu0 0
        %4375 = vmatmul.mubr.bf16.gmra.mrb[0].mxu0 %v4285
        %v4376 = vpop.f32.mrb[0].mxu0
        %v4377 = vadd.f32 0.0, %v4376
        %v4378 = vpop.f32.mrb[0].mxu0
        %v4379 = vpop.f32.mrb[0].mxu0
        %v4380 = vadd.f32 0.0, %v4379
        %v4381 = vpop.f32.mrb[0].mxu0
        %4382 = vdwg.mxu0
        %v4383 = vadd.f32 %v4012, %v4321
        %v4384 = vadd.f32 %v4013, %v4324
        %v4385 = vadd.f32 %v4014, %v4329
        %v4386 = vadd.f32 %v4015, %v4332
        %v4387 = vadd.f32 %v4016, %v4337
        %v4388 = vadd.f32 %v4017, %v4340
        %v4389 = vadd.f32 %v4018, %v4345
        %v4390 = vadd.f32 %v4019, %v4348
        %v4391 = vadd.f32 %v4020, %v4353
        %v4392 = vadd.f32 %v4021, %v4356
        %v4393 = vadd.f32 %v4022, %v4361
        %v4394 = vadd.f32 %v4023, %v4364
        %v4395 = vadd.f32 %v4024, %v4369
        %v4396 = vadd.f32 %v4025, %v4372
        %v4397 = vadd.f32 %v4026, %v4377
        %v4398 = vadd.f32 %v4027, %v4380
        %s4399 = scalar_lea.vmem %s3, 256
        %v4400 = vld [vmem:[%s4399] sm:$0xf]
        %v4401 = vld [vmem:[%s4399 + $0x4] sm:$0xf]
        %v4402 = vld [vmem:[%s4399 + $0x8] sm:$0xf]
        %v4403 = vld [vmem:[%s4399 + $0xc] sm:$0xf]
        %v4404 = vld [vmem:[%s4399 + $0x10] sm:$0xf]
        %v4405 = vld [vmem:[%s4399 + $0x14] sm:$0xf]
        %v4406 = vld [vmem:[%s4399 + $0x18] sm:$0xf]
        %v4407 = vld [vmem:[%s4399 + $0x1c] sm:$0xf]
        %v4408 = vld [vmem:[%s4399 + $0x20] sm:$0xf]
        %v4409 = vld [vmem:[%s4399 + $0x24] sm:$0xf]
        %v4410 = vld [vmem:[%s4399 + $0x28] sm:$0xf]
        %v4411 = vld [vmem:[%s4399 + $0x2c] sm:$0xf]
        %v4412 = vld [vmem:[%s4399 + $0x30] sm:$0xf]
        %v4413 = vld [vmem:[%s4399 + $0x34] sm:$0xf]
        %v4414 = vld [vmem:[%s4399 + $0x38] sm:$0xf]
        %v4415 = vld [vmem:[%s4399 + $0x3c] sm:$0xf]
        %s4416 = scalar_lea.vmem %s277, 9 [#allocation3]
        %v4417 = vld [vmem:[%s4416] ss:$2 sm:$0xff]
        %s4418 = scalar_lea.vmem %s277, 41 [#allocation3]
        %v4419 = vld [vmem:[%s4418] ss:$2 sm:$0xff]
        %s4420 = scalar_lea.vmem %s277, 73 [#allocation3]
        %v4421 = vld [vmem:[%s4420] ss:$2 sm:$0xff]
        %s4422 = scalar_lea.vmem %s277, 105 [#allocation3]
        %v4423 = vld [vmem:[%s4422] ss:$2 sm:$0xff]
        %s4424 = scalar_lea.vmem %s277, 137 [#allocation3]
        %v4425 = vld [vmem:[%s4424] ss:$2 sm:$0xff]
        %s4426 = scalar_lea.vmem %s277, 169 [#allocation3]
        %v4427 = vld [vmem:[%s4426] ss:$2 sm:$0xff]
        %s4428 = scalar_lea.vmem %s277, 201 [#allocation3]
        %v4429 = vld [vmem:[%s4428] ss:$2 sm:$0xff]
        %s4430 = scalar_lea.vmem %s277, 233 [#allocation3]
        %v4431 = vld [vmem:[%s4430] ss:$2 sm:$0xff]
        %s4432 = scalar_lea.vmem %s277, 265 [#allocation3]
        %v4433 = vld [vmem:[%s4432] ss:$2 sm:$0xff]
        %s4434 = scalar_lea.vmem %s277, 297 [#allocation3]
        %v4435 = vld [vmem:[%s4434] ss:$2 sm:$0xff]
        %s4436 = scalar_lea.vmem %s277, 329 [#allocation3]
        %v4437 = vld [vmem:[%s4436] ss:$2 sm:$0xff]
        %s4438 = scalar_lea.vmem %s277, 361 [#allocation3]
        %v4439 = vld [vmem:[%s4438] ss:$2 sm:$0xff]
        %s4440 = scalar_lea.vmem %s277, 393 [#allocation3]
        %v4441 = vld [vmem:[%s4440] ss:$2 sm:$0xff]
        %s4442 = scalar_lea.vmem %s277, 425 [#allocation3]
        %v4443 = vld [vmem:[%s4442] ss:$2 sm:$0xff]
        %s4444 = scalar_lea.vmem %s277, 457 [#allocation3]
        %v4445 = vld [vmem:[%s4444] ss:$2 sm:$0xff]
        %s4446 = scalar_lea.vmem %s277, 489 [#allocation3]
        %v4447 = vld [vmem:[%s4446] ss:$2 sm:$0xff]
        %v4464 = vunpack.c.l.b16 %v4400
        %v4465 = vunpack.c.l.b16 %v4401
        %v4466 = vunpack.c.l.b16 %v4402
        %v4467 = vunpack.c.l.b16 %v4403
        %v4468 = vunpack.c.l.b16 %v4404
        %v4469 = vunpack.c.l.b16 %v4405
        %v4470 = vunpack.c.l.b16 %v4406
        %v4471 = vunpack.c.l.b16 %v4407
        %v4472 = vunpack.c.l.b16 %v4408
        %v4473 = vunpack.c.l.b16 %v4409
        %v4474 = vunpack.c.l.b16 %v4410
        %v4475 = vunpack.c.l.b16 %v4411
        %v4476 = vunpack.c.l.b16 %v4412
        %v4477 = vunpack.c.l.b16 %v4413
        %v4478 = vunpack.c.l.b16 %v4414
        %v4479 = vunpack.c.l.b16 %v4415
        %v4480 = vpack.c.b16 %v4465, %v4464
        %v4481 = vpack.c.b16 %v4467, %v4466
        %v4482 = vpack.c.b16 %v4469, %v4468
        %v4483 = vpack.c.b16 %v4471, %v4470
        %v4484 = vpack.c.b16 %v4473, %v4472
        %v4485 = vpack.c.b16 %v4475, %v4474
        %v4486 = vpack.c.b16 %v4477, %v4476
        %v4487 = vpack.c.b16 %v4479, %v4478
        %4496 = vmatprep.subr.bf16.mxu0 0
        %4497 = vmatpush1.bf16.msra.mxu0 %v4480
        %4498 = vmatprep.subr.bf16.mxu0 0
        %4499 = vmatpush1.bf16.msra.mxu0 %v4481
        %4500 = vmatprep.subr.bf16.mxu0 0
        %4501 = vmatpush1.bf16.msra.mxu0 %v4482
        %4502 = vmatprep.subr.bf16.mxu0 0
        %4503 = vmatpush1.bf16.msra.mxu0 %v4483
        %4504 = vmatprep.subr.bf16.mxu0 0
        %4505 = vmatpush1.bf16.msra.mxu0 %v4484
        %4506 = vmatprep.subr.bf16.mxu0 0
        %4507 = vmatpush1.bf16.msra.mxu0 %v4485
        %4508 = vmatprep.subr.bf16.mxu0 0
        %4509 = vmatpush1.bf16.msra.mxu0 %v4486
        %4510 = vmatprep.subr.bf16.mxu0 0
        %4511 = vmatpush1.bf16.msra.mxu0 %v4487
        %4512 = vmatprep.subr.bf16.mxu0 0
        %4513 = vmatpush1.bf16.msra.mxu0 0
        %4514 = vmatprep.subr.bf16.mxu0 0
        %4515 = vmatpush1.bf16.msra.mxu0 0
        %4516 = vmatprep.subr.bf16.mxu0 0
        %4517 = vmatpush1.bf16.msra.mxu0 0
        %4518 = vmatprep.subr.bf16.mxu0 0
        %4519 = vmatpush1.bf16.msra.mxu0 0
        %4520 = vmatprep.subr.bf16.mxu0 0
        %4521 = vmatpush1.bf16.msra.mxu0 0
        %4522 = vmatprep.subr.bf16.mxu0 0
        %4523 = vmatpush1.bf16.msra.mxu0 0
        %4524 = vmatprep.subr.bf16.mxu0 0
        %4525 = vmatpush1.bf16.msra.mxu0 0
        %4526 = vmatprep.subr.bf16.mxu0 0
        %4527 = vmatpush1.bf16.msra.mxu0 0
        %4528 = vmatprep.mubr.bf16.mxu0 0
        %4529 = vmatmul.mubr.bf16.gmra.mrb[0].mxu0 %v4278
        %v4530 = vpop.f32.mrb[0].mxu0
        %v4531 = vadd.f32 0.0, %v4530
        %v4532 = vpop.f32.mrb[0].mxu0
        %v4533 = vpop.f32.mrb[0].mxu0
        %v4534 = vadd.f32 0.0, %v4533
        %v4535 = vpop.f32.mrb[0].mxu0
        %4536 = vmatprep.mubr.bf16.mxu0 0
        %4537 = vmatmul.mubr.bf16.gmra.mrb[0].mxu0 %v4279
        %v4538 = vpop.f32.mrb[0].mxu0
        %v4539 = vadd.f32 0.0, %v4538
        %v4540 = vpop.f32.mrb[0].mxu0
        %v4541 = vpop.f32.mrb[0].mxu0
        %v4542 = vadd.f32 0.0, %v4541
        %v4543 = vpop.f32.mrb[0].mxu0
        %4544 = vmatprep.mubr.bf16.mxu0 0
        %4545 = vmatmul.mubr.bf16.gmra.mrb[0].mxu0 %v4280
        %v4546 = vpop.f32.mrb[0].mxu0
        %v4547 = vadd.f32 0.0, %v4546
        %v4548 = vpop.f32.mrb[0].mxu0
        %v4549 = vpop.f32.mrb[0].mxu0
        %v4550 = vadd.f32 0.0, %v4549
        %v4551 = vpop.f32.mrb[0].mxu0
        %4552 = vmatprep.mubr.bf16.mxu0 0
        %4553 = vmatmul.mubr.bf16.gmra.mrb[0].mxu0 %v4281
        %v4554 = vpop.f32.mrb[0].mxu0
        %v4555 = vadd.f32 0.0, %v4554
        %v4556 = vpop.f32.mrb[0].mxu0
        %v4557 = vpop.f32.mrb[0].mxu0
        %v4558 = vadd.f32 0.0, %v4557
        %v4559 = vpop.f32.mrb[0].mxu0
        %4560 = vmatprep.mubr.bf16.mxu0 0
        %4561 = vmatmul.mubr.bf16.gmra.mrb[0].mxu0 %v4282
        %v4562 = vpop.f32.mrb[0].mxu0
        %v4563 = vadd.f32 0.0, %v4562
        %v4564 = vpop.f32.mrb[0].mxu0
        %v4565 = vpop.f32.mrb[0].mxu0
        %v4566 = vadd.f32 0.0, %v4565
        %v4567 = vpop.f32.mrb[0].mxu0
        %4568 = vmatprep.mubr.bf16.mxu0 0
        %4569 = vmatmul.mubr.bf16.gmra.mrb[0].mxu0 %v4283
        %v4570 = vpop.f32.mrb[0].mxu0
        %v4571 = vadd.f32 0.0, %v4570
        %v4572 = vpop.f32.mrb[0].mxu0
        %v4573 = vpop.f32.mrb[0].mxu0
        %v4574 = vadd.f32 0.0, %v4573
        %v4575 = vpop.f32.mrb[0].mxu0
        %4576 = vmatprep.mubr.bf16.mxu0 0
        %4577 = vmatmul.mubr.bf16.gmra.mrb[0].mxu0 %v4284
        %v4578 = vpop.f32.mrb[0].mxu0
        %v4579 = vadd.f32 0.0, %v4578
        %v4580 = vpop.f32.mrb[0].mxu0
        %v4581 = vpop.f32.mrb[0].mxu0
        %v4582 = vadd.f32 0.0, %v4581
        %v4583 = vpop.f32.mrb[0].mxu0
        %4584 = vmatprep.mubr.bf16.mxu0 0
        %4585 = vmatmul.mubr.bf16.gmra.mrb[0].mxu0 %v4285
        %v4586 = vpop.f32.mrb[0].mxu0
        %v4587 = vadd.f32 0.0, %v4586
        %v4588 = vpop.f32.mrb[0].mxu0
        %v4589 = vpop.f32.mrb[0].mxu0
        %v4590 = vadd.f32 0.0, %v4589
        %v4591 = vpop.f32.mrb[0].mxu0
        %4592 = vdwg.mxu0
        %v4593 = vadd.f32 %v4262, %v4531
        %v4594 = vadd.f32 %v4263, %v4534
        %v4595 = vadd.f32 %v4264, %v4539
        %v4596 = vadd.f32 %v4265, %v4542
        %v4597 = vadd.f32 %v4266, %v4547
        %v4598 = vadd.f32 %v4267, %v4550
        %v4599 = vadd.f32 %v4268, %v4555
        %v4600 = vadd.f32 %v4269, %v4558
        %v4601 = vadd.f32 %v4270, %v4563
        %v4602 = vadd.f32 %v4271, %v4566
        %v4603 = vadd.f32 %v4272, %v4571
        %v4604 = vadd.f32 %v4273, %v4574
        %v4605 = vadd.f32 %v4274, %v4579
        %v4606 = vadd.f32 %v4275, %v4582
        %v4607 = vadd.f32 %v4276, %v4587
        %v4608 = vadd.f32 %v4277, %v4590
        %v4609 = vpack.c.bf16 %v4419, %v4417
        %v4610 = vpack.c.bf16 %v4423, %v4421
        %v4611 = vpack.c.bf16 %v4427, %v4425
        %v4612 = vpack.c.bf16 %v4431, %v4429
        %v4613 = vpack.c.bf16 %v4435, %v4433
        %v4614 = vpack.c.bf16 %v4439, %v4437
        %v4615 = vpack.c.bf16 %v4443, %v4441
        %v4616 = vpack.c.bf16 %v4447, %v4445
        %4617 = vmatprep.subr.bf16.mxu0 0
        %4618 = vmatpush1.bf16.msra.mxu0 %v4480
        %4619 = vmatprep.subr.bf16.mxu0 0
        %4620 = vmatpush1.bf16.msra.mxu0 %v4481
        %4621 = vmatprep.subr.bf16.mxu0 0
        %4622 = vmatpush1.bf16.msra.mxu0 %v4482
        %4623 = vmatprep.subr.bf16.mxu0 0
        %4624 = vmatpush1.bf16.msra.mxu0 %v4483
        %4625 = vmatprep.subr.bf16.mxu0 0
        %4626 = vmatpush1.bf16.msra.mxu0 %v4484
        %4627 = vmatprep.subr.bf16.mxu0 0
        %4628 = vmatpush1.bf16.msra.mxu0 %v4485
        %4629 = vmatprep.subr.bf16.mxu0 0
        %4630 = vmatpush1.bf16.msra.mxu0 %v4486
        %4631 = vmatprep.subr.bf16.mxu0 0
        %4632 = vmatpush1.bf16.msra.mxu0 %v4487
        %4633 = vmatprep.subr.bf16.mxu0 0
        %4634 = vmatpush1.bf16.msra.mxu0 0
        %4635 = vmatprep.subr.bf16.mxu0 0
        %4636 = vmatpush1.bf16.msra.mxu0 0
        %4637 = vmatprep.subr.bf16.mxu0 0
        %4638 = vmatpush1.bf16.msra.mxu0 0
        %4639 = vmatprep.subr.bf16.mxu0 0
        %4640 = vmatpush1.bf16.msra.mxu0 0
        %4641 = vmatprep.subr.bf16.mxu0 0
        %4642 = vmatpush1.bf16.msra.mxu0 0
        %4643 = vmatprep.subr.bf16.mxu0 0
        %4644 = vmatpush1.bf16.msra.mxu0 0
        %4645 = vmatprep.subr.bf16.mxu0 0
        %4646 = vmatpush1.bf16.msra.mxu0 0
        %4647 = vmatprep.subr.bf16.mxu0 0
        %4648 = vmatpush1.bf16.msra.mxu0 0
        %4649 = vmatprep.mubr.bf16.mxu0 0
        %4650 = vmatmul.mubr.bf16.gmra.mrb[0].mxu0 %v4609
        %v4651 = vpop.f32.mrb[0].mxu0
        %v4652 = vadd.f32 0.0, %v4651
        %v4653 = vpop.f32.mrb[0].mxu0
        %v4654 = vpop.f32.mrb[0].mxu0
        %v4655 = vadd.f32 0.0, %v4654
        %v4656 = vpop.f32.mrb[0].mxu0
        %4657 = vmatprep.mubr.bf16.mxu0 0
        %4658 = vmatmul.mubr.bf16.gmra.mrb[0].mxu0 %v4610
        %v4659 = vpop.f32.mrb[0].mxu0
        %v4660 = vadd.f32 0.0, %v4659
        %v4661 = vpop.f32.mrb[0].mxu0
        %v4662 = vpop.f32.mrb[0].mxu0
        %v4663 = vadd.f32 0.0, %v4662
        %v4664 = vpop.f32.mrb[0].mxu0
        %4665 = vmatprep.mubr.bf16.mxu0 0
        %4666 = vmatmul.mubr.bf16.gmra.mrb[0].mxu0 %v4611
        %v4667 = vpop.f32.mrb[0].mxu0
        %v4668 = vadd.f32 0.0, %v4667
        %v4669 = vpop.f32.mrb[0].mxu0
        %v4670 = vpop.f32.mrb[0].mxu0
        %v4671 = vadd.f32 0.0, %v4670
        %v4672 = vpop.f32.mrb[0].mxu0
        %4673 = vmatprep.mubr.bf16.mxu0 0
        %4674 = vmatmul.mubr.bf16.gmra.mrb[0].mxu0 %v4612
        %v4675 = vpop.f32.mrb[0].mxu0
        %v4676 = vadd.f32 0.0, %v4675
        %v4677 = vpop.f32.mrb[0].mxu0
        %v4678 = vpop.f32.mrb[0].mxu0
        %v4679 = vadd.f32 0.0, %v4678
        %v4680 = vpop.f32.mrb[0].mxu0
        %4681 = vmatprep.mubr.bf16.mxu0 0
        %4682 = vmatmul.mubr.bf16.gmra.mrb[0].mxu0 %v4613
        %v4683 = vpop.f32.mrb[0].mxu0
        %v4684 = vadd.f32 0.0, %v4683
        %v4685 = vpop.f32.mrb[0].mxu0
        %v4686 = vpop.f32.mrb[0].mxu0
        %v4687 = vadd.f32 0.0, %v4686
        %v4688 = vpop.f32.mrb[0].mxu0
        %4689 = vmatprep.mubr.bf16.mxu0 0
        %4690 = vmatmul.mubr.bf16.gmra.mrb[0].mxu0 %v4614
        %v4691 = vpop.f32.mrb[0].mxu0
        %v4692 = vadd.f32 0.0, %v4691
        %v4693 = vpop.f32.mrb[0].mxu0
        %v4694 = vpop.f32.mrb[0].mxu0
        %v4695 = vadd.f32 0.0, %v4694
        %v4696 = vpop.f32.mrb[0].mxu0
        %4697 = vmatprep.mubr.bf16.mxu0 0
        %4698 = vmatmul.mubr.bf16.gmra.mrb[0].mxu0 %v4615
        %v4699 = vpop.f32.mrb[0].mxu0
        %v4700 = vadd.f32 0.0, %v4699
        %v4701 = vpop.f32.mrb[0].mxu0
        %v4702 = vpop.f32.mrb[0].mxu0
        %v4703 = vadd.f32 0.0, %v4702
        %v4704 = vpop.f32.mrb[0].mxu0
        %4705 = vmatprep.mubr.bf16.mxu0 0
        %4706 = vmatmul.mubr.bf16.gmra.mrb[0].mxu0 %v4616
        %v4707 = vpop.f32.mrb[0].mxu0
        %v4708 = vadd.f32 0.0, %v4707
        %v4709 = vpop.f32.mrb[0].mxu0
        %v4710 = vpop.f32.mrb[0].mxu0
        %v4711 = vadd.f32 0.0, %v4710
        %v4712 = vpop.f32.mrb[0].mxu0
        %4713 = vdwg.mxu0
        %v4714 = vadd.f32 %v4383, %v4652
        %v4715 = vadd.f32 %v4384, %v4655
        %v4716 = vadd.f32 %v4385, %v4660
        %v4717 = vadd.f32 %v4386, %v4663
        %v4718 = vadd.f32 %v4387, %v4668
        %v4719 = vadd.f32 %v4388, %v4671
        %v4720 = vadd.f32 %v4389, %v4676
        %v4721 = vadd.f32 %v4390, %v4679
        %v4722 = vadd.f32 %v4391, %v4684
        %v4723 = vadd.f32 %v4392, %v4687
        %v4724 = vadd.f32 %v4393, %v4692
        %v4725 = vadd.f32 %v4394, %v4695
        %v4726 = vadd.f32 %v4395, %v4700
        %v4727 = vadd.f32 %v4396, %v4703
        %v4728 = vadd.f32 %v4397, %v4708
        %v4729 = vadd.f32 %v4398, %v4711
        %s4730 = scalar_lea.vmem %s3, 320
        %v4731 = vld [vmem:[%s4730] sm:$0xf]
        %v4732 = vld [vmem:[%s4730 + $0x4] sm:$0xf]
        %v4733 = vld [vmem:[%s4730 + $0x8] sm:$0xf]
        %v4734 = vld [vmem:[%s4730 + $0xc] sm:$0xf]
        %v4735 = vld [vmem:[%s4730 + $0x10] sm:$0xf]
        %v4736 = vld [vmem:[%s4730 + $0x14] sm:$0xf]
        %v4737 = vld [vmem:[%s4730 + $0x18] sm:$0xf]
        %v4738 = vld [vmem:[%s4730 + $0x1c] sm:$0xf]
        %v4739 = vld [vmem:[%s4730 + $0x20] sm:$0xf]
        %v4740 = vld [vmem:[%s4730 + $0x24] sm:$0xf]
        %v4741 = vld [vmem:[%s4730 + $0x28] sm:$0xf]
        %v4742 = vld [vmem:[%s4730 + $0x2c] sm:$0xf]
        %v4743 = vld [vmem:[%s4730 + $0x30] sm:$0xf]
        %v4744 = vld [vmem:[%s4730 + $0x34] sm:$0xf]
        %v4745 = vld [vmem:[%s4730 + $0x38] sm:$0xf]
        %v4746 = vld [vmem:[%s4730 + $0x3c] sm:$0xf]
        %s4747 = scalar_lea.vmem %s277, 10 [#allocation3]
        %v4748 = vld [vmem:[%s4747] ss:$2 sm:$0xff]
        %s4749 = scalar_lea.vmem %s277, 42 [#allocation3]
        %v4750 = vld [vmem:[%s4749] ss:$2 sm:$0xff]
        %s4751 = scalar_lea.vmem %s277, 74 [#allocation3]
        %v4752 = vld [vmem:[%s4751] ss:$2 sm:$0xff]
        %s4753 = scalar_lea.vmem %s277, 106 [#allocation3]
        %v4754 = vld [vmem:[%s4753] ss:$2 sm:$0xff]
        %s4755 = scalar_lea.vmem %s277, 138 [#allocation3]
        %v4756 = vld [vmem:[%s4755] ss:$2 sm:$0xff]
        %s4757 = scalar_lea.vmem %s277, 170 [#allocation3]
        %v4758 = vld [vmem:[%s4757] ss:$2 sm:$0xff]
        %s4759 = scalar_lea.vmem %s277, 202 [#allocation3]
        %v4760 = vld [vmem:[%s4759] ss:$2 sm:$0xff]
        %s4761 = scalar_lea.vmem %s277, 234 [#allocation3]
        %v4762 = vld [vmem:[%s4761] ss:$2 sm:$0xff]
        %s4763 = scalar_lea.vmem %s277, 266 [#allocation3]
        %v4764 = vld [vmem:[%s4763] ss:$2 sm:$0xff]
        %s4765 = scalar_lea.vmem %s277, 298 [#allocation3]
        %v4766 = vld [vmem:[%s4765] ss:$2 sm:$0xff]
        %s4767 = scalar_lea.vmem %s277, 330 [#allocation3]
        %v4768 = vld [vmem:[%s4767] ss:$2 sm:$0xff]
        %s4769 = scalar_lea.vmem %s277, 362 [#allocation3]
        %v4770 = vld [vmem:[%s4769] ss:$2 sm:$0xff]
        %s4771 = scalar_lea.vmem %s277, 394 [#allocation3]
        %v4772 = vld [vmem:[%s4771] ss:$2 sm:$0xff]
        %s4773 = scalar_lea.vmem %s277, 426 [#allocation3]
        %v4774 = vld [vmem:[%s4773] ss:$2 sm:$0xff]
        %s4775 = scalar_lea.vmem %s277, 458 [#allocation3]
        %v4776 = vld [vmem:[%s4775] ss:$2 sm:$0xff]
        %s4777 = scalar_lea.vmem %s277, 490 [#allocation3]
        %v4778 = vld [vmem:[%s4777] ss:$2 sm:$0xff]
        %v4795 = vunpack.c.l.b16 %v4731
        %v4796 = vunpack.c.l.b16 %v4732
        %v4797 = vunpack.c.l.b16 %v4733
        %v4798 = vunpack.c.l.b16 %v4734
        %v4799 = vunpack.c.l.b16 %v4735
        %v4800 = vunpack.c.l.b16 %v4736
        %v4801 = vunpack.c.l.b16 %v4737
        %v4802 = vunpack.c.l.b16 %v4738
        %v4803 = vunpack.c.l.b16 %v4739
        %v4804 = vunpack.c.l.b16 %v4740
        %v4805 = vunpack.c.l.b16 %v4741
        %v4806 = vunpack.c.l.b16 %v4742
        %v4807 = vunpack.c.l.b16 %v4743
        %v4808 = vunpack.c.l.b16 %v4744
        %v4809 = vunpack.c.l.b16 %v4745
        %v4810 = vunpack.c.l.b16 %v4746
        %v4811 = vpack.c.b16 %v4796, %v4795
        %v4812 = vpack.c.b16 %v4798, %v4797
        %v4813 = vpack.c.b16 %v4800, %v4799
        %v4814 = vpack.c.b16 %v4802, %v4801
        %v4815 = vpack.c.b16 %v4804, %v4803
        %v4816 = vpack.c.b16 %v4806, %v4805
        %v4817 = vpack.c.b16 %v4808, %v4807
        %v4818 = vpack.c.b16 %v4810, %v4809
        %4827 = vmatprep.subr.bf16.mxu0 0
        %4828 = vmatpush1.bf16.msra.mxu0 %v4811
        %4829 = vmatprep.subr.bf16.mxu0 0
        %4830 = vmatpush1.bf16.msra.mxu0 %v4812
        %4831 = vmatprep.subr.bf16.mxu0 0
        %4832 = vmatpush1.bf16.msra.mxu0 %v4813
        %4833 = vmatprep.subr.bf16.mxu0 0
        %4834 = vmatpush1.bf16.msra.mxu0 %v4814
        %4835 = vmatprep.subr.bf16.mxu0 0
        %4836 = vmatpush1.bf16.msra.mxu0 %v4815
        %4837 = vmatprep.subr.bf16.mxu0 0
        %4838 = vmatpush1.bf16.msra.mxu0 %v4816
        %4839 = vmatprep.subr.bf16.mxu0 0
        %4840 = vmatpush1.bf16.msra.mxu0 %v4817
        %4841 = vmatprep.subr.bf16.mxu0 0
        %4842 = vmatpush1.bf16.msra.mxu0 %v4818
        %4843 = vmatprep.subr.bf16.mxu0 0
        %4844 = vmatpush1.bf16.msra.mxu0 0
        %4845 = vmatprep.subr.bf16.mxu0 0
        %4846 = vmatpush1.bf16.msra.mxu0 0
        %4847 = vmatprep.subr.bf16.mxu0 0
        %4848 = vmatpush1.bf16.msra.mxu0 0
        %4849 = vmatprep.subr.bf16.mxu0 0
        %4850 = vmatpush1.bf16.msra.mxu0 0
        %4851 = vmatprep.subr.bf16.mxu0 0
        %4852 = vmatpush1.bf16.msra.mxu0 0
        %4853 = vmatprep.subr.bf16.mxu0 0
        %4854 = vmatpush1.bf16.msra.mxu0 0
        %4855 = vmatprep.subr.bf16.mxu0 0
        %4856 = vmatpush1.bf16.msra.mxu0 0
        %4857 = vmatprep.subr.bf16.mxu0 0
        %4858 = vmatpush1.bf16.msra.mxu0 0
        %4859 = vmatprep.mubr.bf16.mxu0 0
        %4860 = vmatmul.mubr.bf16.gmra.mrb[0].mxu0 %v4609
        %v4861 = vpop.f32.mrb[0].mxu0
        %v4862 = vadd.f32 0.0, %v4861
        %v4863 = vpop.f32.mrb[0].mxu0
        %v4864 = vpop.f32.mrb[0].mxu0
        %v4865 = vadd.f32 0.0, %v4864
        %v4866 = vpop.f32.mrb[0].mxu0
        %4867 = vmatprep.mubr.bf16.mxu0 0
        %4868 = vmatmul.mubr.bf16.gmra.mrb[0].mxu0 %v4610
        %v4869 = vpop.f32.mrb[0].mxu0
        %v4870 = vadd.f32 0.0, %v4869
        %v4871 = vpop.f32.mrb[0].mxu0
        %v4872 = vpop.f32.mrb[0].mxu0
        %v4873 = vadd.f32 0.0, %v4872
        %v4874 = vpop.f32.mrb[0].mxu0
        %4875 = vmatprep.mubr.bf16.mxu0 0
        %4876 = vmatmul.mubr.bf16.gmra.mrb[0].mxu0 %v4611
        %v4877 = vpop.f32.mrb[0].mxu0
        %v4878 = vadd.f32 0.0, %v4877
        %v4879 = vpop.f32.mrb[0].mxu0
        %v4880 = vpop.f32.mrb[0].mxu0
        %v4881 = vadd.f32 0.0, %v4880
        %v4882 = vpop.f32.mrb[0].mxu0
        %4883 = vmatprep.mubr.bf16.mxu0 0
        %4884 = vmatmul.mubr.bf16.gmra.mrb[0].mxu0 %v4612
        %v4885 = vpop.f32.mrb[0].mxu0
        %v4886 = vadd.f32 0.0, %v4885
        %v4887 = vpop.f32.mrb[0].mxu0
        %v4888 = vpop.f32.mrb[0].mxu0
        %v4889 = vadd.f32 0.0, %v4888
        %v4890 = vpop.f32.mrb[0].mxu0
        %4891 = vmatprep.mubr.bf16.mxu0 0
        %4892 = vmatmul.mubr.bf16.gmra.mrb[0].mxu0 %v4613
        %v4893 = vpop.f32.mrb[0].mxu0
        %v4894 = vadd.f32 0.0, %v4893
        %v4895 = vpop.f32.mrb[0].mxu0
        %v4896 = vpop.f32.mrb[0].mxu0
        %v4897 = vadd.f32 0.0, %v4896
        %v4898 = vpop.f32.mrb[0].mxu0
        %4899 = vmatprep.mubr.bf16.mxu0 0
        %4900 = vmatmul.mubr.bf16.gmra.mrb[0].mxu0 %v4614
        %v4901 = vpop.f32.mrb[0].mxu0
        %v4902 = vadd.f32 0.0, %v4901
        %v4903 = vpop.f32.mrb[0].mxu0
        %v4904 = vpop.f32.mrb[0].mxu0
        %v4905 = vadd.f32 0.0, %v4904
        %v4906 = vpop.f32.mrb[0].mxu0
        %4907 = vmatprep.mubr.bf16.mxu0 0
        %4908 = vmatmul.mubr.bf16.gmra.mrb[0].mxu0 %v4615
        %v4909 = vpop.f32.mrb[0].mxu0
        %v4910 = vadd.f32 0.0, %v4909
        %v4911 = vpop.f32.mrb[0].mxu0
        %v4912 = vpop.f32.mrb[0].mxu0
        %v4913 = vadd.f32 0.0, %v4912
        %v4914 = vpop.f32.mrb[0].mxu0
        %4915 = vmatprep.mubr.bf16.mxu0 0
        %4916 = vmatmul.mubr.bf16.gmra.mrb[0].mxu0 %v4616
        %v4917 = vpop.f32.mrb[0].mxu0
        %v4918 = vadd.f32 0.0, %v4917
        %v4919 = vpop.f32.mrb[0].mxu0
        %v4920 = vpop.f32.mrb[0].mxu0
        %v4921 = vadd.f32 0.0, %v4920
        %v4922 = vpop.f32.mrb[0].mxu0
        %4923 = vdwg.mxu0
        %v4924 = vadd.f32 %v4593, %v4862
        %v4925 = vadd.f32 %v4594, %v4865
        %v4926 = vadd.f32 %v4595, %v4870
        %v4927 = vadd.f32 %v4596, %v4873
        %v4928 = vadd.f32 %v4597, %v4878
        %v4929 = vadd.f32 %v4598, %v4881
        %v4930 = vadd.f32 %v4599, %v4886
        %v4931 = vadd.f32 %v4600, %v4889
        %v4932 = vadd.f32 %v4601, %v4894
        %v4933 = vadd.f32 %v4602, %v4897
        %v4934 = vadd.f32 %v4603, %v4902
        %v4935 = vadd.f32 %v4604, %v4905
        %v4936 = vadd.f32 %v4605, %v4910
        %v4937 = vadd.f32 %v4606, %v4913
        %v4938 = vadd.f32 %v4607, %v4918
        %v4939 = vadd.f32 %v4608, %v4921
        %v4940 = vpack.c.bf16 %v4750, %v4748
        %v4941 = vpack.c.bf16 %v4754, %v4752
        %v4942 = vpack.c.bf16 %v4758, %v4756
        %v4943 = vpack.c.bf16 %v4762, %v4760
        %v4944 = vpack.c.bf16 %v4766, %v4764
        %v4945 = vpack.c.bf16 %v4770, %v4768
        %v4946 = vpack.c.bf16 %v4774, %v4772
        %v4947 = vpack.c.bf16 %v4778, %v4776
        %4948 = vmatprep.subr.bf16.mxu0 0
        %4949 = vmatpush1.bf16.msra.mxu0 %v4811
        %4950 = vmatprep.subr.bf16.mxu0 0
        %4951 = vmatpush1.bf16.msra.mxu0 %v4812
        %4952 = vmatprep.subr.bf16.mxu0 0
        %4953 = vmatpush1.bf16.msra.mxu0 %v4813
        %4954 = vmatprep.subr.bf16.mxu0 0
        %4955 = vmatpush1.bf16.msra.mxu0 %v4814
        %4956 = vmatprep.subr.bf16.mxu0 0
        %4957 = vmatpush1.bf16.msra.mxu0 %v4815
        %4958 = vmatprep.subr.bf16.mxu0 0
        %4959 = vmatpush1.bf16.msra.mxu0 %v4816
        %4960 = vmatprep.subr.bf16.mxu0 0
        %4961 = vmatpush1.bf16.msra.mxu0 %v4817
        %4962 = vmatprep.subr.bf16.mxu0 0
        %4963 = vmatpush1.bf16.msra.mxu0 %v4818
        %4964 = vmatprep.subr.bf16.mxu0 0
        %4965 = vmatpush1.bf16.msra.mxu0 0
        %4966 = vmatprep.subr.bf16.mxu0 0
        %4967 = vmatpush1.bf16.msra.mxu0 0
        %4968 = vmatprep.subr.bf16.mxu0 0
        %4969 = vmatpush1.bf16.msra.mxu0 0
        %4970 = vmatprep.subr.bf16.mxu0 0
        %4971 = vmatpush1.bf16.msra.mxu0 0
        %4972 = vmatprep.subr.bf16.mxu0 0
        %4973 = vmatpush1.bf16.msra.mxu0 0
        %4974 = vmatprep.subr.bf16.mxu0 0
        %4975 = vmatpush1.bf16.msra.mxu0 0
        %4976 = vmatprep.subr.bf16.mxu0 0
        %4977 = vmatpush1.bf16.msra.mxu0 0
        %4978 = vmatprep.subr.bf16.mxu0 0
        %4979 = vmatpush1.bf16.msra.mxu0 0
        %4980 = vmatprep.mubr.bf16.mxu0 0
        %4981 = vmatmul.mubr.bf16.gmra.mrb[0].mxu0 %v4940
        %v4982 = vpop.f32.mrb[0].mxu0
        %v4983 = vadd.f32 0.0, %v4982
        %v4984 = vpop.f32.mrb[0].mxu0
        %v4985 = vpop.f32.mrb[0].mxu0
        %v4986 = vadd.f32 0.0, %v4985
        %v4987 = vpop.f32.mrb[0].mxu0
        %4988 = vmatprep.mubr.bf16.mxu0 0
        %4989 = vmatmul.mubr.bf16.gmra.mrb[0].mxu0 %v4941
        %v4990 = vpop.f32.mrb[0].mxu0
        %v4991 = vadd.f32 0.0, %v4990
        %v4992 = vpop.f32.mrb[0].mxu0
        %v4993 = vpop.f32.mrb[0].mxu0
        %v4994 = vadd.f32 0.0, %v4993
        %v4995 = vpop.f32.mrb[0].mxu0
        %4996 = vmatprep.mubr.bf16.mxu0 0
        %4997 = vmatmul.mubr.bf16.gmra.mrb[0].mxu0 %v4942
        %v4998 = vpop.f32.mrb[0].mxu0
        %v4999 = vadd.f32 0.0, %v4998
        %v5000 = vpop.f32.mrb[0].mxu0
        %v5001 = vpop.f32.mrb[0].mxu0
        %v5002 = vadd.f32 0.0, %v5001
        %v5003 = vpop.f32.mrb[0].mxu0
        %5004 = vmatprep.mubr.bf16.mxu0 0
        %5005 = vmatmul.mubr.bf16.gmra.mrb[0].mxu0 %v4943
        %v5006 = vpop.f32.mrb[0].mxu0
        %v5007 = vadd.f32 0.0, %v5006
        %v5008 = vpop.f32.mrb[0].mxu0
        %v5009 = vpop.f32.mrb[0].mxu0
        %v5010 = vadd.f32 0.0, %v5009
        %v5011 = vpop.f32.mrb[0].mxu0
        %5012 = vmatprep.mubr.bf16.mxu0 0
        %5013 = vmatmul.mubr.bf16.gmra.mrb[0].mxu0 %v4944
        %v5014 = vpop.f32.mrb[0].mxu0
        %v5015 = vadd.f32 0.0, %v5014
        %v5016 = vpop.f32.mrb[0].mxu0
        %v5017 = vpop.f32.mrb[0].mxu0
        %v5018 = vadd.f32 0.0, %v5017
        %v5019 = vpop.f32.mrb[0].mxu0
        %5020 = vmatprep.mubr.bf16.mxu0 0
        %5021 = vmatmul.mubr.bf16.gmra.mrb[0].mxu0 %v4945
        %v5022 = vpop.f32.mrb[0].mxu0
        %v5023 = vadd.f32 0.0, %v5022
        %v5024 = vpop.f32.mrb[0].mxu0
        %v5025 = vpop.f32.mrb[0].mxu0
        %v5026 = vadd.f32 0.0, %v5025
        %v5027 = vpop.f32.mrb[0].mxu0
        %5028 = vmatprep.mubr.bf16.mxu0 0
        %5029 = vmatmul.mubr.bf16.gmra.mrb[0].mxu0 %v4946
        %v5030 = vpop.f32.mrb[0].mxu0
        %v5031 = vadd.f32 0.0, %v5030
        %v5032 = vpop.f32.mrb[0].mxu0
        %v5033 = vpop.f32.mrb[0].mxu0
        %v5034 = vadd.f32 0.0, %v5033
        %v5035 = vpop.f32.mrb[0].mxu0
        %5036 = vmatprep.mubr.bf16.mxu0 0
        %5037 = vmatmul.mubr.bf16.gmra.mrb[0].mxu0 %v4947
        %v5038 = vpop.f32.mrb[0].mxu0
        %v5039 = vadd.f32 0.0, %v5038
        %v5040 = vpop.f32.mrb[0].mxu0
        %v5041 = vpop.f32.mrb[0].mxu0
        %v5042 = vadd.f32 0.0, %v5041
        %v5043 = vpop.f32.mrb[0].mxu0
        %5044 = vdwg.mxu0
        %v5045 = vadd.f32 %v4714, %v4983
        %v5046 = vadd.f32 %v4715, %v4986
        %v5047 = vadd.f32 %v4716, %v4991
        %v5048 = vadd.f32 %v4717, %v4994
        %v5049 = vadd.f32 %v4718, %v4999
        %v5050 = vadd.f32 %v4719, %v5002
        %v5051 = vadd.f32 %v4720, %v5007
        %v5052 = vadd.f32 %v4721, %v5010
        %v5053 = vadd.f32 %v4722, %v5015
        %v5054 = vadd.f32 %v4723, %v5018
        %v5055 = vadd.f32 %v4724, %v5023
        %v5056 = vadd.f32 %v4725, %v5026
        %v5057 = vadd.f32 %v4726, %v5031
        %v5058 = vadd.f32 %v4727, %v5034
        %v5059 = vadd.f32 %v4728, %v5039
        %v5060 = vadd.f32 %v4729, %v5042
        %s5061 = scalar_lea.vmem %s3, 384
        %v5062 = vld [vmem:[%s5061] sm:$0xf]
        %v5063 = vld [vmem:[%s5061 + $0x4] sm:$0xf]
        %v5064 = vld [vmem:[%s5061 + $0x8] sm:$0xf]
        %v5065 = vld [vmem:[%s5061 + $0xc] sm:$0xf]
        %v5066 = vld [vmem:[%s5061 + $0x10] sm:$0xf]
        %v5067 = vld [vmem:[%s5061 + $0x14] sm:$0xf]
        %v5068 = vld [vmem:[%s5061 + $0x18] sm:$0xf]
        %v5069 = vld [vmem:[%s5061 + $0x1c] sm:$0xf]
        %v5070 = vld [vmem:[%s5061 + $0x20] sm:$0xf]
        %v5071 = vld [vmem:[%s5061 + $0x24] sm:$0xf]
        %v5072 = vld [vmem:[%s5061 + $0x28] sm:$0xf]
        %v5073 = vld [vmem:[%s5061 + $0x2c] sm:$0xf]
        %v5074 = vld [vmem:[%s5061 + $0x30] sm:$0xf]
        %v5075 = vld [vmem:[%s5061 + $0x34] sm:$0xf]
        %v5076 = vld [vmem:[%s5061 + $0x38] sm:$0xf]
        %v5077 = vld [vmem:[%s5061 + $0x3c] sm:$0xf]
        %s5078 = scalar_lea.vmem [#allocation3], 64
        %s5079 = scalar_lea.vmem %s5078, 7 [#allocation3]
        %v5080 = vld [vmem:[%s5079] ss:$2 sm:$0xff]
        %s5081 = scalar_lea.vmem %s5078, 39 [#allocation3]
        %v5082 = vld [vmem:[%s5081] ss:$2 sm:$0xff]
        %s5083 = scalar_lea.vmem %s5078, 71 [#allocation3]
        %v5084 = vld [vmem:[%s5083] ss:$2 sm:$0xff]
        %s5085 = scalar_lea.vmem %s5078, 103 [#allocation3]
        %v5086 = vld [vmem:[%s5085] ss:$2 sm:$0xff]
        %s5087 = scalar_lea.vmem %s5078, 135 [#allocation3]
        %v5088 = vld [vmem:[%s5087] ss:$2 sm:$0xff]
        %s5089 = scalar_lea.vmem %s5078, 167 [#allocation3]
        %v5090 = vld [vmem:[%s5089] ss:$2 sm:$0xff]
        %s5091 = scalar_lea.vmem %s5078, 199 [#allocation3]
        %v5092 = vld [vmem:[%s5091] ss:$2 sm:$0xff]
        %s5093 = scalar_lea.vmem %s5078, 231 [#allocation3]
        %v5094 = vld [vmem:[%s5093] ss:$2 sm:$0xff]
        %s5095 = scalar_lea.vmem %s5078, 263 [#allocation3]
        %v5096 = vld [vmem:[%s5095] ss:$2 sm:$0xff]
        %s5097 = scalar_lea.vmem %s5078, 295 [#allocation3]
        %v5098 = vld [vmem:[%s5097] ss:$2 sm:$0xff]
        %s5099 = scalar_lea.vmem %s5078, 327 [#allocation3]
        %v5100 = vld [vmem:[%s5099] ss:$2 sm:$0xff]
        %s5101 = scalar_lea.vmem %s5078, 359 [#allocation3]
        %v5102 = vld [vmem:[%s5101] ss:$2 sm:$0xff]
        %s5103 = scalar_lea.vmem %s5078, 391 [#allocation3]
        %v5104 = vld [vmem:[%s5103] ss:$2 sm:$0xff]
        %s5105 = scalar_lea.vmem %s5078, 423 [#allocation3]
        %v5106 = vld [vmem:[%s5105] ss:$2 sm:$0xff]
        %s5107 = scalar_lea.vmem %s5078, 455 [#allocation3]
        %v5108 = vld [vmem:[%s5107] ss:$2 sm:$0xff]
        %s5109 = scalar_lea.vmem %s5078, 487 [#allocation3]
        %v5110 = vld [vmem:[%s5109] ss:$2 sm:$0xff]
        %s5111 = scalar_lea.vmem %s5078, 8 [#allocation3]
        %v5112 = vld [vmem:[%s5111] ss:$2 sm:$0xff]
        %s5113 = scalar_lea.vmem %s5078, 40 [#allocation3]
        %v5114 = vld [vmem:[%s5113] ss:$2 sm:$0xff]
        %s5115 = scalar_lea.vmem %s5078, 72 [#allocation3]
        %v5116 = vld [vmem:[%s5115] ss:$2 sm:$0xff]
        %s5117 = scalar_lea.vmem %s5078, 104 [#allocation3]
        %v5118 = vld [vmem:[%s5117] ss:$2 sm:$0xff]
        %s5119 = scalar_lea.vmem %s5078, 136 [#allocation3]
        %v5120 = vld [vmem:[%s5119] ss:$2 sm:$0xff]
        %s5121 = scalar_lea.vmem %s5078, 168 [#allocation3]
        %v5122 = vld [vmem:[%s5121] ss:$2 sm:$0xff]
        %s5123 = scalar_lea.vmem %s5078, 200 [#allocation3]
        %v5124 = vld [vmem:[%s5123] ss:$2 sm:$0xff]
        %s5125 = scalar_lea.vmem %s5078, 232 [#allocation3]
        %v5126 = vld [vmem:[%s5125] ss:$2 sm:$0xff]
        %s5127 = scalar_lea.vmem %s5078, 264 [#allocation3]
        %v5128 = vld [vmem:[%s5127] ss:$2 sm:$0xff]
        %s5129 = scalar_lea.vmem %s5078, 296 [#allocation3]
        %v5130 = vld [vmem:[%s5129] ss:$2 sm:$0xff]
        %s5131 = scalar_lea.vmem %s5078, 328 [#allocation3]
        %v5132 = vld [vmem:[%s5131] ss:$2 sm:$0xff]
        %s5133 = scalar_lea.vmem %s5078, 360 [#allocation3]
        %v5134 = vld [vmem:[%s5133] ss:$2 sm:$0xff]
        %s5135 = scalar_lea.vmem %s5078, 392 [#allocation3]
        %v5136 = vld [vmem:[%s5135] ss:$2 sm:$0xff]
        %s5137 = scalar_lea.vmem %s5078, 424 [#allocation3]
        %v5138 = vld [vmem:[%s5137] ss:$2 sm:$0xff]
        %s5139 = scalar_lea.vmem %s5078, 456 [#allocation3]
        %v5140 = vld [vmem:[%s5139] ss:$2 sm:$0xff]
        %s5141 = scalar_lea.vmem %s5078, 488 [#allocation3]
        %v5142 = vld [vmem:[%s5141] ss:$2 sm:$0xff]
        %v5143 = vpack.c.bf16 %v5082, %v5080
        %v5144 = vpack.c.bf16 %v5086, %v5084
        %v5145 = vpack.c.bf16 %v5090, %v5088
        %v5146 = vpack.c.bf16 %v5094, %v5092
        %v5147 = vpack.c.bf16 %v5098, %v5096
        %v5148 = vpack.c.bf16 %v5102, %v5100
        %v5149 = vpack.c.bf16 %v5106, %v5104
        %v5150 = vpack.c.bf16 %v5110, %v5108
        %v5167 = vunpack.c.l.b16 %v5062
        %v5168 = vunpack.c.l.b16 %v5063
        %v5169 = vunpack.c.l.b16 %v5064
        %v5170 = vunpack.c.l.b16 %v5065
        %v5171 = vunpack.c.l.b16 %v5066
        %v5172 = vunpack.c.l.b16 %v5067
        %v5173 = vunpack.c.l.b16 %v5068
        %v5174 = vunpack.c.l.b16 %v5069
        %v5175 = vunpack.c.l.b16 %v5070
        %v5176 = vunpack.c.l.b16 %v5071
        %v5177 = vunpack.c.l.b16 %v5072
        %v5178 = vunpack.c.l.b16 %v5073
        %v5179 = vunpack.c.l.b16 %v5074
        %v5180 = vunpack.c.l.b16 %v5075
        %v5181 = vunpack.c.l.b16 %v5076
        %v5182 = vunpack.c.l.b16 %v5077
        %v5183 = vpack.c.b16 %v5168, %v5167
        %v5184 = vpack.c.b16 %v5170, %v5169
        %v5185 = vpack.c.b16 %v5172, %v5171
        %v5186 = vpack.c.b16 %v5174, %v5173
        %v5187 = vpack.c.b16 %v5176, %v5175
        %v5188 = vpack.c.b16 %v5178, %v5177
        %v5189 = vpack.c.b16 %v5180, %v5179
        %v5190 = vpack.c.b16 %v5182, %v5181
        %5199 = vmatprep.subr.bf16.mxu0 0
        %5200 = vmatpush1.bf16.msra.mxu0 %v5183
        %5201 = vmatprep.subr.bf16.mxu0 0
        %5202 = vmatpush1.bf16.msra.mxu0 %v5184
        %5203 = vmatprep.subr.bf16.mxu0 0
        %5204 = vmatpush1.bf16.msra.mxu0 %v5185
        %5205 = vmatprep.subr.bf16.mxu0 0
        %5206 = vmatpush1.bf16.msra.mxu0 %v5186
        %5207 = vmatprep.subr.bf16.mxu0 0
        %5208 = vmatpush1.bf16.msra.mxu0 %v5187
        %5209 = vmatprep.subr.bf16.mxu0 0
        %5210 = vmatpush1.bf16.msra.mxu0 %v5188
        %5211 = vmatprep.subr.bf16.mxu0 0
        %5212 = vmatpush1.bf16.msra.mxu0 %v5189
        %5213 = vmatprep.subr.bf16.mxu0 0
        %5214 = vmatpush1.bf16.msra.mxu0 %v5190
        %5215 = vmatprep.subr.bf16.mxu0 0
        %5216 = vmatpush1.bf16.msra.mxu0 0
        %5217 = vmatprep.subr.bf16.mxu0 0
        %5218 = vmatpush1.bf16.msra.mxu0 0
        %5219 = vmatprep.subr.bf16.mxu0 0
        %5220 = vmatpush1.bf16.msra.mxu0 0
        %5221 = vmatprep.subr.bf16.mxu0 0
        %5222 = vmatpush1.bf16.msra.mxu0 0
        %5223 = vmatprep.subr.bf16.mxu0 0
        %5224 = vmatpush1.bf16.msra.mxu0 0
        %5225 = vmatprep.subr.bf16.mxu0 0
        %5226 = vmatpush1.bf16.msra.mxu0 0
        %5227 = vmatprep.subr.bf16.mxu0 0
        %5228 = vmatpush1.bf16.msra.mxu0 0
        %5229 = vmatprep.subr.bf16.mxu0 0
        %5230 = vmatpush1.bf16.msra.mxu0 0
        %5231 = vmatprep.mubr.bf16.mxu0 0
        %5232 = vmatmul.mubr.bf16.gmra.mrb[0].mxu0 %v5143
        %v5233 = vpop.f32.mrb[0].mxu0
        %v5234 = vadd.f32 0.0, %v5233
        %v5235 = vpop.f32.mrb[0].mxu0
        %v5236 = vpop.f32.mrb[0].mxu0
        %v5237 = vadd.f32 0.0, %v5236
        %v5238 = vpop.f32.mrb[0].mxu0
        %5239 = vmatprep.mubr.bf16.mxu0 0
        %5240 = vmatmul.mubr.bf16.gmra.mrb[0].mxu0 %v5144
        %v5241 = vpop.f32.mrb[0].mxu0
        %v5242 = vadd.f32 0.0, %v5241
        %v5243 = vpop.f32.mrb[0].mxu0
        %v5244 = vpop.f32.mrb[0].mxu0
        %v5245 = vadd.f32 0.0, %v5244
        %v5246 = vpop.f32.mrb[0].mxu0
        %5247 = vmatprep.mubr.bf16.mxu0 0
        %5248 = vmatmul.mubr.bf16.gmra.mrb[0].mxu0 %v5145
        %v5249 = vpop.f32.mrb[0].mxu0
        %v5250 = vadd.f32 0.0, %v5249
        %v5251 = vpop.f32.mrb[0].mxu0
        %v5252 = vpop.f32.mrb[0].mxu0
        %v5253 = vadd.f32 0.0, %v5252
        %v5254 = vpop.f32.mrb[0].mxu0
        %5255 = vmatprep.mubr.bf16.mxu0 0
        %5256 = vmatmul.mubr.bf16.gmra.mrb[0].mxu0 %v5146
        %v5257 = vpop.f32.mrb[0].mxu0
        %v5258 = vadd.f32 0.0, %v5257
        %v5259 = vpop.f32.mrb[0].mxu0
        %v5260 = vpop.f32.mrb[0].mxu0
        %v5261 = vadd.f32 0.0, %v5260
        %v5262 = vpop.f32.mrb[0].mxu0
        %5263 = vmatprep.mubr.bf16.mxu0 0
        %5264 = vmatmul.mubr.bf16.gmra.mrb[0].mxu0 %v5147
        %v5265 = vpop.f32.mrb[0].mxu0
        %v5266 = vadd.f32 0.0, %v5265
        %v5267 = vpop.f32.mrb[0].mxu0
        %v5268 = vpop.f32.mrb[0].mxu0
        %v5269 = vadd.f32 0.0, %v5268
        %v5270 = vpop.f32.mrb[0].mxu0
        %5271 = vmatprep.mubr.bf16.mxu0 0
        %5272 = vmatmul.mubr.bf16.gmra.mrb[0].mxu0 %v5148
        %v5273 = vpop.f32.mrb[0].mxu0
        %v5274 = vadd.f32 0.0, %v5273
        %v5275 = vpop.f32.mrb[0].mxu0
        %v5276 = vpop.f32.mrb[0].mxu0
        %v5277 = vadd.f32 0.0, %v5276
        %v5278 = vpop.f32.mrb[0].mxu0
        %5279 = vmatprep.mubr.bf16.mxu0 0
        %5280 = vmatmul.mubr.bf16.gmra.mrb[0].mxu0 %v5149
        %v5281 = vpop.f32.mrb[0].mxu0
        %v5282 = vadd.f32 0.0, %v5281
        %v5283 = vpop.f32.mrb[0].mxu0
        %v5284 = vpop.f32.mrb[0].mxu0
        %v5285 = vadd.f32 0.0, %v5284
        %v5286 = vpop.f32.mrb[0].mxu0
        %5287 = vmatprep.mubr.bf16.mxu0 0
        %5288 = vmatmul.mubr.bf16.gmra.mrb[0].mxu0 %v5150
        %v5289 = vpop.f32.mrb[0].mxu0
        %v5290 = vadd.f32 0.0, %v5289
        %v5291 = vpop.f32.mrb[0].mxu0
        %v5292 = vpop.f32.mrb[0].mxu0
        %v5293 = vadd.f32 0.0, %v5292
        %v5294 = vpop.f32.mrb[0].mxu0
        %5295 = vdwg.mxu0
        %v5296 = vadd.f32 %v4924, %v5234
        %v5297 = vadd.f32 %v4925, %v5237
        %v5298 = vadd.f32 %v4926, %v5242
        %v5299 = vadd.f32 %v4927, %v5245
        %v5300 = vadd.f32 %v4928, %v5250
        %v5301 = vadd.f32 %v4929, %v5253
        %v5302 = vadd.f32 %v4930, %v5258
        %v5303 = vadd.f32 %v4931, %v5261
        %v5304 = vadd.f32 %v4932, %v5266
        %v5305 = vadd.f32 %v4933, %v5269
        %v5306 = vadd.f32 %v4934, %v5274
        %v5307 = vadd.f32 %v4935, %v5277
        %v5308 = vadd.f32 %v4936, %v5282
        %v5309 = vadd.f32 %v4937, %v5285
        %v5310 = vadd.f32 %v4938, %v5290
        %v5311 = vadd.f32 %v4939, %v5293
        %v5312 = vpack.c.bf16 %v5114, %v5112
        %v5313 = vpack.c.bf16 %v5118, %v5116
        %v5314 = vpack.c.bf16 %v5122, %v5120
        %v5315 = vpack.c.bf16 %v5126, %v5124
        %v5316 = vpack.c.bf16 %v5130, %v5128
        %v5317 = vpack.c.bf16 %v5134, %v5132
        %v5318 = vpack.c.bf16 %v5138, %v5136
        %v5319 = vpack.c.bf16 %v5142, %v5140
        %5320 = vmatprep.subr.bf16.mxu0 0
        %5321 = vmatpush1.bf16.msra.mxu0 %v5183
        %5322 = vmatprep.subr.bf16.mxu0 0
        %5323 = vmatpush1.bf16.msra.mxu0 %v5184
        %5324 = vmatprep.subr.bf16.mxu0 0
        %5325 = vmatpush1.bf16.msra.mxu0 %v5185
        %5326 = vmatprep.subr.bf16.mxu0 0
        %5327 = vmatpush1.bf16.msra.mxu0 %v5186
        %5328 = vmatprep.subr.bf16.mxu0 0
        %5329 = vmatpush1.bf16.msra.mxu0 %v5187
        %5330 = vmatprep.subr.bf16.mxu0 0
        %5331 = vmatpush1.bf16.msra.mxu0 %v5188
        %5332 = vmatprep.subr.bf16.mxu0 0
        %5333 = vmatpush1.bf16.msra.mxu0 %v5189
        %5334 = vmatprep.subr.bf16.mxu0 0
        %5335 = vmatpush1.bf16.msra.mxu0 %v5190
        %5336 = vmatprep.subr.bf16.mxu0 0
        %5337 = vmatpush1.bf16.msra.mxu0 0
        %5338 = vmatprep.subr.bf16.mxu0 0
        %5339 = vmatpush1.bf16.msra.mxu0 0
        %5340 = vmatprep.subr.bf16.mxu0 0
        %5341 = vmatpush1.bf16.msra.mxu0 0
        %5342 = vmatprep.subr.bf16.mxu0 0
        %5343 = vmatpush1.bf16.msra.mxu0 0
        %5344 = vmatprep.subr.bf16.mxu0 0
        %5345 = vmatpush1.bf16.msra.mxu0 0
        %5346 = vmatprep.subr.bf16.mxu0 0
        %5347 = vmatpush1.bf16.msra.mxu0 0
        %5348 = vmatprep.subr.bf16.mxu0 0
        %5349 = vmatpush1.bf16.msra.mxu0 0
        %5350 = vmatprep.subr.bf16.mxu0 0
        %5351 = vmatpush1.bf16.msra.mxu0 0
        %5352 = vmatprep.mubr.bf16.mxu0 0
        %5353 = vmatmul.mubr.bf16.gmra.mrb[0].mxu0 %v5312
        %v5354 = vpop.f32.mrb[0].mxu0
        %v5355 = vadd.f32 0.0, %v5354
        %v5356 = vpop.f32.mrb[0].mxu0
        %v5357 = vpop.f32.mrb[0].mxu0
        %v5358 = vadd.f32 0.0, %v5357
        %v5359 = vpop.f32.mrb[0].mxu0
        %5360 = vmatprep.mubr.bf16.mxu0 0
        %5361 = vmatmul.mubr.bf16.gmra.mrb[0].mxu0 %v5313
        %v5362 = vpop.f32.mrb[0].mxu0
        %v5363 = vadd.f32 0.0, %v5362
        %v5364 = vpop.f32.mrb[0].mxu0
        %v5365 = vpop.f32.mrb[0].mxu0
        %v5366 = vadd.f32 0.0, %v5365
        %v5367 = vpop.f32.mrb[0].mxu0
        %5368 = vmatprep.mubr.bf16.mxu0 0
        %5369 = vmatmul.mubr.bf16.gmra.mrb[0].mxu0 %v5314
        %v5370 = vpop.f32.mrb[0].mxu0
        %v5371 = vadd.f32 0.0, %v5370
        %v5372 = vpop.f32.mrb[0].mxu0
        %v5373 = vpop.f32.mrb[0].mxu0
        %v5374 = vadd.f32 0.0, %v5373
        %v5375 = vpop.f32.mrb[0].mxu0
        %5376 = vmatprep.mubr.bf16.mxu0 0
        %5377 = vmatmul.mubr.bf16.gmra.mrb[0].mxu0 %v5315
        %v5378 = vpop.f32.mrb[0].mxu0
        %v5379 = vadd.f32 0.0, %v5378
        %v5380 = vpop.f32.mrb[0].mxu0
        %v5381 = vpop.f32.mrb[0].mxu0
        %v5382 = vadd.f32 0.0, %v5381
        %v5383 = vpop.f32.mrb[0].mxu0
        %5384 = vmatprep.mubr.bf16.mxu0 0
        %5385 = vmatmul.mubr.bf16.gmra.mrb[0].mxu0 %v5316
        %v5386 = vpop.f32.mrb[0].mxu0
        %v5387 = vadd.f32 0.0, %v5386
        %v5388 = vpop.f32.mrb[0].mxu0
        %v5389 = vpop.f32.mrb[0].mxu0
        %v5390 = vadd.f32 0.0, %v5389
        %v5391 = vpop.f32.mrb[0].mxu0
        %5392 = vmatprep.mubr.bf16.mxu0 0
        %5393 = vmatmul.mubr.bf16.gmra.mrb[0].mxu0 %v5317
        %v5394 = vpop.f32.mrb[0].mxu0
        %v5395 = vadd.f32 0.0, %v5394
        %v5396 = vpop.f32.mrb[0].mxu0
        %v5397 = vpop.f32.mrb[0].mxu0
        %v5398 = vadd.f32 0.0, %v5397
        %v5399 = vpop.f32.mrb[0].mxu0
        %5400 = vmatprep.mubr.bf16.mxu0 0
        %5401 = vmatmul.mubr.bf16.gmra.mrb[0].mxu0 %v5318
        %v5402 = vpop.f32.mrb[0].mxu0
        %v5403 = vadd.f32 0.0, %v5402
        %v5404 = vpop.f32.mrb[0].mxu0
        %v5405 = vpop.f32.mrb[0].mxu0
        %v5406 = vadd.f32 0.0, %v5405
        %v5407 = vpop.f32.mrb[0].mxu0
        %5408 = vmatprep.mubr.bf16.mxu0 0
        %5409 = vmatmul.mubr.bf16.gmra.mrb[0].mxu0 %v5319
        %v5410 = vpop.f32.mrb[0].mxu0
        %v5411 = vadd.f32 0.0, %v5410
        %v5412 = vpop.f32.mrb[0].mxu0
        %v5413 = vpop.f32.mrb[0].mxu0
        %v5414 = vadd.f32 0.0, %v5413
        %v5415 = vpop.f32.mrb[0].mxu0
        %5416 = vdwg.mxu0
        %v5417 = vadd.f32 %v5045, %v5355
        %v5418 = vadd.f32 %v5046, %v5358
        %v5419 = vadd.f32 %v5047, %v5363
        %v5420 = vadd.f32 %v5048, %v5366
        %v5421 = vadd.f32 %v5049, %v5371
        %v5422 = vadd.f32 %v5050, %v5374
        %v5423 = vadd.f32 %v5051, %v5379
        %v5424 = vadd.f32 %v5052, %v5382
        %v5425 = vadd.f32 %v5053, %v5387
        %v5426 = vadd.f32 %v5054, %v5390
        %v5427 = vadd.f32 %v5055, %v5395
        %v5428 = vadd.f32 %v5056, %v5398
        %v5429 = vadd.f32 %v5057, %v5403
        %v5430 = vadd.f32 %v5058, %v5406
        %v5431 = vadd.f32 %v5059, %v5411
        %v5432 = vadd.f32 %v5060, %v5414
        %s5433 = scalar_lea.vmem %s3, 448
        %v5434 = vld [vmem:[%s5433] sm:$0xf]
        %v5435 = vld [vmem:[%s5433 + $0x4] sm:$0xf]
        %v5436 = vld [vmem:[%s5433 + $0x8] sm:$0xf]
        %v5437 = vld [vmem:[%s5433 + $0xc] sm:$0xf]
        %v5438 = vld [vmem:[%s5433 + $0x10] sm:$0xf]
        %v5439 = vld [vmem:[%s5433 + $0x14] sm:$0xf]
        %v5440 = vld [vmem:[%s5433 + $0x18] sm:$0xf]
        %v5441 = vld [vmem:[%s5433 + $0x1c] sm:$0xf]
        %v5442 = vld [vmem:[%s5433 + $0x20] sm:$0xf]
        %v5443 = vld [vmem:[%s5433 + $0x24] sm:$0xf]
        %v5444 = vld [vmem:[%s5433 + $0x28] sm:$0xf]
        %v5445 = vld [vmem:[%s5433 + $0x2c] sm:$0xf]
        %v5446 = vld [vmem:[%s5433 + $0x30] sm:$0xf]
        %v5447 = vld [vmem:[%s5433 + $0x34] sm:$0xf]
        %v5448 = vld [vmem:[%s5433 + $0x38] sm:$0xf]
        %v5449 = vld [vmem:[%s5433 + $0x3c] sm:$0xf]
        %s5450 = scalar_lea.vmem %s5078, 9 [#allocation3]
        %v5451 = vld [vmem:[%s5450] ss:$2 sm:$0xff]
        %s5452 = scalar_lea.vmem %s5078, 41 [#allocation3]
        %v5453 = vld [vmem:[%s5452] ss:$2 sm:$0xff]
        %s5454 = scalar_lea.vmem %s5078, 73 [#allocation3]
        %v5455 = vld [vmem:[%s5454] ss:$2 sm:$0xff]
        %s5456 = scalar_lea.vmem %s5078, 105 [#allocation3]
        %v5457 = vld [vmem:[%s5456] ss:$2 sm:$0xff]
        %s5458 = scalar_lea.vmem %s5078, 137 [#allocation3]
        %v5459 = vld [vmem:[%s5458] ss:$2 sm:$0xff]
        %s5460 = scalar_lea.vmem %s5078, 169 [#allocation3]
        %v5461 = vld [vmem:[%s5460] ss:$2 sm:$0xff]
        %s5462 = scalar_lea.vmem %s5078, 201 [#allocation3]
        %v5463 = vld [vmem:[%s5462] ss:$2 sm:$0xff]
        %s5464 = scalar_lea.vmem %s5078, 233 [#allocation3]
        %v5465 = vld [vmem:[%s5464] ss:$2 sm:$0xff]
        %s5466 = scalar_lea.vmem %s5078, 265 [#allocation3]
        %v5467 = vld [vmem:[%s5466] ss:$2 sm:$0xff]
        %s5468 = scalar_lea.vmem %s5078, 297 [#allocation3]
        %v5469 = vld [vmem:[%s5468] ss:$2 sm:$0xff]
        %s5470 = scalar_lea.vmem %s5078, 329 [#allocation3]
        %v5471 = vld [vmem:[%s5470] ss:$2 sm:$0xff]
        %s5472 = scalar_lea.vmem %s5078, 361 [#allocation3]
        %v5473 = vld [vmem:[%s5472] ss:$2 sm:$0xff]
        %s5474 = scalar_lea.vmem %s5078, 393 [#allocation3]
        %v5475 = vld [vmem:[%s5474] ss:$2 sm:$0xff]
        %s5476 = scalar_lea.vmem %s5078, 425 [#allocation3]
        %v5477 = vld [vmem:[%s5476] ss:$2 sm:$0xff]
        %s5478 = scalar_lea.vmem %s5078, 457 [#allocation3]
        %v5479 = vld [vmem:[%s5478] ss:$2 sm:$0xff]
        %s5480 = scalar_lea.vmem %s5078, 489 [#allocation3]
        %v5481 = vld [vmem:[%s5480] ss:$2 sm:$0xff]
        %v5498 = vunpack.c.l.b16 %v5434
        %v5499 = vunpack.c.l.b16 %v5435
        %v5500 = vunpack.c.l.b16 %v5436
        %v5501 = vunpack.c.l.b16 %v5437
        %v5502 = vunpack.c.l.b16 %v5438
        %v5503 = vunpack.c.l.b16 %v5439
        %v5504 = vunpack.c.l.b16 %v5440
        %v5505 = vunpack.c.l.b16 %v5441
        %v5506 = vunpack.c.l.b16 %v5442
        %v5507 = vunpack.c.l.b16 %v5443
        %v5508 = vunpack.c.l.b16 %v5444
        %v5509 = vunpack.c.l.b16 %v5445
        %v5510 = vunpack.c.l.b16 %v5446
        %v5511 = vunpack.c.l.b16 %v5447
        %v5512 = vunpack.c.l.b16 %v5448
        %v5513 = vunpack.c.l.b16 %v5449
        %v5514 = vpack.c.b16 %v5499, %v5498
        %v5515 = vpack.c.b16 %v5501, %v5500
        %v5516 = vpack.c.b16 %v5503, %v5502
        %v5517 = vpack.c.b16 %v5505, %v5504
        %v5518 = vpack.c.b16 %v5507, %v5506
        %v5519 = vpack.c.b16 %v5509, %v5508
        %v5520 = vpack.c.b16 %v5511, %v5510
        %v5521 = vpack.c.b16 %v5513, %v5512
        %5530 = vmatprep.subr.bf16.mxu0 0
        %5531 = vmatpush1.bf16.msra.mxu0 %v5514
        %5532 = vmatprep.subr.bf16.mxu0 0
        %5533 = vmatpush1.bf16.msra.mxu0 %v5515
        %5534 = vmatprep.subr.bf16.mxu0 0
        %5535 = vmatpush1.bf16.msra.mxu0 %v5516
        %5536 = vmatprep.subr.bf16.mxu0 0
        %5537 = vmatpush1.bf16.msra.mxu0 %v5517
        %5538 = vmatprep.subr.bf16.mxu0 0
        %5539 = vmatpush1.bf16.msra.mxu0 %v5518
        %5540 = vmatprep.subr.bf16.mxu0 0
        %5541 = vmatpush1.bf16.msra.mxu0 %v5519
        %5542 = vmatprep.subr.bf16.mxu0 0
        %5543 = vmatpush1.bf16.msra.mxu0 %v5520
        %5544 = vmatprep.subr.bf16.mxu0 0
        %5545 = vmatpush1.bf16.msra.mxu0 %v5521
        %5546 = vmatprep.subr.bf16.mxu0 0
        %5547 = vmatpush1.bf16.msra.mxu0 0
        %5548 = vmatprep.subr.bf16.mxu0 0
        %5549 = vmatpush1.bf16.msra.mxu0 0
        %5550 = vmatprep.subr.bf16.mxu0 0
        %5551 = vmatpush1.bf16.msra.mxu0 0
        %5552 = vmatprep.subr.bf16.mxu0 0
        %5553 = vmatpush1.bf16.msra.mxu0 0
        %5554 = vmatprep.subr.bf16.mxu0 0
        %5555 = vmatpush1.bf16.msra.mxu0 0
        %5556 = vmatprep.subr.bf16.mxu0 0
        %5557 = vmatpush1.bf16.msra.mxu0 0
        %5558 = vmatprep.subr.bf16.mxu0 0
        %5559 = vmatpush1.bf16.msra.mxu0 0
        %5560 = vmatprep.subr.bf16.mxu0 0
        %5561 = vmatpush1.bf16.msra.mxu0 0
        %5562 = vmatprep.mubr.bf16.mxu0 0
        %5563 = vmatmul.mubr.bf16.gmra.mrb[0].mxu0 %v5312
        %v5564 = vpop.f32.mrb[0].mxu0
        %v5565 = vadd.f32 0.0, %v5564
        %v5566 = vpop.f32.mrb[0].mxu0
        %v5567 = vpop.f32.mrb[0].mxu0
        %v5568 = vadd.f32 0.0, %v5567
        %v5569 = vpop.f32.mrb[0].mxu0
        %5570 = vmatprep.mubr.bf16.mxu0 0
        %5571 = vmatmul.mubr.bf16.gmra.mrb[0].mxu0 %v5313
        %v5572 = vpop.f32.mrb[0].mxu0
        %v5573 = vadd.f32 0.0, %v5572
        %v5574 = vpop.f32.mrb[0].mxu0
        %v5575 = vpop.f32.mrb[0].mxu0
        %v5576 = vadd.f32 0.0, %v5575
        %v5577 = vpop.f32.mrb[0].mxu0
        %5578 = vmatprep.mubr.bf16.mxu0 0
        %5579 = vmatmul.mubr.bf16.gmra.mrb[0].mxu0 %v5314
        %v5580 = vpop.f32.mrb[0].mxu0
        %v5581 = vadd.f32 0.0, %v5580
        %v5582 = vpop.f32.mrb[0].mxu0
        %v5583 = vpop.f32.mrb[0].mxu0
        %v5584 = vadd.f32 0.0, %v5583
        %v5585 = vpop.f32.mrb[0].mxu0
        %5586 = vmatprep.mubr.bf16.mxu0 0
        %5587 = vmatmul.mubr.bf16.gmra.mrb[0].mxu0 %v5315
        %v5588 = vpop.f32.mrb[0].mxu0
        %v5589 = vadd.f32 0.0, %v5588
        %v5590 = vpop.f32.mrb[0].mxu0
        %v5591 = vpop.f32.mrb[0].mxu0
        %v5592 = vadd.f32 0.0, %v5591
        %v5593 = vpop.f32.mrb[0].mxu0
        %5594 = vmatprep.mubr.bf16.mxu0 0
        %5595 = vmatmul.mubr.bf16.gmra.mrb[0].mxu0 %v5316
        %v5596 = vpop.f32.mrb[0].mxu0
        %v5597 = vadd.f32 0.0, %v5596
        %v5598 = vpop.f32.mrb[0].mxu0
        %v5599 = vpop.f32.mrb[0].mxu0
        %v5600 = vadd.f32 0.0, %v5599
        %v5601 = vpop.f32.mrb[0].mxu0
        %5602 = vmatprep.mubr.bf16.mxu0 0
        %5603 = vmatmul.mubr.bf16.gmra.mrb[0].mxu0 %v5317
        %v5604 = vpop.f32.mrb[0].mxu0
        %v5605 = vadd.f32 0.0, %v5604
        %v5606 = vpop.f32.mrb[0].mxu0
        %v5607 = vpop.f32.mrb[0].mxu0
        %v5608 = vadd.f32 0.0, %v5607
        %v5609 = vpop.f32.mrb[0].mxu0
        %5610 = vmatprep.mubr.bf16.mxu0 0
        %5611 = vmatmul.mubr.bf16.gmra.mrb[0].mxu0 %v5318
        %v5612 = vpop.f32.mrb[0].mxu0
        %v5613 = vadd.f32 0.0, %v5612
        %v5614 = vpop.f32.mrb[0].mxu0
        %v5615 = vpop.f32.mrb[0].mxu0
        %v5616 = vadd.f32 0.0, %v5615
        %v5617 = vpop.f32.mrb[0].mxu0
        %5618 = vmatprep.mubr.bf16.mxu0 0
        %5619 = vmatmul.mubr.bf16.gmra.mrb[0].mxu0 %v5319
        %v5620 = vpop.f32.mrb[0].mxu0
        %v5621 = vadd.f32 0.0, %v5620
        %v5622 = vpop.f32.mrb[0].mxu0
        %v5623 = vpop.f32.mrb[0].mxu0
        %v5624 = vadd.f32 0.0, %v5623
        %v5625 = vpop.f32.mrb[0].mxu0
        %5626 = vdwg.mxu0
        %v5627 = vadd.f32 %v5296, %v5565
        %v5628 = vadd.f32 %v5297, %v5568
        %v5629 = vadd.f32 %v5298, %v5573
        %v5630 = vadd.f32 %v5299, %v5576
        %v5631 = vadd.f32 %v5300, %v5581
        %v5632 = vadd.f32 %v5301, %v5584
        %v5633 = vadd.f32 %v5302, %v5589
        %v5634 = vadd.f32 %v5303, %v5592
        %v5635 = vadd.f32 %v5304, %v5597
        %v5636 = vadd.f32 %v5305, %v5600
        %v5637 = vadd.f32 %v5306, %v5605
        %v5638 = vadd.f32 %v5307, %v5608
        %v5639 = vadd.f32 %v5308, %v5613
        %v5640 = vadd.f32 %v5309, %v5616
        %v5641 = vadd.f32 %v5310, %v5621
        %v5642 = vadd.f32 %v5311, %v5624
        %v5643 = vpack.c.bf16 %v5453, %v5451
        %v5644 = vpack.c.bf16 %v5457, %v5455
        %v5645 = vpack.c.bf16 %v5461, %v5459
        %v5646 = vpack.c.bf16 %v5465, %v5463
        %v5647 = vpack.c.bf16 %v5469, %v5467
        %v5648 = vpack.c.bf16 %v5473, %v5471
        %v5649 = vpack.c.bf16 %v5477, %v5475
        %v5650 = vpack.c.bf16 %v5481, %v5479
        %5651 = vmatprep.subr.bf16.mxu0 0
        %5652 = vmatpush1.bf16.msra.mxu0 %v5514
        %5653 = vmatprep.subr.bf16.mxu0 0
        %5654 = vmatpush1.bf16.msra.mxu0 %v5515
        %5655 = vmatprep.subr.bf16.mxu0 0
        %5656 = vmatpush1.bf16.msra.mxu0 %v5516
        %5657 = vmatprep.subr.bf16.mxu0 0
        %5658 = vmatpush1.bf16.msra.mxu0 %v5517
        %5659 = vmatprep.subr.bf16.mxu0 0
        %5660 = vmatpush1.bf16.msra.mxu0 %v5518
        %5661 = vmatprep.subr.bf16.mxu0 0
        %5662 = vmatpush1.bf16.msra.mxu0 %v5519
        %5663 = vmatprep.subr.bf16.mxu0 0
        %5664 = vmatpush1.bf16.msra.mxu0 %v5520
        %5665 = vmatprep.subr.bf16.mxu0 0
        %5666 = vmatpush1.bf16.msra.mxu0 %v5521
        %5667 = vmatprep.subr.bf16.mxu0 0
        %5668 = vmatpush1.bf16.msra.mxu0 0
        %5669 = vmatprep.subr.bf16.mxu0 0
        %5670 = vmatpush1.bf16.msra.mxu0 0
        %5671 = vmatprep.subr.bf16.mxu0 0
        %5672 = vmatpush1.bf16.msra.mxu0 0
        %5673 = vmatprep.subr.bf16.mxu0 0
        %5674 = vmatpush1.bf16.msra.mxu0 0
        %5675 = vmatprep.subr.bf16.mxu0 0
        %5676 = vmatpush1.bf16.msra.mxu0 0
        %5677 = vmatprep.subr.bf16.mxu0 0
        %5678 = vmatpush1.bf16.msra.mxu0 0
        %5679 = vmatprep.subr.bf16.mxu0 0
        %5680 = vmatpush1.bf16.msra.mxu0 0
        %5681 = vmatprep.subr.bf16.mxu0 0
        %5682 = vmatpush1.bf16.msra.mxu0 0
        %5683 = vmatprep.mubr.bf16.mxu0 0
        %5684 = vmatmul.mubr.bf16.gmra.mrb[0].mxu0 %v5643
        %v5685 = vpop.f32.mrb[0].mxu0
        %v5686 = vadd.f32 0.0, %v5685
        %v5687 = vpop.f32.mrb[0].mxu0
        %v5688 = vpop.f32.mrb[0].mxu0
        %v5689 = vadd.f32 0.0, %v5688
        %v5690 = vpop.f32.mrb[0].mxu0
        %5691 = vmatprep.mubr.bf16.mxu0 0
        %5692 = vmatmul.mubr.bf16.gmra.mrb[0].mxu0 %v5644
        %v5693 = vpop.f32.mrb[0].mxu0
        %v5694 = vadd.f32 0.0, %v5693
        %v5695 = vpop.f32.mrb[0].mxu0
        %v5696 = vpop.f32.mrb[0].mxu0
        %v5697 = vadd.f32 0.0, %v5696
        %v5698 = vpop.f32.mrb[0].mxu0
        %5699 = vmatprep.mubr.bf16.mxu0 0
        %5700 = vmatmul.mubr.bf16.gmra.mrb[0].mxu0 %v5645
        %v5701 = vpop.f32.mrb[0].mxu0
        %v5702 = vadd.f32 0.0, %v5701
        %v5703 = vpop.f32.mrb[0].mxu0
        %v5704 = vpop.f32.mrb[0].mxu0
        %v5705 = vadd.f32 0.0, %v5704
        %v5706 = vpop.f32.mrb[0].mxu0
        %5707 = vmatprep.mubr.bf16.mxu0 0
        %5708 = vmatmul.mubr.bf16.gmra.mrb[0].mxu0 %v5646
        %v5709 = vpop.f32.mrb[0].mxu0
        %v5710 = vadd.f32 0.0, %v5709
        %v5711 = vpop.f32.mrb[0].mxu0
        %v5712 = vpop.f32.mrb[0].mxu0
        %v5713 = vadd.f32 0.0, %v5712
        %v5714 = vpop.f32.mrb[0].mxu0
        %5715 = vmatprep.mubr.bf16.mxu0 0
        %5716 = vmatmul.mubr.bf16.gmra.mrb[0].mxu0 %v5647
        %v5717 = vpop.f32.mrb[0].mxu0
        %v5718 = vadd.f32 0.0, %v5717
        %v5719 = vpop.f32.mrb[0].mxu0
        %v5720 = vpop.f32.mrb[0].mxu0
        %v5721 = vadd.f32 0.0, %v5720
        %v5722 = vpop.f32.mrb[0].mxu0
        %5723 = vmatprep.mubr.bf16.mxu0 0
        %5724 = vmatmul.mubr.bf16.gmra.mrb[0].mxu0 %v5648
        %v5725 = vpop.f32.mrb[0].mxu0
        %v5726 = vadd.f32 0.0, %v5725
        %v5727 = vpop.f32.mrb[0].mxu0
        %v5728 = vpop.f32.mrb[0].mxu0
        %v5729 = vadd.f32 0.0, %v5728
        %v5730 = vpop.f32.mrb[0].mxu0
        %5731 = vmatprep.mubr.bf16.mxu0 0
        %5732 = vmatmul.mubr.bf16.gmra.mrb[0].mxu0 %v5649
        %v5733 = vpop.f32.mrb[0].mxu0
        %v5734 = vadd.f32 0.0, %v5733
        %v5735 = vpop.f32.mrb[0].mxu0
        %v5736 = vpop.f32.mrb[0].mxu0
        %v5737 = vadd.f32 0.0, %v5736
        %v5738 = vpop.f32.mrb[0].mxu0
        %5739 = vmatprep.mubr.bf16.mxu0 0
        %5740 = vmatmul.mubr.bf16.gmra.mrb[0].mxu0 %v5650
        %v5741 = vpop.f32.mrb[0].mxu0
        %v5742 = vadd.f32 0.0, %v5741
        %v5743 = vpop.f32.mrb[0].mxu0
        %v5744 = vpop.f32.mrb[0].mxu0
        %v5745 = vadd.f32 0.0, %v5744
        %v5746 = vpop.f32.mrb[0].mxu0
        %5747 = vdwg.mxu0
        %v5748 = vadd.f32 %v5417, %v5686
        %v5749 = vadd.f32 %v5418, %v5689
        %v5750 = vadd.f32 %v5419, %v5694
        %v5751 = vadd.f32 %v5420, %v5697
        %v5752 = vadd.f32 %v5421, %v5702
        %v5753 = vadd.f32 %v5422, %v5705
        %v5754 = vadd.f32 %v5423, %v5710
        %v5755 = vadd.f32 %v5424, %v5713
        %v5756 = vadd.f32 %v5425, %v5718
        %v5757 = vadd.f32 %v5426, %v5721
        %v5758 = vadd.f32 %v5427, %v5726
        %v5759 = vadd.f32 %v5428, %v5729
        %v5760 = vadd.f32 %v5429, %v5734
        %v5761 = vadd.f32 %v5430, %v5737
        %v5762 = vadd.f32 %v5431, %v5742
        %v5763 = vadd.f32 %v5432, %v5745
        %s5764 = scalar_lea.vmem %s3, 512
        %v5765 = vld [vmem:[%s5764] sm:$0xf]
        %v5766 = vld [vmem:[%s5764 + $0x4] sm:$0xf]
        %v5767 = vld [vmem:[%s5764 + $0x8] sm:$0xf]
        %v5768 = vld [vmem:[%s5764 + $0xc] sm:$0xf]
        %v5769 = vld [vmem:[%s5764 + $0x10] sm:$0xf]
        %v5770 = vld [vmem:[%s5764 + $0x14] sm:$0xf]
        %v5771 = vld [vmem:[%s5764 + $0x18] sm:$0xf]
        %v5772 = vld [vmem:[%s5764 + $0x1c] sm:$0xf]
        %v5773 = vld [vmem:[%s5764 + $0x20] sm:$0xf]
        %v5774 = vld [vmem:[%s5764 + $0x24] sm:$0xf]
        %v5775 = vld [vmem:[%s5764 + $0x28] sm:$0xf]
        %v5776 = vld [vmem:[%s5764 + $0x2c] sm:$0xf]
        %v5777 = vld [vmem:[%s5764 + $0x30] sm:$0xf]
        %v5778 = vld [vmem:[%s5764 + $0x34] sm:$0xf]
        %v5779 = vld [vmem:[%s5764 + $0x38] sm:$0xf]
        %v5780 = vld [vmem:[%s5764 + $0x3c] sm:$0xf]
        %s5781 = scalar_lea.vmem %s5078, 10 [#allocation3]
        %v5782 = vld [vmem:[%s5781] ss:$2 sm:$0xff]
        %s5783 = scalar_lea.vmem %s5078, 42 [#allocation3]
        %v5784 = vld [vmem:[%s5783] ss:$2 sm:$0xff]
        %s5785 = scalar_lea.vmem %s5078, 74 [#allocation3]
        %v5786 = vld [vmem:[%s5785] ss:$2 sm:$0xff]
        %s5787 = scalar_lea.vmem %s5078, 106 [#allocation3]
        %v5788 = vld [vmem:[%s5787] ss:$2 sm:$0xff]
        %s5789 = scalar_lea.vmem %s5078, 138 [#allocation3]
        %v5790 = vld [vmem:[%s5789] ss:$2 sm:$0xff]
        %s5791 = scalar_lea.vmem %s5078, 170 [#allocation3]
        %v5792 = vld [vmem:[%s5791] ss:$2 sm:$0xff]
        %s5793 = scalar_lea.vmem %s5078, 202 [#allocation3]
        %v5794 = vld [vmem:[%s5793] ss:$2 sm:$0xff]
        %s5795 = scalar_lea.vmem %s5078, 234 [#allocation3]
        %v5796 = vld [vmem:[%s5795] ss:$2 sm:$0xff]
        %s5797 = scalar_lea.vmem %s5078, 266 [#allocation3]
        %v5798 = vld [vmem:[%s5797] ss:$2 sm:$0xff]
        %s5799 = scalar_lea.vmem %s5078, 298 [#allocation3]
        %v5800 = vld [vmem:[%s5799] ss:$2 sm:$0xff]
        %s5801 = scalar_lea.vmem %s5078, 330 [#allocation3]
        %v5802 = vld [vmem:[%s5801] ss:$2 sm:$0xff]
        %s5803 = scalar_lea.vmem %s5078, 362 [#allocation3]
        %v5804 = vld [vmem:[%s5803] ss:$2 sm:$0xff]
        %s5805 = scalar_lea.vmem %s5078, 394 [#allocation3]
        %v5806 = vld [vmem:[%s5805] ss:$2 sm:$0xff]
        %s5807 = scalar_lea.vmem %s5078, 426 [#allocation3]
        %v5808 = vld [vmem:[%s5807] ss:$2 sm:$0xff]
        %s5809 = scalar_lea.vmem %s5078, 458 [#allocation3]
        %v5810 = vld [vmem:[%s5809] ss:$2 sm:$0xff]
        %s5811 = scalar_lea.vmem %s5078, 490 [#allocation3]
        %v5812 = vld [vmem:[%s5811] ss:$2 sm:$0xff]
        %v5829 = vunpack.c.l.b16 %v5765
        %v5830 = vunpack.c.l.b16 %v5766
        %v5831 = vunpack.c.l.b16 %v5767
        %v5832 = vunpack.c.l.b16 %v5768
        %v5833 = vunpack.c.l.b16 %v5769
        %v5834 = vunpack.c.l.b16 %v5770
        %v5835 = vunpack.c.l.b16 %v5771
        %v5836 = vunpack.c.l.b16 %v5772
        %v5837 = vunpack.c.l.b16 %v5773
        %v5838 = vunpack.c.l.b16 %v5774
        %v5839 = vunpack.c.l.b16 %v5775
        %v5840 = vunpack.c.l.b16 %v5776
        %v5841 = vunpack.c.l.b16 %v5777
        %v5842 = vunpack.c.l.b16 %v5778
        %v5843 = vunpack.c.l.b16 %v5779
        %v5844 = vunpack.c.l.b16 %v5780
        %v5845 = vpack.c.b16 %v5830, %v5829
        %v5846 = vpack.c.b16 %v5832, %v5831
        %v5847 = vpack.c.b16 %v5834, %v5833
        %v5848 = vpack.c.b16 %v5836, %v5835
        %v5849 = vpack.c.b16 %v5838, %v5837
        %v5850 = vpack.c.b16 %v5840, %v5839
        %v5851 = vpack.c.b16 %v5842, %v5841
        %v5852 = vpack.c.b16 %v5844, %v5843
        %5861 = vmatprep.subr.bf16.mxu0 0
        %5862 = vmatpush1.bf16.msra.mxu0 %v5845
        %5863 = vmatprep.subr.bf16.mxu0 0
        %5864 = vmatpush1.bf16.msra.mxu0 %v5846
        %5865 = vmatprep.subr.bf16.mxu0 0
        %5866 = vmatpush1.bf16.msra.mxu0 %v5847
        %5867 = vmatprep.subr.bf16.mxu0 0
        %5868 = vmatpush1.bf16.msra.mxu0 %v5848
        %5869 = vmatprep.subr.bf16.mxu0 0
        %5870 = vmatpush1.bf16.msra.mxu0 %v5849
        %5871 = vmatprep.subr.bf16.mxu0 0
        %5872 = vmatpush1.bf16.msra.mxu0 %v5850
        %5873 = vmatprep.subr.bf16.mxu0 0
        %5874 = vmatpush1.bf16.msra.mxu0 %v5851
        %5875 = vmatprep.subr.bf16.mxu0 0
        %5876 = vmatpush1.bf16.msra.mxu0 %v5852
        %5877 = vmatprep.subr.bf16.mxu0 0
        %5878 = vmatpush1.bf16.msra.mxu0 0
        %5879 = vmatprep.subr.bf16.mxu0 0
        %5880 = vmatpush1.bf16.msra.mxu0 0
        %5881 = vmatprep.subr.bf16.mxu0 0
        %5882 = vmatpush1.bf16.msra.mxu0 0
        %5883 = vmatprep.subr.bf16.mxu0 0
        %5884 = vmatpush1.bf16.msra.mxu0 0
        %5885 = vmatprep.subr.bf16.mxu0 0
        %5886 = vmatpush1.bf16.msra.mxu0 0
        %5887 = vmatprep.subr.bf16.mxu0 0
        %5888 = vmatpush1.bf16.msra.mxu0 0
        %5889 = vmatprep.subr.bf16.mxu0 0
        %5890 = vmatpush1.bf16.msra.mxu0 0
        %5891 = vmatprep.subr.bf16.mxu0 0
        %5892 = vmatpush1.bf16.msra.mxu0 0
        %5893 = vmatprep.mubr.bf16.mxu0 0
        %5894 = vmatmul.mubr.bf16.gmra.mrb[0].mxu0 %v5643
        %v5895 = vpop.f32.mrb[0].mxu0
        %v5896 = vadd.f32 0.0, %v5895
        %v5897 = vpop.f32.mrb[0].mxu0
        %v5898 = vpop.f32.mrb[0].mxu0
        %v5899 = vadd.f32 0.0, %v5898
        %v5900 = vpop.f32.mrb[0].mxu0
        %5901 = vmatprep.mubr.bf16.mxu0 0
        %5902 = vmatmul.mubr.bf16.gmra.mrb[0].mxu0 %v5644
        %v5903 = vpop.f32.mrb[0].mxu0
        %v5904 = vadd.f32 0.0, %v5903
        %v5905 = vpop.f32.mrb[0].mxu0
        %v5906 = vpop.f32.mrb[0].mxu0
        %v5907 = vadd.f32 0.0, %v5906
        %v5908 = vpop.f32.mrb[0].mxu0
        %5909 = vmatprep.mubr.bf16.mxu0 0
        %5910 = vmatmul.mubr.bf16.gmra.mrb[0].mxu0 %v5645
        %v5911 = vpop.f32.mrb[0].mxu0
        %v5912 = vadd.f32 0.0, %v5911
        %v5913 = vpop.f32.mrb[0].mxu0
        %v5914 = vpop.f32.mrb[0].mxu0
        %v5915 = vadd.f32 0.0, %v5914
        %v5916 = vpop.f32.mrb[0].mxu0
        %5917 = vmatprep.mubr.bf16.mxu0 0
        %5918 = vmatmul.mubr.bf16.gmra.mrb[0].mxu0 %v5646
        %v5919 = vpop.f32.mrb[0].mxu0
        %v5920 = vadd.f32 0.0, %v5919
        %v5921 = vpop.f32.mrb[0].mxu0
        %v5922 = vpop.f32.mrb[0].mxu0
        %v5923 = vadd.f32 0.0, %v5922
        %v5924 = vpop.f32.mrb[0].mxu0
        %5925 = vmatprep.mubr.bf16.mxu0 0
        %5926 = vmatmul.mubr.bf16.gmra.mrb[0].mxu0 %v5647
        %v5927 = vpop.f32.mrb[0].mxu0
        %v5928 = vadd.f32 0.0, %v5927
        %v5929 = vpop.f32.mrb[0].mxu0
        %v5930 = vpop.f32.mrb[0].mxu0
        %v5931 = vadd.f32 0.0, %v5930
        %v5932 = vpop.f32.mrb[0].mxu0
        %5933 = vmatprep.mubr.bf16.mxu0 0
        %5934 = vmatmul.mubr.bf16.gmra.mrb[0].mxu0 %v5648
        %v5935 = vpop.f32.mrb[0].mxu0
        %v5936 = vadd.f32 0.0, %v5935
        %v5937 = vpop.f32.mrb[0].mxu0
        %v5938 = vpop.f32.mrb[0].mxu0
        %v5939 = vadd.f32 0.0, %v5938
        %v5940 = vpop.f32.mrb[0].mxu0
        %5941 = vmatprep.mubr.bf16.mxu0 0
        %5942 = vmatmul.mubr.bf16.gmra.mrb[0].mxu0 %v5649
        %v5943 = vpop.f32.mrb[0].mxu0
        %v5944 = vadd.f32 0.0, %v5943
        %v5945 = vpop.f32.mrb[0].mxu0
        %v5946 = vpop.f32.mrb[0].mxu0
        %v5947 = vadd.f32 0.0, %v5946
        %v5948 = vpop.f32.mrb[0].mxu0
        %5949 = vmatprep.mubr.bf16.mxu0 0
        %5950 = vmatmul.mubr.bf16.gmra.mrb[0].mxu0 %v5650
        %v5951 = vpop.f32.mrb[0].mxu0
        %v5952 = vadd.f32 0.0, %v5951
        %v5953 = vpop.f32.mrb[0].mxu0
        %v5954 = vpop.f32.mrb[0].mxu0
        %v5955 = vadd.f32 0.0, %v5954
        %v5956 = vpop.f32.mrb[0].mxu0
        %5957 = vdwg.mxu0
        %v5958 = vadd.f32 %v5627, %v5896
        %v5959 = vadd.f32 %v5628, %v5899
        %v5960 = vadd.f32 %v5629, %v5904
        %v5961 = vadd.f32 %v5630, %v5907
        %v5962 = vadd.f32 %v5631, %v5912
        %v5963 = vadd.f32 %v5632, %v5915
        %v5964 = vadd.f32 %v5633, %v5920
        %v5965 = vadd.f32 %v5634, %v5923
        %v5966 = vadd.f32 %v5635, %v5928
        %v5967 = vadd.f32 %v5636, %v5931
        %v5968 = vadd.f32 %v5637, %v5936
        %v5969 = vadd.f32 %v5638, %v5939
        %v5970 = vadd.f32 %v5639, %v5944
        %v5971 = vadd.f32 %v5640, %v5947
        %v5972 = vadd.f32 %v5641, %v5952
        %v5973 = vadd.f32 %v5642, %v5955
        %v5974 = vpack.c.bf16 %v5784, %v5782
        %v5975 = vpack.c.bf16 %v5788, %v5786
        %v5976 = vpack.c.bf16 %v5792, %v5790
        %v5977 = vpack.c.bf16 %v5796, %v5794
        %v5978 = vpack.c.bf16 %v5800, %v5798
        %v5979 = vpack.c.bf16 %v5804, %v5802
        %v5980 = vpack.c.bf16 %v5808, %v5806
        %v5981 = vpack.c.bf16 %v5812, %v5810
        %5982 = vmatprep.subr.bf16.mxu0 0
        %5983 = vmatpush1.bf16.msra.mxu0 %v5845
        %5984 = vmatprep.subr.bf16.mxu0 0
        %5985 = vmatpush1.bf16.msra.mxu0 %v5846
        %5986 = vmatprep.subr.bf16.mxu0 0
        %5987 = vmatpush1.bf16.msra.mxu0 %v5847
        %5988 = vmatprep.subr.bf16.mxu0 0
        %5989 = vmatpush1.bf16.msra.mxu0 %v5848
        %5990 = vmatprep.subr.bf16.mxu0 0
        %5991 = vmatpush1.bf16.msra.mxu0 %v5849
        %5992 = vmatprep.subr.bf16.mxu0 0
        %5993 = vmatpush1.bf16.msra.mxu0 %v5850
        %5994 = vmatprep.subr.bf16.mxu0 0
        %5995 = vmatpush1.bf16.msra.mxu0 %v5851
        %5996 = vmatprep.subr.bf16.mxu0 0
        %5997 = vmatpush1.bf16.msra.mxu0 %v5852
        %5998 = vmatprep.subr.bf16.mxu0 0
        %5999 = vmatpush1.bf16.msra.mxu0 0
        %6000 = vmatprep.subr.bf16.mxu0 0
        %6001 = vmatpush1.bf16.msra.mxu0 0
        %6002 = vmatprep.subr.bf16.mxu0 0
        %6003 = vmatpush1.bf16.msra.mxu0 0
        %6004 = vmatprep.subr.bf16.mxu0 0
        %6005 = vmatpush1.bf16.msra.mxu0 0
        %6006 = vmatprep.subr.bf16.mxu0 0
        %6007 = vmatpush1.bf16.msra.mxu0 0
        %6008 = vmatprep.subr.bf16.mxu0 0
        %6009 = vmatpush1.bf16.msra.mxu0 0
        %6010 = vmatprep.subr.bf16.mxu0 0
        %6011 = vmatpush1.bf16.msra.mxu0 0
        %6012 = vmatprep.subr.bf16.mxu0 0
        %6013 = vmatpush1.bf16.msra.mxu0 0
        %6014 = vmatprep.mubr.bf16.mxu0 0
        %6015 = vmatmul.mubr.bf16.gmra.mrb[0].mxu0 %v5974
        %v6016 = vpop.f32.mrb[0].mxu0
        %v6017 = vadd.f32 0.0, %v6016
        %v6018 = vpop.f32.mrb[0].mxu0
        %v6019 = vpop.f32.mrb[0].mxu0
        %v6020 = vadd.f32 0.0, %v6019
        %v6021 = vpop.f32.mrb[0].mxu0
        %6022 = vmatprep.mubr.bf16.mxu0 0
        %6023 = vmatmul.mubr.bf16.gmra.mrb[0].mxu0 %v5975
        %v6024 = vpop.f32.mrb[0].mxu0
        %v6025 = vadd.f32 0.0, %v6024
        %v6026 = vpop.f32.mrb[0].mxu0
        %v6027 = vpop.f32.mrb[0].mxu0
        %v6028 = vadd.f32 0.0, %v6027
        %v6029 = vpop.f32.mrb[0].mxu0
        %6030 = vmatprep.mubr.bf16.mxu0 0
        %6031 = vmatmul.mubr.bf16.gmra.mrb[0].mxu0 %v5976
        %v6032 = vpop.f32.mrb[0].mxu0
        %v6033 = vadd.f32 0.0, %v6032
        %v6034 = vpop.f32.mrb[0].mxu0
        %v6035 = vpop.f32.mrb[0].mxu0
        %v6036 = vadd.f32 0.0, %v6035
        %v6037 = vpop.f32.mrb[0].mxu0
        %6038 = vmatprep.mubr.bf16.mxu0 0
        %6039 = vmatmul.mubr.bf16.gmra.mrb[0].mxu0 %v5977
        %v6040 = vpop.f32.mrb[0].mxu0
        %v6041 = vadd.f32 0.0, %v6040
        %v6042 = vpop.f32.mrb[0].mxu0
        %v6043 = vpop.f32.mrb[0].mxu0
        %v6044 = vadd.f32 0.0, %v6043
        %v6045 = vpop.f32.mrb[0].mxu0
        %6046 = vmatprep.mubr.bf16.mxu0 0
        %6047 = vmatmul.mubr.bf16.gmra.mrb[0].mxu0 %v5978
        %v6048 = vpop.f32.mrb[0].mxu0
        %v6049 = vadd.f32 0.0, %v6048
        %v6050 = vpop.f32.mrb[0].mxu0
        %v6051 = vpop.f32.mrb[0].mxu0
        %v6052 = vadd.f32 0.0, %v6051
        %v6053 = vpop.f32.mrb[0].mxu0
        %6054 = vmatprep.mubr.bf16.mxu0 0
        %6055 = vmatmul.mubr.bf16.gmra.mrb[0].mxu0 %v5979
        %v6056 = vpop.f32.mrb[0].mxu0
        %v6057 = vadd.f32 0.0, %v6056
        %v6058 = vpop.f32.mrb[0].mxu0
        %v6059 = vpop.f32.mrb[0].mxu0
        %v6060 = vadd.f32 0.0, %v6059
        %v6061 = vpop.f32.mrb[0].mxu0
        %6062 = vmatprep.mubr.bf16.mxu0 0
        %6063 = vmatmul.mubr.bf16.gmra.mrb[0].mxu0 %v5980
        %v6064 = vpop.f32.mrb[0].mxu0
        %v6065 = vadd.f32 0.0, %v6064
        %v6066 = vpop.f32.mrb[0].mxu0
        %v6067 = vpop.f32.mrb[0].mxu0
        %v6068 = vadd.f32 0.0, %v6067
        %v6069 = vpop.f32.mrb[0].mxu0
        %6070 = vmatprep.mubr.bf16.mxu0 0
        %6071 = vmatmul.mubr.bf16.gmra.mrb[0].mxu0 %v5981
        %v6072 = vpop.f32.mrb[0].mxu0
        %v6073 = vadd.f32 0.0, %v6072
        %v6074 = vpop.f32.mrb[0].mxu0
        %v6075 = vpop.f32.mrb[0].mxu0
        %v6076 = vadd.f32 0.0, %v6075
        %v6077 = vpop.f32.mrb[0].mxu0
        %6078 = vdwg.mxu0
        %v6079 = vadd.f32 %v5748, %v6017
        %v6080 = vadd.f32 %v5749, %v6020
        %v6081 = vadd.f32 %v5750, %v6025
        %v6082 = vadd.f32 %v5751, %v6028
        %v6083 = vadd.f32 %v5752, %v6033
        %v6084 = vadd.f32 %v5753, %v6036
        %v6085 = vadd.f32 %v5754, %v6041
        %v6086 = vadd.f32 %v5755, %v6044
        %v6087 = vadd.f32 %v5756, %v6049
        %v6088 = vadd.f32 %v5757, %v6052
        %v6089 = vadd.f32 %v5758, %v6057
        %v6090 = vadd.f32 %v5759, %v6060
        %v6091 = vadd.f32 %v5760, %v6065
        %v6092 = vadd.f32 %v5761, %v6068
        %v6093 = vadd.f32 %v5762, %v6073
        %v6094 = vadd.f32 %v5763, %v6076
        %v6095 = vld [vmem:[%s4] sm:$0x1]
        %v6097 = vlaneseq
        %v6098 = vshrl.u32 %v6097, 7
        %v6099 = vsub.s32 0, %v6098
        %v6100 = vrot.slane %v6095, %v6099
        %v6102 = vadd.f32 %v5958, %v6100
        %v6103 = vadd.f32 %v5959, %v6100
        %v6104 = vadd.f32 %v5960, %v6100
        %v6105 = vadd.f32 %v5961, %v6100
        %v6106 = vadd.f32 %v5962, %v6100
        %v6107 = vadd.f32 %v5963, %v6100
        %v6108 = vadd.f32 %v5964, %v6100
        %v6109 = vadd.f32 %v5965, %v6100
        %v6110 = vadd.f32 %v5966, %v6100
        %v6111 = vadd.f32 %v5967, %v6100
        %v6112 = vadd.f32 %v5968, %v6100
        %v6113 = vadd.f32 %v5969, %v6100
        %v6114 = vadd.f32 %v5970, %v6100
        %v6115 = vadd.f32 %v5971, %v6100
        %v6116 = vadd.f32 %v5972, %v6100
        %v6117 = vadd.f32 %v5973, %v6100
        %v6118 = vmax.f32 %v6102, 0.0
        %v6119 = vmax.f32 %v6103, 0.0
        %v6120 = vmax.f32 %v6104, 0.0
        %v6121 = vmax.f32 %v6105, 0.0
        %v6122 = vmax.f32 %v6106, 0.0
        %v6123 = vmax.f32 %v6107, 0.0
        %v6124 = vmax.f32 %v6108, 0.0
        %v6125 = vmax.f32 %v6109, 0.0
        %v6126 = vmax.f32 %v6110, 0.0
        %v6127 = vmax.f32 %v6111, 0.0
        %v6128 = vmax.f32 %v6112, 0.0
        %v6129 = vmax.f32 %v6113, 0.0
        %v6130 = vmax.f32 %v6114, 0.0
        %v6131 = vmax.f32 %v6115, 0.0
        %v6132 = vmax.f32 %v6116, 0.0
        %v6133 = vmax.f32 %v6117, 0.0
        %v6134 = vadd.f32 %v6079, %v6100
        %v6135 = vadd.f32 %v6080, %v6100
        %v6136 = vadd.f32 %v6081, %v6100
        %v6137 = vadd.f32 %v6082, %v6100
        %v6138 = vadd.f32 %v6083, %v6100
        %v6139 = vadd.f32 %v6084, %v6100
        %v6140 = vadd.f32 %v6085, %v6100
        %v6141 = vadd.f32 %v6086, %v6100
        %v6142 = vadd.f32 %v6087, %v6100
        %v6143 = vadd.f32 %v6088, %v6100
        %v6144 = vadd.f32 %v6089, %v6100
        %v6145 = vadd.f32 %v6090, %v6100
        %v6146 = vadd.f32 %v6091, %v6100
        %v6147 = vadd.f32 %v6092, %v6100
        %v6148 = vadd.f32 %v6093, %v6100
        %v6149 = vadd.f32 %v6094, %v6100
        %v6150 = vmax.f32 %v6134, 0.0
        %v6151 = vmax.f32 %v6135, 0.0
        %v6152 = vmax.f32 %v6136, 0.0
        %v6153 = vmax.f32 %v6137, 0.0
        %v6154 = vmax.f32 %v6138, 0.0
        %v6155 = vmax.f32 %v6139, 0.0
        %v6156 = vmax.f32 %v6140, 0.0
        %v6157 = vmax.f32 %v6141, 0.0
        %v6158 = vmax.f32 %v6142, 0.0
        %v6159 = vmax.f32 %v6143, 0.0
        %v6160 = vmax.f32 %v6144, 0.0
        %v6161 = vmax.f32 %v6145, 0.0
        %v6162 = vmax.f32 %v6146, 0.0
        %v6163 = vmax.f32 %v6147, 0.0
        %v6164 = vmax.f32 %v6148, 0.0
        %v6165 = vmax.f32 %v6149, 0.0
        %v6166 = vadd.f32 %v6118, %v6150
        %v6167 = vadd.f32 %v6119, %v6151
        %v6168 = vadd.f32 %v6120, %v6152
        %v6169 = vadd.f32 %v6121, %v6153
        %v6170 = vadd.f32 %v6122, %v6154
        %v6171 = vadd.f32 %v6123, %v6155
        %v6172 = vadd.f32 %v6124, %v6156
        %v6173 = vadd.f32 %v6125, %v6157
        %v6174 = vadd.f32 %v6126, %v6158
        %v6175 = vadd.f32 %v6127, %v6159
        %v6176 = vadd.f32 %v6128, %v6160
        %v6177 = vadd.f32 %v6129, %v6161
        %v6178 = vadd.f32 %v6130, %v6162
        %v6179 = vadd.f32 %v6131, %v6163
        %v6180 = vadd.f32 %v6132, %v6164
        %v6181 = vadd.f32 %v6133, %v6165
        %v6182 = vadd.f32 %v6166, %v6167
        %v6183 = vadd.f32 %v6168, %v6169
        %v6184 = vadd.f32 %v6170, %v6171
        %v6185 = vadd.f32 %v6172, %v6173
        %v6186 = vadd.f32 %v6174, %v6175
        %v6187 = vadd.f32 %v6176, %v6177
        %v6188 = vadd.f32 %v6178, %v6179
        %v6189 = vadd.f32 %v6180, %v6181
        %v6190 = vmul.f32 %v6182, 0.25
        %v6191 = vmul.f32 %v6183, 0.25
        %v6192 = vmul.f32 %v6184, 0.25
        %v6193 = vmul.f32 %v6185, 0.25
        %v6194 = vmul.f32 %v6186, 0.25
        %v6195 = vmul.f32 %v6187, 0.25
        %v6196 = vmul.f32 %v6188, 0.25
        %v6197 = vmul.f32 %v6189, 0.25
        %6198 = vst [vmem:[%s217] sm:$0xff] %v6190
        %6199 = vst [vmem:[%s217 + $0x8] sm:$0xff] %v6191
        %6200 = vst [vmem:[%s217 + $0x10] sm:$0xff] %v6192
        %6201 = vst [vmem:[%s217 + $0x18] sm:$0xff] %v6193
        %6202 = vst [vmem:[%s217 + $0x20] sm:$0xff] %v6194
        %6203 = vst [vmem:[%s217 + $0x28] sm:$0xff] %v6195
        %6204 = vst [vmem:[%s217 + $0x30] sm:$0xff] %v6196
        %6205 = vst [vmem:[%s217 + $0x38] sm:$0xff] %v6197
        %s6206 = sand.u32 %s137, 1
        %s6207 = scalar_lea.sflag [#allocation5], %s6206
        %s6208 = sand.u32 %s137, 1
        %s6209 = smul.addr %s6208, 64
        %s6210 = scalar_lea.vmem [#allocation4], %s6209
        // Predicated region
        $region41: #{tpu_custom_call.1} parent=39 // pred_check
          %p6211 = pneg %p147
        $region42: #{tpu_custom_call.1} parent=39 // pred_check_branch
          %6213 = sbr.rel (%p6211) target = $region44
        $region43: #{tpu_custom_call.1} parent=39 // pred_region
          %s6215 = ssub.s32 1024, 1024
          %6216 = vsyncadd %s6207, %s6215
          %s6217 = smul.addr %s19, 8
          %s6218 = smul.addr %s6217, 128
          %s6219 = scalar_lea.hbm %s5, %s6218
          %s6220 = sshll.u32 %s6210, 4
          %s6221 = int_to_ptr.vmem [resolvable:$true] %s6220
          %6226 = dma.vmem_to_hbm [thread:$0]  %s6221, 1024, %s6219, %s6207, 128, 128, 8
        $region44: #{tpu_custom_call.1} parent=39 // pred_fallthru
          _
      $region40: #{tpu_custom_call.1} parent=5 // pred_fallthru
        _
      %p6227 = scmp.le.s32.totalorder 2, %s14
      // Predicated region
      $region45: #{tpu_custom_call.1} parent=5 // pred_check
        %p6228 = pneg %p6227
      $region46: #{tpu_custom_call.1} parent=5 // pred_check_branch
        %6230 = sbr.rel (%p6228) target = $region48
      $region47: #{tpu_custom_call.1} parent=5 // pred_region
        %s6231 = ssub.s32 %s14, 2
        // Predicated region
        $region49: #{tpu_custom_call.1} parent=47 // pred_check
          %p6232 = pneg %p153
        $region50: #{tpu_custom_call.1} parent=47 // pred_check_branch
          %6234 = sbr.rel (%p6232) target = $region52
        $region51: #{tpu_custom_call.1} parent=47 // pred_region
          %s6235 = sand.u32 %s138, 1
          %s6236 = scalar_lea.sflag [#allocation5], %s6235
          %s6237 = sand.u32 %s138, 1
          %s6238 = smul.addr %s6237, 64
          %s6239 = scalar_lea.vmem [#allocation4], %s6238
          %6240 = dma.done %s6236, 1024
        $region52: #{tpu_custom_call.1} parent=47 // pred_fallthru
          _
      $region48: #{tpu_custom_call.1} parent=5 // pred_fallthru
        _
    $region6: #{tpu_custom_call.1} parent=1 // loop_footer
      %s18 = sadd.s32 1, %s14
    $region7: #{tpu_custom_call.1} parent=1 // loop_footer_branch
      %13 = sbr.rel target = $region3
    $region8: #{tpu_custom_call.1} parent=1 // loop_exit
      _
    %6241 = vsyncpa [#allocation5], 1
    %s6242 = scalar_lea.sflag [#allocation5], 1
    %6243 = vsyncpa %s6242, 1

</llo_original>
